<compile_context>
chip_gen: v5e
topology: v5e:2x2
jax: 0.10.0
libtpu: 0.0.40
codegen_flags: <defaults>
</compile_context>

<pallas_src>
import math

import jax
import jax.numpy as jnp
from jax import lax
from jax.experimental import pallas as pl
from jax.experimental.pallas import tpu as pltpu

CHANNEL = 8          # stands in for settings.channel (not provided in source)
RES_SCALE = 1.0      # PyramidAttention(res_scale=1)
NEG_SLOPE = 0.2      # LeakyReLU slope


# ------------------------------ Pallas kernel --------------------------------

def _mega_kernel(p1_ref, p2_ref, p3_ref, p4_ref,
                 wf_ref, bias_ref,
                 s1_ref, s2_ref, s3_ref, s4_ref,
                 u4_ref, u3_ref, wfus_ref, bfus_ref,
                 o_ref):
    """Entire Bottomupupbottom forward for one batch element (one grid step).

    p{1..4}_ref : (1, C, HWk)  pooled inputs, channel-major, lane-dense space
    wf_ref      : (8, C, 9C)   fused 3x3 weights (conv11..conv24)
    bias_ref    : (8, C, HW1)  per-block per-pixel bias maps (zero padded)
    s{1..4}_ref : (9, HWk, HWk) 0/1 shift+border-mask matrices per pyramid level
    u4_ref      : (HW4, HW1)   nearest-upsample matrix (level4 -> level1)
    u3_ref      : (HW3, HW1)   nearest-upsample matrix (level3 -> level1)
    wfus_ref    : (C, 6C)      fusion 1x1 weight; bfus_ref: (C, 1) bias
    o_ref       : (1, C, HW1)
    """
    C = p1_ref.shape[1]
    scale = 1.0 / math.sqrt(C)

    def conv_block(x, k, s_ref):
        # x: (C, hw).  im2col patch built with 9 shift-matmuls, then one
        # (C, 9C) @ (9C, hw) matmul on the MXU.  LeakyReLU(0.2) epilogue.
        hw = s_ref.shape[1]
        taps = [jnp.dot(x, s_ref[t], preferred_element_type=jnp.float32)
                for t in range(9)]
        patch = jnp.concatenate(taps, axis=0)                       # (9C, hw)
        y = jnp.dot(wf_ref[k], patch, preferred_element_type=jnp.float32)
        y = y + bias_ref[k, :, :hw]
        return jnp.where(y >= 0, y, NEG_SLOPE * y)

    def attention(q, kv):
        # TODO(synk): PyramidAttention source not provided; kept as the same
        # parameter-free residual global cross-attention stand-in as before
        # (scale=1/sqrt(C), res_scale=1), now lane-dense along the query axis.
        qs = q * scale                                              # (C, Nq)
        sc = lax.dot_general(kv, qs, (((0,), (0,)), ((), ())),
                             preferred_element_type=jnp.float32)    # (Nk, Nq)
        m = jnp.max(sc, axis=0, keepdims=True)
        p = jnp.exp(sc - m)
        inv = pl.reciprocal(jnp.sum(p, axis=0, keepdims=True), approx=True)
        out = jnp.dot(kv, p, preferred_element_type=jnp.float32)    # (C, Nq)
        return q + RES_SCALE * (out * inv)

    pool1 = p1_ref[0]
    pool2 = p2_ref[0]
    pool3 = p3_ref[0]
    pool4 = p4_ref[0]

    conv11 = conv_block(pool4, 0, s4_ref)
    bu1 = attention(pool3, conv11)                  # s2l1
    conv12 = conv_block(bu1, 1, s3_ref)
    bu2 = attention(pool2, conv12)                  # s2l1
    conv13 = conv_block(bu2, 2, s2_ref)
    bu3 = attention(pool1, conv13)                  # s2l1
    conv14 = conv_block(bu3, 3, s1_ref)

    conv21 = conv_block(conv14, 4, s1_ref)
    ub1 = attention(conv13, conv21)                 # l2s1
    conv22 = conv_block(ub1, 5, s2_ref)
    ub2 = attention(conv12, conv22)                 # l2s1
    conv23 = conv_block(ub2, 6, s3_ref)
    ub3 = attention(conv12, conv23)                 # l2s1 (conv12, as in source)
    conv24 = conv_block(ub3, 7, s3_ref)

    # nearest upsampling as matmuls (lane-dense outputs)
    up_p4 = jnp.dot(pool4, u4_ref[...], preferred_element_type=jnp.float32)
    up_c11 = jnp.dot(conv11, u4_ref[...], preferred_element_type=jnp.float32)
    up_c24 = jnp.dot(conv24, u3_ref[...], preferred_element_type=jnp.float32)

    fused = jnp.concatenate([pool1, conv14, conv21, up_p4, up_c11, up_c24],
                            axis=0)                                 # (6C, HW1)
    y = jnp.dot(wfus_ref[...], fused, preferred_element_type=jnp.float32)
    y = y + bfus_ref[...]
    y = jnp.where(y >= 0, y, NEG_SLOPE * y)
    o_ref[0] = y.astype(o_ref.dtype)


# -------------------------- wrapper-side operators ----------------------------

def maxpool2_nchw(x):
    B, C, H, W = x.shape
    return x.reshape(B, C, H // 2, 2, W // 2, 2).max(axis=(3, 5))


def pos_enc_chw(H, W, C, dtype=jnp.float32):
    """PositionalEncodingPermute2D equivalent, emitted as (C, H, W)."""
    ch = int(math.ceil(C / 2))
    inv_freq = 1.0 / (10000 ** (jnp.arange(0, ch, 2, dtype=jnp.float32) / ch))
    sin_x = jnp.arange(H, dtype=jnp.float32)[:, None] * inv_freq[None, :]
    sin_y = jnp.arange(W, dtype=jnp.float32)[:, None] * inv_freq[None, :]
    emb_x = jnp.concatenate([jnp.sin(sin_x), jnp.cos(sin_x)], axis=-1)  # (H, 2f)
    emb_y = jnp.concatenate([jnp.sin(sin_y), jnp.cos(sin_y)], axis=-1)  # (W, 2f)
    emb = jnp.zeros((H, W, 2 * ch), dtype)
    emb = emb.at[:, :, :emb_x.shape[-1]].set(emb_x[:, None, :])
    emb = emb.at[:, :, ch:ch + emb_y.shape[-1]].set(emb_y[None, :, :])
    return jnp.transpose(emb[:, :, :C], (2, 0, 1)).astype(dtype)        # (C,H,W)


def shift_matrices(H, W):
    """(9, HW, HW) 0/1 matrices: (x @ S_t)[:, p] = x[:, p+off_t] with zero pad."""
    hw = H * W
    p = jnp.arange(hw)
    row, col = p // W, p % W
    mats = []
    for dy in (-1, 0, 1):
        for dx in (-1, 0, 1):
            rr, cc = row + dy, col + dx
            valid = (rr >= 0) & (rr < H) & (cc >= 0) & (cc < W)
            q = jnp.where(valid, rr * W + cc, 0)
            s = jnp.zeros((hw, hw), jnp.float32).at[q, p].set(
                valid.astype(jnp.float32))
            mats.append(s)
    return jnp.stack(mats)


def upsample_matrix(small, big):
    """(hs*ws, H*W) 0/1 matrix implementing F.upsample(..., mode='nearest')."""
    hs, ws = small
    H, W = big
    idx = jnp.arange(H * W)
    Y, X = idx // W, idx % W
    src = (Y * hs // H) * ws + (X * ws // W)
    return jnp.zeros((hs * ws, H * W), jnp.float32).at[src, idx].set(1.0)


# ------------------------------ parameters ------------------------------------

def init_params(key, C):
    """Raw parameters in PyTorch layout (out, in[, kh, kw])."""
    def conv_block_params(k):
        k1, k2, k3, k4 = jax.random.split(k, 4)
        return (0.1 * jax.random.normal(k1, (C, 2 * C), jnp.float32),   # 1x1 w
                0.1 * jax.random.normal(k2, (C,), jnp.float32),          # 1x1 b
                0.1 * jax.random.normal(k3, (C, C, 3, 3), jnp.float32),  # 3x3 w
                0.1 * jax.random.normal(k4, (C,), jnp.float32))          # 3x3 b

    keys = jax.random.split(key, 9)
    names = ["11", "12", "13", "14", "21", "22", "23", "24"]
    params = {f"conv{n}": conv_block_params(keys[i]) for i, n in enumerate(names)}
    kf1, kf2 = jax.random.split(keys[8])
    params["fusion"] = (0.1 * jax.random.normal(kf1, (C, 6 * C), jnp.float32),
                        0.1 * jax.random.normal(kf2, (C,), jnp.float32))
    return params


def prepare_packed(params, C, H, W):
    """Fold 1x1 conv + positional encoding + biases into the 3x3 conv, build
    shift/upsample operators.  Runs once, outside the kernel."""
    dims = [(H, W), (H // 2, W // 2), (H // 4, W // 4), (H // 8, W // 8)]
    hw1 = H * W
    conv_names = ["11", "12", "13", "14", "21", "22", "23", "24"]
    conv_lvls = [3, 2, 1, 0, 0, 1, 2, 2]        # pyramid level (0 = full res)
    pes = [pos_enc_chw(h, w, C) for (h, w) in dims]

    wf_list, bias_list = [], []
    for name, lvl in zip(conv_names, conv_lvls):
        w1, b1, w2, b2 = params["conv" + name]
        h, w = dims[lvl]
        w1a, w1b = w1[:, :C], w1[:, C:]
        # fused tap weights: Wf[t] = W2[:, :, ky, kx] @ W1a   ->  (C, 9C)
        wf = jnp.einsum("omyx,mc->yxoc", w2, w1a).reshape(9, C, C)
        wf_list.append(jnp.transpose(wf, (1, 0, 2)).reshape(C, 9 * C))
        # bias map = conv3x3_zeropad(W1b @ PE + b1, W2) + b2  ->  (C, h*w)
        m = jnp.einsum("oc,chw->ohw", w1b, pes[lvl]) + b1[:, None, None]
        bm = lax.conv_general_dilated(
            m[None], w2, (1, 1), "SAME",
            dimension_numbers=("NCHW", "OIHW", "NCHW"))[0] + b2[:, None, None]
        bm = bm.reshape(C, h * w)
        bias_list.append(jnp.pad(bm, ((0, 0), (0, hw1 - h * w))))

    wf_all = jnp.stack(wf_list)                  # (8, C, 9C)
    bias_all = jnp.stack(bias_list)              # (8, C, HW1)
    s_mats = [shift_matrices(h, w) for (h, w) in dims]
    u_l4 = upsample_matrix(dims[3], dims[0])     # level4 -> level1
    u_l3 = upsample_matrix(dims[2], dims[0])     # level3 -> level1
    wfus, bfus = params["fusion"]
    return (wf_all, bias_all, s_mats[0], s_mats[1], s_mats[2], s_mats[3],
            u_l4, u_l3, wfus, bfus[:, None])


# ------------------------------ forward pass ----------------------------------

def bottomupupbottom(x_nchw, packed):
    (wf_all, bias_all, s1, s2, s3, s4, u4, u3, wfus, bfus) = packed
    B, C, H, W = x_nchw.shape

    pool1 = x_nchw
    pool2 = maxpool2_nchw(pool1)
    pool3 = maxpool2_nchw(pool2)
    pool4 = maxpool2_nchw(pool3)

    hw1, hw2 = H * W, (H // 2) * (W // 2)
    hw3, hw4 = (H // 4) * (W // 4), (H // 8) * (W // 8)
    p1 = pool1.reshape(B, C, hw1)
    p2 = pool2.reshape(B, C, hw2)
    p3 = pool3.reshape(B, C, hw3)
    p4 = pool4.reshape(B, C, hw4)

    def batched(shape):      # per-batch block
        n = len(shape)
        return pl.BlockSpec((1,) + shape, lambda b, n=n: (b,) + (0,) * n)

    def rep(arr):            # replicated (resident) block
        n = arr.ndim
        return pl.BlockSpec(arr.shape, lambda b, n=n: (0,) * n)

    out = pl.pallas_call(
        _mega_kernel,
        out_shape=jax.ShapeDtypeStruct((B, C, hw1), jnp.float32),
        grid=(B,),
        in_specs=[
            batched((C, hw1)), batched((C, hw2)),
            batched((C, hw3)), batched((C, hw4)),
            rep(wf_all), rep(bias_all),
            rep(s1), rep(s2), rep(s3), rep(s4),
            rep(u4), rep(u3), rep(wfus), rep(bfus),
        ],
        out_specs=batched((C, hw1)),
        compiler_params=pltpu.CompilerParams(dimension_semantics=("parallel",)),
    )(p1, p2, p3, p4, wf_all, bias_all, s1, s2, s3, s4, u4, u3, wfus, bfus)

    return out.reshape(B, C, H, W)


# --------------------------------- main ----------------------------------------

if __name__ == "__main__":
    key = jax.random.PRNGKey(0)
    kx, kp = jax.random.split(key)
    B, C, H, W = 2, CHANNEL, 16, 16
    x = jax.random.normal(kx, (B, C, H, W), jnp.float32)   # PyTorch-style NCHW
    params = init_params(kp, C)
    packed = prepare_packed(params, C, H, W)                # one-time fusion prep

    out = jax.jit(bottomupupbottom)(x, packed)
    out = jax.block_until_ready(out)
    assert out.shape == (B, C, H, W), out.shape
    assert bool(jnp.all(jnp.isfinite(out)))
    print("KERNEL_OK")
</pallas_src>

<mosaic_0001>
module attributes {stable_mosaic.version = 11 : i64} {
  func.func @_mega_kernel(%arg0: i32, %arg1: memref<1x8x256xf32, #tpu.memory_space<vmem>>, %arg2: memref<1x8x64xf32, #tpu.memory_space<vmem>>, %arg3: memref<1x8x16xf32, #tpu.memory_space<vmem>>, %arg4: memref<1x8x4xf32, #tpu.memory_space<vmem>>, %arg5: memref<8x8x72xf32, #tpu.memory_space<vmem>>, %arg6: memref<8x8x256xf32, #tpu.memory_space<vmem>>, %arg7: memref<9x256x256xf32, #tpu.memory_space<vmem>>, %arg8: memref<9x64x64xf32, #tpu.memory_space<vmem>>, %arg9: memref<9x16x16xf32, #tpu.memory_space<vmem>>, %arg10: memref<9x4x4xf32, #tpu.memory_space<vmem>>, %arg11: memref<4x256xf32, #tpu.memory_space<vmem>>, %arg12: memref<16x256xf32, #tpu.memory_space<vmem>>, %arg13: memref<8x48xf32, #tpu.memory_space<vmem>>, %arg14: memref<8x1xf32, #tpu.memory_space<vmem>>, %arg15: memref<1x8x256xf32, #tpu.memory_space<vmem>>) attributes {dimension_semantics = [#tpu.dimension_semantics<parallel>], iteration_bounds = array<i64: 2>, scalar_prefetch = 0 : i64, scratch_operands = 0 : i64, tpu.core_type = #tpu.core_type<tc>, window_params = [{transform_indices = @transform_0, window_bounds = array<i64: 1, 8, 256>}, {transform_indices = @transform_1, window_bounds = array<i64: 1, 8, 64>}, {transform_indices = @transform_2, window_bounds = array<i64: 1, 8, 16>}, {transform_indices = @transform_3, window_bounds = array<i64: 1, 8, 4>}, {pipeline_mode = #tpu.pipeline_mode<synchronous>, transform_indices = @transform_4, window_bounds = array<i64: 8, 8, 72>}, {pipeline_mode = #tpu.pipeline_mode<synchronous>, transform_indices = @transform_5, window_bounds = array<i64: 8, 8, 256>}, {pipeline_mode = #tpu.pipeline_mode<synchronous>, transform_indices = @transform_6, window_bounds = array<i64: 9, 256, 256>}, {pipeline_mode = #tpu.pipeline_mode<synchronous>, transform_indices = @transform_7, window_bounds = array<i64: 9, 64, 64>}, {pipeline_mode = #tpu.pipeline_mode<synchronous>, transform_indices = @transform_8, window_bounds = array<i64: 9, 16, 16>}, {pipeline_mode = #tpu.pipeline_mode<synchronous>, transform_indices = @transform_9, window_bounds = array<i64: 9, 4, 4>}, {pipeline_mode = #tpu.pipeline_mode<synchronous>, transform_indices = @transform_10, window_bounds = array<i64: 4, 256>}, {pipeline_mode = #tpu.pipeline_mode<synchronous>, transform_indices = @transform_11, window_bounds = array<i64: 16, 256>}, {pipeline_mode = #tpu.pipeline_mode<synchronous>, transform_indices = @transform_12, window_bounds = array<i64: 8, 48>}, {pipeline_mode = #tpu.pipeline_mode<synchronous>, transform_indices = @transform_13, window_bounds = array<i64: 8, 1>}, {transform_indices = @transform_14, window_bounds = array<i64: 1, 8, 256>}]} {
    %c0 = arith.constant 0 : index
    %c0_0 = arith.constant 0 : index
    %c0_1 = arith.constant 0 : index
    %0 = vector.load %arg1[%c0, %c0_0, %c0_1] : memref<1x8x256xf32, #tpu.memory_space<vmem>>, vector<1x8x256xf32>
    %1 = vector.shape_cast %0 : vector<1x8x256xf32> to vector<8x256xf32>
    %c0_2 = arith.constant 0 : index
    %c0_3 = arith.constant 0 : index
    %c0_4 = arith.constant 0 : index
    %2 = vector.load %arg2[%c0_2, %c0_3, %c0_4] : memref<1x8x64xf32, #tpu.memory_space<vmem>>, vector<1x8x64xf32>
    %3 = vector.shape_cast %2 : vector<1x8x64xf32> to vector<8x64xf32>
    %c0_5 = arith.constant 0 : index
    %c0_6 = arith.constant 0 : index
    %c0_7 = arith.constant 0 : index
    %4 = vector.load %arg3[%c0_5, %c0_6, %c0_7] : memref<1x8x16xf32, #tpu.memory_space<vmem>>, vector<1x8x16xf32>
    %5 = vector.shape_cast %4 : vector<1x8x16xf32> to vector<8x16xf32>
    %c0_8 = arith.constant 0 : index
    %c0_9 = arith.constant 0 : index
    %c0_10 = arith.constant 0 : index
    %6 = vector.load %arg4[%c0_8, %c0_9, %c0_10] : memref<1x8x4xf32, #tpu.memory_space<vmem>>, vector<1x8x4xf32>
    %7 = vector.shape_cast %6 : vector<1x8x4xf32> to vector<8x4xf32>
    %c0_11 = arith.constant 0 : index
    %c0_12 = arith.constant 0 : index
    %c0_13 = arith.constant 0 : index
    %8 = vector.load %arg10[%c0_11, %c0_12, %c0_13] : memref<9x4x4xf32, #tpu.memory_space<vmem>>, vector<1x4x4xf32>
    %9 = vector.shape_cast %8 : vector<1x4x4xf32> to vector<4x4xf32>
    %cst = arith.constant dense<0.000000e+00> : vector<8x4xf32>
    %10 = tpu.matmul %7, %9, %cst {dimension_numbers = #tpu.dot_dimension_numbers<[1], [0], [0], [1], [0, 0, 1, 1], [], []>} : vector<8x4xf32>, vector<4x4xf32>, vector<8x4xf32> -> vector<8x4xf32>
    %c1 = arith.constant 1 : index
    %c0_14 = arith.constant 0 : index
    %c0_15 = arith.constant 0 : index
    %11 = vector.load %arg10[%c1, %c0_14, %c0_15] : memref<9x4x4xf32, #tpu.memory_space<vmem>>, vector<1x4x4xf32>
    %12 = vector.shape_cast %11 : vector<1x4x4xf32> to vector<4x4xf32>
    %cst_16 = arith.constant dense<0.000000e+00> : vector<8x4xf32>
    %13 = tpu.matmul %7, %12, %cst_16 {dimension_numbers = #tpu.dot_dimension_numbers<[1], [0], [0], [1], [0, 0, 1, 1], [], []>} : vector<8x4xf32>, vector<4x4xf32>, vector<8x4xf32> -> vector<8x4xf32>
    %c2 = arith.constant 2 : index
    %c0_17 = arith.constant 0 : index
    %c0_18 = arith.constant 0 : index
    %14 = vector.load %arg10[%c2, %c0_17, %c0_18] : memref<9x4x4xf32, #tpu.memory_space<vmem>>, vector<1x4x4xf32>
    %15 = vector.shape_cast %14 : vector<1x4x4xf32> to vector<4x4xf32>
    %cst_19 = arith.constant dense<0.000000e+00> : vector<8x4xf32>
    %16 = tpu.matmul %7, %15, %cst_19 {dimension_numbers = #tpu.dot_dimension_numbers<[1], [0], [0], [1], [0, 0, 1, 1], [], []>} : vector<8x4xf32>, vector<4x4xf32>, vector<8x4xf32> -> vector<8x4xf32>
    %c3 = arith.constant 3 : index
    %c0_20 = arith.constant 0 : index
    %c0_21 = arith.constant 0 : index
    %17 = vector.load %arg10[%c3, %c0_20, %c0_21] : memref<9x4x4xf32, #tpu.memory_space<vmem>>, vector<1x4x4xf32>
    %18 = vector.shape_cast %17 : vector<1x4x4xf32> to vector<4x4xf32>
    %cst_22 = arith.constant dense<0.000000e+00> : vector<8x4xf32>
    %19 = tpu.matmul %7, %18, %cst_22 {dimension_numbers = #tpu.dot_dimension_numbers<[1], [0], [0], [1], [0, 0, 1, 1], [], []>} : vector<8x4xf32>, vector<4x4xf32>, vector<8x4xf32> -> vector<8x4xf32>
    %c4 = arith.constant 4 : index
    %c0_23 = arith.constant 0 : index
    %c0_24 = arith.constant 0 : index
    %20 = vector.load %arg10[%c4, %c0_23, %c0_24] : memref<9x4x4xf32, #tpu.memory_space<vmem>>, vector<1x4x4xf32>
    %21 = vector.shape_cast %20 : vector<1x4x4xf32> to vector<4x4xf32>
    %cst_25 = arith.constant dense<0.000000e+00> : vector<8x4xf32>
    %22 = tpu.matmul %7, %21, %cst_25 {dimension_numbers = #tpu.dot_dimension_numbers<[1], [0], [0], [1], [0, 0, 1, 1], [], []>} : vector<8x4xf32>, vector<4x4xf32>, vector<8x4xf32> -> vector<8x4xf32>
    %c5 = arith.constant 5 : index
    %c0_26 = arith.constant 0 : index
    %c0_27 = arith.constant 0 : index
    %23 = vector.load %arg10[%c5, %c0_26, %c0_27] : memref<9x4x4xf32, #tpu.memory_space<vmem>>, vector<1x4x4xf32>
    %24 = vector.shape_cast %23 : vector<1x4x4xf32> to vector<4x4xf32>
    %cst_28 = arith.constant dense<0.000000e+00> : vector<8x4xf32>
    %25 = tpu.matmul %7, %24, %cst_28 {dimension_numbers = #tpu.dot_dimension_numbers<[1], [0], [0], [1], [0, 0, 1, 1], [], []>} : vector<8x4xf32>, vector<4x4xf32>, vector<8x4xf32> -> vector<8x4xf32>
    %c6 = arith.constant 6 : index
    %c0_29 = arith.constant 0 : index
    %c0_30 = arith.constant 0 : index
    %26 = vector.load %arg10[%c6, %c0_29, %c0_30] : memref<9x4x4xf32, #tpu.memory_space<vmem>>, vector<1x4x4xf32>
    %27 = vector.shape_cast %26 : vector<1x4x4xf32> to vector<4x4xf32>
    %cst_31 = arith.constant dense<0.000000e+00> : vector<8x4xf32>
    %28 = tpu.matmul %7, %27, %cst_31 {dimension_numbers = #tpu.dot_dimension_numbers<[1], [0], [0], [1], [0, 0, 1, 1], [], []>} : vector<8x4xf32>, vector<4x4xf32>, vector<8x4xf32> -> vector<8x4xf32>
    %c7 = arith.constant 7 : index
    %c0_32 = arith.constant 0 : index
    %c0_33 = arith.constant 0 : index
    %29 = vector.load %arg10[%c7, %c0_32, %c0_33] : memref<9x4x4xf32, #tpu.memory_space<vmem>>, vector<1x4x4xf32>
    %30 = vector.shape_cast %29 : vector<1x4x4xf32> to vector<4x4xf32>
    %cst_34 = arith.constant dense<0.000000e+00> : vector<8x4xf32>
    %31 = tpu.matmul %7, %30, %cst_34 {dimension_numbers = #tpu.dot_dimension_numbers<[1], [0], [0], [1], [0, 0, 1, 1], [], []>} : vector<8x4xf32>, vector<4x4xf32>, vector<8x4xf32> -> vector<8x4xf32>
    %c8 = arith.constant 8 : index
    %c0_35 = arith.constant 0 : index
    %c0_36 = arith.constant 0 : index
    %32 = vector.load %arg10[%c8, %c0_35, %c0_36] : memref<9x4x4xf32, #tpu.memory_space<vmem>>, vector<1x4x4xf32>
    %33 = vector.shape_cast %32 : vector<1x4x4xf32> to vector<4x4xf32>
    %cst_37 = arith.constant dense<0.000000e+00> : vector<8x4xf32>
    %34 = tpu.matmul %7, %33, %cst_37 {dimension_numbers = #tpu.dot_dimension_numbers<[1], [0], [0], [1], [0, 0, 1, 1], [], []>} : vector<8x4xf32>, vector<4x4xf32>, vector<8x4xf32> -> vector<8x4xf32>
    %35 = tpu.concatenate %10, %13, %16, %19, %22, %25, %28, %31, %34 in 0 : vector<8x4xf32>, vector<8x4xf32>, vector<8x4xf32>, vector<8x4xf32>, vector<8x4xf32>, vector<8x4xf32>, vector<8x4xf32>, vector<8x4xf32>, vector<8x4xf32> -> vector<72x4xf32>
    %c0_38 = arith.constant 0 : index
    %c0_39 = arith.constant 0 : index
    %c0_40 = arith.constant 0 : index
    %36 = vector.load %arg5[%c0_38, %c0_39, %c0_40] : memref<8x8x72xf32, #tpu.memory_space<vmem>>, vector<1x8x72xf32>
    %37 = vector.shape_cast %36 : vector<1x8x72xf32> to vector<8x72xf32>
    %cst_41 = arith.constant dense<0.000000e+00> : vector<8x4xf32>
    %38 = tpu.matmul %37, %35, %cst_41 {dimension_numbers = #tpu.dot_dimension_numbers<[1], [0], [0], [1], [0, 0, 1, 1], [], []>} : vector<8x72xf32>, vector<72x4xf32>, vector<8x4xf32> -> vector<8x4xf32>
    %c0_42 = arith.constant 0 : index
    %c0_43 = arith.constant 0 : index
    %c0_44 = arith.constant 0 : index
    %39 = vector.load %arg6[%c0_42, %c0_43, %c0_44] : memref<8x8x256xf32, #tpu.memory_space<vmem>>, vector<1x8x4xf32>
    %40 = vector.shape_cast %39 : vector<1x8x4xf32> to vector<8x4xf32>
    %41 = arith.addf %38, %40 : vector<8x4xf32>
    %cst_45 = arith.constant 0.000000e+00 : f32
    %42 = vector.broadcast %cst_45 : f32 to vector<8x4xf32>
    %43 = arith.cmpf oge, %41, %42 : vector<8x4xf32>
    %cst_46 = arith.constant 2.000000e-01 : f32
    %44 = vector.broadcast %cst_46 : f32 to vector<8x4xf32>
    %45 = arith.mulf %44, %41 : vector<8x4xf32>
    %46 = arith.select %43, %41, %45 : vector<8x4xi1>, vector<8x4xf32>
    %cst_47 = arith.constant 0.353553385 : f32
    %47 = vector.broadcast %cst_47 : f32 to vector<8x16xf32>
    %48 = arith.mulf %5, %47 : vector<8x16xf32>
    %cst_48 = arith.constant dense<0.000000e+00> : vector<4x16xf32>
    %49 = tpu.matmul %46, %48, %cst_48 {dimension_numbers = #tpu.dot_dimension_numbers<[0], [0], [1], [1], [0, 1, 1, 1], [], []>} : vector<8x4xf32>, vector<8x16xf32>, vector<4x16xf32> -> vector<4x16xf32>
    %cst_49 = arith.constant dense<0xFF800000> : vector<16xf32>
    %50 = vector.multi_reduction <maximumf>, %49, %cst_49 [0] : vector<4x16xf32> to vector<16xf32>
    %51 = vector.shape_cast %50 : vector<16xf32> to vector<1x16xf32>
    %52 = vector.broadcast %51 : vector<1x16xf32> to vector<4x16xf32>
    %53 = arith.subf %49, %52 : vector<4x16xf32>
    %54 = math.exp %53 : vector<4x16xf32>
    %cst_50 = arith.constant dense<0.000000e+00> : vector<16xf32>
    %55 = vector.multi_reduction <add>, %54, %cst_50 [0] : vector<4x16xf32> to vector<16xf32>
    %56 = vector.shape_cast %55 : vector<16xf32> to vector<1x16xf32>
    %57 = tpu.reciprocal %56 {approx = true} : vector<1x16xf32> -> vector<1x16xf32>
    %cst_51 = arith.constant dense<0.000000e+00> : vector<8x16xf32>
    %58 = tpu.matmul %46, %54, %cst_51 {dimension_numbers = #tpu.dot_dimension_numbers<[1], [0], [0], [1], [0, 0, 1, 1], [], []>} : vector<8x4xf32>, vector<4x16xf32>, vector<8x16xf32> -> vector<8x16xf32>
    %59 = vector.broadcast %57 : vector<1x16xf32> to vector<8x16xf32>
    %60 = arith.mulf %58, %59 : vector<8x16xf32>
    %cst_52 = arith.constant 1.000000e+00 : f32
    %61 = vector.broadcast %cst_52 : f32 to vector<8x16xf32>
    %62 = arith.mulf %61, %60 : vector<8x16xf32>
    %63 = arith.addf %5, %62 : vector<8x16xf32>
    %c0_53 = arith.constant 0 : index
    %c0_54 = arith.constant 0 : index
    %c0_55 = arith.constant 0 : index
    %64 = vector.load %arg9[%c0_53, %c0_54, %c0_55] : memref<9x16x16xf32, #tpu.memory_space<vmem>>, vector<1x16x16xf32>
    %65 = vector.shape_cast %64 : vector<1x16x16xf32> to vector<16x16xf32>
    %cst_56 = arith.constant dense<0.000000e+00> : vector<8x16xf32>
    %66 = tpu.matmul %63, %65, %cst_56 {dimension_numbers = #tpu.dot_dimension_numbers<[1], [0], [0], [1], [0, 0, 1, 1], [], []>} : vector<8x16xf32>, vector<16x16xf32>, vector<8x16xf32> -> vector<8x16xf32>
    %c1_57 = arith.constant 1 : index
    %c0_58 = arith.constant 0 : index
    %c0_59 = arith.constant 0 : index
    %67 = vector.load %arg9[%c1_57, %c0_58, %c0_59] : memref<9x16x16xf32, #tpu.memory_space<vmem>>, vector<1x16x16xf32>
    %68 = vector.shape_cast %67 : vector<1x16x16xf32> to vector<16x16xf32>
    %cst_60 = arith.constant dense<0.000000e+00> : vector<8x16xf32>
    %69 = tpu.matmul %63, %68, %cst_60 {dimension_numbers = #tpu.dot_dimension_numbers<[1], [0], [0], [1], [0, 0, 1, 1], [], []>} : vector<8x16xf32>, vector<16x16xf32>, vector<8x16xf32> -> vector<8x16xf32>
    %c2_61 = arith.constant 2 : index
    %c0_62 = arith.constant 0 : index
    %c0_63 = arith.constant 0 : index
    %70 = vector.load %arg9[%c2_61, %c0_62, %c0_63] : memref<9x16x16xf32, #tpu.memory_space<vmem>>, vector<1x16x16xf32>
    %71 = vector.shape_cast %70 : vector<1x16x16xf32> to vector<16x16xf32>
    %cst_64 = arith.constant dense<0.000000e+00> : vector<8x16xf32>
    %72 = tpu.matmul %63, %71, %cst_64 {dimension_numbers = #tpu.dot_dimension_numbers<[1], [0], [0], [1], [0, 0, 1, 1], [], []>} : vector<8x16xf32>, vector<16x16xf32>, vector<8x16xf32> -> vector<8x16xf32>
    %c3_65 = arith.constant 3 : index
    %c0_66 = arith.constant 0 : index
    %c0_67 = arith.constant 0 : index
    %73 = vector.load %arg9[%c3_65, %c0_66, %c0_67] : memref<9x16x16xf32, #tpu.memory_space<vmem>>, vector<1x16x16xf32>
    %74 = vector.shape_cast %73 : vector<1x16x16xf32> to vector<16x16xf32>
    %cst_68 = arith.constant dense<0.000000e+00> : vector<8x16xf32>
    %75 = tpu.matmul %63, %74, %cst_68 {dimension_numbers = #tpu.dot_dimension_numbers<[1], [0], [0], [1], [0, 0, 1, 1], [], []>} : vector<8x16xf32>, vector<16x16xf32>, vector<8x16xf32> -> vector<8x16xf32>
    %c4_69 = arith.constant 4 : index
    %c0_70 = arith.constant 0 : index
    %c0_71 = arith.constant 0 : index
    %76 = vector.load %arg9[%c4_69, %c0_70, %c0_71] : memref<9x16x16xf32, #tpu.memory_space<vmem>>, vector<1x16x16xf32>
    %77 = vector.shape_cast %76 : vector<1x16x16xf32> to vector<16x16xf32>
    %cst_72 = arith.constant dense<0.000000e+00> : vector<8x16xf32>
    %78 = tpu.matmul %63, %77, %cst_72 {dimension_numbers = #tpu.dot_dimension_numbers<[1], [0], [0], [1], [0, 0, 1, 1], [], []>} : vector<8x16xf32>, vector<16x16xf32>, vector<8x16xf32> -> vector<8x16xf32>
    %c5_73 = arith.constant 5 : index
    %c0_74 = arith.constant 0 : index
    %c0_75 = arith.constant 0 : index
    %79 = vector.load %arg9[%c5_73, %c0_74, %c0_75] : memref<9x16x16xf32, #tpu.memory_space<vmem>>, vector<1x16x16xf32>
    %80 = vector.shape_cast %79 : vector<1x16x16xf32> to vector<16x16xf32>
    %cst_76 = arith.constant dense<0.000000e+00> : vector<8x16xf32>
    %81 = tpu.matmul %63, %80, %cst_76 {dimension_numbers = #tpu.dot_dimension_numbers<[1], [0], [0], [1], [0, 0, 1, 1], [], []>} : vector<8x16xf32>, vector<16x16xf32>, vector<8x16xf32> -> vector<8x16xf32>
    %c6_77 = arith.constant 6 : index
    %c0_78 = arith.constant 0 : index
    %c0_79 = arith.constant 0 : index
    %82 = vector.load %arg9[%c6_77, %c0_78, %c0_79] : memref<9x16x16xf32, #tpu.memory_space<vmem>>, vector<1x16x16xf32>
    %83 = vector.shape_cast %82 : vector<1x16x16xf32> to vector<16x16xf32>
    %cst_80 = arith.constant dense<0.000000e+00> : vector<8x16xf32>
    %84 = tpu.matmul %63, %83, %cst_80 {dimension_numbers = #tpu.dot_dimension_numbers<[1], [0], [0], [1], [0, 0, 1, 1], [], []>} : vector<8x16xf32>, vector<16x16xf32>, vector<8x16xf32> -> vector<8x16xf32>
    %c7_81 = arith.constant 7 : index
    %c0_82 = arith.constant 0 : index
    %c0_83 = arith.constant 0 : index
    %85 = vector.load %arg9[%c7_81, %c0_82, %c0_83] : memref<9x16x16xf32, #tpu.memory_space<vmem>>, vector<1x16x16xf32>
    %86 = vector.shape_cast %85 : vector<1x16x16xf32> to vector<16x16xf32>
    %cst_84 = arith.constant dense<0.000000e+00> : vector<8x16xf32>
    %87 = tpu.matmul %63, %86, %cst_84 {dimension_numbers = #tpu.dot_dimension_numbers<[1], [0], [0], [1], [0, 0, 1, 1], [], []>} : vector<8x16xf32>, vector<16x16xf32>, vector<8x16xf32> -> vector<8x16xf32>
    %c8_85 = arith.constant 8 : index
    %c0_86 = arith.constant 0 : index
    %c0_87 = arith.constant 0 : index
    %88 = vector.load %arg9[%c8_85, %c0_86, %c0_87] : memref<9x16x16xf32, #tpu.memory_space<vmem>>, vector<1x16x16xf32>
    %89 = vector.shape_cast %88 : vector<1x16x16xf32> to vector<16x16xf32>
    %cst_88 = arith.constant dense<0.000000e+00> : vector<8x16xf32>
    %90 = tpu.matmul %63, %89, %cst_88 {dimension_numbers = #tpu.dot_dimension_numbers<[1], [0], [0], [1], [0, 0, 1, 1], [], []>} : vector<8x16xf32>, vector<16x16xf32>, vector<8x16xf32> -> vector<8x16xf32>
    %91 = tpu.concatenate %66, %69, %72, %75, %78, %81, %84, %87, %90 in 0 : vector<8x16xf32>, vector<8x16xf32>, vector<8x16xf32>, vector<8x16xf32>, vector<8x16xf32>, vector<8x16xf32>, vector<8x16xf32>, vector<8x16xf32>, vector<8x16xf32> -> vector<72x16xf32>
    %c1_89 = arith.constant 1 : index
    %c0_90 = arith.constant 0 : index
    %c0_91 = arith.constant 0 : index
    %92 = vector.load %arg5[%c1_89, %c0_90, %c0_91] : memref<8x8x72xf32, #tpu.memory_space<vmem>>, vector<1x8x72xf32>
    %93 = vector.shape_cast %92 : vector<1x8x72xf32> to vector<8x72xf32>
    %cst_92 = arith.constant dense<0.000000e+00> : vector<8x16xf32>
    %94 = tpu.matmul %93, %91, %cst_92 {dimension_numbers = #tpu.dot_dimension_numbers<[1], [0], [0], [1], [0, 0, 1, 1], [], []>} : vector<8x72xf32>, vector<72x16xf32>, vector<8x16xf32> -> vector<8x16xf32>
    %c1_93 = arith.constant 1 : index
    %c0_94 = arith.constant 0 : index
    %c0_95 = arith.constant 0 : index
    %95 = vector.load %arg6[%c1_93, %c0_94, %c0_95] : memref<8x8x256xf32, #tpu.memory_space<vmem>>, vector<1x8x16xf32>
    %96 = vector.shape_cast %95 : vector<1x8x16xf32> to vector<8x16xf32>
    %97 = arith.addf %94, %96 : vector<8x16xf32>
    %cst_96 = arith.constant 0.000000e+00 : f32
    %98 = vector.broadcast %cst_96 : f32 to vector<8x16xf32>
    %99 = arith.cmpf oge, %97, %98 : vector<8x16xf32>
    %cst_97 = arith.constant 2.000000e-01 : f32
    %100 = vector.broadcast %cst_97 : f32 to vector<8x16xf32>
    %101 = arith.mulf %100, %97 : vector<8x16xf32>
    %102 = arith.select %99, %97, %101 : vector<8x16xi1>, vector<8x16xf32>
    %cst_98 = arith.constant 0.353553385 : f32
    %103 = vector.broadcast %cst_98 : f32 to vector<8x64xf32>
    %104 = arith.mulf %3, %103 : vector<8x64xf32>
    %cst_99 = arith.constant dense<0.000000e+00> : vector<16x64xf32>
    %105 = tpu.matmul %102, %104, %cst_99 {dimension_numbers = #tpu.dot_dimension_numbers<[0], [0], [1], [1], [0, 1, 1, 1], [], []>} : vector<8x16xf32>, vector<8x64xf32>, vector<16x64xf32> -> vector<16x64xf32>
    %cst_100 = arith.constant dense<0xFF800000> : vector<64xf32>
    %106 = vector.multi_reduction <maximumf>, %105, %cst_100 [0] : vector<16x64xf32> to vector<64xf32>
    %107 = vector.shape_cast %106 : vector<64xf32> to vector<1x64xf32>
    %108 = vector.broadcast %107 : vector<1x64xf32> to vector<16x64xf32>
    %109 = arith.subf %105, %108 : vector<16x64xf32>
    %110 = math.exp %109 : vector<16x64xf32>
    %cst_101 = arith.constant dense<0.000000e+00> : vector<64xf32>
    %111 = vector.multi_reduction <add>, %110, %cst_101 [0] : vector<16x64xf32> to vector<64xf32>
    %112 = vector.shape_cast %111 : vector<64xf32> to vector<1x64xf32>
    %113 = tpu.reciprocal %112 {approx = true} : vector<1x64xf32> -> vector<1x64xf32>
    %cst_102 = arith.constant dense<0.000000e+00> : vector<8x64xf32>
    %114 = tpu.matmul %102, %110, %cst_102 {dimension_numbers = #tpu.dot_dimension_numbers<[1], [0], [0], [1], [0, 0, 1, 1], [], []>} : vector<8x16xf32>, vector<16x64xf32>, vector<8x64xf32> -> vector<8x64xf32>
    %115 = vector.broadcast %113 : vector<1x64xf32> to vector<8x64xf32>
    %116 = arith.mulf %114, %115 : vector<8x64xf32>
    %cst_103 = arith.constant 1.000000e+00 : f32
    %117 = vector.broadcast %cst_103 : f32 to vector<8x64xf32>
    %118 = arith.mulf %117, %116 : vector<8x64xf32>
    %119 = arith.addf %3, %118 : vector<8x64xf32>
    %c0_104 = arith.constant 0 : index
    %c0_105 = arith.constant 0 : index
    %c0_106 = arith.constant 0 : index
    %120 = vector.load %arg8[%c0_104, %c0_105, %c0_106] : memref<9x64x64xf32, #tpu.memory_space<vmem>>, vector<1x64x64xf32>
    %121 = vector.shape_cast %120 : vector<1x64x64xf32> to vector<64x64xf32>
    %cst_107 = arith.constant dense<0.000000e+00> : vector<8x64xf32>
    %122 = tpu.matmul %119, %121, %cst_107 {dimension_numbers = #tpu.dot_dimension_numbers<[1], [0], [0], [1], [0, 0, 1, 1], [], []>} : vector<8x64xf32>, vector<64x64xf32>, vector<8x64xf32> -> vector<8x64xf32>
    %c1_108 = arith.constant 1 : index
    %c0_109 = arith.constant 0 : index
    %c0_110 = arith.constant 0 : index
    %123 = vector.load %arg8[%c1_108, %c0_109, %c0_110] : memref<9x64x64xf32, #tpu.memory_space<vmem>>, vector<1x64x64xf32>
    %124 = vector.shape_cast %123 : vector<1x64x64xf32> to vector<64x64xf32>
    %cst_111 = arith.constant dense<0.000000e+00> : vector<8x64xf32>
    %125 = tpu.matmul %119, %124, %cst_111 {dimension_numbers = #tpu.dot_dimension_numbers<[1], [0], [0], [1], [0, 0, 1, 1], [], []>} : vector<8x64xf32>, vector<64x64xf32>, vector<8x64xf32> -> vector<8x64xf32>
    %c2_112 = arith.constant 2 : index
    %c0_113 = arith.constant 0 : index
    %c0_114 = arith.constant 0 : index
    %126 = vector.load %arg8[%c2_112, %c0_113, %c0_114] : memref<9x64x64xf32, #tpu.memory_space<vmem>>, vector<1x64x64xf32>
    %127 = vector.shape_cast %126 : vector<1x64x64xf32> to vector<64x64xf32>
    %cst_115 = arith.constant dense<0.000000e+00> : vector<8x64xf32>
    %128 = tpu.matmul %119, %127, %cst_115 {dimension_numbers = #tpu.dot_dimension_numbers<[1], [0], [0], [1], [0, 0, 1, 1], [], []>} : vector<8x64xf32>, vector<64x64xf32>, vector<8x64xf32> -> vector<8x64xf32>
    %c3_116 = arith.constant 3 : index
    %c0_117 = arith.constant 0 : index
    %c0_118 = arith.constant 0 : index
    %129 = vector.load %arg8[%c3_116, %c0_117, %c0_118] : memref<9x64x64xf32, #tpu.memory_space<vmem>>, vector<1x64x64xf32>
    %130 = vector.shape_cast %129 : vector<1x64x64xf32> to vector<64x64xf32>
    %cst_119 = arith.constant dense<0.000000e+00> : vector<8x64xf32>
    %131 = tpu.matmul %119, %130, %cst_119 {dimension_numbers = #tpu.dot_dimension_numbers<[1], [0], [0], [1], [0, 0, 1, 1], [], []>} : vector<8x64xf32>, vector<64x64xf32>, vector<8x64xf32> -> vector<8x64xf32>
    %c4_120 = arith.constant 4 : index
    %c0_121 = arith.constant 0 : index
    %c0_122 = arith.constant 0 : index
    %132 = vector.load %arg8[%c4_120, %c0_121, %c0_122] : memref<9x64x64xf32, #tpu.memory_space<vmem>>, vector<1x64x64xf32>
    %133 = vector.shape_cast %132 : vector<1x64x64xf32> to vector<64x64xf32>
    %cst_123 = arith.constant dense<0.000000e+00> : vector<8x64xf32>
    %134 = tpu.matmul %119, %133, %cst_123 {dimension_numbers = #tpu.dot_dimension_numbers<[1], [0], [0], [1], [0, 0, 1, 1], [], []>} : vector<8x64xf32>, vector<64x64xf32>, vector<8x64xf32> -> vector<8x64xf32>
    %c5_124 = arith.constant 5 : index
    %c0_125 = arith.constant 0 : index
    %c0_126 = arith.constant 0 : index
    %135 = vector.load %arg8[%c5_124, %c0_125, %c0_126] : memref<9x64x64xf32, #tpu.memory_space<vmem>>, vector<1x64x64xf32>
    %136 = vector.shape_cast %135 : vector<1x64x64xf32> to vector<64x64xf32>
    %cst_127 = arith.constant dense<0.000000e+00> : vector<8x64xf32>
    %137 = tpu.matmul %119, %136, %cst_127 {dimension_numbers = #tpu.dot_dimension_numbers<[1], [0], [0], [1], [0, 0, 1, 1], [], []>} : vector<8x64xf32>, vector<64x64xf32>, vector<8x64xf32> -> vector<8x64xf32>
    %c6_128 = arith.constant 6 : index
    %c0_129 = arith.constant 0 : index
    %c0_130 = arith.constant 0 : index
    %138 = vector.load %arg8[%c6_128, %c0_129, %c0_130] : memref<9x64x64xf32, #tpu.memory_space<vmem>>, vector<1x64x64xf32>
    %139 = vector.shape_cast %138 : vector<1x64x64xf32> to vector<64x64xf32>
    %cst_131 = arith.constant dense<0.000000e+00> : vector<8x64xf32>
    %140 = tpu.matmul %119, %139, %cst_131 {dimension_numbers = #tpu.dot_dimension_numbers<[1], [0], [0], [1], [0, 0, 1, 1], [], []>} : vector<8x64xf32>, vector<64x64xf32>, vector<8x64xf32> -> vector<8x64xf32>
    %c7_132 = arith.constant 7 : index
    %c0_133 = arith.constant 0 : index
    %c0_134 = arith.constant 0 : index
    %141 = vector.load %arg8[%c7_132, %c0_133, %c0_134] : memref<9x64x64xf32, #tpu.memory_space<vmem>>, vector<1x64x64xf32>
    %142 = vector.shape_cast %141 : vector<1x64x64xf32> to vector<64x64xf32>
    %cst_135 = arith.constant dense<0.000000e+00> : vector<8x64xf32>
    %143 = tpu.matmul %119, %142, %cst_135 {dimension_numbers = #tpu.dot_dimension_numbers<[1], [0], [0], [1], [0, 0, 1, 1], [], []>} : vector<8x64xf32>, vector<64x64xf32>, vector<8x64xf32> -> vector<8x64xf32>
    %c8_136 = arith.constant 8 : index
    %c0_137 = arith.constant 0 : index
    %c0_138 = arith.constant 0 : index
    %144 = vector.load %arg8[%c8_136, %c0_137, %c0_138] : memref<9x64x64xf32, #tpu.memory_space<vmem>>, vector<1x64x64xf32>
    %145 = vector.shape_cast %144 : vector<1x64x64xf32> to vector<64x64xf32>
    %cst_139 = arith.constant dense<0.000000e+00> : vector<8x64xf32>
    %146 = tpu.matmul %119, %145, %cst_139 {dimension_numbers = #tpu.dot_dimension_numbers<[1], [0], [0], [1], [0, 0, 1, 1], [], []>} : vector<8x64xf32>, vector<64x64xf32>, vector<8x64xf32> -> vector<8x64xf32>
    %147 = tpu.concatenate %122, %125, %128, %131, %134, %137, %140, %143, %146 in 0 : vector<8x64xf32>, vector<8x64xf32>, vector<8x64xf32>, vector<8x64xf32>, vector<8x64xf32>, vector<8x64xf32>, vector<8x64xf32>, vector<8x64xf32>, vector<8x64xf32> -> vector<72x64xf32>
    %c2_140 = arith.constant 2 : index
    %c0_141 = arith.constant 0 : index
    %c0_142 = arith.constant 0 : index
    %148 = vector.load %arg5[%c2_140, %c0_141, %c0_142] : memref<8x8x72xf32, #tpu.memory_space<vmem>>, vector<1x8x72xf32>
    %149 = vector.shape_cast %148 : vector<1x8x72xf32> to vector<8x72xf32>
    %cst_143 = arith.constant dense<0.000000e+00> : vector<8x64xf32>
    %150 = tpu.matmul %149, %147, %cst_143 {dimension_numbers = #tpu.dot_dimension_numbers<[1], [0], [0], [1], [0, 0, 1, 1], [], []>} : vector<8x72xf32>, vector<72x64xf32>, vector<8x64xf32> -> vector<8x64xf32>
    %c2_144 = arith.constant 2 : index
    %c0_145 = arith.constant 0 : index
    %c0_146 = arith.constant 0 : index
    %151 = vector.load %arg6[%c2_144, %c0_145, %c0_146] : memref<8x8x256xf32, #tpu.memory_space<vmem>>, vector<1x8x64xf32>
    %152 = vector.shape_cast %151 : vector<1x8x64xf32> to vector<8x64xf32>
    %153 = arith.addf %150, %152 : vector<8x64xf32>
    %cst_147 = arith.constant 0.000000e+00 : f32
    %154 = vector.broadcast %cst_147 : f32 to vector<8x64xf32>
    %155 = arith.cmpf oge, %153, %154 : vector<8x64xf32>
    %cst_148 = arith.constant 2.000000e-01 : f32
    %156 = vector.broadcast %cst_148 : f32 to vector<8x64xf32>
    %157 = arith.mulf %156, %153 : vector<8x64xf32>
    %158 = arith.select %155, %153, %157 : vector<8x64xi1>, vector<8x64xf32>
    %cst_149 = arith.constant 0.353553385 : f32
    %159 = vector.broadcast %cst_149 : f32 to vector<8x256xf32>
    %160 = arith.mulf %1, %159 : vector<8x256xf32>
    %cst_150 = arith.constant dense<0.000000e+00> : vector<64x256xf32>
    %161 = tpu.matmul %158, %160, %cst_150 {dimension_numbers = #tpu.dot_dimension_numbers<[0], [0], [1], [1], [0, 1, 1, 1], [], []>} : vector<8x64xf32>, vector<8x256xf32>, vector<64x256xf32> -> vector<64x256xf32>
    %cst_151 = arith.constant dense<0xFF800000> : vector<256xf32>
    %162 = vector.multi_reduction <maximumf>, %161, %cst_151 [0] : vector<64x256xf32> to vector<256xf32>
    %163 = vector.shape_cast %162 : vector<256xf32> to vector<1x256xf32>
    %164 = vector.broadcast %163 : vector<1x256xf32> to vector<64x256xf32>
    %165 = arith.subf %161, %164 : vector<64x256xf32>
    %166 = math.exp %165 : vector<64x256xf32>
    %cst_152 = arith.constant dense<0.000000e+00> : vector<256xf32>
    %167 = vector.multi_reduction <add>, %166, %cst_152 [0] : vector<64x256xf32> to vector<256xf32>
    %168 = vector.shape_cast %167 : vector<256xf32> to vector<1x256xf32>
    %169 = tpu.reciprocal %168 {approx = true} : vector<1x256xf32> -> vector<1x256xf32>
    %cst_153 = arith.constant dense<0.000000e+00> : vector<8x256xf32>
    %170 = tpu.matmul %158, %166, %cst_153 {dimension_numbers = #tpu.dot_dimension_numbers<[1], [0], [0], [1], [0, 0, 1, 1], [], []>} : vector<8x64xf32>, vector<64x256xf32>, vector<8x256xf32> -> vector<8x256xf32>
    %171 = vector.broadcast %169 : vector<1x256xf32> to vector<8x256xf32>
    %172 = arith.mulf %170, %171 : vector<8x256xf32>
    %cst_154 = arith.constant 1.000000e+00 : f32
    %173 = vector.broadcast %cst_154 : f32 to vector<8x256xf32>
    %174 = arith.mulf %173, %172 : vector<8x256xf32>
    %175 = arith.addf %1, %174 : vector<8x256xf32>
    %c0_155 = arith.constant 0 : index
    %c0_156 = arith.constant 0 : index
    %c0_157 = arith.constant 0 : index
    %176 = vector.load %arg7[%c0_155, %c0_156, %c0_157] : memref<9x256x256xf32, #tpu.memory_space<vmem>>, vector<1x256x256xf32>
    %177 = vector.shape_cast %176 : vector<1x256x256xf32> to vector<256x256xf32>
    %cst_158 = arith.constant dense<0.000000e+00> : vector<8x256xf32>
    %178 = tpu.matmul %175, %177, %cst_158 {dimension_numbers = #tpu.dot_dimension_numbers<[1], [0], [0], [1], [0, 0, 1, 1], [], []>} : vector<8x256xf32>, vector<256x256xf32>, vector<8x256xf32> -> vector<8x256xf32>
    %c1_159 = arith.constant 1 : index
    %c0_160 = arith.constant 0 : index
    %c0_161 = arith.constant 0 : index
    %179 = vector.load %arg7[%c1_159, %c0_160, %c0_161] : memref<9x256x256xf32, #tpu.memory_space<vmem>>, vector<1x256x256xf32>
    %180 = vector.shape_cast %179 : vector<1x256x256xf32> to vector<256x256xf32>
    %cst_162 = arith.constant dense<0.000000e+00> : vector<8x256xf32>
    %181 = tpu.matmul %175, %180, %cst_162 {dimension_numbers = #tpu.dot_dimension_numbers<[1], [0], [0], [1], [0, 0, 1, 1], [], []>} : vector<8x256xf32>, vector<256x256xf32>, vector<8x256xf32> -> vector<8x256xf32>
    %c2_163 = arith.constant 2 : index
    %c0_164 = arith.constant 0 : index
    %c0_165 = arith.constant 0 : index
    %182 = vector.load %arg7[%c2_163, %c0_164, %c0_165] : memref<9x256x256xf32, #tpu.memory_space<vmem>>, vector<1x256x256xf32>
    %183 = vector.shape_cast %182 : vector<1x256x256xf32> to vector<256x256xf32>
    %cst_166 = arith.constant dense<0.000000e+00> : vector<8x256xf32>
    %184 = tpu.matmul %175, %183, %cst_166 {dimension_numbers = #tpu.dot_dimension_numbers<[1], [0], [0], [1], [0, 0, 1, 1], [], []>} : vector<8x256xf32>, vector<256x256xf32>, vector<8x256xf32> -> vector<8x256xf32>
    %c3_167 = arith.constant 3 : index
    %c0_168 = arith.constant 0 : index
    %c0_169 = arith.constant 0 : index
    %185 = vector.load %arg7[%c3_167, %c0_168, %c0_169] : memref<9x256x256xf32, #tpu.memory_space<vmem>>, vector<1x256x256xf32>
    %186 = vector.shape_cast %185 : vector<1x256x256xf32> to vector<256x256xf32>
    %cst_170 = arith.constant dense<0.000000e+00> : vector<8x256xf32>
    %187 = tpu.matmul %175, %186, %cst_170 {dimension_numbers = #tpu.dot_dimension_numbers<[1], [0], [0], [1], [0, 0, 1, 1], [], []>} : vector<8x256xf32>, vector<256x256xf32>, vector<8x256xf32> -> vector<8x256xf32>
    %c4_171 = arith.constant 4 : index
    %c0_172 = arith.constant 0 : index
    %c0_173 = arith.constant 0 : index
    %188 = vector.load %arg7[%c4_171, %c0_172, %c0_173] : memref<9x256x256xf32, #tpu.memory_space<vmem>>, vector<1x256x256xf32>
    %189 = vector.shape_cast %188 : vector<1x256x256xf32> to vector<256x256xf32>
    %cst_174 = arith.constant dense<0.000000e+00> : vector<8x256xf32>
    %190 = tpu.matmul %175, %189, %cst_174 {dimension_numbers = #tpu.dot_dimension_numbers<[1], [0], [0], [1], [0, 0, 1, 1], [], []>} : vector<8x256xf32>, vector<256x256xf32>, vector<8x256xf32> -> vector<8x256xf32>
    %c5_175 = arith.constant 5 : index
    %c0_176 = arith.constant 0 : index
    %c0_177 = arith.constant 0 : index
    %191 = vector.load %arg7[%c5_175, %c0_176, %c0_177] : memref<9x256x256xf32, #tpu.memory_space<vmem>>, vector<1x256x256xf32>
    %192 = vector.shape_cast %191 : vector<1x256x256xf32> to vector<256x256xf32>
    %cst_178 = arith.constant dense<0.000000e+00> : vector<8x256xf32>
    %193 = tpu.matmul %175, %192, %cst_178 {dimension_numbers = #tpu.dot_dimension_numbers<[1], [0], [0], [1], [0, 0, 1, 1], [], []>} : vector<8x256xf32>, vector<256x256xf32>, vector<8x256xf32> -> vector<8x256xf32>
    %c6_179 = arith.constant 6 : index
    %c0_180 = arith.constant 0 : index
    %c0_181 = arith.constant 0 : index
    %194 = vector.load %arg7[%c6_179, %c0_180, %c0_181] : memref<9x256x256xf32, #tpu.memory_space<vmem>>, vector<1x256x256xf32>
    %195 = vector.shape_cast %194 : vector<1x256x256xf32> to vector<256x256xf32>
    %cst_182 = arith.constant dense<0.000000e+00> : vector<8x256xf32>
    %196 = tpu.matmul %175, %195, %cst_182 {dimension_numbers = #tpu.dot_dimension_numbers<[1], [0], [0], [1], [0, 0, 1, 1], [], []>} : vector<8x256xf32>, vector<256x256xf32>, vector<8x256xf32> -> vector<8x256xf32>
    %c7_183 = arith.constant 7 : index
    %c0_184 = arith.constant 0 : index
    %c0_185 = arith.constant 0 : index
    %197 = vector.load %arg7[%c7_183, %c0_184, %c0_185] : memref<9x256x256xf32, #tpu.memory_space<vmem>>, vector<1x256x256xf32>
    %198 = vector.shape_cast %197 : vector<1x256x256xf32> to vector<256x256xf32>
    %cst_186 = arith.constant dense<0.000000e+00> : vector<8x256xf32>
    %199 = tpu.matmul %175, %198, %cst_186 {dimension_numbers = #tpu.dot_dimension_numbers<[1], [0], [0], [1], [0, 0, 1, 1], [], []>} : vector<8x256xf32>, vector<256x256xf32>, vector<8x256xf32> -> vector<8x256xf32>
    %c8_187 = arith.constant 8 : index
    %c0_188 = arith.constant 0 : index
    %c0_189 = arith.constant 0 : index
    %200 = vector.load %arg7[%c8_187, %c0_188, %c0_189] : memref<9x256x256xf32, #tpu.memory_space<vmem>>, vector<1x256x256xf32>
    %201 = vector.shape_cast %200 : vector<1x256x256xf32> to vector<256x256xf32>
    %cst_190 = arith.constant dense<0.000000e+00> : vector<8x256xf32>
    %202 = tpu.matmul %175, %201, %cst_190 {dimension_numbers = #tpu.dot_dimension_numbers<[1], [0], [0], [1], [0, 0, 1, 1], [], []>} : vector<8x256xf32>, vector<256x256xf32>, vector<8x256xf32> -> vector<8x256xf32>
    %203 = tpu.concatenate %178, %181, %184, %187, %190, %193, %196, %199, %202 in 0 : vector<8x256xf32>, vector<8x256xf32>, vector<8x256xf32>, vector<8x256xf32>, vector<8x256xf32>, vector<8x256xf32>, vector<8x256xf32>, vector<8x256xf32>, vector<8x256xf32> -> vector<72x256xf32>
    %c3_191 = arith.constant 3 : index
    %c0_192 = arith.constant 0 : index
    %c0_193 = arith.constant 0 : index
    %204 = vector.load %arg5[%c3_191, %c0_192, %c0_193] : memref<8x8x72xf32, #tpu.memory_space<vmem>>, vector<1x8x72xf32>
    %205 = vector.shape_cast %204 : vector<1x8x72xf32> to vector<8x72xf32>
    %cst_194 = arith.constant dense<0.000000e+00> : vector<8x256xf32>
    %206 = tpu.matmul %205, %203, %cst_194 {dimension_numbers = #tpu.dot_dimension_numbers<[1], [0], [0], [1], [0, 0, 1, 1], [], []>} : vector<8x72xf32>, vector<72x256xf32>, vector<8x256xf32> -> vector<8x256xf32>
    %c3_195 = arith.constant 3 : index
    %c0_196 = arith.constant 0 : index
    %c0_197 = arith.constant 0 : index
    %207 = vector.load %arg6[%c3_195, %c0_196, %c0_197] : memref<8x8x256xf32, #tpu.memory_space<vmem>>, vector<1x8x256xf32>
    %208 = vector.shape_cast %207 : vector<1x8x256xf32> to vector<8x256xf32>
    %209 = arith.addf %206, %208 : vector<8x256xf32>
    %cst_198 = arith.constant 0.000000e+00 : f32
    %210 = vector.broadcast %cst_198 : f32 to vector<8x256xf32>
    %211 = arith.cmpf oge, %209, %210 : vector<8x256xf32>
    %cst_199 = arith.constant 2.000000e-01 : f32
    %212 = vector.broadcast %cst_199 : f32 to vector<8x256xf32>
    %213 = arith.mulf %212, %209 : vector<8x256xf32>
    %214 = arith.select %211, %209, %213 : vector<8x256xi1>, vector<8x256xf32>
    %c0_200 = arith.constant 0 : index
    %c0_201 = arith.constant 0 : index
    %c0_202 = arith.constant 0 : index
    %215 = vector.load %arg7[%c0_200, %c0_201, %c0_202] : memref<9x256x256xf32, #tpu.memory_space<vmem>>, vector<1x256x256xf32>
    %216 = vector.shape_cast %215 : vector<1x256x256xf32> to vector<256x256xf32>
    %cst_203 = arith.constant dense<0.000000e+00> : vector<8x256xf32>
    %217 = tpu.matmul %214, %216, %cst_203 {dimension_numbers = #tpu.dot_dimension_numbers<[1], [0], [0], [1], [0, 0, 1, 1], [], []>} : vector<8x256xf32>, vector<256x256xf32>, vector<8x256xf32> -> vector<8x256xf32>
    %c1_204 = arith.constant 1 : index
    %c0_205 = arith.constant 0 : index
    %c0_206 = arith.constant 0 : index
    %218 = vector.load %arg7[%c1_204, %c0_205, %c0_206] : memref<9x256x256xf32, #tpu.memory_space<vmem>>, vector<1x256x256xf32>
    %219 = vector.shape_cast %218 : vector<1x256x256xf32> to vector<256x256xf32>
    %cst_207 = arith.constant dense<0.000000e+00> : vector<8x256xf32>
    %220 = tpu.matmul %214, %219, %cst_207 {dimension_numbers = #tpu.dot_dimension_numbers<[1], [0], [0], [1], [0, 0, 1, 1], [], []>} : vector<8x256xf32>, vector<256x256xf32>, vector<8x256xf32> -> vector<8x256xf32>
    %c2_208 = arith.constant 2 : index
    %c0_209 = arith.constant 0 : index
    %c0_210 = arith.constant 0 : index
    %221 = vector.load %arg7[%c2_208, %c0_209, %c0_210] : memref<9x256x256xf32, #tpu.memory_space<vmem>>, vector<1x256x256xf32>
    %222 = vector.shape_cast %221 : vector<1x256x256xf32> to vector<256x256xf32>
    %cst_211 = arith.constant dense<0.000000e+00> : vector<8x256xf32>
    %223 = tpu.matmul %214, %222, %cst_211 {dimension_numbers = #tpu.dot_dimension_numbers<[1], [0], [0], [1], [0, 0, 1, 1], [], []>} : vector<8x256xf32>, vector<256x256xf32>, vector<8x256xf32> -> vector<8x256xf32>
    %c3_212 = arith.constant 3 : index
    %c0_213 = arith.constant 0 : index
    %c0_214 = arith.constant 0 : index
    %224 = vector.load %arg7[%c3_212, %c0_213, %c0_214] : memref<9x256x256xf32, #tpu.memory_space<vmem>>, vector<1x256x256xf32>
    %225 = vector.shape_cast %224 : vector<1x256x256xf32> to vector<256x256xf32>
    %cst_215 = arith.constant dense<0.000000e+00> : vector<8x256xf32>
    %226 = tpu.matmul %214, %225, %cst_215 {dimension_numbers = #tpu.dot_dimension_numbers<[1], [0], [0], [1], [0, 0, 1, 1], [], []>} : vector<8x256xf32>, vector<256x256xf32>, vector<8x256xf32> -> vector<8x256xf32>
    %c4_216 = arith.constant 4 : index
    %c0_217 = arith.constant 0 : index
    %c0_218 = arith.constant 0 : index
    %227 = vector.load %arg7[%c4_216, %c0_217, %c0_218] : memref<9x256x256xf32, #tpu.memory_space<vmem>>, vector<1x256x256xf32>
    %228 = vector.shape_cast %227 : vector<1x256x256xf32> to vector<256x256xf32>
    %cst_219 = arith.constant dense<0.000000e+00> : vector<8x256xf32>
    %229 = tpu.matmul %214, %228, %cst_219 {dimension_numbers = #tpu.dot_dimension_numbers<[1], [0], [0], [1], [0, 0, 1, 1], [], []>} : vector<8x256xf32>, vector<256x256xf32>, vector<8x256xf32> -> vector<8x256xf32>
    %c5_220 = arith.constant 5 : index
    %c0_221 = arith.constant 0 : index
    %c0_222 = arith.constant 0 : index
    %230 = vector.load %arg7[%c5_220, %c0_221, %c0_222] : memref<9x256x256xf32, #tpu.memory_space<vmem>>, vector<1x256x256xf32>
    %231 = vector.shape_cast %230 : vector<1x256x256xf32> to vector<256x256xf32>
    %cst_223 = arith.constant dense<0.000000e+00> : vector<8x256xf32>
    %232 = tpu.matmul %214, %231, %cst_223 {dimension_numbers = #tpu.dot_dimension_numbers<[1], [0], [0], [1], [0, 0, 1, 1], [], []>} : vector<8x256xf32>, vector<256x256xf32>, vector<8x256xf32> -> vector<8x256xf32>
    %c6_224 = arith.constant 6 : index
    %c0_225 = arith.constant 0 : index
    %c0_226 = arith.constant 0 : index
    %233 = vector.load %arg7[%c6_224, %c0_225, %c0_226] : memref<9x256x256xf32, #tpu.memory_space<vmem>>, vector<1x256x256xf32>
    %234 = vector.shape_cast %233 : vector<1x256x256xf32> to vector<256x256xf32>
    %cst_227 = arith.constant dense<0.000000e+00> : vector<8x256xf32>
    %235 = tpu.matmul %214, %234, %cst_227 {dimension_numbers = #tpu.dot_dimension_numbers<[1], [0], [0], [1], [0, 0, 1, 1], [], []>} : vector<8x256xf32>, vector<256x256xf32>, vector<8x256xf32> -> vector<8x256xf32>
    %c7_228 = arith.constant 7 : index
    %c0_229 = arith.constant 0 : index
    %c0_230 = arith.constant 0 : index
    %236 = vector.load %arg7[%c7_228, %c0_229, %c0_230] : memref<9x256x256xf32, #tpu.memory_space<vmem>>, vector<1x256x256xf32>
    %237 = vector.shape_cast %236 : vector<1x256x256xf32> to vector<256x256xf32>
    %cst_231 = arith.constant dense<0.000000e+00> : vector<8x256xf32>
    %238 = tpu.matmul %214, %237, %cst_231 {dimension_numbers = #tpu.dot_dimension_numbers<[1], [0], [0], [1], [0, 0, 1, 1], [], []>} : vector<8x256xf32>, vector<256x256xf32>, vector<8x256xf32> -> vector<8x256xf32>
    %c8_232 = arith.constant 8 : index
    %c0_233 = arith.constant 0 : index
    %c0_234 = arith.constant 0 : index
    %239 = vector.load %arg7[%c8_232, %c0_233, %c0_234] : memref<9x256x256xf32, #tpu.memory_space<vmem>>, vector<1x256x256xf32>
    %240 = vector.shape_cast %239 : vector<1x256x256xf32> to vector<256x256xf32>
    %cst_235 = arith.constant dense<0.000000e+00> : vector<8x256xf32>
    %241 = tpu.matmul %214, %240, %cst_235 {dimension_numbers = #tpu.dot_dimension_numbers<[1], [0], [0], [1], [0, 0, 1, 1], [], []>} : vector<8x256xf32>, vector<256x256xf32>, vector<8x256xf32> -> vector<8x256xf32>
    %242 = tpu.concatenate %217, %220, %223, %226, %229, %232, %235, %238, %241 in 0 : vector<8x256xf32>, vector<8x256xf32>, vector<8x256xf32>, vector<8x256xf32>, vector<8x256xf32>, vector<8x256xf32>, vector<8x256xf32>, vector<8x256xf32>, vector<8x256xf32> -> vector<72x256xf32>
    %c4_236 = arith.constant 4 : index
    %c0_237 = arith.constant 0 : index
    %c0_238 = arith.constant 0 : index
    %243 = vector.load %arg5[%c4_236, %c0_237, %c0_238] : memref<8x8x72xf32, #tpu.memory_space<vmem>>, vector<1x8x72xf32>
    %244 = vector.shape_cast %243 : vector<1x8x72xf32> to vector<8x72xf32>
    %cst_239 = arith.constant dense<0.000000e+00> : vector<8x256xf32>
    %245 = tpu.matmul %244, %242, %cst_239 {dimension_numbers = #tpu.dot_dimension_numbers<[1], [0], [0], [1], [0, 0, 1, 1], [], []>} : vector<8x72xf32>, vector<72x256xf32>, vector<8x256xf32> -> vector<8x256xf32>
    %c4_240 = arith.constant 4 : index
    %c0_241 = arith.constant 0 : index
    %c0_242 = arith.constant 0 : index
    %246 = vector.load %arg6[%c4_240, %c0_241, %c0_242] : memref<8x8x256xf32, #tpu.memory_space<vmem>>, vector<1x8x256xf32>
    %247 = vector.shape_cast %246 : vector<1x8x256xf32> to vector<8x256xf32>
    %248 = arith.addf %245, %247 : vector<8x256xf32>
    %cst_243 = arith.constant 0.000000e+00 : f32
    %249 = vector.broadcast %cst_243 : f32 to vector<8x256xf32>
    %250 = arith.cmpf oge, %248, %249 : vector<8x256xf32>
    %cst_244 = arith.constant 2.000000e-01 : f32
    %251 = vector.broadcast %cst_244 : f32 to vector<8x256xf32>
    %252 = arith.mulf %251, %248 : vector<8x256xf32>
    %253 = arith.select %250, %248, %252 : vector<8x256xi1>, vector<8x256xf32>
    %cst_245 = arith.constant 0.353553385 : f32
    %254 = vector.broadcast %cst_245 : f32 to vector<8x64xf32>
    %255 = arith.mulf %158, %254 : vector<8x64xf32>
    %cst_246 = arith.constant dense<0.000000e+00> : vector<256x64xf32>
    %256 = tpu.matmul %253, %255, %cst_246 {dimension_numbers = #tpu.dot_dimension_numbers<[0], [0], [1], [1], [0, 1, 1, 1], [], []>} : vector<8x256xf32>, vector<8x64xf32>, vector<256x64xf32> -> vector<256x64xf32>
    %cst_247 = arith.constant dense<0xFF800000> : vector<64xf32>
    %257 = vector.multi_reduction <maximumf>, %256, %cst_247 [0] : vector<256x64xf32> to vector<64xf32>
    %258 = vector.shape_cast %257 : vector<64xf32> to vector<1x64xf32>
    %259 = vector.broadcast %258 : vector<1x64xf32> to vector<256x64xf32>
    %260 = arith.subf %256, %259 : vector<256x64xf32>
    %261 = math.exp %260 : vector<256x64xf32>
    %cst_248 = arith.constant dense<0.000000e+00> : vector<64xf32>
    %262 = vector.multi_reduction <add>, %261, %cst_248 [0] : vector<256x64xf32> to vector<64xf32>
    %263 = vector.shape_cast %262 : vector<64xf32> to vector<1x64xf32>
    %264 = tpu.reciprocal %263 {approx = true} : vector<1x64xf32> -> vector<1x64xf32>
    %cst_249 = arith.constant dense<0.000000e+00> : vector<8x64xf32>
    %265 = tpu.matmul %253, %261, %cst_249 {dimension_numbers = #tpu.dot_dimension_numbers<[1], [0], [0], [1], [0, 0, 1, 1], [], []>} : vector<8x256xf32>, vector<256x64xf32>, vector<8x64xf32> -> vector<8x64xf32>
    %266 = vector.broadcast %264 : vector<1x64xf32> to vector<8x64xf32>
    %267 = arith.mulf %265, %266 : vector<8x64xf32>
    %cst_250 = arith.constant 1.000000e+00 : f32
    %268 = vector.broadcast %cst_250 : f32 to vector<8x64xf32>
    %269 = arith.mulf %268, %267 : vector<8x64xf32>
    %270 = arith.addf %158, %269 : vector<8x64xf32>
    %c0_251 = arith.constant 0 : index
    %c0_252 = arith.constant 0 : index
    %c0_253 = arith.constant 0 : index
    %271 = vector.load %arg8[%c0_251, %c0_252, %c0_253] : memref<9x64x64xf32, #tpu.memory_space<vmem>>, vector<1x64x64xf32>
    %272 = vector.shape_cast %271 : vector<1x64x64xf32> to vector<64x64xf32>
    %cst_254 = arith.constant dense<0.000000e+00> : vector<8x64xf32>
    %273 = tpu.matmul %270, %272, %cst_254 {dimension_numbers = #tpu.dot_dimension_numbers<[1], [0], [0], [1], [0, 0, 1, 1], [], []>} : vector<8x64xf32>, vector<64x64xf32>, vector<8x64xf32> -> vector<8x64xf32>
    %c1_255 = arith.constant 1 : index
    %c0_256 = arith.constant 0 : index
    %c0_257 = arith.constant 0 : index
    %274 = vector.load %arg8[%c1_255, %c0_256, %c0_257] : memref<9x64x64xf32, #tpu.memory_space<vmem>>, vector<1x64x64xf32>
    %275 = vector.shape_cast %274 : vector<1x64x64xf32> to vector<64x64xf32>
    %cst_258 = arith.constant dense<0.000000e+00> : vector<8x64xf32>
    %276 = tpu.matmul %270, %275, %cst_258 {dimension_numbers = #tpu.dot_dimension_numbers<[1], [0], [0], [1], [0, 0, 1, 1], [], []>} : vector<8x64xf32>, vector<64x64xf32>, vector<8x64xf32> -> vector<8x64xf32>
    %c2_259 = arith.constant 2 : index
    %c0_260 = arith.constant 0 : index
    %c0_261 = arith.constant 0 : index
    %277 = vector.load %arg8[%c2_259, %c0_260, %c0_261] : memref<9x64x64xf32, #tpu.memory_space<vmem>>, vector<1x64x64xf32>
    %278 = vector.shape_cast %277 : vector<1x64x64xf32> to vector<64x64xf32>
    %cst_262 = arith.constant dense<0.000000e+00> : vector<8x64xf32>
    %279 = tpu.matmul %270, %278, %cst_262 {dimension_numbers = #tpu.dot_dimension_numbers<[1], [0], [0], [1], [0, 0, 1, 1], [], []>} : vector<8x64xf32>, vector<64x64xf32>, vector<8x64xf32> -> vector<8x64xf32>
    %c3_263 = arith.constant 3 : index
    %c0_264 = arith.constant 0 : index
    %c0_265 = arith.constant 0 : index
    %280 = vector.load %arg8[%c3_263, %c0_264, %c0_265] : memref<9x64x64xf32, #tpu.memory_space<vmem>>, vector<1x64x64xf32>
    %281 = vector.shape_cast %280 : vector<1x64x64xf32> to vector<64x64xf32>
    %cst_266 = arith.constant dense<0.000000e+00> : vector<8x64xf32>
    %282 = tpu.matmul %270, %281, %cst_266 {dimension_numbers = #tpu.dot_dimension_numbers<[1], [0], [0], [1], [0, 0, 1, 1], [], []>} : vector<8x64xf32>, vector<64x64xf32>, vector<8x64xf32> -> vector<8x64xf32>
    %c4_267 = arith.constant 4 : index
    %c0_268 = arith.constant 0 : index
    %c0_269 = arith.constant 0 : index
    %283 = vector.load %arg8[%c4_267, %c0_268, %c0_269] : memref<9x64x64xf32, #tpu.memory_space<vmem>>, vector<1x64x64xf32>
    %284 = vector.shape_cast %283 : vector<1x64x64xf32> to vector<64x64xf32>
    %cst_270 = arith.constant dense<0.000000e+00> : vector<8x64xf32>
    %285 = tpu.matmul %270, %284, %cst_270 {dimension_numbers = #tpu.dot_dimension_numbers<[1], [0], [0], [1], [0, 0, 1, 1], [], []>} : vector<8x64xf32>, vector<64x64xf32>, vector<8x64xf32> -> vector<8x64xf32>
    %c5_271 = arith.constant 5 : index
    %c0_272 = arith.constant 0 : index
    %c0_273 = arith.constant 0 : index
    %286 = vector.load %arg8[%c5_271, %c0_272, %c0_273] : memref<9x64x64xf32, #tpu.memory_space<vmem>>, vector<1x64x64xf32>
    %287 = vector.shape_cast %286 : vector<1x64x64xf32> to vector<64x64xf32>
    %cst_274 = arith.constant dense<0.000000e+00> : vector<8x64xf32>
    %288 = tpu.matmul %270, %287, %cst_274 {dimension_numbers = #tpu.dot_dimension_numbers<[1], [0], [0], [1], [0, 0, 1, 1], [], []>} : vector<8x64xf32>, vector<64x64xf32>, vector<8x64xf32> -> vector<8x64xf32>
    %c6_275 = arith.constant 6 : index
    %c0_276 = arith.constant 0 : index
    %c0_277 = arith.constant 0 : index
    %289 = vector.load %arg8[%c6_275, %c0_276, %c0_277] : memref<9x64x64xf32, #tpu.memory_space<vmem>>, vector<1x64x64xf32>
    %290 = vector.shape_cast %289 : vector<1x64x64xf32> to vector<64x64xf32>
    %cst_278 = arith.constant dense<0.000000e+00> : vector<8x64xf32>
    %291 = tpu.matmul %270, %290, %cst_278 {dimension_numbers = #tpu.dot_dimension_numbers<[1], [0], [0], [1], [0, 0, 1, 1], [], []>} : vector<8x64xf32>, vector<64x64xf32>, vector<8x64xf32> -> vector<8x64xf32>
    %c7_279 = arith.constant 7 : index
    %c0_280 = arith.constant 0 : index
    %c0_281 = arith.constant 0 : index
    %292 = vector.load %arg8[%c7_279, %c0_280, %c0_281] : memref<9x64x64xf32, #tpu.memory_space<vmem>>, vector<1x64x64xf32>
    %293 = vector.shape_cast %292 : vector<1x64x64xf32> to vector<64x64xf32>
    %cst_282 = arith.constant dense<0.000000e+00> : vector<8x64xf32>
    %294 = tpu.matmul %270, %293, %cst_282 {dimension_numbers = #tpu.dot_dimension_numbers<[1], [0], [0], [1], [0, 0, 1, 1], [], []>} : vector<8x64xf32>, vector<64x64xf32>, vector<8x64xf32> -> vector<8x64xf32>
    %c8_283 = arith.constant 8 : index
    %c0_284 = arith.constant 0 : index
    %c0_285 = arith.constant 0 : index
    %295 = vector.load %arg8[%c8_283, %c0_284, %c0_285] : memref<9x64x64xf32, #tpu.memory_space<vmem>>, vector<1x64x64xf32>
    %296 = vector.shape_cast %295 : vector<1x64x64xf32> to vector<64x64xf32>
    %cst_286 = arith.constant dense<0.000000e+00> : vector<8x64xf32>
    %297 = tpu.matmul %270, %296, %cst_286 {dimension_numbers = #tpu.dot_dimension_numbers<[1], [0], [0], [1], [0, 0, 1, 1], [], []>} : vector<8x64xf32>, vector<64x64xf32>, vector<8x64xf32> -> vector<8x64xf32>
    %298 = tpu.concatenate %273, %276, %279, %282, %285, %288, %291, %294, %297 in 0 : vector<8x64xf32>, vector<8x64xf32>, vector<8x64xf32>, vector<8x64xf32>, vector<8x64xf32>, vector<8x64xf32>, vector<8x64xf32>, vector<8x64xf32>, vector<8x64xf32> -> vector<72x64xf32>
    %c5_287 = arith.constant 5 : index
    %c0_288 = arith.constant 0 : index
    %c0_289 = arith.constant 0 : index
    %299 = vector.load %arg5[%c5_287, %c0_288, %c0_289] : memref<8x8x72xf32, #tpu.memory_space<vmem>>, vector<1x8x72xf32>
    %300 = vector.shape_cast %299 : vector<1x8x72xf32> to vector<8x72xf32>
    %cst_290 = arith.constant dense<0.000000e+00> : vector<8x64xf32>
    %301 = tpu.matmul %300, %298, %cst_290 {dimension_numbers = #tpu.dot_dimension_numbers<[1], [0], [0], [1], [0, 0, 1, 1], [], []>} : vector<8x72xf32>, vector<72x64xf32>, vector<8x64xf32> -> vector<8x64xf32>
    %c5_291 = arith.constant 5 : index
    %c0_292 = arith.constant 0 : index
    %c0_293 = arith.constant 0 : index
    %302 = vector.load %arg6[%c5_291, %c0_292, %c0_293] : memref<8x8x256xf32, #tpu.memory_space<vmem>>, vector<1x8x64xf32>
    %303 = vector.shape_cast %302 : vector<1x8x64xf32> to vector<8x64xf32>
    %304 = arith.addf %301, %303 : vector<8x64xf32>
    %cst_294 = arith.constant 0.000000e+00 : f32
    %305 = vector.broadcast %cst_294 : f32 to vector<8x64xf32>
    %306 = arith.cmpf oge, %304, %305 : vector<8x64xf32>
    %cst_295 = arith.constant 2.000000e-01 : f32
    %307 = vector.broadcast %cst_295 : f32 to vector<8x64xf32>
    %308 = arith.mulf %307, %304 : vector<8x64xf32>
    %309 = arith.select %306, %304, %308 : vector<8x64xi1>, vector<8x64xf32>
    %cst_296 = arith.constant 0.353553385 : f32
    %310 = vector.broadcast %cst_296 : f32 to vector<8x16xf32>
    %311 = arith.mulf %102, %310 : vector<8x16xf32>
    %cst_297 = arith.constant dense<0.000000e+00> : vector<64x16xf32>
    %312 = tpu.matmul %309, %311, %cst_297 {dimension_numbers = #tpu.dot_dimension_numbers<[0], [0], [1], [1], [0, 1, 1, 1], [], []>} : vector<8x64xf32>, vector<8x16xf32>, vector<64x16xf32> -> vector<64x16xf32>
    %cst_298 = arith.constant dense<0xFF800000> : vector<16xf32>
    %313 = vector.multi_reduction <maximumf>, %312, %cst_298 [0] : vector<64x16xf32> to vector<16xf32>
    %314 = vector.shape_cast %313 : vector<16xf32> to vector<1x16xf32>
    %315 = vector.broadcast %314 : vector<1x16xf32> to vector<64x16xf32>
    %316 = arith.subf %312, %315 : vector<64x16xf32>
    %317 = math.exp %316 : vector<64x16xf32>
    %cst_299 = arith.constant dense<0.000000e+00> : vector<16xf32>
    %318 = vector.multi_reduction <add>, %317, %cst_299 [0] : vector<64x16xf32> to vector<16xf32>
    %319 = vector.shape_cast %318 : vector<16xf32> to vector<1x16xf32>
    %320 = tpu.reciprocal %319 {approx = true} : vector<1x16xf32> -> vector<1x16xf32>
    %cst_300 = arith.constant dense<0.000000e+00> : vector<8x16xf32>
    %321 = tpu.matmul %309, %317, %cst_300 {dimension_numbers = #tpu.dot_dimension_numbers<[1], [0], [0], [1], [0, 0, 1, 1], [], []>} : vector<8x64xf32>, vector<64x16xf32>, vector<8x16xf32> -> vector<8x16xf32>
    %322 = vector.broadcast %320 : vector<1x16xf32> to vector<8x16xf32>
    %323 = arith.mulf %321, %322 : vector<8x16xf32>
    %cst_301 = arith.constant 1.000000e+00 : f32
    %324 = vector.broadcast %cst_301 : f32 to vector<8x16xf32>
    %325 = arith.mulf %324, %323 : vector<8x16xf32>
    %326 = arith.addf %102, %325 : vector<8x16xf32>
    %c0_302 = arith.constant 0 : index
    %c0_303 = arith.constant 0 : index
    %c0_304 = arith.constant 0 : index
    %327 = vector.load %arg9[%c0_302, %c0_303, %c0_304] : memref<9x16x16xf32, #tpu.memory_space<vmem>>, vector<1x16x16xf32>
    %328 = vector.shape_cast %327 : vector<1x16x16xf32> to vector<16x16xf32>
    %cst_305 = arith.constant dense<0.000000e+00> : vector<8x16xf32>
    %329 = tpu.matmul %326, %328, %cst_305 {dimension_numbers = #tpu.dot_dimension_numbers<[1], [0], [0], [1], [0, 0, 1, 1], [], []>} : vector<8x16xf32>, vector<16x16xf32>, vector<8x16xf32> -> vector<8x16xf32>
    %c1_306 = arith.constant 1 : index
    %c0_307 = arith.constant 0 : index
    %c0_308 = arith.constant 0 : index
    %330 = vector.load %arg9[%c1_306, %c0_307, %c0_308] : memref<9x16x16xf32, #tpu.memory_space<vmem>>, vector<1x16x16xf32>
    %331 = vector.shape_cast %330 : vector<1x16x16xf32> to vector<16x16xf32>
    %cst_309 = arith.constant dense<0.000000e+00> : vector<8x16xf32>
    %332 = tpu.matmul %326, %331, %cst_309 {dimension_numbers = #tpu.dot_dimension_numbers<[1], [0], [0], [1], [0, 0, 1, 1], [], []>} : vector<8x16xf32>, vector<16x16xf32>, vector<8x16xf32> -> vector<8x16xf32>
    %c2_310 = arith.constant 2 : index
    %c0_311 = arith.constant 0 : index
    %c0_312 = arith.constant 0 : index
    %333 = vector.load %arg9[%c2_310, %c0_311, %c0_312] : memref<9x16x16xf32, #tpu.memory_space<vmem>>, vector<1x16x16xf32>
    %334 = vector.shape_cast %333 : vector<1x16x16xf32> to vector<16x16xf32>
    %cst_313 = arith.constant dense<0.000000e+00> : vector<8x16xf32>
    %335 = tpu.matmul %326, %334, %cst_313 {dimension_numbers = #tpu.dot_dimension_numbers<[1], [0], [0], [1], [0, 0, 1, 1], [], []>} : vector<8x16xf32>, vector<16x16xf32>, vector<8x16xf32> -> vector<8x16xf32>
    %c3_314 = arith.constant 3 : index
    %c0_315 = arith.constant 0 : index
    %c0_316 = arith.constant 0 : index
    %336 = vector.load %arg9[%c3_314, %c0_315, %c0_316] : memref<9x16x16xf32, #tpu.memory_space<vmem>>, vector<1x16x16xf32>
    %337 = vector.shape_cast %336 : vector<1x16x16xf32> to vector<16x16xf32>
    %cst_317 = arith.constant dense<0.000000e+00> : vector<8x16xf32>
    %338 = tpu.matmul %326, %337, %cst_317 {dimension_numbers = #tpu.dot_dimension_numbers<[1], [0], [0], [1], [0, 0, 1, 1], [], []>} : vector<8x16xf32>, vector<16x16xf32>, vector<8x16xf32> -> vector<8x16xf32>
    %c4_318 = arith.constant 4 : index
    %c0_319 = arith.constant 0 : index
    %c0_320 = arith.constant 0 : index
    %339 = vector.load %arg9[%c4_318, %c0_319, %c0_320] : memref<9x16x16xf32, #tpu.memory_space<vmem>>, vector<1x16x16xf32>
    %340 = vector.shape_cast %339 : vector<1x16x16xf32> to vector<16x16xf32>
    %cst_321 = arith.constant dense<0.000000e+00> : vector<8x16xf32>
    %341 = tpu.matmul %326, %340, %cst_321 {dimension_numbers = #tpu.dot_dimension_numbers<[1], [0], [0], [1], [0, 0, 1, 1], [], []>} : vector<8x16xf32>, vector<16x16xf32>, vector<8x16xf32> -> vector<8x16xf32>
    %c5_322 = arith.constant 5 : index
    %c0_323 = arith.constant 0 : index
    %c0_324 = arith.constant 0 : index
    %342 = vector.load %arg9[%c5_322, %c0_323, %c0_324] : memref<9x16x16xf32, #tpu.memory_space<vmem>>, vector<1x16x16xf32>
    %343 = vector.shape_cast %342 : vector<1x16x16xf32> to vector<16x16xf32>
    %cst_325 = arith.constant dense<0.000000e+00> : vector<8x16xf32>
    %344 = tpu.matmul %326, %343, %cst_325 {dimension_numbers = #tpu.dot_dimension_numbers<[1], [0], [0], [1], [0, 0, 1, 1], [], []>} : vector<8x16xf32>, vector<16x16xf32>, vector<8x16xf32> -> vector<8x16xf32>
    %c6_326 = arith.constant 6 : index
    %c0_327 = arith.constant 0 : index
    %c0_328 = arith.constant 0 : index
    %345 = vector.load %arg9[%c6_326, %c0_327, %c0_328] : memref<9x16x16xf32, #tpu.memory_space<vmem>>, vector<1x16x16xf32>
    %346 = vector.shape_cast %345 : vector<1x16x16xf32> to vector<16x16xf32>
    %cst_329 = arith.constant dense<0.000000e+00> : vector<8x16xf32>
    %347 = tpu.matmul %326, %346, %cst_329 {dimension_numbers = #tpu.dot_dimension_numbers<[1], [0], [0], [1], [0, 0, 1, 1], [], []>} : vector<8x16xf32>, vector<16x16xf32>, vector<8x16xf32> -> vector<8x16xf32>
    %c7_330 = arith.constant 7 : index
    %c0_331 = arith.constant 0 : index
    %c0_332 = arith.constant 0 : index
    %348 = vector.load %arg9[%c7_330, %c0_331, %c0_332] : memref<9x16x16xf32, #tpu.memory_space<vmem>>, vector<1x16x16xf32>
    %349 = vector.shape_cast %348 : vector<1x16x16xf32> to vector<16x16xf32>
    %cst_333 = arith.constant dense<0.000000e+00> : vector<8x16xf32>
    %350 = tpu.matmul %326, %349, %cst_333 {dimension_numbers = #tpu.dot_dimension_numbers<[1], [0], [0], [1], [0, 0, 1, 1], [], []>} : vector<8x16xf32>, vector<16x16xf32>, vector<8x16xf32> -> vector<8x16xf32>
    %c8_334 = arith.constant 8 : index
    %c0_335 = arith.constant 0 : index
    %c0_336 = arith.constant 0 : index
    %351 = vector.load %arg9[%c8_334, %c0_335, %c0_336] : memref<9x16x16xf32, #tpu.memory_space<vmem>>, vector<1x16x16xf32>
    %352 = vector.shape_cast %351 : vector<1x16x16xf32> to vector<16x16xf32>
    %cst_337 = arith.constant dense<0.000000e+00> : vector<8x16xf32>
    %353 = tpu.matmul %326, %352, %cst_337 {dimension_numbers = #tpu.dot_dimension_numbers<[1], [0], [0], [1], [0, 0, 1, 1], [], []>} : vector<8x16xf32>, vector<16x16xf32>, vector<8x16xf32> -> vector<8x16xf32>
    %354 = tpu.concatenate %329, %332, %335, %338, %341, %344, %347, %350, %353 in 0 : vector<8x16xf32>, vector<8x16xf32>, vector<8x16xf32>, vector<8x16xf32>, vector<8x16xf32>, vector<8x16xf32>, vector<8x16xf32>, vector<8x16xf32>, vector<8x16xf32> -> vector<72x16xf32>
    %c6_338 = arith.constant 6 : index
    %c0_339 = arith.constant 0 : index
    %c0_340 = arith.constant 0 : index
    %355 = vector.load %arg5[%c6_338, %c0_339, %c0_340] : memref<8x8x72xf32, #tpu.memory_space<vmem>>, vector<1x8x72xf32>
    %356 = vector.shape_cast %355 : vector<1x8x72xf32> to vector<8x72xf32>
    %cst_341 = arith.constant dense<0.000000e+00> : vector<8x16xf32>
    %357 = tpu.matmul %356, %354, %cst_341 {dimension_numbers = #tpu.dot_dimension_numbers<[1], [0], [0], [1], [0, 0, 1, 1], [], []>} : vector<8x72xf32>, vector<72x16xf32>, vector<8x16xf32> -> vector<8x16xf32>
    %c6_342 = arith.constant 6 : index
    %c0_343 = arith.constant 0 : index
    %c0_344 = arith.constant 0 : index
    %358 = vector.load %arg6[%c6_342, %c0_343, %c0_344] : memref<8x8x256xf32, #tpu.memory_space<vmem>>, vector<1x8x16xf32>
    %359 = vector.shape_cast %358 : vector<1x8x16xf32> to vector<8x16xf32>
    %360 = arith.addf %357, %359 : vector<8x16xf32>
    %cst_345 = arith.constant 0.000000e+00 : f32
    %361 = vector.broadcast %cst_345 : f32 to vector<8x16xf32>
    %362 = arith.cmpf oge, %360, %361 : vector<8x16xf32>
    %cst_346 = arith.constant 2.000000e-01 : f32
    %363 = vector.broadcast %cst_346 : f32 to vector<8x16xf32>
    %364 = arith.mulf %363, %360 : vector<8x16xf32>
    %365 = arith.select %362, %360, %364 : vector<8x16xi1>, vector<8x16xf32>
    %cst_347 = arith.constant 0.353553385 : f32
    %366 = vector.broadcast %cst_347 : f32 to vector<8x16xf32>
    %367 = arith.mulf %102, %366 : vector<8x16xf32>
    %cst_348 = arith.constant dense<0.000000e+00> : vector<16x16xf32>
    %368 = tpu.matmul %365, %367, %cst_348 {dimension_numbers = #tpu.dot_dimension_numbers<[0], [0], [1], [1], [0, 1, 1, 1], [], []>} : vector<8x16xf32>, vector<8x16xf32>, vector<16x16xf32> -> vector<16x16xf32>
    %cst_349 = arith.constant dense<0xFF800000> : vector<16xf32>
    %369 = vector.multi_reduction <maximumf>, %368, %cst_349 [0] : vector<16x16xf32> to vector<16xf32>
    %370 = vector.shape_cast %369 : vector<16xf32> to vector<1x16xf32>
    %371 = vector.broadcast %370 : vector<1x16xf32> to vector<16x16xf32>
    %372 = arith.subf %368, %371 : vector<16x16xf32>
    %373 = math.exp %372 : vector<16x16xf32>
    %cst_350 = arith.constant dense<0.000000e+00> : vector<16xf32>
    %374 = vector.multi_reduction <add>, %373, %cst_350 [0] : vector<16x16xf32> to vector<16xf32>
    %375 = vector.shape_cast %374 : vector<16xf32> to vector<1x16xf32>
    %376 = tpu.reciprocal %375 {approx = true} : vector<1x16xf32> -> vector<1x16xf32>
    %cst_351 = arith.constant dense<0.000000e+00> : vector<8x16xf32>
    %377 = tpu.matmul %365, %373, %cst_351 {dimension_numbers = #tpu.dot_dimension_numbers<[1], [0], [0], [1], [0, 0, 1, 1], [], []>} : vector<8x16xf32>, vector<16x16xf32>, vector<8x16xf32> -> vector<8x16xf32>
    %378 = vector.broadcast %376 : vector<1x16xf32> to vector<8x16xf32>
    %379 = arith.mulf %377, %378 : vector<8x16xf32>
    %cst_352 = arith.constant 1.000000e+00 : f32
    %380 = vector.broadcast %cst_352 : f32 to vector<8x16xf32>
    %381 = arith.mulf %380, %379 : vector<8x16xf32>
    %382 = arith.addf %102, %381 : vector<8x16xf32>
    %c0_353 = arith.constant 0 : index
    %c0_354 = arith.constant 0 : index
    %c0_355 = arith.constant 0 : index
    %383 = vector.load %arg9[%c0_353, %c0_354, %c0_355] : memref<9x16x16xf32, #tpu.memory_space<vmem>>, vector<1x16x16xf32>
    %384 = vector.shape_cast %383 : vector<1x16x16xf32> to vector<16x16xf32>
    %cst_356 = arith.constant dense<0.000000e+00> : vector<8x16xf32>
    %385 = tpu.matmul %382, %384, %cst_356 {dimension_numbers = #tpu.dot_dimension_numbers<[1], [0], [0], [1], [0, 0, 1, 1], [], []>} : vector<8x16xf32>, vector<16x16xf32>, vector<8x16xf32> -> vector<8x16xf32>
    %c1_357 = arith.constant 1 : index
    %c0_358 = arith.constant 0 : index
    %c0_359 = arith.constant 0 : index
    %386 = vector.load %arg9[%c1_357, %c0_358, %c0_359] : memref<9x16x16xf32, #tpu.memory_space<vmem>>, vector<1x16x16xf32>
    %387 = vector.shape_cast %386 : vector<1x16x16xf32> to vector<16x16xf32>
    %cst_360 = arith.constant dense<0.000000e+00> : vector<8x16xf32>
    %388 = tpu.matmul %382, %387, %cst_360 {dimension_numbers = #tpu.dot_dimension_numbers<[1], [0], [0], [1], [0, 0, 1, 1], [], []>} : vector<8x16xf32>, vector<16x16xf32>, vector<8x16xf32> -> vector<8x16xf32>
    %c2_361 = arith.constant 2 : index
    %c0_362 = arith.constant 0 : index
    %c0_363 = arith.constant 0 : index
    %389 = vector.load %arg9[%c2_361, %c0_362, %c0_363] : memref<9x16x16xf32, #tpu.memory_space<vmem>>, vector<1x16x16xf32>
    %390 = vector.shape_cast %389 : vector<1x16x16xf32> to vector<16x16xf32>
    %cst_364 = arith.constant dense<0.000000e+00> : vector<8x16xf32>
    %391 = tpu.matmul %382, %390, %cst_364 {dimension_numbers = #tpu.dot_dimension_numbers<[1], [0], [0], [1], [0, 0, 1, 1], [], []>} : vector<8x16xf32>, vector<16x16xf32>, vector<8x16xf32> -> vector<8x16xf32>
    %c3_365 = arith.constant 3 : index
    %c0_366 = arith.constant 0 : index
    %c0_367 = arith.constant 0 : index
    %392 = vector.load %arg9[%c3_365, %c0_366, %c0_367] : memref<9x16x16xf32, #tpu.memory_space<vmem>>, vector<1x16x16xf32>
    %393 = vector.shape_cast %392 : vector<1x16x16xf32> to vector<16x16xf32>
    %cst_368 = arith.constant dense<0.000000e+00> : vector<8x16xf32>
    %394 = tpu.matmul %382, %393, %cst_368 {dimension_numbers = #tpu.dot_dimension_numbers<[1], [0], [0], [1], [0, 0, 1, 1], [], []>} : vector<8x16xf32>, vector<16x16xf32>, vector<8x16xf32> -> vector<8x16xf32>
    %c4_369 = arith.constant 4 : index
    %c0_370 = arith.constant 0 : index
    %c0_371 = arith.constant 0 : index
    %395 = vector.load %arg9[%c4_369, %c0_370, %c0_371] : memref<9x16x16xf32, #tpu.memory_space<vmem>>, vector<1x16x16xf32>
    %396 = vector.shape_cast %395 : vector<1x16x16xf32> to vector<16x16xf32>
    %cst_372 = arith.constant dense<0.000000e+00> : vector<8x16xf32>
    %397 = tpu.matmul %382, %396, %cst_372 {dimension_numbers = #tpu.dot_dimension_numbers<[1], [0], [0], [1], [0, 0, 1, 1], [], []>} : vector<8x16xf32>, vector<16x16xf32>, vector<8x16xf32> -> vector<8x16xf32>
    %c5_373 = arith.constant 5 : index
    %c0_374 = arith.constant 0 : index
    %c0_375 = arith.constant 0 : index
    %398 = vector.load %arg9[%c5_373, %c0_374, %c0_375] : memref<9x16x16xf32, #tpu.memory_space<vmem>>, vector<1x16x16xf32>
    %399 = vector.shape_cast %398 : vector<1x16x16xf32> to vector<16x16xf32>
    %cst_376 = arith.constant dense<0.000000e+00> : vector<8x16xf32>
    %400 = tpu.matmul %382, %399, %cst_376 {dimension_numbers = #tpu.dot_dimension_numbers<[1], [0], [0], [1], [0, 0, 1, 1], [], []>} : vector<8x16xf32>, vector<16x16xf32>, vector<8x16xf32> -> vector<8x16xf32>
    %c6_377 = arith.constant 6 : index
    %c0_378 = arith.constant 0 : index
    %c0_379 = arith.constant 0 : index
    %401 = vector.load %arg9[%c6_377, %c0_378, %c0_379] : memref<9x16x16xf32, #tpu.memory_space<vmem>>, vector<1x16x16xf32>
    %402 = vector.shape_cast %401 : vector<1x16x16xf32> to vector<16x16xf32>
    %cst_380 = arith.constant dense<0.000000e+00> : vector<8x16xf32>
    %403 = tpu.matmul %382, %402, %cst_380 {dimension_numbers = #tpu.dot_dimension_numbers<[1], [0], [0], [1], [0, 0, 1, 1], [], []>} : vector<8x16xf32>, vector<16x16xf32>, vector<8x16xf32> -> vector<8x16xf32>
    %c7_381 = arith.constant 7 : index
    %c0_382 = arith.constant 0 : index
    %c0_383 = arith.constant 0 : index
    %404 = vector.load %arg9[%c7_381, %c0_382, %c0_383] : memref<9x16x16xf32, #tpu.memory_space<vmem>>, vector<1x16x16xf32>
    %405 = vector.shape_cast %404 : vector<1x16x16xf32> to vector<16x16xf32>
    %cst_384 = arith.constant dense<0.000000e+00> : vector<8x16xf32>
    %406 = tpu.matmul %382, %405, %cst_384 {dimension_numbers = #tpu.dot_dimension_numbers<[1], [0], [0], [1], [0, 0, 1, 1], [], []>} : vector<8x16xf32>, vector<16x16xf32>, vector<8x16xf32> -> vector<8x16xf32>
    %c8_385 = arith.constant 8 : index
    %c0_386 = arith.constant 0 : index
    %c0_387 = arith.constant 0 : index
    %407 = vector.load %arg9[%c8_385, %c0_386, %c0_387] : memref<9x16x16xf32, #tpu.memory_space<vmem>>, vector<1x16x16xf32>
    %408 = vector.shape_cast %407 : vector<1x16x16xf32> to vector<16x16xf32>
    %cst_388 = arith.constant dense<0.000000e+00> : vector<8x16xf32>
    %409 = tpu.matmul %382, %408, %cst_388 {dimension_numbers = #tpu.dot_dimension_numbers<[1], [0], [0], [1], [0, 0, 1, 1], [], []>} : vector<8x16xf32>, vector<16x16xf32>, vector<8x16xf32> -> vector<8x16xf32>
    %410 = tpu.concatenate %385, %388, %391, %394, %397, %400, %403, %406, %409 in 0 : vector<8x16xf32>, vector<8x16xf32>, vector<8x16xf32>, vector<8x16xf32>, vector<8x16xf32>, vector<8x16xf32>, vector<8x16xf32>, vector<8x16xf32>, vector<8x16xf32> -> vector<72x16xf32>
    %c7_389 = arith.constant 7 : index
    %c0_390 = arith.constant 0 : index
    %c0_391 = arith.constant 0 : index
    %411 = vector.load %arg5[%c7_389, %c0_390, %c0_391] : memref<8x8x72xf32, #tpu.memory_space<vmem>>, vector<1x8x72xf32>
    %412 = vector.shape_cast %411 : vector<1x8x72xf32> to vector<8x72xf32>
    %cst_392 = arith.constant dense<0.000000e+00> : vector<8x16xf32>
    %413 = tpu.matmul %412, %410, %cst_392 {dimension_numbers = #tpu.dot_dimension_numbers<[1], [0], [0], [1], [0, 0, 1, 1], [], []>} : vector<8x72xf32>, vector<72x16xf32>, vector<8x16xf32> -> vector<8x16xf32>
    %c7_393 = arith.constant 7 : index
    %c0_394 = arith.constant 0 : index
    %c0_395 = arith.constant 0 : index
    %414 = vector.load %arg6[%c7_393, %c0_394, %c0_395] : memref<8x8x256xf32, #tpu.memory_space<vmem>>, vector<1x8x16xf32>
    %415 = vector.shape_cast %414 : vector<1x8x16xf32> to vector<8x16xf32>
    %416 = arith.addf %413, %415 : vector<8x16xf32>
    %cst_396 = arith.constant 0.000000e+00 : f32
    %417 = vector.broadcast %cst_396 : f32 to vector<8x16xf32>
    %418 = arith.cmpf oge, %416, %417 : vector<8x16xf32>
    %cst_397 = arith.constant 2.000000e-01 : f32
    %419 = vector.broadcast %cst_397 : f32 to vector<8x16xf32>
    %420 = arith.mulf %419, %416 : vector<8x16xf32>
    %421 = arith.select %418, %416, %420 : vector<8x16xi1>, vector<8x16xf32>
    %c0_398 = arith.constant 0 : index
    %c0_399 = arith.constant 0 : index
    %422 = vector.load %arg11[%c0_398, %c0_399] : memref<4x256xf32, #tpu.memory_space<vmem>>, vector<4x256xf32>
    %cst_400 = arith.constant dense<0.000000e+00> : vector<8x256xf32>
    %423 = tpu.matmul %7, %422, %cst_400 {dimension_numbers = #tpu.dot_dimension_numbers<[1], [0], [0], [1], [0, 0, 1, 1], [], []>} : vector<8x4xf32>, vector<4x256xf32>, vector<8x256xf32> -> vector<8x256xf32>
    %c0_401 = arith.constant 0 : index
    %c0_402 = arith.constant 0 : index
    %424 = vector.load %arg11[%c0_401, %c0_402] : memref<4x256xf32, #tpu.memory_space<vmem>>, vector<4x256xf32>
    %cst_403 = arith.constant dense<0.000000e+00> : vector<8x256xf32>
    %425 = tpu.matmul %46, %424, %cst_403 {dimension_numbers = #tpu.dot_dimension_numbers<[1], [0], [0], [1], [0, 0, 1, 1], [], []>} : vector<8x4xf32>, vector<4x256xf32>, vector<8x256xf32> -> vector<8x256xf32>
    %c0_404 = arith.constant 0 : index
    %c0_405 = arith.constant 0 : index
    %426 = vector.load %arg12[%c0_404, %c0_405] : memref<16x256xf32, #tpu.memory_space<vmem>>, vector<16x256xf32>
    %cst_406 = arith.constant dense<0.000000e+00> : vector<8x256xf32>
    %427 = tpu.matmul %421, %426, %cst_406 {dimension_numbers = #tpu.dot_dimension_numbers<[1], [0], [0], [1], [0, 0, 1, 1], [], []>} : vector<8x16xf32>, vector<16x256xf32>, vector<8x256xf32> -> vector<8x256xf32>
    %428 = tpu.concatenate %1, %214, %253, %423, %425, %427 in 0 : vector<8x256xf32>, vector<8x256xf32>, vector<8x256xf32>, vector<8x256xf32>, vector<8x256xf32>, vector<8x256xf32> -> vector<48x256xf32>
    %c0_407 = arith.constant 0 : index
    %c0_408 = arith.constant 0 : index
    %429 = vector.load %arg13[%c0_407, %c0_408] : memref<8x48xf32, #tpu.memory_space<vmem>>, vector<8x48xf32>
    %cst_409 = arith.constant dense<0.000000e+00> : vector<8x256xf32>
    %430 = tpu.matmul %429, %428, %cst_409 {dimension_numbers = #tpu.dot_dimension_numbers<[1], [0], [0], [1], [0, 0, 1, 1], [], []>} : vector<8x48xf32>, vector<48x256xf32>, vector<8x256xf32> -> vector<8x256xf32>
    %c0_410 = arith.constant 0 : index
    %c0_411 = arith.constant 0 : index
    %431 = vector.load %arg14[%c0_410, %c0_411] : memref<8x1xf32, #tpu.memory_space<vmem>>, vector<8x1xf32>
    %432 = vector.broadcast %431 : vector<8x1xf32> to vector<8x256xf32>
    %433 = arith.addf %430, %432 : vector<8x256xf32>
    %cst_412 = arith.constant 0.000000e+00 : f32
    %434 = vector.broadcast %cst_412 : f32 to vector<8x256xf32>
    %435 = arith.cmpf oge, %433, %434 : vector<8x256xf32>
    %cst_413 = arith.constant 2.000000e-01 : f32
    %436 = vector.broadcast %cst_413 : f32 to vector<8x256xf32>
    %437 = arith.mulf %436, %433 : vector<8x256xf32>
    %438 = arith.select %435, %433, %437 : vector<8x256xi1>, vector<8x256xf32>
    %c0_414 = arith.constant 0 : index
    %c0_415 = arith.constant 0 : index
    %c0_416 = arith.constant 0 : index
    %439 = vector.load %arg15[%c0_414, %c0_415, %c0_416] : memref<1x8x256xf32, #tpu.memory_space<vmem>>, vector<1x8x256xf32>
    %440 = vector.shape_cast %439 : vector<1x8x256xf32> to vector<8x256xf32>
    %441 = vector.shape_cast %438 : vector<8x256xf32> to vector<1x8x256xf32>
    tpu.vector_store %arg15[%c0_414, %c0_415, %c0_416], %441 {strides = array<i32>} : memref<1x8x256xf32, #tpu.memory_space<vmem>>, vector<1x8x256xf32>,
    return
  }
  func.func @transform_0(%arg0: i32) -> (i32, i32, i32) {
    %c0_i32 = arith.constant 0 : i32
    %c0_i32_0 = arith.constant 0 : i32
    %c0_i32_1 = arith.constant 0 : i32
    return %arg0, %c0_i32, %c0_i32_0 : i32, i32, i32
  }
  func.func @transform_1(%arg0: i32) -> (i32, i32, i32) {
    %c0_i32 = arith.constant 0 : i32
    %c0_i32_0 = arith.constant 0 : i32
    %c0_i32_1 = arith.constant 0 : i32
    return %arg0, %c0_i32, %c0_i32_0 : i32, i32, i32
  }
  func.func @transform_2(%arg0: i32) -> (i32, i32, i32) {
    %c0_i32 = arith.constant 0 : i32
    %c0_i32_0 = arith.constant 0 : i32
    %c0_i32_1 = arith.constant 0 : i32
    return %arg0, %c0_i32, %c0_i32_0 : i32, i32, i32
  }
  func.func @transform_3(%arg0: i32) -> (i32, i32, i32) {
    %c0_i32 = arith.constant 0 : i32
    %c0_i32_0 = arith.constant 0 : i32
    %c0_i32_1 = arith.constant 0 : i32
    return %arg0, %c0_i32, %c0_i32_0 : i32, i32, i32
  }
  func.func @transform_4(%arg0: i32) -> (i32, i32, i32) {
    %c0_i32 = arith.constant 0 : i32
    %c0_i32_0 = arith.constant 0 : i32
    %c0_i32_1 = arith.constant 0 : i32
    %c0_i32_2 = arith.constant 0 : i32
    return %c0_i32, %c0_i32_0, %c0_i32_1 : i32, i32, i32
  }
  func.func @transform_5(%arg0: i32) -> (i32, i32, i32) {
    %c0_i32 = arith.constant 0 : i32
    %c0_i32_0 = arith.constant 0 : i32
    %c0_i32_1 = arith.constant 0 : i32
    %c0_i32_2 = arith.constant 0 : i32
    return %c0_i32, %c0_i32_0, %c0_i32_1 : i32, i32, i32
  }
  func.func @transform_6(%arg0: i32) -> (i32, i32, i32) {
    %c0_i32 = arith.constant 0 : i32
    %c0_i32_0 = arith.constant 0 : i32
    %c0_i32_1 = arith.constant 0 : i32
    %c0_i32_2 = arith.constant 0 : i32
    return %c0_i32, %c0_i32_0, %c0_i32_1 : i32, i32, i32
  }
  func.func @transform_7(%arg0: i32) -> (i32, i32, i32) {
    %c0_i32 = arith.constant 0 : i32
    %c0_i32_0 = arith.constant 0 : i32
    %c0_i32_1 = arith.constant 0 : i32
    %c0_i32_2 = arith.constant 0 : i32
    return %c0_i32, %c0_i32_0, %c0_i32_1 : i32, i32, i32
  }
  func.func @transform_8(%arg0: i32) -> (i32, i32, i32) {
    %c0_i32 = arith.constant 0 : i32
    %c0_i32_0 = arith.constant 0 : i32
    %c0_i32_1 = arith.constant 0 : i32
    %c0_i32_2 = arith.constant 0 : i32
    return %c0_i32, %c0_i32_0, %c0_i32_1 : i32, i32, i32
  }
  func.func @transform_9(%arg0: i32) -> (i32, i32, i32) {
    %c0_i32 = arith.constant 0 : i32
    %c0_i32_0 = arith.constant 0 : i32
    %c0_i32_1 = arith.constant 0 : i32
    %c0_i32_2 = arith.constant 0 : i32
    return %c0_i32, %c0_i32_0, %c0_i32_1 : i32, i32, i32
  }
  func.func @transform_10(%arg0: i32) -> (i32, i32) {
    %c0_i32 = arith.constant 0 : i32
    %c0_i32_0 = arith.constant 0 : i32
    %c0_i32_1 = arith.constant 0 : i32
    return %c0_i32, %c0_i32_0 : i32, i32
  }
  func.func @transform_11(%arg0: i32) -> (i32, i32) {
    %c0_i32 = arith.constant 0 : i32
    %c0_i32_0 = arith.constant 0 : i32
    %c0_i32_1 = arith.constant 0 : i32
    return %c0_i32, %c0_i32_0 : i32, i32
  }
  func.func @transform_12(%arg0: i32) -> (i32, i32) {
    %c0_i32 = arith.constant 0 : i32
    %c0_i32_0 = arith.constant 0 : i32
    %c0_i32_1 = arith.constant 0 : i32
    return %c0_i32, %c0_i32_0 : i32, i32
  }
  func.func @transform_13(%arg0: i32) -> (i32, i32) {
    %c0_i32 = arith.constant 0 : i32
    %c0_i32_0 = arith.constant 0 : i32
    %c0_i32_1 = arith.constant 0 : i32
    return %c0_i32, %c0_i32_0 : i32, i32
  }
  func.func @transform_14(%arg0: i32) -> (i32, i32, i32) {
    %c0_i32 = arith.constant 0 : i32
    %c0_i32_0 = arith.constant 0 : i32
    %c0_i32_1 = arith.constant 0 : i32
    return %arg0, %c0_i32, %c0_i32_0 : i32, i32, i32
  }
}

</mosaic_0001>

<llo_original>
// kernel: bottomupupbottom.1
$region0: #{bottomupupbottom.1}
  #allocation0 [shape = 'u32[]', space=smem, size = 0x4, offset = 0x4, fixed_abs, tag = 'smem constant byte address 0x4 - core index']
  #allocation1 [shape = 'u32[72,128]{1,0:T(1,128)}', space=vmem, size = 0x9000, scoped, tag = 'internal scratch']
  %s0 = inlined_call_operand.vmem [shape: f32[2,8,256], index: 0, kind: input, shape index: {}]
  %s1 = inlined_call_operand.vmem [shape: f32[2,8,64], index: 1, kind: input, shape index: {}]
  %s2 = inlined_call_operand.vmem [shape: f32[2,8,16], index: 2, kind: input, shape index: {}]
  %s3 = inlined_call_operand.vmem [shape: f32[2,8,4], index: 3, kind: input, shape index: {}]
  %s4 = inlined_call_operand.hbm [shape: f32[8,8,72], index: 4, kind: input, shape index: {}]
  %s5 = inlined_call_operand.hbm [shape: f32[8,8,256], index: 5, kind: input, shape index: {}]
  %s6 = inlined_call_operand.hbm [shape: f32[9,256,256], index: 6, kind: input, shape index: {}]
  %s7 = inlined_call_operand.hbm [shape: f32[9,64,64], index: 7, kind: input, shape index: {}]
  %s8 = inlined_call_operand.hbm [shape: f32[9,16,16], index: 8, kind: input, shape index: {}]
  %s9 = inlined_call_operand.vmem [shape: f32[9,4,4], index: 9, kind: input, shape index: {}]
  %s10 = inlined_call_operand.hbm [shape: f32[4,256], index: 10, kind: input, shape index: {}]
  %s11 = inlined_call_operand.hbm [shape: f32[16,256], index: 11, kind: input, shape index: {}]
  %s12 = inlined_call_operand.hbm [shape: f32[8,48], index: 12, kind: input, shape index: {}]
  %s13 = inlined_call_operand.vmem [shape: f32[8,1], index: 13, kind: input, shape index: {}]
  %s14 = inlined_call_operand.vmem [shape: f32[2,8,256], index: 14, kind: output, shape index: {}]
  %s15 = sld [smem:[#allocation0]]
  $region121: #{bottomupupbottom.1} parent=0
    _
  %s17 = ssub.s32 1, %s15
  %s18 = scalar_select 0, %s17, %s15
  $region1: #{bottomupupbottom.1} parent=0
    #allocation2 [shape = 'u8[32768]{0}', space=vmem, size = 0x8000, scoped, tag = 'input window, operand 4, single buffered']
    #allocation3 [shape = 's32[2]{0}', space=sflag, size = 0x8, scoped, tag = 'scoped memory for bottomupupbottom.1']
    #allocation4 [shape = 'u8[65536]{0}', space=vmem, size = 0x10000, scoped, tag = 'input window, operand 5, single buffered']
    #allocation5 [shape = 's32[1]{0}', space=sflag, size = 0x4, scoped, tag = 'scoped memory for bottomupupbottom.1']
    #allocation6 [shape = 'u8[2359296]{0}', space=vmem, size = 0x240000, scoped, tag = 'input window, operand 6, single buffered']
    #allocation7 [shape = 'u8[294912]{0}', space=vmem, size = 0x48000, scoped, tag = 'input window, operand 7, single buffered']
    #allocation8 [shape = 's32[1]{0}', space=sflag, size = 0x4, scoped, tag = 'scoped memory for bottomupupbottom.1']
    #allocation9 [shape = 'u8[73728]{0}', space=vmem, size = 0x12000, scoped, tag = 'input window, operand 8, single buffered']
    #allocation10 [shape = 'u8[4096]{0}', space=vmem, size = 0x1000, scoped, tag = 'input window, operand 10, single buffered']
    #allocation11 [shape = 's32[1]{0}', space=sflag, size = 0x4, scoped, tag = 'scoped memory for bottomupupbottom.1']
    #allocation12 [shape = 'u8[16384]{0}', space=vmem, size = 0x4000, scoped, tag = 'input window, operand 11, single buffered']
    #allocation13 [shape = 'u8[4096]{0}', space=vmem, size = 0x1000, scoped, tag = 'input window, operand 12, single buffered']
    #allocation14 [shape = 's32[1]{0}', space=sflag, size = 0x4, scoped, tag = 'scoped memory for bottomupupbottom.1']
    %19 = vsyncpa [#allocation3], 0
    %20 = vsyncpa [#allocation5], 0
    %21 = vsyncpa [#allocation8], 0
    %22 = vsyncpa [#allocation11], 0
    %23 = vsyncpa [#allocation14], 0
    loop: start=0, step=1, limit=4
    $region2: #{bottomupupbottom.1} parent=1 // loop_pre_header
      _
    $region3: #{bottomupupbottom.1} parent=1 // loop_header
      %s25 = sphi 0, %s29
      %p26 = scmp.ge.s32.totalorder %s25, 4
      %s35 = sphi 0, %s37
      %s38 = sphi 0, %s35
      %s39 = sphi 0, %s38
      %s55 = sphi 0, %s39
      %s61 = sphi 0, %s63
      %s64 = sphi 0, %s61
      %s65 = sphi 0, %s64
      %s81 = sphi 0, %s65
      %s87 = sphi 0, %s89
      %s90 = sphi 0, %s87
      %s91 = sphi 0, %s90
      %s107 = sphi 0, %s91
      %s113 = sphi 0, %s115
      %s116 = sphi 0, %s113
      %s117 = sphi 0, %s116
      %s133 = sphi 0, %s117
      %s137 = sphi 0, %s137
      %s139 = sphi 0, %s137
      %s140 = sphi 0, %s139
      %s154 = sphi 0, %s140
      %s158 = sphi 0, %s158
      %s160 = sphi 0, %s158
      %s161 = sphi 0, %s160
      %s175 = sphi 0, %s161
      %s179 = sphi 0, %s179
      %s181 = sphi 0, %s179
      %s182 = sphi 0, %s181
      %s196 = sphi 0, %s182
      %s200 = sphi 0, %s200
      %s202 = sphi 0, %s200
      %s203 = sphi 0, %s202
      %s217 = sphi 0, %s203
      %s221 = sphi 0, %s221
      %s223 = sphi 0, %s221
      %s224 = sphi 0, %s223
      %s238 = sphi 0, %s224
      %s242 = sphi 0, %s242
      %s244 = sphi 0, %s242
      %s245 = sphi 0, %s244
      %s259 = sphi 0, %s245
      %s263 = sphi 0, %s263
      %s265 = sphi 0, %s263
      %s266 = sphi 0, %s265
      %s280 = sphi 0, %s266
      %s284 = sphi 0, %s284
      %s286 = sphi 0, %s284
      %s287 = sphi 0, %s286
      %s301 = sphi 0, %s287
      %s305 = sphi 0, %s305
      %s307 = sphi 0, %s305
      %s308 = sphi 0, %s307
      %s322 = sphi 0, %s308
      %s326 = sphi 0, %s326
      %s328 = sphi 0, %s326
      %s329 = sphi 0, %s328
      %s343 = sphi 0, %s329
      %s349 = sphi 0, %s351
      %s352 = sphi 0, %s349
      %s353 = sphi 0, %s352
      %s369 = sphi 0, %s353
    $region4: #{bottomupupbottom.1} parent=1 // loop_header_branch
      %28 = sbr.rel (%p26) target = $region8
    $region5: #{bottomupupbottom.1} parent=1 // loop_body
      %s30 = ssub.s32 %s25, 1
      %s31 = ssub.s32 %s25, 2
      %s32 = sadd.s32 %s25, 1
      %s33 = ssub.s32 %s25, %s32
      %p34 = scmp.eq.s32.totalorder %s33, 0
      %s36 = sadd.s32 %s35, 1
      %s37 = scalar_select %p34, %s35, %s36
      %p40 = pneg %p34
      %p41 = scmp.eq.s32.totalorder %s25, 1
      %p42 = por %p40, %p41
      %p43 = scmp.ne.s32.totalorder %s35, %s38
      %p44 = scmp.eq.s32.totalorder %s25, 0
      %p45 = por %p43, %p44
      %p46 = scmp.ne.s32.totalorder %s35, %s38
      %p47 = scmp.eq.s32.totalorder %s30, 1
      %p48 = por %p46, %p47
      %p49 = scmp.ne.s32.totalorder %s38, %s39
      %p50 = scmp.eq.s32.totalorder %s30, 0
      %p51 = por %p49, %p50
      %p52 = scmp.ne.s32.totalorder %s38, %s39
      %p53 = scmp.eq.s32.totalorder %s31, 1
      %p54 = por %p52, %p53
      %p56 = scmp.ne.s32.totalorder %s39, %s55
      %p57 = scmp.eq.s32.totalorder %s31, 0
      %p58 = por %p56, %p57
      %s59 = ssub.s32 %s25, %s32
      %p60 = scmp.eq.s32.totalorder %s59, 0
      %s62 = sadd.s32 %s61, 1
      %s63 = scalar_select %p60, %s61, %s62
      %p66 = pneg %p60
      %p67 = scmp.eq.s32.totalorder %s25, 1
      %p68 = por %p66, %p67
      %p69 = scmp.ne.s32.totalorder %s61, %s64
      %p70 = scmp.eq.s32.totalorder %s25, 0
      %p71 = por %p69, %p70
      %p72 = scmp.ne.s32.totalorder %s61, %s64
      %p73 = scmp.eq.s32.totalorder %s30, 1
      %p74 = por %p72, %p73
      %p75 = scmp.ne.s32.totalorder %s64, %s65
      %p76 = scmp.eq.s32.totalorder %s30, 0
      %p77 = por %p75, %p76
      %p78 = scmp.ne.s32.totalorder %s64, %s65
      %p79 = scmp.eq.s32.totalorder %s31, 1
      %p80 = por %p78, %p79
      %p82 = scmp.ne.s32.totalorder %s65, %s81
      %p83 = scmp.eq.s32.totalorder %s31, 0
      %p84 = por %p82, %p83
      %s85 = ssub.s32 %s25, %s32
      %p86 = scmp.eq.s32.totalorder %s85, 0
      %s88 = sadd.s32 %s87, 1
      %s89 = scalar_select %p86, %s87, %s88
      %p92 = pneg %p86
      %p93 = scmp.eq.s32.totalorder %s25, 1
      %p94 = por %p92, %p93
      %p95 = scmp.ne.s32.totalorder %s87, %s90
      %p96 = scmp.eq.s32.totalorder %s25, 0
      %p97 = por %p95, %p96
      %p98 = scmp.ne.s32.totalorder %s87, %s90
      %p99 = scmp.eq.s32.totalorder %s30, 1
      %p100 = por %p98, %p99
      %p101 = scmp.ne.s32.totalorder %s90, %s91
      %p102 = scmp.eq.s32.totalorder %s30, 0
      %p103 = por %p101, %p102
      %p104 = scmp.ne.s32.totalorder %s90, %s91
      %p105 = scmp.eq.s32.totalorder %s31, 1
      %p106 = por %p104, %p105
      %p108 = scmp.ne.s32.totalorder %s91, %s107
      %p109 = scmp.eq.s32.totalorder %s31, 0
      %p110 = por %p108, %p109
      %s111 = ssub.s32 %s25, %s32
      %p112 = scmp.eq.s32.totalorder %s111, 0
      %s114 = sadd.s32 %s113, 1
      %s115 = scalar_select %p112, %s113, %s114
      %p118 = pneg %p112
      %p119 = scmp.eq.s32.totalorder %s25, 1
      %p120 = por %p118, %p119
      %p121 = scmp.ne.s32.totalorder %s113, %s116
      %p122 = scmp.eq.s32.totalorder %s25, 0
      %p123 = por %p121, %p122
      %p124 = scmp.ne.s32.totalorder %s113, %s116
      %p125 = scmp.eq.s32.totalorder %s30, 1
      %p126 = por %p124, %p125
      %p127 = scmp.ne.s32.totalorder %s116, %s117
      %p128 = scmp.eq.s32.totalorder %s30, 0
      %p129 = por %p127, %p128
      %p130 = scmp.ne.s32.totalorder %s116, %s117
      %p131 = scmp.eq.s32.totalorder %s31, 1
      %p132 = por %p130, %p131
      %p134 = scmp.ne.s32.totalorder %s117, %s133
      %p135 = scmp.eq.s32.totalorder %s31, 0
      %p136 = por %p134, %p135
      %s138 = sadd.s32 %s137, 1
      %p141 = scmp.eq.s32.totalorder %s25, 1
      %p142 = scmp.ne.s32.totalorder %s137, %s139
      %p143 = scmp.eq.s32.totalorder %s25, 0
      %p144 = por %p142, %p143
      %p145 = scmp.ne.s32.totalorder %s137, %s139
      %p146 = scmp.eq.s32.totalorder %s30, 1
      %p147 = por %p145, %p146
      %p148 = scmp.ne.s32.totalorder %s139, %s140
      %p149 = scmp.eq.s32.totalorder %s30, 0
      %p150 = por %p148, %p149
      %p151 = scmp.ne.s32.totalorder %s139, %s140
      %p152 = scmp.eq.s32.totalorder %s31, 1
      %p153 = por %p151, %p152
      %p155 = scmp.ne.s32.totalorder %s140, %s154
      %p156 = scmp.eq.s32.totalorder %s31, 0
      %p157 = por %p155, %p156
      %s159 = sadd.s32 %s158, 1
      %p162 = scmp.eq.s32.totalorder %s25, 1
      %p163 = scmp.ne.s32.totalorder %s158, %s160
      %p164 = scmp.eq.s32.totalorder %s25, 0
      %p165 = por %p163, %p164
      %p166 = scmp.ne.s32.totalorder %s158, %s160
      %p167 = scmp.eq.s32.totalorder %s30, 1
      %p168 = por %p166, %p167
      %p169 = scmp.ne.s32.totalorder %s160, %s161
      %p170 = scmp.eq.s32.totalorder %s30, 0
      %p171 = por %p169, %p170
      %p172 = scmp.ne.s32.totalorder %s160, %s161
      %p173 = scmp.eq.s32.totalorder %s31, 1
      %p174 = por %p172, %p173
      %p176 = scmp.ne.s32.totalorder %s161, %s175
      %p177 = scmp.eq.s32.totalorder %s31, 0
      %p178 = por %p176, %p177
      %s180 = sadd.s32 %s179, 1
      %p183 = scmp.eq.s32.totalorder %s25, 1
      %p184 = scmp.ne.s32.totalorder %s179, %s181
      %p185 = scmp.eq.s32.totalorder %s25, 0
      %p186 = por %p184, %p185
      %p187 = scmp.ne.s32.totalorder %s179, %s181
      %p188 = scmp.eq.s32.totalorder %s30, 1
      %p189 = por %p187, %p188
      %p190 = scmp.ne.s32.totalorder %s181, %s182
      %p191 = scmp.eq.s32.totalorder %s30, 0
      %p192 = por %p190, %p191
      %p193 = scmp.ne.s32.totalorder %s181, %s182
      %p194 = scmp.eq.s32.totalorder %s31, 1
      %p195 = por %p193, %p194
      %p197 = scmp.ne.s32.totalorder %s182, %s196
      %p198 = scmp.eq.s32.totalorder %s31, 0
      %p199 = por %p197, %p198
      %s201 = sadd.s32 %s200, 1
      %p204 = scmp.eq.s32.totalorder %s25, 1
      %p205 = scmp.ne.s32.totalorder %s200, %s202
      %p206 = scmp.eq.s32.totalorder %s25, 0
      %p207 = por %p205, %p206
      %p208 = scmp.ne.s32.totalorder %s200, %s202
      %p209 = scmp.eq.s32.totalorder %s30, 1
      %p210 = por %p208, %p209
      %p211 = scmp.ne.s32.totalorder %s202, %s203
      %p212 = scmp.eq.s32.totalorder %s30, 0
      %p213 = por %p211, %p212
      %p214 = scmp.ne.s32.totalorder %s202, %s203
      %p215 = scmp.eq.s32.totalorder %s31, 1
      %p216 = por %p214, %p215
      %p218 = scmp.ne.s32.totalorder %s203, %s217
      %p219 = scmp.eq.s32.totalorder %s31, 0
      %p220 = por %p218, %p219
      %s222 = sadd.s32 %s221, 1
      %p225 = scmp.eq.s32.totalorder %s25, 1
      %p226 = scmp.ne.s32.totalorder %s221, %s223
      %p227 = scmp.eq.s32.totalorder %s25, 0
      %p228 = por %p226, %p227
      %p229 = scmp.ne.s32.totalorder %s221, %s223
      %p230 = scmp.eq.s32.totalorder %s30, 1
      %p231 = por %p229, %p230
      %p232 = scmp.ne.s32.totalorder %s223, %s224
      %p233 = scmp.eq.s32.totalorder %s30, 0
      %p234 = por %p232, %p233
      %p235 = scmp.ne.s32.totalorder %s223, %s224
      %p236 = scmp.eq.s32.totalorder %s31, 1
      %p237 = por %p235, %p236
      %p239 = scmp.ne.s32.totalorder %s224, %s238
      %p240 = scmp.eq.s32.totalorder %s31, 0
      %p241 = por %p239, %p240
      %s243 = sadd.s32 %s242, 1
      %p246 = scmp.eq.s32.totalorder %s25, 1
      %p247 = scmp.ne.s32.totalorder %s242, %s244
      %p248 = scmp.eq.s32.totalorder %s25, 0
      %p249 = por %p247, %p248
      %p250 = scmp.ne.s32.totalorder %s242, %s244
      %p251 = scmp.eq.s32.totalorder %s30, 1
      %p252 = por %p250, %p251
      %p253 = scmp.ne.s32.totalorder %s244, %s245
      %p254 = scmp.eq.s32.totalorder %s30, 0
      %p255 = por %p253, %p254
      %p256 = scmp.ne.s32.totalorder %s244, %s245
      %p257 = scmp.eq.s32.totalorder %s31, 1
      %p258 = por %p256, %p257
      %p260 = scmp.ne.s32.totalorder %s245, %s259
      %p261 = scmp.eq.s32.totalorder %s31, 0
      %p262 = por %p260, %p261
      %s264 = sadd.s32 %s263, 1
      %p267 = scmp.eq.s32.totalorder %s25, 1
      %p268 = scmp.ne.s32.totalorder %s263, %s265
      %p269 = scmp.eq.s32.totalorder %s25, 0
      %p270 = por %p268, %p269
      %p271 = scmp.ne.s32.totalorder %s263, %s265
      %p272 = scmp.eq.s32.totalorder %s30, 1
      %p273 = por %p271, %p272
      %p274 = scmp.ne.s32.totalorder %s265, %s266
      %p275 = scmp.eq.s32.totalorder %s30, 0
      %p276 = por %p274, %p275
      %p277 = scmp.ne.s32.totalorder %s265, %s266
      %p278 = scmp.eq.s32.totalorder %s31, 1
      %p279 = por %p277, %p278
      %p281 = scmp.ne.s32.totalorder %s266, %s280
      %p282 = scmp.eq.s32.totalorder %s31, 0
      %p283 = por %p281, %p282
      %s285 = sadd.s32 %s284, 1
      %p288 = scmp.eq.s32.totalorder %s25, 1
      %p289 = scmp.ne.s32.totalorder %s284, %s286
      %p290 = scmp.eq.s32.totalorder %s25, 0
      %p291 = por %p289, %p290
      %p292 = scmp.ne.s32.totalorder %s284, %s286
      %p293 = scmp.eq.s32.totalorder %s30, 1
      %p294 = por %p292, %p293
      %p295 = scmp.ne.s32.totalorder %s286, %s287
      %p296 = scmp.eq.s32.totalorder %s30, 0
      %p297 = por %p295, %p296
      %p298 = scmp.ne.s32.totalorder %s286, %s287
      %p299 = scmp.eq.s32.totalorder %s31, 1
      %p300 = por %p298, %p299
      %p302 = scmp.ne.s32.totalorder %s287, %s301
      %p303 = scmp.eq.s32.totalorder %s31, 0
      %p304 = por %p302, %p303
      %s306 = sadd.s32 %s305, 1
      %p309 = scmp.eq.s32.totalorder %s25, 1
      %p310 = scmp.ne.s32.totalorder %s305, %s307
      %p311 = scmp.eq.s32.totalorder %s25, 0
      %p312 = por %p310, %p311
      %p313 = scmp.ne.s32.totalorder %s305, %s307
      %p314 = scmp.eq.s32.totalorder %s30, 1
      %p315 = por %p313, %p314
      %p316 = scmp.ne.s32.totalorder %s307, %s308
      %p317 = scmp.eq.s32.totalorder %s30, 0
      %p318 = por %p316, %p317
      %p319 = scmp.ne.s32.totalorder %s307, %s308
      %p320 = scmp.eq.s32.totalorder %s31, 1
      %p321 = por %p319, %p320
      %p323 = scmp.ne.s32.totalorder %s308, %s322
      %p324 = scmp.eq.s32.totalorder %s31, 0
      %p325 = por %p323, %p324
      %s327 = sadd.s32 %s326, 1
      %p330 = scmp.eq.s32.totalorder %s25, 1
      %p331 = scmp.ne.s32.totalorder %s326, %s328
      %p332 = scmp.eq.s32.totalorder %s25, 0
      %p333 = por %p331, %p332
      %p334 = scmp.ne.s32.totalorder %s326, %s328
      %p335 = scmp.eq.s32.totalorder %s30, 1
      %p336 = por %p334, %p335
      %p337 = scmp.ne.s32.totalorder %s328, %s329
      %p338 = scmp.eq.s32.totalorder %s30, 0
      %p339 = por %p337, %p338
      %p340 = scmp.ne.s32.totalorder %s328, %s329
      %p341 = scmp.eq.s32.totalorder %s31, 1
      %p342 = por %p340, %p341
      %p344 = scmp.ne.s32.totalorder %s329, %s343
      %p345 = scmp.eq.s32.totalorder %s31, 0
      %p346 = por %p344, %p345
      %s347 = ssub.s32 %s25, %s32
      %p348 = scmp.eq.s32.totalorder %s347, 0
      %s350 = sadd.s32 %s349, 1
      %s351 = scalar_select %p348, %s349, %s350
      %p354 = pneg %p348
      %p355 = scmp.eq.s32.totalorder %s25, 1
      %p356 = por %p354, %p355
      %p357 = scmp.ne.s32.totalorder %s349, %s352
      %p358 = scmp.eq.s32.totalorder %s25, 0
      %p359 = por %p357, %p358
      %p360 = scmp.ne.s32.totalorder %s349, %s352
      %p361 = scmp.eq.s32.totalorder %s30, 1
      %p362 = por %p360, %p361
      %p363 = scmp.ne.s32.totalorder %s352, %s353
      %p364 = scmp.eq.s32.totalorder %s30, 0
      %p365 = por %p363, %p364
      %p366 = scmp.ne.s32.totalorder %s352, %s353
      %p367 = scmp.eq.s32.totalorder %s31, 1
      %p368 = por %p366, %p367
      %p370 = scmp.ne.s32.totalorder %s353, %s369
      %p371 = scmp.eq.s32.totalorder %s31, 0
      %p372 = por %p370, %p371
      %p373 = scmp.le.s32.totalorder 1, %s25
      %p374 = scmp.lt.s32.totalorder %s25, 3
      %p375 = pnand %p373, %p374
      %p376 = pneg %p375
      // Predicated region
      $region9: #{bottomupupbottom.1} parent=5 // pred_check
        _
      $region10: #{bottomupupbottom.1} parent=5 // pred_check_branch
        %378 = sbr.rel (%p375) target = $region12
      $region11: #{bottomupupbottom.1} parent=5 // pred_region
        %s379 = ssub.s32 %s25, 1
        // Predicated region
        $region13: #{bottomupupbottom.1} parent=11 // pred_check
          %p380 = pneg %p150
        $region14: #{bottomupupbottom.1} parent=11 // pred_check_branch
          %382 = sbr.rel (%p380) target = $region16
        $region15: #{bottomupupbottom.1} parent=11 // pred_region
          %384 = vsyncadd [#allocation3], 0
          %s385 = sshll.u32 %s4, 4
          %s386 = int_to_ptr.hbm [resolvable:$true] %s385
          %s387 = sshll.u32 [#allocation2], 4
          %s388 = int_to_ptr.vmem [resolvable:$true] %s387
          %393 = dma.hbm_to_vmem [thread:$0]  %s386, 1024, %s388, [#allocation3], 128, 128, 8
        $region16: #{bottomupupbottom.1} parent=11 // pred_fallthru
          _
        // Predicated region
        $region17: #{bottomupupbottom.1} parent=11 // pred_check
          %p394 = pneg %p171
        $region18: #{bottomupupbottom.1} parent=11 // pred_check_branch
          %396 = sbr.rel (%p394) target = $region20
        $region19: #{bottomupupbottom.1} parent=11 // pred_region
          %398 = vsyncadd [#allocation5], 0
          %s399 = sshll.u32 %s5, 4
          %s400 = int_to_ptr.hbm [resolvable:$true] %s399
          %s401 = sshll.u32 [#allocation4], 4
          %s402 = int_to_ptr.vmem [resolvable:$true] %s401
          %407 = dma.hbm_to_vmem [thread:$0]  %s400, 2048, %s402, [#allocation5], 256, 256, 16
        $region20: #{bottomupupbottom.1} parent=11 // pred_fallthru
          _
        // Predicated region
        $region21: #{bottomupupbottom.1} parent=11 // pred_check
          %p408 = pneg %p192
        $region22: #{bottomupupbottom.1} parent=11 // pred_check_branch
          %410 = sbr.rel (%p408) target = $region24
        $region23: #{bottomupupbottom.1} parent=11 // pred_region
          %412 = vsyncadd [#allocation5], 0
          %s413 = sshll.u32 %s6, 4
          %s414 = int_to_ptr.hbm [resolvable:$true] %s413
          %s415 = sshll.u32 [#allocation6], 4
          %s416 = int_to_ptr.vmem [resolvable:$true] %s415
          %421 = dma.hbm_to_vmem [thread:$0]  %s414, 73728, %s416, [#allocation5], 256, 256, 16
        $region24: #{bottomupupbottom.1} parent=11 // pred_fallthru
          _
        // Predicated region
        $region25: #{bottomupupbottom.1} parent=11 // pred_check
          %p422 = pneg %p213
        $region26: #{bottomupupbottom.1} parent=11 // pred_check_branch
          %424 = sbr.rel (%p422) target = $region28
        $region27: #{bottomupupbottom.1} parent=11 // pred_region
          %426 = vsyncadd [#allocation8], 0
          %s427 = sshll.u32 %s7, 4
          %s428 = int_to_ptr.hbm [resolvable:$true] %s427
          %s429 = sshll.u32 [#allocation7], 4
          %s430 = int_to_ptr.vmem [resolvable:$true] %s429
          %435 = dma.hbm_to_vmem [thread:$0]  %s428, 9216, %s430, [#allocation8], 128, 128, 8
        $region28: #{bottomupupbottom.1} parent=11 // pred_fallthru
          _
        // Predicated region
        $region29: #{bottomupupbottom.1} parent=11 // pred_check
          %p436 = pneg %p234
        $region30: #{bottomupupbottom.1} parent=11 // pred_check_branch
          %438 = sbr.rel (%p436) target = $region32
        $region31: #{bottomupupbottom.1} parent=11 // pred_region
          %440 = vsyncadd [#allocation8], 0
          %s441 = sshll.u32 %s8, 4
          %s442 = int_to_ptr.hbm [resolvable:$true] %s441
          %s443 = sshll.u32 [#allocation9], 4
          %s444 = int_to_ptr.vmem [resolvable:$true] %s443
          %449 = dma.hbm_to_vmem [thread:$0]  %s442, 2304, %s444, [#allocation8], 128, 128, 8
        $region32: #{bottomupupbottom.1} parent=11 // pred_fallthru
          _
        // Predicated region
        $region33: #{bottomupupbottom.1} parent=11 // pred_check
          %p450 = pneg %p255
        $region34: #{bottomupupbottom.1} parent=11 // pred_check_branch
          %452 = sbr.rel (%p450) target = $region36
        $region35: #{bottomupupbottom.1} parent=11 // pred_region
          _
        $region36: #{bottomupupbottom.1} parent=11 // pred_fallthru
          _
        // Predicated region
        $region37: #{bottomupupbottom.1} parent=11 // pred_check
          %p453 = pneg %p276
        $region38: #{bottomupupbottom.1} parent=11 // pred_check_branch
          %455 = sbr.rel (%p453) target = $region40
        $region39: #{bottomupupbottom.1} parent=11 // pred_region
          %457 = vsyncadd [#allocation11], 0
          %s459 = sshll.u32 %s10, 4
          %s460 = int_to_ptr.hbm [resolvable:$true] %s459
          %s461 = sshll.u32 [#allocation10], 4
          %s462 = int_to_ptr.vmem [resolvable:$true] %s461
          %464 = dma.hbm_to_vmem [thread:$0]  %s460, 128, %s462, [#allocation11]
        $region40: #{bottomupupbottom.1} parent=11 // pred_fallthru
          _
        // Predicated region
        $region41: #{bottomupupbottom.1} parent=11 // pred_check
          %p465 = pneg %p297
        $region42: #{bottomupupbottom.1} parent=11 // pred_check_branch
          %467 = sbr.rel (%p465) target = $region44
        $region43: #{bottomupupbottom.1} parent=11 // pred_region
          %469 = vsyncadd [#allocation11], 0
          %s470 = sshll.u32 %s11, 4
          %s471 = int_to_ptr.hbm [resolvable:$true] %s470
          %s472 = sshll.u32 [#allocation12], 4
          %s473 = int_to_ptr.vmem [resolvable:$true] %s472
          %478 = dma.hbm_to_vmem [thread:$0]  %s471, 512, %s473, [#allocation11], 256, 256, 16
        $region44: #{bottomupupbottom.1} parent=11 // pred_fallthru
          _
        // Predicated region
        $region45: #{bottomupupbottom.1} parent=11 // pred_check
          %p479 = pneg %p318
        $region46: #{bottomupupbottom.1} parent=11 // pred_check_branch
          %481 = sbr.rel (%p479) target = $region48
        $region47: #{bottomupupbottom.1} parent=11 // pred_region
          %483 = vsyncadd [#allocation14], 0
          %s485 = sshll.u32 %s12, 4
          %s486 = int_to_ptr.hbm [resolvable:$true] %s485
          %s487 = sshll.u32 [#allocation13], 4
          %s488 = int_to_ptr.vmem [resolvable:$true] %s487
          %490 = dma.hbm_to_vmem [thread:$0]  %s486, 128, %s488, [#allocation14]
        $region48: #{bottomupupbottom.1} parent=11 // pred_fallthru
          _
        // Predicated region
        $region49: #{bottomupupbottom.1} parent=11 // pred_check
          %p491 = pneg %p339
        $region50: #{bottomupupbottom.1} parent=11 // pred_check_branch
          %493 = sbr.rel (%p491) target = $region52
        $region51: #{bottomupupbottom.1} parent=11 // pred_region
          _
        $region52: #{bottomupupbottom.1} parent=11 // pred_fallthru
          _
      $region12: #{bottomupupbottom.1} parent=5 // pred_fallthru
        _
      %p494 = scmp.lt.s32.totalorder %s25, 2
      // Predicated region
      $region53: #{bottomupupbottom.1} parent=5 // pred_check
        %p495 = pneg %p494
      $region54: #{bottomupupbottom.1} parent=5 // pred_check_branch
        %497 = sbr.rel (%p495) target = $region56
      $region55: #{bottomupupbottom.1} parent=5 // pred_region
        // Predicated region
        $region57: #{bottomupupbottom.1} parent=55 // pred_check
          %p498 = pneg %p45
        $region58: #{bottomupupbottom.1} parent=55 // pred_check_branch
          %500 = sbr.rel (%p498) target = $region60
        $region59: #{bottomupupbottom.1} parent=55 // pred_region
          %p501 = scmp.lt.s32.totalorder %s25, 1
          %s502 = scalar_select %p501, %s25, 1
          %s503 = smul.addr %s502, 2
          %s504 = smul.addr %s503, 8
          %s505 = scalar_lea.vmem %s0, %s504
        $region60: #{bottomupupbottom.1} parent=55 // pred_fallthru
          _
        // Predicated region
        $region61: #{bottomupupbottom.1} parent=55 // pred_check
          %p506 = pneg %p71
        $region62: #{bottomupupbottom.1} parent=55 // pred_check_branch
          %508 = sbr.rel (%p506) target = $region64
        $region63: #{bottomupupbottom.1} parent=55 // pred_region
          %p509 = scmp.lt.s32.totalorder %s25, 1
          %s510 = scalar_select %p509, %s25, 1
          %s511 = smul.addr %s510, 8
          %s512 = scalar_lea.vmem %s1, %s511
        $region64: #{bottomupupbottom.1} parent=55 // pred_fallthru
          _
        // Predicated region
        $region65: #{bottomupupbottom.1} parent=55 // pred_check
          %p513 = pneg %p97
        $region66: #{bottomupupbottom.1} parent=55 // pred_check_branch
          %515 = sbr.rel (%p513) target = $region68
        $region67: #{bottomupupbottom.1} parent=55 // pred_region
          %p516 = scmp.lt.s32.totalorder %s25, 1
          %s517 = scalar_select %p516, %s25, 1
          %s518 = smul.addr %s517, 8
          %s519 = scalar_lea.vmem %s2, %s518
        $region68: #{bottomupupbottom.1} parent=55 // pred_fallthru
          _
        // Predicated region
        $region69: #{bottomupupbottom.1} parent=55 // pred_check
          %p520 = pneg %p123
        $region70: #{bottomupupbottom.1} parent=55 // pred_check_branch
          %522 = sbr.rel (%p520) target = $region72
        $region71: #{bottomupupbottom.1} parent=55 // pred_region
          %p523 = scmp.lt.s32.totalorder %s25, 1
          %s524 = scalar_select %p523, %s25, 1
          %s525 = smul.addr %s524, 8
          %s526 = scalar_lea.vmem %s3, %s525
        $region72: #{bottomupupbottom.1} parent=55 // pred_fallthru
          _
      $region56: #{bottomupupbottom.1} parent=5 // pred_fallthru
        _
      %p527 = scmp.le.s32.totalorder 1, %s25
      %p528 = scmp.lt.s32.totalorder %s25, 3
      %p529 = pnand %p527, %p528
      %p530 = pneg %p529
      // Predicated region
      $region73: #{bottomupupbottom.1} parent=5 // pred_check
        _
      $region74: #{bottomupupbottom.1} parent=5 // pred_check_branch
        %532 = sbr.rel (%p529) target = $region76
      $region75: #{bottomupupbottom.1} parent=5 // pred_region
        %s533 = ssub.s32 %s25, 1
        // Predicated region
        $region77: #{bottomupupbottom.1} parent=75 // pred_check
          %p534 = pneg %p150
        $region78: #{bottomupupbottom.1} parent=75 // pred_check_branch
          %536 = sbr.rel (%p534) target = $region80
        $region79: #{bottomupupbottom.1} parent=75 // pred_region
          %538 = dma.done [#allocation3], 1024
        $region80: #{bottomupupbottom.1} parent=75 // pred_fallthru
          _
        // Predicated region
        $region81: #{bottomupupbottom.1} parent=75 // pred_check
          %p539 = pneg %p171
        $region82: #{bottomupupbottom.1} parent=75 // pred_check_branch
          %541 = sbr.rel (%p539) target = $region84
        $region83: #{bottomupupbottom.1} parent=75 // pred_region
          %543 = dma.done [#allocation5], 2048
        $region84: #{bottomupupbottom.1} parent=75 // pred_fallthru
          _
        // Predicated region
        $region85: #{bottomupupbottom.1} parent=75 // pred_check
          %p544 = pneg %p192
        $region86: #{bottomupupbottom.1} parent=75 // pred_check_branch
          %546 = sbr.rel (%p544) target = $region88
        $region87: #{bottomupupbottom.1} parent=75 // pred_region
          %548 = dma.done [#allocation5], 73728
        $region88: #{bottomupupbottom.1} parent=75 // pred_fallthru
          _
        // Predicated region
        $region89: #{bottomupupbottom.1} parent=75 // pred_check
          %p549 = pneg %p213
        $region90: #{bottomupupbottom.1} parent=75 // pred_check_branch
          %551 = sbr.rel (%p549) target = $region92
        $region91: #{bottomupupbottom.1} parent=75 // pred_region
          %553 = dma.done [#allocation8], 9216
        $region92: #{bottomupupbottom.1} parent=75 // pred_fallthru
          _
        // Predicated region
        $region93: #{bottomupupbottom.1} parent=75 // pred_check
          %p554 = pneg %p234
        $region94: #{bottomupupbottom.1} parent=75 // pred_check_branch
          %556 = sbr.rel (%p554) target = $region96
        $region95: #{bottomupupbottom.1} parent=75 // pred_region
          %558 = dma.done [#allocation8], 2304
        $region96: #{bottomupupbottom.1} parent=75 // pred_fallthru
          _
        // Predicated region
        $region97: #{bottomupupbottom.1} parent=75 // pred_check
          %p559 = pneg %p276
        $region98: #{bottomupupbottom.1} parent=75 // pred_check_branch
          %561 = sbr.rel (%p559) target = $region100
        $region99: #{bottomupupbottom.1} parent=75 // pred_region
          %563 = dma.done [#allocation11], 128
        $region100: #{bottomupupbottom.1} parent=75 // pred_fallthru
          _
        // Predicated region
        $region101: #{bottomupupbottom.1} parent=75 // pred_check
          %p564 = pneg %p297
        $region102: #{bottomupupbottom.1} parent=75 // pred_check_branch
          %566 = sbr.rel (%p564) target = $region104
        $region103: #{bottomupupbottom.1} parent=75 // pred_region
          %568 = dma.done [#allocation11], 512
        $region104: #{bottomupupbottom.1} parent=75 // pred_fallthru
          _
        // Predicated region
        $region105: #{bottomupupbottom.1} parent=75 // pred_check
          %p569 = pneg %p318
        $region106: #{bottomupupbottom.1} parent=75 // pred_check_branch
          %571 = sbr.rel (%p569) target = $region108
        $region107: #{bottomupupbottom.1} parent=75 // pred_region
          %573 = dma.done [#allocation14], 128
        $region108: #{bottomupupbottom.1} parent=75 // pred_fallthru
          _
        %p574 = scmp.lt.s32.totalorder %s30, 1
        %s575 = scalar_select %p574, %s30, 1
        %s576 = smul.addr %s575, 2
        %s577 = smul.addr %s576, 8
        %s578 = scalar_lea.vmem %s0, %s577
        %p579 = pneg %p51
        %p580 = pneg %p48
        %p581 = scmp.lt.s32.totalorder %s30, 1
        %s582 = scalar_select %p581, %s30, 1
        %s583 = smul.addr %s582, 8
        %s584 = scalar_lea.vmem %s1, %s583
        %p585 = pneg %p77
        %p586 = pneg %p74
        %p587 = scmp.lt.s32.totalorder %s30, 1
        %s588 = scalar_select %p587, %s30, 1
        %s589 = smul.addr %s588, 8
        %s590 = scalar_lea.vmem %s2, %s589
        %p591 = pneg %p103
        %p592 = pneg %p100
        %p593 = scmp.lt.s32.totalorder %s30, 1
        %s594 = scalar_select %p593, %s30, 1
        %s595 = smul.addr %s594, 8
        %s596 = scalar_lea.vmem %s3, %s595
        %p597 = pneg %p129
        %p598 = pneg %p126
        %p599 = pneg %p150
        %p600 = pneg %p147
        %p601 = pneg %p171
        %p602 = pneg %p168
        %p603 = pneg %p192
        %p604 = pneg %p189
        %p605 = pneg %p213
        %p606 = pneg %p210
        %p607 = pneg %p234
        %p608 = pneg %p231
        %p609 = pneg %p255
        %p610 = pneg %p252
        %p611 = pneg %p276
        %p612 = pneg %p273
        %p613 = pneg %p297
        %p614 = pneg %p294
        %p615 = pneg %p318
        %p616 = pneg %p315
        %p617 = pneg %p339
        %p618 = pneg %p336
        %p619 = pneg %p365
        %p620 = pneg %p362
        %p621 = scmp.lt.s32.totalorder %s30, 1
        %s622 = scalar_select %p621, %s30, 1
        %s623 = smul.addr %s622, 2
        %s624 = smul.addr %s623, 8
        %s625 = scalar_lea.vmem %s14, %s624
        %p626 = scmp.lt.s32.totalorder %s30, 1
        %s627 = scalar_select %p626, %s30, 1
        %s628 = smul.addr %s627, 2
        %s629 = smul.addr %s628, 8
        %s630 = scalar_lea.vmem %s0, %s629
        %p631 = scmp.lt.s32.totalorder %s30, 1
        %s632 = scalar_select %p631, %s30, 1
        %s633 = smul.addr %s632, 8
        %s634 = scalar_lea.vmem %s1, %s633
        %p635 = scmp.lt.s32.totalorder %s30, 1
        %s636 = scalar_select %p635, %s30, 1
        %s637 = smul.addr %s636, 8
        %s638 = scalar_lea.vmem %s2, %s637
        %p639 = scmp.lt.s32.totalorder %s30, 1
        %s640 = scalar_select %p639, %s30, 1
        %s641 = smul.addr %s640, 8
        %s642 = scalar_lea.vmem %s3, %s641
        %p643 = scmp.lt.s32.totalorder %s30, 1
        %s644 = scalar_select %p643, %s30, 1
        %s645 = smul.addr %s644, 2
        %s646 = smul.addr %s645, 8
        %s647 = scalar_lea.vmem %s14, %s646
        %v648 = vld [vmem:[%s630] sm:$0xff]
        %v649 = vld [vmem:[%s630 + $0x8] sm:$0xff]
        %v650 = vld [vmem:[%s634] sm:$0xff]
        %v651 = vld [vmem:[%s638] sm:$0xff]
        %v652 = vld [vmem:[%s642] sm:$0xff]
        %v653 = vld [vmem:[%s9] sm:$0xf]
        %vm654 = vcmask 31744
        %v656 = vsel %vm654, %v652, 0
        %vm658 = vcmask 1043456
        %v660 = vsel %vm658, %v653, 0
        %662 = vmatpush.msra.mxu0 0.0
        %663 = vmatpush.msra.mxu0 0.0
        %664 = vmatpush.msra.mxu0 0.0
        %665 = vmatpush.msra.mxu0 0.0
        %666 = vmatpush.msra.mxu0 0.0
        %667 = vmatpush.msra.mxu0 0.0
        %668 = vmatpush.msra.mxu0 0.0
        %669 = vmatpush.msra.mxu0 0.0
        %670 = vmatpush.msra.mxu0 0.0
        %671 = vmatpush.msra.mxu0 0.0
        %672 = vmatpush.msra.mxu0 0.0
        %673 = vmatpush.msra.mxu0 0.0
        %674 = vmatpush.msra.mxu0 0.0
        %675 = vmatpush.msra.mxu0 0.0
        %676 = vmatpush.msra.mxu0 0.0
        %677 = vmatpush.msra.mxu0 %v660
        %678 = vmatmul.f32.gmra.mxu0 %v656
        %v679 = vpop.f32.mrf.mxu0
        %v680 = vadd.f32 0.0, %v679
        %681 = vdwg.mxu0
        %s682 = scalar_lea.vmem %s9, 4
        %v683 = vld [vmem:[%s682] sm:$0xf]
        %v685 = vsel %vm658, %v683, 0
        %687 = vmatpush.msra.mxu0 0.0
        %688 = vmatpush.msra.mxu0 0.0
        %689 = vmatpush.msra.mxu0 0.0
        %690 = vmatpush.msra.mxu0 0.0
        %691 = vmatpush.msra.mxu0 0.0
        %692 = vmatpush.msra.mxu0 0.0
        %693 = vmatpush.msra.mxu0 0.0
        %694 = vmatpush.msra.mxu0 0.0
        %695 = vmatpush.msra.mxu0 0.0
        %696 = vmatpush.msra.mxu0 0.0
        %697 = vmatpush.msra.mxu0 0.0
        %698 = vmatpush.msra.mxu0 0.0
        %699 = vmatpush.msra.mxu0 0.0
        %700 = vmatpush.msra.mxu0 0.0
        %701 = vmatpush.msra.mxu0 0.0
        %702 = vmatpush.msra.mxu0 %v685
        %703 = vmatmul.f32.gmra.mxu0 %v656
        %v704 = vpop.f32.mrf.mxu0
        %v705 = vadd.f32 0.0, %v704
        %706 = vdwg.mxu0
        %s707 = scalar_lea.vmem %s9, 8
        %v708 = vld [vmem:[%s707] sm:$0xf]
        %v710 = vsel %vm658, %v708, 0
        %712 = vmatpush.msra.mxu0 0.0
        %713 = vmatpush.msra.mxu0 0.0
        %714 = vmatpush.msra.mxu0 0.0
        %715 = vmatpush.msra.mxu0 0.0
        %716 = vmatpush.msra.mxu0 0.0
        %717 = vmatpush.msra.mxu0 0.0
        %718 = vmatpush.msra.mxu0 0.0
        %719 = vmatpush.msra.mxu0 0.0
        %720 = vmatpush.msra.mxu0 0.0
        %721 = vmatpush.msra.mxu0 0.0
        %722 = vmatpush.msra.mxu0 0.0
        %723 = vmatpush.msra.mxu0 0.0
        %724 = vmatpush.msra.mxu0 0.0
        %725 = vmatpush.msra.mxu0 0.0
        %726 = vmatpush.msra.mxu0 0.0
        %727 = vmatpush.msra.mxu0 %v710
        %728 = vmatmul.f32.gmra.mxu0 %v656
        %v729 = vpop.f32.mrf.mxu0
        %v730 = vadd.f32 0.0, %v729
        %731 = vdwg.mxu0
        %s732 = scalar_lea.vmem %s9, 12
        %v733 = vld [vmem:[%s732] sm:$0xf]
        %v735 = vsel %vm658, %v733, 0
        %737 = vmatpush.msra.mxu0 0.0
        %738 = vmatpush.msra.mxu0 0.0
        %739 = vmatpush.msra.mxu0 0.0
        %740 = vmatpush.msra.mxu0 0.0
        %741 = vmatpush.msra.mxu0 0.0
        %742 = vmatpush.msra.mxu0 0.0
        %743 = vmatpush.msra.mxu0 0.0
        %744 = vmatpush.msra.mxu0 0.0
        %745 = vmatpush.msra.mxu0 0.0
        %746 = vmatpush.msra.mxu0 0.0
        %747 = vmatpush.msra.mxu0 0.0
        %748 = vmatpush.msra.mxu0 0.0
        %749 = vmatpush.msra.mxu0 0.0
        %750 = vmatpush.msra.mxu0 0.0
        %751 = vmatpush.msra.mxu0 0.0
        %752 = vmatpush.msra.mxu0 %v735
        %753 = vmatmul.f32.gmra.mxu0 %v656
        %v754 = vpop.f32.mrf.mxu0
        %v755 = vadd.f32 0.0, %v754
        %756 = vdwg.mxu0
        %s757 = scalar_lea.vmem %s9, 16
        %v758 = vld [vmem:[%s757] sm:$0xf]
        %v760 = vsel %vm658, %v758, 0
        %762 = vmatpush.msra.mxu0 0.0
        %763 = vmatpush.msra.mxu0 0.0
        %764 = vmatpush.msra.mxu0 0.0
        %765 = vmatpush.msra.mxu0 0.0
        %766 = vmatpush.msra.mxu0 0.0
        %767 = vmatpush.msra.mxu0 0.0
        %768 = vmatpush.msra.mxu0 0.0
        %769 = vmatpush.msra.mxu0 0.0
        %770 = vmatpush.msra.mxu0 0.0
        %771 = vmatpush.msra.mxu0 0.0
        %772 = vmatpush.msra.mxu0 0.0
        %773 = vmatpush.msra.mxu0 0.0
        %774 = vmatpush.msra.mxu0 0.0
        %775 = vmatpush.msra.mxu0 0.0
        %776 = vmatpush.msra.mxu0 0.0
        %777 = vmatpush.msra.mxu0 %v760
        %778 = vmatmul.f32.gmra.mxu0 %v656
        %v779 = vpop.f32.mrf.mxu0
        %v780 = vadd.f32 0.0, %v779
        %781 = vdwg.mxu0
        %s782 = scalar_lea.vmem %s9, 20
        %v783 = vld [vmem:[%s782] sm:$0xf]
        %v785 = vsel %vm658, %v783, 0
        %787 = vmatpush.msra.mxu0 0.0
        %788 = vmatpush.msra.mxu0 0.0
        %789 = vmatpush.msra.mxu0 0.0
        %790 = vmatpush.msra.mxu0 0.0
        %791 = vmatpush.msra.mxu0 0.0
        %792 = vmatpush.msra.mxu0 0.0
        %793 = vmatpush.msra.mxu0 0.0
        %794 = vmatpush.msra.mxu0 0.0
        %795 = vmatpush.msra.mxu0 0.0
        %796 = vmatpush.msra.mxu0 0.0
        %797 = vmatpush.msra.mxu0 0.0
        %798 = vmatpush.msra.mxu0 0.0
        %799 = vmatpush.msra.mxu0 0.0
        %800 = vmatpush.msra.mxu0 0.0
        %801 = vmatpush.msra.mxu0 0.0
        %802 = vmatpush.msra.mxu0 %v785
        %803 = vmatmul.f32.gmra.mxu0 %v656
        %v804 = vpop.f32.mrf.mxu0
        %v805 = vadd.f32 0.0, %v804
        %806 = vdwg.mxu0
        %s807 = scalar_lea.vmem %s9, 24
        %v808 = vld [vmem:[%s807] sm:$0xf]
        %v810 = vsel %vm658, %v808, 0
        %812 = vmatpush.msra.mxu0 0.0
        %813 = vmatpush.msra.mxu0 0.0
        %814 = vmatpush.msra.mxu0 0.0
        %815 = vmatpush.msra.mxu0 0.0
        %816 = vmatpush.msra.mxu0 0.0
        %817 = vmatpush.msra.mxu0 0.0
        %818 = vmatpush.msra.mxu0 0.0
        %819 = vmatpush.msra.mxu0 0.0
        %820 = vmatpush.msra.mxu0 0.0
        %821 = vmatpush.msra.mxu0 0.0
        %822 = vmatpush.msra.mxu0 0.0
        %823 = vmatpush.msra.mxu0 0.0
        %824 = vmatpush.msra.mxu0 0.0
        %825 = vmatpush.msra.mxu0 0.0
        %826 = vmatpush.msra.mxu0 0.0
        %827 = vmatpush.msra.mxu0 %v810
        %828 = vmatmul.f32.gmra.mxu0 %v656
        %v829 = vpop.f32.mrf.mxu0
        %v830 = vadd.f32 0.0, %v829
        %831 = vdwg.mxu0
        %s832 = scalar_lea.vmem %s9, 28
        %v833 = vld [vmem:[%s832] sm:$0xf]
        %v835 = vsel %vm658, %v833, 0
        %837 = vmatpush.msra.mxu0 0.0
        %838 = vmatpush.msra.mxu0 0.0
        %839 = vmatpush.msra.mxu0 0.0
        %840 = vmatpush.msra.mxu0 0.0
        %841 = vmatpush.msra.mxu0 0.0
        %842 = vmatpush.msra.mxu0 0.0
        %843 = vmatpush.msra.mxu0 0.0
        %844 = vmatpush.msra.mxu0 0.0
        %845 = vmatpush.msra.mxu0 0.0
        %846 = vmatpush.msra.mxu0 0.0
        %847 = vmatpush.msra.mxu0 0.0
        %848 = vmatpush.msra.mxu0 0.0
        %849 = vmatpush.msra.mxu0 0.0
        %850 = vmatpush.msra.mxu0 0.0
        %851 = vmatpush.msra.mxu0 0.0
        %852 = vmatpush.msra.mxu0 %v835
        %853 = vmatmul.f32.gmra.mxu0 %v656
        %v854 = vpop.f32.mrf.mxu0
        %v855 = vadd.f32 0.0, %v854
        %856 = vdwg.mxu0
        %s857 = scalar_lea.vmem %s9, 32
        %v858 = vld [vmem:[%s857] sm:$0xf]
        %v860 = vsel %vm658, %v858, 0
        %862 = vmatpush.msra.mxu0 0.0
        %863 = vmatpush.msra.mxu0 0.0
        %864 = vmatpush.msra.mxu0 0.0
        %865 = vmatpush.msra.mxu0 0.0
        %866 = vmatpush.msra.mxu0 0.0
        %867 = vmatpush.msra.mxu0 0.0
        %868 = vmatpush.msra.mxu0 0.0
        %869 = vmatpush.msra.mxu0 0.0
        %870 = vmatpush.msra.mxu0 0.0
        %871 = vmatpush.msra.mxu0 0.0
        %872 = vmatpush.msra.mxu0 0.0
        %873 = vmatpush.msra.mxu0 0.0
        %874 = vmatpush.msra.mxu0 0.0
        %875 = vmatpush.msra.mxu0 0.0
        %876 = vmatpush.msra.mxu0 0.0
        %877 = vmatpush.msra.mxu0 %v860
        %878 = vmatmul.f32.gmra.mxu0 %v656
        %v879 = vpop.f32.mrf.mxu0
        %v880 = vadd.f32 0.0, %v879
        %881 = vdwg.mxu0
        %v882 = vld [vmem:[#allocation2] sm:$0xff]
        %v883 = vld [vmem:[#allocation4] sm:$0xff]
        %vm884 = vcmask 588800
        %v886 = vsel %vm884, %v882, 0
        %888 = vmatpush.msra.mxu0 0.0
        %889 = vmatpush.msra.mxu0 0.0
        %890 = vmatpush.msra.mxu0 0.0
        %891 = vmatpush.msra.mxu0 0.0
        %892 = vmatpush.msra.mxu0 0.0
        %893 = vmatpush.msra.mxu0 0.0
        %894 = vmatpush.msra.mxu0 0.0
        %895 = vmatpush.msra.mxu0 %v880
        %896 = vmatpush.msra.mxu0 %v855
        %897 = vmatpush.msra.mxu0 %v830
        %898 = vmatpush.msra.mxu0 %v805
        %899 = vmatpush.msra.mxu0 %v780
        %900 = vmatpush.msra.mxu0 %v755
        %901 = vmatpush.msra.mxu0 %v730
        %902 = vmatpush.msra.mxu0 %v705
        %903 = vmatpush.msra.mxu0 %v680
        %904 = vmatmul.f32.gmra.mxu0 %v886
        %v905 = vpop.f32.mrf.mxu0
        %v906 = vadd.f32 %v883, %v905
        %907 = vdwg.mxu0
        %vm908 = vcmp.ge.f32.partialorder %v906, 0.0
        %v909 = vmul.f32 %v906, 0.2
        %v910 = vsel %vm908, %v906, %v909
        %v911 = vmul.f32 %v651, 0.35355338
        %912 = vxpose.xlu0.b32.start [1/16] %v910, 128
        %913 = vxpose.xlu0.b32.cont [2/16] 0.0, 128
        %914 = vxpose.xlu0.b32.cont [3/16] 0.0, 128
        %915 = vxpose.xlu0.b32.cont [4/16] 0.0, 128
        %916 = vxpose.xlu0.b32.cont [5/16] 0.0, 128
        %917 = vxpose.xlu0.b32.cont [6/16] 0.0, 128
        %918 = vxpose.xlu0.b32.cont [7/16] 0.0, 128
        %919 = vxpose.xlu0.b32.cont [8/16] 0.0, 128
        %920 = vxpose.xlu0.b32.cont [9/16] 0.0, 128
        %921 = vxpose.xlu0.b32.cont [10/16] 0.0, 128
        %922 = vxpose.xlu0.b32.cont [11/16] 0.0, 128
        %923 = vxpose.xlu0.b32.cont [12/16] 0.0, 128
        %924 = vxpose.xlu0.b32.cont [13/16] 0.0, 128
        %925 = vxpose.xlu0.b32.cont [14/16] 0.0, 128
        %926 = vxpose.xlu0.b32.cont [15/16] 0.0, 128
        %927 = vxpose.xlu0.b32.end [16/16] 0.0, 128
        %v928 = vpop.trf.xlu0
        %v929 = vpop.trf.xlu0
        %v930 = vpop.trf.xlu0
        %v931 = vpop.trf.xlu0
        %v932 = vpop.trf.xlu0
        %v933 = vpop.trf.xlu0
        %v934 = vpop.trf.xlu0
        %v935 = vpop.trf.xlu0
        %v936 = vpop.trf.xlu0
        %v937 = vpop.trf.xlu0
        %v938 = vpop.trf.xlu0
        %v939 = vpop.trf.xlu0
        %v940 = vpop.trf.xlu0
        %v941 = vpop.trf.xlu0
        %v942 = vpop.trf.xlu0
        %v943 = vpop.trf.xlu0
        %vm944 = vcmask 64512
        %v946 = vsel %vm944, %v928, 0
        %948 = vmatpush.msra.mxu0 0.0
        %949 = vmatpush.msra.mxu0 0.0
        %950 = vmatpush.msra.mxu0 0.0
        %951 = vmatpush.msra.mxu0 0.0
        %952 = vmatpush.msra.mxu0 0.0
        %953 = vmatpush.msra.mxu0 0.0
        %954 = vmatpush.msra.mxu0 0.0
        %955 = vmatpush.msra.mxu0 0.0
        %956 = vmatpush.msra.mxu0 0.0
        %957 = vmatpush.msra.mxu0 0.0
        %958 = vmatpush.msra.mxu0 0.0
        %959 = vmatpush.msra.mxu0 0.0
        %960 = vmatpush.msra.mxu0 0.0
        %961 = vmatpush.msra.mxu0 0.0
        %962 = vmatpush.msra.mxu0 0.0
        %963 = vmatpush.msra.mxu0 %v911
        %964 = vmatmul.f32.gmra.mxu0 %v946
        %v965 = vpop.f32.mrf.mxu0
        %v966 = vadd.f32 0.0, %v965
        %967 = vdwg.mxu0
        %vm968 = vcmask 125952
        %v969 = vsel %vm968, %v966, -inf
        %v970 = vrot.slane %v969, 4
        %v971 = vmax.f32 %v969, %v970
        %v972 = vrot.slane %v971, 2
        %v973 = vmax.f32 %v971, %v972
        %v974 = vrot.slane %v973, 1
        %v975 = vmax.f32 %v973, %v974
        %v976 = vsub.f32 %v966, %v975
        %v977 = vmul.f32 %v976, 1.442695
        %v978 = vpow.pop %v977
        %v979 = vsel %vm968, %v978, 0.0
        %v980 = vrot.slane %v979, 4
        %v981 = vadd.f32 %v979, %v980
        %v982 = vrot.slane %v981, 2
        %v983 = vadd.f32 %v981, %v982
        %v984 = vrot.slane %v983, 1
        %v985 = vadd.f32 %v983, %v984
        %v986 = vrcp.pop %v985
        %v988 = vsel %vm654, %v910, 0
        %v991 = vsel %vm658, %v978, 0
        %993 = vmatpush.msra.mxu0 0.0
        %994 = vmatpush.msra.mxu0 0.0
        %995 = vmatpush.msra.mxu0 0.0
        %996 = vmatpush.msra.mxu0 0.0
        %997 = vmatpush.msra.mxu0 0.0
        %998 = vmatpush.msra.mxu0 0.0
        %999 = vmatpush.msra.mxu0 0.0
        %1000 = vmatpush.msra.mxu0 0.0
        %1001 = vmatpush.msra.mxu0 0.0
        %1002 = vmatpush.msra.mxu0 0.0
        %1003 = vmatpush.msra.mxu0 0.0
        %1004 = vmatpush.msra.mxu0 0.0
        %1005 = vmatpush.msra.mxu0 0.0
        %1006 = vmatpush.msra.mxu0 0.0
        %1007 = vmatpush.msra.mxu0 0.0
        %1008 = vmatpush.msra.mxu0 %v991
        %1009 = vmatmul.f32.gmra.mxu0 %v988
        %v1010 = vpop.f32.mrf.mxu0
        %v1011 = vadd.f32 0.0, %v1010
        %1012 = vdwg.mxu0
        %v1013 = vmul.f32 %v1011, %v986
        %v1014 = vadd.f32 %v651, %v1013
        %v1015 = vld [vmem:[#allocation9] sm:$0xff]
        %v1016 = vld [vmem:[#allocation9 + $0x8] sm:$0xff]
        %vm1017 = vcmask 130048
        %v1019 = vsel %vm1017, %v1014, 0
        %1021 = vmatpush.msra.mxu0 0.0
        %1022 = vmatpush.msra.mxu0 0.0
        %1023 = vmatpush.msra.mxu0 0.0
        %1024 = vmatpush.msra.mxu0 0.0
        %1025 = vmatpush.msra.mxu0 0.0
        %1026 = vmatpush.msra.mxu0 0.0
        %1027 = vmatpush.msra.mxu0 0.0
        %1028 = vmatpush.msra.mxu0 0.0
        %1029 = vmatpush.msra.mxu0 0.0
        %1030 = vmatpush.msra.mxu0 0.0
        %1031 = vmatpush.msra.mxu0 0.0
        %1032 = vmatpush.msra.mxu0 0.0
        %1033 = vmatpush.msra.mxu0 0.0
        %1034 = vmatpush.msra.mxu0 0.0
        %1035 = vmatpush.msra.mxu0 %v1016
        %1036 = vmatpush.msra.mxu0 %v1015
        %1037 = vmatmul.f32.gmra.mxu0 %v1019
        %v1038 = vpop.f32.mrf.mxu0
        %v1039 = vadd.f32 0.0, %v1038
        %1040 = vdwg.mxu0
        %s1041 = scalar_lea.vmem [#allocation9], 16
        %v1042 = vld [vmem:[%s1041] sm:$0xff]
        %v1043 = vld [vmem:[%s1041 + $0x8] sm:$0xff]
        %1044 = vmatpush.msra.mxu0 0.0
        %1045 = vmatpush.msra.mxu0 0.0
        %1046 = vmatpush.msra.mxu0 0.0
        %1047 = vmatpush.msra.mxu0 0.0
        %1048 = vmatpush.msra.mxu0 0.0
        %1049 = vmatpush.msra.mxu0 0.0
        %1050 = vmatpush.msra.mxu0 0.0
        %1051 = vmatpush.msra.mxu0 0.0
        %1052 = vmatpush.msra.mxu0 0.0
        %1053 = vmatpush.msra.mxu0 0.0
        %1054 = vmatpush.msra.mxu0 0.0
        %1055 = vmatpush.msra.mxu0 0.0
        %1056 = vmatpush.msra.mxu0 0.0
        %1057 = vmatpush.msra.mxu0 0.0
        %1058 = vmatpush.msra.mxu0 %v1043
        %1059 = vmatpush.msra.mxu0 %v1042
        %1060 = vmatmul.f32.gmra.mxu0 %v1019
        %v1061 = vpop.f32.mrf.mxu0
        %v1062 = vadd.f32 0.0, %v1061
        %1063 = vdwg.mxu0
        %s1064 = scalar_lea.vmem [#allocation9], 32
        %v1065 = vld [vmem:[%s1064] sm:$0xff]
        %v1066 = vld [vmem:[%s1064 + $0x8] sm:$0xff]
        %1067 = vmatpush.msra.mxu0 0.0
        %1068 = vmatpush.msra.mxu0 0.0
        %1069 = vmatpush.msra.mxu0 0.0
        %1070 = vmatpush.msra.mxu0 0.0
        %1071 = vmatpush.msra.mxu0 0.0
        %1072 = vmatpush.msra.mxu0 0.0
        %1073 = vmatpush.msra.mxu0 0.0
        %1074 = vmatpush.msra.mxu0 0.0
        %1075 = vmatpush.msra.mxu0 0.0
        %1076 = vmatpush.msra.mxu0 0.0
        %1077 = vmatpush.msra.mxu0 0.0
        %1078 = vmatpush.msra.mxu0 0.0
        %1079 = vmatpush.msra.mxu0 0.0
        %1080 = vmatpush.msra.mxu0 0.0
        %1081 = vmatpush.msra.mxu0 %v1066
        %1082 = vmatpush.msra.mxu0 %v1065
        %1083 = vmatmul.f32.gmra.mxu0 %v1019
        %v1084 = vpop.f32.mrf.mxu0
        %v1085 = vadd.f32 0.0, %v1084
        %1086 = vdwg.mxu0
        %s1087 = scalar_lea.vmem [#allocation9], 48
        %v1088 = vld [vmem:[%s1087] sm:$0xff]
        %v1089 = vld [vmem:[%s1087 + $0x8] sm:$0xff]
        %1090 = vmatpush.msra.mxu0 0.0
        %1091 = vmatpush.msra.mxu0 0.0
        %1092 = vmatpush.msra.mxu0 0.0
        %1093 = vmatpush.msra.mxu0 0.0
        %1094 = vmatpush.msra.mxu0 0.0
        %1095 = vmatpush.msra.mxu0 0.0
        %1096 = vmatpush.msra.mxu0 0.0
        %1097 = vmatpush.msra.mxu0 0.0
        %1098 = vmatpush.msra.mxu0 0.0
        %1099 = vmatpush.msra.mxu0 0.0
        %1100 = vmatpush.msra.mxu0 0.0
        %1101 = vmatpush.msra.mxu0 0.0
        %1102 = vmatpush.msra.mxu0 0.0
        %1103 = vmatpush.msra.mxu0 0.0
        %1104 = vmatpush.msra.mxu0 %v1089
        %1105 = vmatpush.msra.mxu0 %v1088
        %1106 = vmatmul.f32.gmra.mxu0 %v1019
        %v1107 = vpop.f32.mrf.mxu0
        %v1108 = vadd.f32 0.0, %v1107
        %1109 = vdwg.mxu0
        %s1110 = scalar_lea.vmem [#allocation9], 64
        %v1111 = vld [vmem:[%s1110] sm:$0xff]
        %v1112 = vld [vmem:[%s1110 + $0x8] sm:$0xff]
        %1113 = vmatpush.msra.mxu0 0.0
        %1114 = vmatpush.msra.mxu0 0.0
        %1115 = vmatpush.msra.mxu0 0.0
        %1116 = vmatpush.msra.mxu0 0.0
        %1117 = vmatpush.msra.mxu0 0.0
        %1118 = vmatpush.msra.mxu0 0.0
        %1119 = vmatpush.msra.mxu0 0.0
        %1120 = vmatpush.msra.mxu0 0.0
        %1121 = vmatpush.msra.mxu0 0.0
        %1122 = vmatpush.msra.mxu0 0.0
        %1123 = vmatpush.msra.mxu0 0.0
        %1124 = vmatpush.msra.mxu0 0.0
        %1125 = vmatpush.msra.mxu0 0.0
        %1126 = vmatpush.msra.mxu0 0.0
        %1127 = vmatpush.msra.mxu0 %v1112
        %1128 = vmatpush.msra.mxu0 %v1111
        %1129 = vmatmul.f32.gmra.mxu0 %v1019
        %v1130 = vpop.f32.mrf.mxu0
        %v1131 = vadd.f32 0.0, %v1130
        %1132 = vdwg.mxu0
        %s1133 = scalar_lea.vmem [#allocation9], 80
        %v1134 = vld [vmem:[%s1133] sm:$0xff]
        %v1135 = vld [vmem:[%s1133 + $0x8] sm:$0xff]
        %1136 = vmatpush.msra.mxu0 0.0
        %1137 = vmatpush.msra.mxu0 0.0
        %1138 = vmatpush.msra.mxu0 0.0
        %1139 = vmatpush.msra.mxu0 0.0
        %1140 = vmatpush.msra.mxu0 0.0
        %1141 = vmatpush.msra.mxu0 0.0
        %1142 = vmatpush.msra.mxu0 0.0
        %1143 = vmatpush.msra.mxu0 0.0
        %1144 = vmatpush.msra.mxu0 0.0
        %1145 = vmatpush.msra.mxu0 0.0
        %1146 = vmatpush.msra.mxu0 0.0
        %1147 = vmatpush.msra.mxu0 0.0
        %1148 = vmatpush.msra.mxu0 0.0
        %1149 = vmatpush.msra.mxu0 0.0
        %1150 = vmatpush.msra.mxu0 %v1135
        %1151 = vmatpush.msra.mxu0 %v1134
        %1152 = vmatmul.f32.gmra.mxu0 %v1019
        %v1153 = vpop.f32.mrf.mxu0
        %v1154 = vadd.f32 0.0, %v1153
        %1155 = vdwg.mxu0
        %s1156 = scalar_lea.vmem [#allocation9], 96
        %v1157 = vld [vmem:[%s1156] sm:$0xff]
        %v1158 = vld [vmem:[%s1156 + $0x8] sm:$0xff]
        %1159 = vmatpush.msra.mxu0 0.0
        %1160 = vmatpush.msra.mxu0 0.0
        %1161 = vmatpush.msra.mxu0 0.0
        %1162 = vmatpush.msra.mxu0 0.0
        %1163 = vmatpush.msra.mxu0 0.0
        %1164 = vmatpush.msra.mxu0 0.0
        %1165 = vmatpush.msra.mxu0 0.0
        %1166 = vmatpush.msra.mxu0 0.0
        %1167 = vmatpush.msra.mxu0 0.0
        %1168 = vmatpush.msra.mxu0 0.0
        %1169 = vmatpush.msra.mxu0 0.0
        %1170 = vmatpush.msra.mxu0 0.0
        %1171 = vmatpush.msra.mxu0 0.0
        %1172 = vmatpush.msra.mxu0 0.0
        %1173 = vmatpush.msra.mxu0 %v1158
        %1174 = vmatpush.msra.mxu0 %v1157
        %1175 = vmatmul.f32.gmra.mxu0 %v1019
        %v1176 = vpop.f32.mrf.mxu0
        %v1177 = vadd.f32 0.0, %v1176
        %1178 = vdwg.mxu0
        %s1179 = scalar_lea.vmem [#allocation9], 112
        %v1180 = vld [vmem:[%s1179] sm:$0xff]
        %v1181 = vld [vmem:[%s1179 + $0x8] sm:$0xff]
        %1182 = vmatpush.msra.mxu0 0.0
        %1183 = vmatpush.msra.mxu0 0.0
        %1184 = vmatpush.msra.mxu0 0.0
        %1185 = vmatpush.msra.mxu0 0.0
        %1186 = vmatpush.msra.mxu0 0.0
        %1187 = vmatpush.msra.mxu0 0.0
        %1188 = vmatpush.msra.mxu0 0.0
        %1189 = vmatpush.msra.mxu0 0.0
        %1190 = vmatpush.msra.mxu0 0.0
        %1191 = vmatpush.msra.mxu0 0.0
        %1192 = vmatpush.msra.mxu0 0.0
        %1193 = vmatpush.msra.mxu0 0.0
        %1194 = vmatpush.msra.mxu0 0.0
        %1195 = vmatpush.msra.mxu0 0.0
        %1196 = vmatpush.msra.mxu0 %v1181
        %1197 = vmatpush.msra.mxu0 %v1180
        %1198 = vmatmul.f32.gmra.mxu0 %v1019
        %v1199 = vpop.f32.mrf.mxu0
        %v1200 = vadd.f32 0.0, %v1199
        %1201 = vdwg.mxu0
        %s1202 = scalar_lea.vmem [#allocation9], 128
        %v1203 = vld [vmem:[%s1202] sm:$0xff]
        %v1204 = vld [vmem:[%s1202 + $0x8] sm:$0xff]
        %1205 = vmatpush.msra.mxu0 0.0
        %1206 = vmatpush.msra.mxu0 0.0
        %1207 = vmatpush.msra.mxu0 0.0
        %1208 = vmatpush.msra.mxu0 0.0
        %1209 = vmatpush.msra.mxu0 0.0
        %1210 = vmatpush.msra.mxu0 0.0
        %1211 = vmatpush.msra.mxu0 0.0
        %1212 = vmatpush.msra.mxu0 0.0
        %1213 = vmatpush.msra.mxu0 0.0
        %1214 = vmatpush.msra.mxu0 0.0
        %1215 = vmatpush.msra.mxu0 0.0
        %1216 = vmatpush.msra.mxu0 0.0
        %1217 = vmatpush.msra.mxu0 0.0
        %1218 = vmatpush.msra.mxu0 0.0
        %1219 = vmatpush.msra.mxu0 %v1204
        %1220 = vmatpush.msra.mxu0 %v1203
        %1221 = vmatmul.f32.gmra.mxu0 %v1019
        %v1222 = vpop.f32.mrf.mxu0
        %v1223 = vadd.f32 0.0, %v1222
        %1224 = vdwg.mxu0
        %s1225 = scalar_lea.vmem [#allocation2], 8
        %v1226 = vld [vmem:[%s1225] sm:$0xff]
        %s1227 = scalar_lea.vmem [#allocation4], 16
        %v1228 = vld [vmem:[%s1227] sm:$0xff]
        %v1230 = vsel %vm884, %v1226, 0
        %1232 = vmatpush.msra.mxu0 0.0
        %1233 = vmatpush.msra.mxu0 0.0
        %1234 = vmatpush.msra.mxu0 0.0
        %1235 = vmatpush.msra.mxu0 0.0
        %1236 = vmatpush.msra.mxu0 0.0
        %1237 = vmatpush.msra.mxu0 0.0
        %1238 = vmatpush.msra.mxu0 0.0
        %1239 = vmatpush.msra.mxu0 %v1223
        %1240 = vmatpush.msra.mxu0 %v1200
        %1241 = vmatpush.msra.mxu0 %v1177
        %1242 = vmatpush.msra.mxu0 %v1154
        %1243 = vmatpush.msra.mxu0 %v1131
        %1244 = vmatpush.msra.mxu0 %v1108
        %1245 = vmatpush.msra.mxu0 %v1085
        %1246 = vmatpush.msra.mxu0 %v1062
        %1247 = vmatpush.msra.mxu0 %v1039
        %1248 = vmatmul.f32.gmra.mxu0 %v1230
        %v1249 = vpop.f32.mrf.mxu0
        %v1250 = vadd.f32 %v1228, %v1249
        %1251 = vdwg.mxu0
        %vm1252 = vcmp.ge.f32.partialorder %v1250, 0.0
        %v1253 = vmul.f32 %v1250, 0.2
        %v1254 = vsel %vm1252, %v1250, %v1253
        %v1255 = vmul.f32 %v650, 0.35355338
        %1256 = vxpose.xlu0.b32.start [1/16] %v1254, 128
        %1257 = vxpose.xlu0.b32.cont [2/16] 0.0, 128
        %1258 = vxpose.xlu0.b32.cont [3/16] 0.0, 128
        %1259 = vxpose.xlu0.b32.cont [4/16] 0.0, 128
        %1260 = vxpose.xlu0.b32.cont [5/16] 0.0, 128
        %1261 = vxpose.xlu0.b32.cont [6/16] 0.0, 128
        %1262 = vxpose.xlu0.b32.cont [7/16] 0.0, 128
        %1263 = vxpose.xlu0.b32.cont [8/16] 0.0, 128
        %1264 = vxpose.xlu0.b32.cont [9/16] 0.0, 128
        %1265 = vxpose.xlu0.b32.cont [10/16] 0.0, 128
        %1266 = vxpose.xlu0.b32.cont [11/16] 0.0, 128
        %1267 = vxpose.xlu0.b32.cont [12/16] 0.0, 128
        %1268 = vxpose.xlu0.b32.cont [13/16] 0.0, 128
        %1269 = vxpose.xlu0.b32.cont [14/16] 0.0, 128
        %1270 = vxpose.xlu0.b32.cont [15/16] 0.0, 128
        %1271 = vxpose.xlu0.b32.end [16/16] 0.0, 128
        %v1272 = vpop.trf.xlu0
        %v1273 = vpop.trf.xlu0
        %v1274 = vpop.trf.xlu0
        %v1275 = vpop.trf.xlu0
        %v1276 = vpop.trf.xlu0
        %v1277 = vpop.trf.xlu0
        %v1278 = vpop.trf.xlu0
        %v1279 = vpop.trf.xlu0
        %v1280 = vpop.trf.xlu0
        %v1281 = vpop.trf.xlu0
        %v1282 = vpop.trf.xlu0
        %v1283 = vpop.trf.xlu0
        %v1284 = vpop.trf.xlu0
        %v1285 = vpop.trf.xlu0
        %v1286 = vpop.trf.xlu0
        %v1287 = vpop.trf.xlu0
        %v1289 = vsel %vm944, %v1272, 0
        %v1292 = vsel %vm944, %v1273, 0
        %1294 = vmatpush.msra.mxu0 0.0
        %1295 = vmatpush.msra.mxu0 0.0
        %1296 = vmatpush.msra.mxu0 0.0
        %1297 = vmatpush.msra.mxu0 0.0
        %1298 = vmatpush.msra.mxu0 0.0
        %1299 = vmatpush.msra.mxu0 0.0
        %1300 = vmatpush.msra.mxu0 0.0
        %1301 = vmatpush.msra.mxu0 0.0
        %1302 = vmatpush.msra.mxu0 0.0
        %1303 = vmatpush.msra.mxu0 0.0
        %1304 = vmatpush.msra.mxu0 0.0
        %1305 = vmatpush.msra.mxu0 0.0
        %1306 = vmatpush.msra.mxu0 0.0
        %1307 = vmatpush.msra.mxu0 0.0
        %1308 = vmatpush.msra.mxu0 0.0
        %1309 = vmatpush.msra.mxu0 %v1255
        %1310 = vmatmul.f32.gmra.mxu0 %v1289
        %v1311 = vpop.f32.mrf.mxu0
        %v1312 = vadd.f32 0.0, %v1311
        %1313 = vmatmul.f32.gmra.mxu0 %v1292
        %v1314 = vpop.f32.mrf.mxu0
        %v1315 = vadd.f32 0.0, %v1314
        %1316 = vdwg.mxu0
        %vm1317 = vcmask 523264
        %v1318 = vsel %vm1317, %v1312, -inf
        %v1319 = vsel %vm1317, %v1315, -inf
        %v1320 = vmax.f32 %v1318, %v1319
        %v1321 = vrot.slane %v1320, 4
        %v1322 = vmax.f32 %v1320, %v1321
        %v1323 = vrot.slane %v1322, 2
        %v1324 = vmax.f32 %v1322, %v1323
        %v1325 = vrot.slane %v1324, 1
        %v1326 = vmax.f32 %v1324, %v1325
        %v1327 = vsub.f32 %v1312, %v1326
        %v1328 = vsub.f32 %v1315, %v1326
        %v1329 = vmul.f32 %v1327, 1.442695
        %v1330 = vpow.pop %v1329
        %v1331 = vmul.f32 %v1328, 1.442695
        %v1332 = vpow.pop %v1331
        %v1333 = vsel %vm1317, %v1330, 0.0
        %v1334 = vsel %vm1317, %v1332, 0.0
        %v1335 = vadd.f32 %v1333, %v1334
        %v1336 = vrot.slane %v1335, 4
        %v1337 = vadd.f32 %v1335, %v1336
        %v1338 = vrot.slane %v1337, 2
        %v1339 = vadd.f32 %v1337, %v1338
        %v1340 = vrot.slane %v1339, 1
        %v1341 = vadd.f32 %v1339, %v1340
        %v1342 = vrcp.pop %v1341
        %v1344 = vsel %vm1017, %v1254, 0
        %1346 = vmatpush.msra.mxu0 0.0
        %1347 = vmatpush.msra.mxu0 0.0
        %1348 = vmatpush.msra.mxu0 0.0
        %1349 = vmatpush.msra.mxu0 0.0
        %1350 = vmatpush.msra.mxu0 0.0
        %1351 = vmatpush.msra.mxu0 0.0
        %1352 = vmatpush.msra.mxu0 0.0
        %1353 = vmatpush.msra.mxu0 0.0
        %1354 = vmatpush.msra.mxu0 0.0
        %1355 = vmatpush.msra.mxu0 0.0
        %1356 = vmatpush.msra.mxu0 0.0
        %1357 = vmatpush.msra.mxu0 0.0
        %1358 = vmatpush.msra.mxu0 0.0
        %1359 = vmatpush.msra.mxu0 0.0
        %1360 = vmatpush.msra.mxu0 %v1332
        %1361 = vmatpush.msra.mxu0 %v1330
        %1362 = vmatmul.f32.gmra.mxu0 %v1344
        %v1363 = vpop.f32.mrf.mxu0
        %v1364 = vadd.f32 0.0, %v1363
        %1365 = vdwg.mxu0
        %v1366 = vmul.f32 %v1364, %v1342
        %v1367 = vadd.f32 %v650, %v1366
        %v1368 = vld [vmem:[#allocation7] sm:$0xff]
        %v1369 = vld [vmem:[#allocation7 + $0x8] sm:$0xff]
        %v1370 = vld [vmem:[#allocation7 + $0x10] sm:$0xff]
        %v1371 = vld [vmem:[#allocation7 + $0x18] sm:$0xff]
        %v1372 = vld [vmem:[#allocation7 + $0x20] sm:$0xff]
        %v1373 = vld [vmem:[#allocation7 + $0x28] sm:$0xff]
        %v1374 = vld [vmem:[#allocation7 + $0x30] sm:$0xff]
        %v1375 = vld [vmem:[#allocation7 + $0x38] sm:$0xff]
        %v1377 = vsel %vm1317, %v1367, 0
        %1379 = vmatpush.msra.mxu0 0.0
        %1380 = vmatpush.msra.mxu0 0.0
        %1381 = vmatpush.msra.mxu0 0.0
        %1382 = vmatpush.msra.mxu0 0.0
        %1383 = vmatpush.msra.mxu0 0.0
        %1384 = vmatpush.msra.mxu0 0.0
        %1385 = vmatpush.msra.mxu0 0.0
        %1386 = vmatpush.msra.mxu0 0.0
        %1387 = vmatpush.msra.mxu0 %v1375
        %1388 = vmatpush.msra.mxu0 %v1374
        %1389 = vmatpush.msra.mxu0 %v1373
        %1390 = vmatpush.msra.mxu0 %v1372
        %1391 = vmatpush.msra.mxu0 %v1371
        %1392 = vmatpush.msra.mxu0 %v1370
        %1393 = vmatpush.msra.mxu0 %v1369
        %1394 = vmatpush.msra.mxu0 %v1368
        %1395 = vmatmul.f32.gmra.mxu0 %v1377
        %v1396 = vpop.f32.mrf.mxu0
        %v1397 = vadd.f32 0.0, %v1396
        %1398 = vdwg.mxu0
        %s1399 = scalar_lea.vmem [#allocation7], 64
        %v1400 = vld [vmem:[%s1399] sm:$0xff]
        %v1401 = vld [vmem:[%s1399 + $0x8] sm:$0xff]
        %v1402 = vld [vmem:[%s1399 + $0x10] sm:$0xff]
        %v1403 = vld [vmem:[%s1399 + $0x18] sm:$0xff]
        %v1404 = vld [vmem:[%s1399 + $0x20] sm:$0xff]
        %v1405 = vld [vmem:[%s1399 + $0x28] sm:$0xff]
        %v1406 = vld [vmem:[%s1399 + $0x30] sm:$0xff]
        %v1407 = vld [vmem:[%s1399 + $0x38] sm:$0xff]
        %1408 = vmatpush.msra.mxu0 0.0
        %1409 = vmatpush.msra.mxu0 0.0
        %1410 = vmatpush.msra.mxu0 0.0
        %1411 = vmatpush.msra.mxu0 0.0
        %1412 = vmatpush.msra.mxu0 0.0
        %1413 = vmatpush.msra.mxu0 0.0
        %1414 = vmatpush.msra.mxu0 0.0
        %1415 = vmatpush.msra.mxu0 0.0
        %1416 = vmatpush.msra.mxu0 %v1407
        %1417 = vmatpush.msra.mxu0 %v1406
        %1418 = vmatpush.msra.mxu0 %v1405
        %1419 = vmatpush.msra.mxu0 %v1404
        %1420 = vmatpush.msra.mxu0 %v1403
        %1421 = vmatpush.msra.mxu0 %v1402
        %1422 = vmatpush.msra.mxu0 %v1401
        %1423 = vmatpush.msra.mxu0 %v1400
        %1424 = vmatmul.f32.gmra.mxu0 %v1377
        %v1425 = vpop.f32.mrf.mxu0
        %v1426 = vadd.f32 0.0, %v1425
        %1427 = vdwg.mxu0
        %s1428 = scalar_lea.vmem [#allocation7], 128
        %v1429 = vld [vmem:[%s1428] sm:$0xff]
        %v1430 = vld [vmem:[%s1428 + $0x8] sm:$0xff]
        %v1431 = vld [vmem:[%s1428 + $0x10] sm:$0xff]
        %v1432 = vld [vmem:[%s1428 + $0x18] sm:$0xff]
        %v1433 = vld [vmem:[%s1428 + $0x20] sm:$0xff]
        %v1434 = vld [vmem:[%s1428 + $0x28] sm:$0xff]
        %v1435 = vld [vmem:[%s1428 + $0x30] sm:$0xff]
        %v1436 = vld [vmem:[%s1428 + $0x38] sm:$0xff]
        %1437 = vmatpush.msra.mxu0 0.0
        %1438 = vmatpush.msra.mxu0 0.0
        %1439 = vmatpush.msra.mxu0 0.0
        %1440 = vmatpush.msra.mxu0 0.0
        %1441 = vmatpush.msra.mxu0 0.0
        %1442 = vmatpush.msra.mxu0 0.0
        %1443 = vmatpush.msra.mxu0 0.0
        %1444 = vmatpush.msra.mxu0 0.0
        %1445 = vmatpush.msra.mxu0 %v1436
        %1446 = vmatpush.msra.mxu0 %v1435
        %1447 = vmatpush.msra.mxu0 %v1434
        %1448 = vmatpush.msra.mxu0 %v1433
        %1449 = vmatpush.msra.mxu0 %v1432
        %1450 = vmatpush.msra.mxu0 %v1431
        %1451 = vmatpush.msra.mxu0 %v1430
        %1452 = vmatpush.msra.mxu0 %v1429
        %1453 = vmatmul.f32.gmra.mxu0 %v1377
        %v1454 = vpop.f32.mrf.mxu0
        %v1455 = vadd.f32 0.0, %v1454
        %1456 = vdwg.mxu0
        %s1457 = scalar_lea.vmem [#allocation7], 192
        %v1458 = vld [vmem:[%s1457] sm:$0xff]
        %v1459 = vld [vmem:[%s1457 + $0x8] sm:$0xff]
        %v1460 = vld [vmem:[%s1457 + $0x10] sm:$0xff]
        %v1461 = vld [vmem:[%s1457 + $0x18] sm:$0xff]
        %v1462 = vld [vmem:[%s1457 + $0x20] sm:$0xff]
        %v1463 = vld [vmem:[%s1457 + $0x28] sm:$0xff]
        %v1464 = vld [vmem:[%s1457 + $0x30] sm:$0xff]
        %v1465 = vld [vmem:[%s1457 + $0x38] sm:$0xff]
        %1466 = vmatpush.msra.mxu0 0.0
        %1467 = vmatpush.msra.mxu0 0.0
        %1468 = vmatpush.msra.mxu0 0.0
        %1469 = vmatpush.msra.mxu0 0.0
        %1470 = vmatpush.msra.mxu0 0.0
        %1471 = vmatpush.msra.mxu0 0.0
        %1472 = vmatpush.msra.mxu0 0.0
        %1473 = vmatpush.msra.mxu0 0.0
        %1474 = vmatpush.msra.mxu0 %v1465
        %1475 = vmatpush.msra.mxu0 %v1464
        %1476 = vmatpush.msra.mxu0 %v1463
        %1477 = vmatpush.msra.mxu0 %v1462
        %1478 = vmatpush.msra.mxu0 %v1461
        %1479 = vmatpush.msra.mxu0 %v1460
        %1480 = vmatpush.msra.mxu0 %v1459
        %1481 = vmatpush.msra.mxu0 %v1458
        %1482 = vmatmul.f32.gmra.mxu0 %v1377
        %v1483 = vpop.f32.mrf.mxu0
        %v1484 = vadd.f32 0.0, %v1483
        %1485 = vdwg.mxu0
        %s1486 = scalar_lea.vmem [#allocation7], 256
        %v1487 = vld [vmem:[%s1486] sm:$0xff]
        %v1488 = vld [vmem:[%s1486 + $0x8] sm:$0xff]
        %v1489 = vld [vmem:[%s1486 + $0x10] sm:$0xff]
        %v1490 = vld [vmem:[%s1486 + $0x18] sm:$0xff]
        %v1491 = vld [vmem:[%s1486 + $0x20] sm:$0xff]
        %v1492 = vld [vmem:[%s1486 + $0x28] sm:$0xff]
        %v1493 = vld [vmem:[%s1486 + $0x30] sm:$0xff]
        %v1494 = vld [vmem:[%s1486 + $0x38] sm:$0xff]
        %1495 = vmatpush.msra.mxu0 0.0
        %1496 = vmatpush.msra.mxu0 0.0
        %1497 = vmatpush.msra.mxu0 0.0
        %1498 = vmatpush.msra.mxu0 0.0
        %1499 = vmatpush.msra.mxu0 0.0
        %1500 = vmatpush.msra.mxu0 0.0
        %1501 = vmatpush.msra.mxu0 0.0
        %1502 = vmatpush.msra.mxu0 0.0
        %1503 = vmatpush.msra.mxu0 %v1494
        %1504 = vmatpush.msra.mxu0 %v1493
        %1505 = vmatpush.msra.mxu0 %v1492
        %1506 = vmatpush.msra.mxu0 %v1491
        %1507 = vmatpush.msra.mxu0 %v1490
        %1508 = vmatpush.msra.mxu0 %v1489
        %1509 = vmatpush.msra.mxu0 %v1488
        %1510 = vmatpush.msra.mxu0 %v1487
        %1511 = vmatmul.f32.gmra.mxu0 %v1377
        %v1512 = vpop.f32.mrf.mxu0
        %v1513 = vadd.f32 0.0, %v1512
        %1514 = vdwg.mxu0
        %s1515 = scalar_lea.vmem [#allocation7], 320
        %v1516 = vld [vmem:[%s1515] sm:$0xff]
        %v1517 = vld [vmem:[%s1515 + $0x8] sm:$0xff]
        %v1518 = vld [vmem:[%s1515 + $0x10] sm:$0xff]
        %v1519 = vld [vmem:[%s1515 + $0x18] sm:$0xff]
        %v1520 = vld [vmem:[%s1515 + $0x20] sm:$0xff]
        %v1521 = vld [vmem:[%s1515 + $0x28] sm:$0xff]
        %v1522 = vld [vmem:[%s1515 + $0x30] sm:$0xff]
        %v1523 = vld [vmem:[%s1515 + $0x38] sm:$0xff]
        %1524 = vmatpush.msra.mxu0 0.0
        %1525 = vmatpush.msra.mxu0 0.0
        %1526 = vmatpush.msra.mxu0 0.0
        %1527 = vmatpush.msra.mxu0 0.0
        %1528 = vmatpush.msra.mxu0 0.0
        %1529 = vmatpush.msra.mxu0 0.0
        %1530 = vmatpush.msra.mxu0 0.0
        %1531 = vmatpush.msra.mxu0 0.0
        %1532 = vmatpush.msra.mxu0 %v1523
        %1533 = vmatpush.msra.mxu0 %v1522
        %1534 = vmatpush.msra.mxu0 %v1521
        %1535 = vmatpush.msra.mxu0 %v1520
        %1536 = vmatpush.msra.mxu0 %v1519
        %1537 = vmatpush.msra.mxu0 %v1518
        %1538 = vmatpush.msra.mxu0 %v1517
        %1539 = vmatpush.msra.mxu0 %v1516
        %1540 = vmatmul.f32.gmra.mxu0 %v1377
        %v1541 = vpop.f32.mrf.mxu0
        %v1542 = vadd.f32 0.0, %v1541
        %1543 = vdwg.mxu0
        %s1544 = scalar_lea.vmem [#allocation7], 384
        %v1545 = vld [vmem:[%s1544] sm:$0xff]
        %v1546 = vld [vmem:[%s1544 + $0x8] sm:$0xff]
        %v1547 = vld [vmem:[%s1544 + $0x10] sm:$0xff]
        %v1548 = vld [vmem:[%s1544 + $0x18] sm:$0xff]
        %v1549 = vld [vmem:[%s1544 + $0x20] sm:$0xff]
        %v1550 = vld [vmem:[%s1544 + $0x28] sm:$0xff]
        %v1551 = vld [vmem:[%s1544 + $0x30] sm:$0xff]
        %v1552 = vld [vmem:[%s1544 + $0x38] sm:$0xff]
        %1553 = vmatpush.msra.mxu0 0.0
        %1554 = vmatpush.msra.mxu0 0.0
        %1555 = vmatpush.msra.mxu0 0.0
        %1556 = vmatpush.msra.mxu0 0.0
        %1557 = vmatpush.msra.mxu0 0.0
        %1558 = vmatpush.msra.mxu0 0.0
        %1559 = vmatpush.msra.mxu0 0.0
        %1560 = vmatpush.msra.mxu0 0.0
        %1561 = vmatpush.msra.mxu0 %v1552
        %1562 = vmatpush.msra.mxu0 %v1551
        %1563 = vmatpush.msra.mxu0 %v1550
        %1564 = vmatpush.msra.mxu0 %v1549
        %1565 = vmatpush.msra.mxu0 %v1548
        %1566 = vmatpush.msra.mxu0 %v1547
        %1567 = vmatpush.msra.mxu0 %v1546
        %1568 = vmatpush.msra.mxu0 %v1545
        %1569 = vmatmul.f32.gmra.mxu0 %v1377
        %v1570 = vpop.f32.mrf.mxu0
        %v1571 = vadd.f32 0.0, %v1570
        %1572 = vdwg.mxu0
        %s1573 = scalar_lea.vmem [#allocation7], 448
        %v1574 = vld [vmem:[%s1573] sm:$0xff]
        %v1575 = vld [vmem:[%s1573 + $0x8] sm:$0xff]
        %v1576 = vld [vmem:[%s1573 + $0x10] sm:$0xff]
        %v1577 = vld [vmem:[%s1573 + $0x18] sm:$0xff]
        %v1578 = vld [vmem:[%s1573 + $0x20] sm:$0xff]
        %v1579 = vld [vmem:[%s1573 + $0x28] sm:$0xff]
        %v1580 = vld [vmem:[%s1573 + $0x30] sm:$0xff]
        %v1581 = vld [vmem:[%s1573 + $0x38] sm:$0xff]
        %1582 = vmatpush.msra.mxu0 0.0
        %1583 = vmatpush.msra.mxu0 0.0
        %1584 = vmatpush.msra.mxu0 0.0
        %1585 = vmatpush.msra.mxu0 0.0
        %1586 = vmatpush.msra.mxu0 0.0
        %1587 = vmatpush.msra.mxu0 0.0
        %1588 = vmatpush.msra.mxu0 0.0
        %1589 = vmatpush.msra.mxu0 0.0
        %1590 = vmatpush.msra.mxu0 %v1581
        %1591 = vmatpush.msra.mxu0 %v1580
        %1592 = vmatpush.msra.mxu0 %v1579
        %1593 = vmatpush.msra.mxu0 %v1578
        %1594 = vmatpush.msra.mxu0 %v1577
        %1595 = vmatpush.msra.mxu0 %v1576
        %1596 = vmatpush.msra.mxu0 %v1575
        %1597 = vmatpush.msra.mxu0 %v1574
        %1598 = vmatmul.f32.gmra.mxu0 %v1377
        %v1599 = vpop.f32.mrf.mxu0
        %v1600 = vadd.f32 0.0, %v1599
        %1601 = vdwg.mxu0
        %s1602 = scalar_lea.vmem [#allocation7], 512
        %v1603 = vld [vmem:[%s1602] sm:$0xff]
        %v1604 = vld [vmem:[%s1602 + $0x8] sm:$0xff]
        %v1605 = vld [vmem:[%s1602 + $0x10] sm:$0xff]
        %v1606 = vld [vmem:[%s1602 + $0x18] sm:$0xff]
        %v1607 = vld [vmem:[%s1602 + $0x20] sm:$0xff]
        %v1608 = vld [vmem:[%s1602 + $0x28] sm:$0xff]
        %v1609 = vld [vmem:[%s1602 + $0x30] sm:$0xff]
        %v1610 = vld [vmem:[%s1602 + $0x38] sm:$0xff]
        %1611 = vmatpush.msra.mxu0 0.0
        %1612 = vmatpush.msra.mxu0 0.0
        %1613 = vmatpush.msra.mxu0 0.0
        %1614 = vmatpush.msra.mxu0 0.0
        %1615 = vmatpush.msra.mxu0 0.0
        %1616 = vmatpush.msra.mxu0 0.0
        %1617 = vmatpush.msra.mxu0 0.0
        %1618 = vmatpush.msra.mxu0 0.0
        %1619 = vmatpush.msra.mxu0 %v1610
        %1620 = vmatpush.msra.mxu0 %v1609
        %1621 = vmatpush.msra.mxu0 %v1608
        %1622 = vmatpush.msra.mxu0 %v1607
        %1623 = vmatpush.msra.mxu0 %v1606
        %1624 = vmatpush.msra.mxu0 %v1605
        %1625 = vmatpush.msra.mxu0 %v1604
        %1626 = vmatpush.msra.mxu0 %v1603
        %1627 = vmatmul.f32.gmra.mxu0 %v1377
        %v1628 = vpop.f32.mrf.mxu0
        %v1629 = vadd.f32 0.0, %v1628
        %1630 = vdwg.mxu0
        %s1631 = scalar_lea.vmem [#allocation2], 16
        %v1632 = vld [vmem:[%s1631] sm:$0xff]
        %s1633 = scalar_lea.vmem [#allocation4], 32
        %v1634 = vld [vmem:[%s1633] sm:$0xff]
        %v1636 = vsel %vm884, %v1632, 0
        %1638 = vmatpush.msra.mxu0 0.0
        %1639 = vmatpush.msra.mxu0 0.0
        %1640 = vmatpush.msra.mxu0 0.0
        %1641 = vmatpush.msra.mxu0 0.0
        %1642 = vmatpush.msra.mxu0 0.0
        %1643 = vmatpush.msra.mxu0 0.0
        %1644 = vmatpush.msra.mxu0 0.0
        %1645 = vmatpush.msra.mxu0 %v1629
        %1646 = vmatpush.msra.mxu0 %v1600
        %1647 = vmatpush.msra.mxu0 %v1571
        %1648 = vmatpush.msra.mxu0 %v1542
        %1649 = vmatpush.msra.mxu0 %v1513
        %1650 = vmatpush.msra.mxu0 %v1484
        %1651 = vmatpush.msra.mxu0 %v1455
        %1652 = vmatpush.msra.mxu0 %v1426
        %1653 = vmatpush.msra.mxu0 %v1397
        %1654 = vmatmul.f32.gmra.mxu0 %v1636
        %v1655 = vpop.f32.mrf.mxu0
        %v1656 = vadd.f32 %v1634, %v1655
        %1657 = vdwg.mxu0
        %vm1658 = vcmp.ge.f32.partialorder %v1656, 0.0
        %v1659 = vmul.f32 %v1656, 0.2
        %v1660 = vsel %vm1658, %v1656, %v1659
        %v1661 = vmul.f32 %v648, 0.35355338
        %v1662 = vmul.f32 %v649, 0.35355338
        %1663 = vxpose.xlu0.b32.start [1/16] %v1660, 128
        %1664 = vxpose.xlu0.b32.cont [2/16] 0.0, 128
        %1665 = vxpose.xlu0.b32.cont [3/16] 0.0, 128
        %1666 = vxpose.xlu0.b32.cont [4/16] 0.0, 128
        %1667 = vxpose.xlu0.b32.cont [5/16] 0.0, 128
        %1668 = vxpose.xlu0.b32.cont [6/16] 0.0, 128
        %1669 = vxpose.xlu0.b32.cont [7/16] 0.0, 128
        %1670 = vxpose.xlu0.b32.cont [8/16] 0.0, 128
        %1671 = vxpose.xlu0.b32.cont [9/16] 0.0, 128
        %1672 = vxpose.xlu0.b32.cont [10/16] 0.0, 128
        %1673 = vxpose.xlu0.b32.cont [11/16] 0.0, 128
        %1674 = vxpose.xlu0.b32.cont [12/16] 0.0, 128
        %1675 = vxpose.xlu0.b32.cont [13/16] 0.0, 128
        %1676 = vxpose.xlu0.b32.cont [14/16] 0.0, 128
        %1677 = vxpose.xlu0.b32.cont [15/16] 0.0, 128
        %1678 = vxpose.xlu0.b32.end [16/16] 0.0, 128
        %v1679 = vpop.trf.xlu0
        %v1680 = vpop.trf.xlu0
        %v1681 = vpop.trf.xlu0
        %v1682 = vpop.trf.xlu0
        %v1683 = vpop.trf.xlu0
        %v1684 = vpop.trf.xlu0
        %v1685 = vpop.trf.xlu0
        %v1686 = vpop.trf.xlu0
        %v1687 = vpop.trf.xlu0
        %v1688 = vpop.trf.xlu0
        %v1689 = vpop.trf.xlu0
        %v1690 = vpop.trf.xlu0
        %v1691 = vpop.trf.xlu0
        %v1692 = vpop.trf.xlu0
        %v1693 = vpop.trf.xlu0
        %v1694 = vpop.trf.xlu0
        %v1696 = vsel %vm944, %v1679, 0
        %v1699 = vsel %vm944, %v1680, 0
        %v1702 = vsel %vm944, %v1681, 0
        %v1705 = vsel %vm944, %v1682, 0
        %v1708 = vsel %vm944, %v1683, 0
        %v1711 = vsel %vm944, %v1684, 0
        %v1714 = vsel %vm944, %v1685, 0
        %v1717 = vsel %vm944, %v1686, 0
        %1719 = vmatpush.msra.mxu0 0.0
        %1720 = vmatpush.msra.mxu0 0.0
        %1721 = vmatpush.msra.mxu0 0.0
        %1722 = vmatpush.msra.mxu0 0.0
        %1723 = vmatpush.msra.mxu0 0.0
        %1724 = vmatpush.msra.mxu0 0.0
        %1725 = vmatpush.msra.mxu0 0.0
        %1726 = vmatpush.msra.mxu0 0.0
        %1727 = vmatpush.msra.mxu0 0.0
        %1728 = vmatpush.msra.mxu0 0.0
        %1729 = vmatpush.msra.mxu0 0.0
        %1730 = vmatpush.msra.mxu0 0.0
        %1731 = vmatpush.msra.mxu0 0.0
        %1732 = vmatpush.msra.mxu0 0.0
        %1733 = vmatpush.msra.mxu0 0.0
        %1734 = vmatpush.msra.mxu0 %v1661
        %1735 = vmatmul.f32.gmra.mxu0 %v1696
        %v1736 = vpop.f32.mrf.mxu0
        %v1737 = vadd.f32 0.0, %v1736
        %1738 = vmatmul.f32.gmra.mxu0 %v1699
        %v1739 = vpop.f32.mrf.mxu0
        %v1740 = vadd.f32 0.0, %v1739
        %1741 = vmatmul.f32.gmra.mxu0 %v1702
        %v1742 = vpop.f32.mrf.mxu0
        %v1743 = vadd.f32 0.0, %v1742
        %1744 = vmatmul.f32.gmra.mxu0 %v1705
        %v1745 = vpop.f32.mrf.mxu0
        %v1746 = vadd.f32 0.0, %v1745
        %1747 = vmatmul.f32.gmra.mxu0 %v1708
        %v1748 = vpop.f32.mrf.mxu0
        %v1749 = vadd.f32 0.0, %v1748
        %1750 = vmatmul.f32.gmra.mxu0 %v1711
        %v1751 = vpop.f32.mrf.mxu0
        %v1752 = vadd.f32 0.0, %v1751
        %1753 = vmatmul.f32.gmra.mxu0 %v1714
        %v1754 = vpop.f32.mrf.mxu0
        %v1755 = vadd.f32 0.0, %v1754
        %1756 = vmatmul.f32.gmra.mxu0 %v1717
        %v1757 = vpop.f32.mrf.mxu0
        %v1758 = vadd.f32 0.0, %v1757
        %1759 = vdwg.mxu0
        %1760 = vmatpush.msra.mxu0 0.0
        %1761 = vmatpush.msra.mxu0 0.0
        %1762 = vmatpush.msra.mxu0 0.0
        %1763 = vmatpush.msra.mxu0 0.0
        %1764 = vmatpush.msra.mxu0 0.0
        %1765 = vmatpush.msra.mxu0 0.0
        %1766 = vmatpush.msra.mxu0 0.0
        %1767 = vmatpush.msra.mxu0 0.0
        %1768 = vmatpush.msra.mxu0 0.0
        %1769 = vmatpush.msra.mxu0 0.0
        %1770 = vmatpush.msra.mxu0 0.0
        %1771 = vmatpush.msra.mxu0 0.0
        %1772 = vmatpush.msra.mxu0 0.0
        %1773 = vmatpush.msra.mxu0 0.0
        %1774 = vmatpush.msra.mxu0 0.0
        %1775 = vmatpush.msra.mxu0 %v1662
        %1776 = vmatmul.f32.gmra.mxu0 %v1696
        %v1777 = vpop.f32.mrf.mxu0
        %v1778 = vadd.f32 0.0, %v1777
        %1779 = vmatmul.f32.gmra.mxu0 %v1699
        %v1780 = vpop.f32.mrf.mxu0
        %v1781 = vadd.f32 0.0, %v1780
        %1782 = vmatmul.f32.gmra.mxu0 %v1702
        %v1783 = vpop.f32.mrf.mxu0
        %v1784 = vadd.f32 0.0, %v1783
        %1785 = vmatmul.f32.gmra.mxu0 %v1705
        %v1786 = vpop.f32.mrf.mxu0
        %v1787 = vadd.f32 0.0, %v1786
        %1788 = vmatmul.f32.gmra.mxu0 %v1708
        %v1789 = vpop.f32.mrf.mxu0
        %v1790 = vadd.f32 0.0, %v1789
        %1791 = vmatmul.f32.gmra.mxu0 %v1711
        %v1792 = vpop.f32.mrf.mxu0
        %v1793 = vadd.f32 0.0, %v1792
        %1794 = vmatmul.f32.gmra.mxu0 %v1714
        %v1795 = vpop.f32.mrf.mxu0
        %v1796 = vadd.f32 0.0, %v1795
        %1797 = vmatmul.f32.gmra.mxu0 %v1717
        %v1798 = vpop.f32.mrf.mxu0
        %v1799 = vadd.f32 0.0, %v1798
        %1800 = vdwg.mxu0
        %v1801 = vmax.f32 %v1737, %v1743
        %v1802 = vmax.f32 %v1740, %v1746
        %v1803 = vmax.f32 %v1801, %v1749
        %v1804 = vmax.f32 %v1802, %v1752
        %v1805 = vmax.f32 %v1803, %v1755
        %v1806 = vmax.f32 %v1804, %v1758
        %v1807 = vmax.f32 %v1805, %v1806
        %v1808 = vrot.slane %v1807, 4
        %v1809 = vmax.f32 %v1807, %v1808
        %v1810 = vrot.slane %v1809, 2
        %v1811 = vmax.f32 %v1809, %v1810
        %v1812 = vrot.slane %v1811, 1
        %v1813 = vmax.f32 %v1811, %v1812
        %v1814 = vmax.f32 %v1778, %v1784
        %v1815 = vmax.f32 %v1781, %v1787
        %v1816 = vmax.f32 %v1814, %v1790
        %v1817 = vmax.f32 %v1815, %v1793
        %v1818 = vmax.f32 %v1816, %v1796
        %v1819 = vmax.f32 %v1817, %v1799
        %v1820 = vmax.f32 %v1818, %v1819
        %v1821 = vrot.slane %v1820, 4
        %v1822 = vmax.f32 %v1820, %v1821
        %v1823 = vrot.slane %v1822, 2
        %v1824 = vmax.f32 %v1822, %v1823
        %v1825 = vrot.slane %v1824, 1
        %v1826 = vmax.f32 %v1824, %v1825
        %v1827 = vsub.f32 %v1737, %v1813
        %v1828 = vsub.f32 %v1778, %v1826
        %v1829 = vsub.f32 %v1740, %v1813
        %v1830 = vsub.f32 %v1781, %v1826
        %v1831 = vsub.f32 %v1743, %v1813
        %v1832 = vsub.f32 %v1784, %v1826
        %v1833 = vsub.f32 %v1746, %v1813
        %v1834 = vsub.f32 %v1787, %v1826
        %v1835 = vsub.f32 %v1749, %v1813
        %v1836 = vsub.f32 %v1790, %v1826
        %v1837 = vsub.f32 %v1752, %v1813
        %v1838 = vsub.f32 %v1793, %v1826
        %v1839 = vsub.f32 %v1755, %v1813
        %v1840 = vsub.f32 %v1796, %v1826
        %v1841 = vsub.f32 %v1758, %v1813
        %v1842 = vsub.f32 %v1799, %v1826
        %v1843 = vmul.f32 %v1827, 1.442695
        %v1844 = vpow.pop %v1843
        %v1845 = vmul.f32 %v1828, 1.442695
        %v1846 = vpow.pop %v1845
        %v1847 = vmul.f32 %v1829, 1.442695
        %v1848 = vpow.pop %v1847
        %v1849 = vmul.f32 %v1830, 1.442695
        %v1850 = vpow.pop %v1849
        %v1851 = vmul.f32 %v1831, 1.442695
        %v1852 = vpow.pop %v1851
        %v1853 = vmul.f32 %v1832, 1.442695
        %v1854 = vpow.pop %v1853
        %v1855 = vmul.f32 %v1833, 1.442695
        %v1856 = vpow.pop %v1855
        %v1857 = vmul.f32 %v1834, 1.442695
        %v1858 = vpow.pop %v1857
        %v1859 = vmul.f32 %v1835, 1.442695
        %v1860 = vpow.pop %v1859
        %v1861 = vmul.f32 %v1836, 1.442695
        %v1862 = vpow.pop %v1861
        %v1863 = vmul.f32 %v1837, 1.442695
        %v1864 = vpow.pop %v1863
        %v1865 = vmul.f32 %v1838, 1.442695
        %v1866 = vpow.pop %v1865
        %v1867 = vmul.f32 %v1839, 1.442695
        %v1868 = vpow.pop %v1867
        %v1869 = vmul.f32 %v1840, 1.442695
        %v1870 = vpow.pop %v1869
        %v1871 = vmul.f32 %v1841, 1.442695
        %v1872 = vpow.pop %v1871
        %v1873 = vmul.f32 %v1842, 1.442695
        %v1874 = vpow.pop %v1873
        %v1875 = vadd.f32 %v1844, %v1848
        %v1876 = vadd.f32 %v1875, %v1852
        %v1877 = vadd.f32 %v1876, %v1856
        %v1878 = vadd.f32 %v1877, %v1860
        %v1879 = vadd.f32 %v1878, %v1864
        %v1880 = vadd.f32 %v1879, %v1868
        %v1881 = vadd.f32 %v1880, %v1872
        %v1882 = vrot.slane %v1881, 4
        %v1883 = vadd.f32 %v1881, %v1882
        %v1884 = vrot.slane %v1883, 2
        %v1885 = vadd.f32 %v1883, %v1884
        %v1886 = vrot.slane %v1885, 1
        %v1887 = vadd.f32 %v1885, %v1886
        %v1888 = vadd.f32 %v1846, %v1850
        %v1889 = vadd.f32 %v1888, %v1854
        %v1890 = vadd.f32 %v1889, %v1858
        %v1891 = vadd.f32 %v1890, %v1862
        %v1892 = vadd.f32 %v1891, %v1866
        %v1893 = vadd.f32 %v1892, %v1870
        %v1894 = vadd.f32 %v1893, %v1874
        %v1895 = vrot.slane %v1894, 4
        %v1896 = vadd.f32 %v1894, %v1895
        %v1897 = vrot.slane %v1896, 2
        %v1898 = vadd.f32 %v1896, %v1897
        %v1899 = vrot.slane %v1898, 1
        %v1900 = vadd.f32 %v1898, %v1899
        %v1901 = vrcp.pop %v1887
        %v1902 = vrcp.pop %v1900
        %v1904 = vsel %vm1317, %v1660, 0
        %1906 = vmatpush.msra.mxu0 0.0
        %1907 = vmatpush.msra.mxu0 0.0
        %1908 = vmatpush.msra.mxu0 0.0
        %1909 = vmatpush.msra.mxu0 0.0
        %1910 = vmatpush.msra.mxu0 0.0
        %1911 = vmatpush.msra.mxu0 0.0
        %1912 = vmatpush.msra.mxu0 0.0
        %1913 = vmatpush.msra.mxu0 0.0
        %1914 = vmatpush.msra.mxu0 %v1872
        %1915 = vmatpush.msra.mxu0 %v1868
        %1916 = vmatpush.msra.mxu0 %v1864
        %1917 = vmatpush.msra.mxu0 %v1860
        %1918 = vmatpush.msra.mxu0 %v1856
        %1919 = vmatpush.msra.mxu0 %v1852
        %1920 = vmatpush.msra.mxu0 %v1848
        %1921 = vmatpush.msra.mxu0 %v1844
        %1922 = vmatmul.f32.gmra.mxu0 %v1904
        %v1923 = vpop.f32.mrf.mxu0
        %v1924 = vadd.f32 0.0, %v1923
        %1925 = vdwg.mxu0
        %1926 = vmatpush.msra.mxu0 0.0
        %1927 = vmatpush.msra.mxu0 0.0
        %1928 = vmatpush.msra.mxu0 0.0
        %1929 = vmatpush.msra.mxu0 0.0
        %1930 = vmatpush.msra.mxu0 0.0
        %1931 = vmatpush.msra.mxu0 0.0
        %1932 = vmatpush.msra.mxu0 0.0
        %1933 = vmatpush.msra.mxu0 0.0
        %1934 = vmatpush.msra.mxu0 %v1874
        %1935 = vmatpush.msra.mxu0 %v1870
        %1936 = vmatpush.msra.mxu0 %v1866
        %1937 = vmatpush.msra.mxu0 %v1862
        %1938 = vmatpush.msra.mxu0 %v1858
        %1939 = vmatpush.msra.mxu0 %v1854
        %1940 = vmatpush.msra.mxu0 %v1850
        %1941 = vmatpush.msra.mxu0 %v1846
        %1942 = vmatmul.f32.gmra.mxu0 %v1904
        %v1943 = vpop.f32.mrf.mxu0
        %v1944 = vadd.f32 0.0, %v1943
        %1945 = vdwg.mxu0
        %v1946 = vmul.f32 %v1924, %v1901
        %v1947 = vmul.f32 %v1944, %v1902
        %v1948 = vadd.f32 %v648, %v1946
        %v1949 = vadd.f32 %v649, %v1947
        %v1950 = vld [vmem:[#allocation6] sm:$0xff]
        %v1951 = vld [vmem:[#allocation6 + $0x8] sm:$0xff]
        %v1952 = vld [vmem:[#allocation6 + $0x10] sm:$0xff]
        %v1953 = vld [vmem:[#allocation6 + $0x18] sm:$0xff]
        %v1954 = vld [vmem:[#allocation6 + $0x20] sm:$0xff]
        %v1955 = vld [vmem:[#allocation6 + $0x28] sm:$0xff]
        %v1956 = vld [vmem:[#allocation6 + $0x30] sm:$0xff]
        %v1957 = vld [vmem:[#allocation6 + $0x38] sm:$0xff]
        %v1958 = vld [vmem:[#allocation6 + $0x40] sm:$0xff]
        %v1959 = vld [vmem:[#allocation6 + $0x48] sm:$0xff]
        %v1960 = vld [vmem:[#allocation6 + $0x50] sm:$0xff]
        %v1961 = vld [vmem:[#allocation6 + $0x58] sm:$0xff]
        %v1962 = vld [vmem:[#allocation6 + $0x60] sm:$0xff]
        %v1963 = vld [vmem:[#allocation6 + $0x68] sm:$0xff]
        %v1964 = vld [vmem:[#allocation6 + $0x70] sm:$0xff]
        %v1965 = vld [vmem:[#allocation6 + $0x78] sm:$0xff]
        %v1966 = vld [vmem:[#allocation6 + $0x80] sm:$0xff]
        %v1967 = vld [vmem:[#allocation6 + $0x88] sm:$0xff]
        %v1968 = vld [vmem:[#allocation6 + $0x90] sm:$0xff]
        %v1969 = vld [vmem:[#allocation6 + $0x98] sm:$0xff]
        %v1970 = vld [vmem:[#allocation6 + $0xa0] sm:$0xff]
        %v1971 = vld [vmem:[#allocation6 + $0xa8] sm:$0xff]
        %v1972 = vld [vmem:[#allocation6 + $0xb0] sm:$0xff]
        %v1973 = vld [vmem:[#allocation6 + $0xb8] sm:$0xff]
        %v1974 = vld [vmem:[#allocation6 + $0xc0] sm:$0xff]
        %v1975 = vld [vmem:[#allocation6 + $0xc8] sm:$0xff]
        %v1976 = vld [vmem:[#allocation6 + $0xd0] sm:$0xff]
        %v1977 = vld [vmem:[#allocation6 + $0xd8] sm:$0xff]
        %v1978 = vld [vmem:[#allocation6 + $0xe0] sm:$0xff]
        %v1979 = vld [vmem:[#allocation6 + $0xe8] sm:$0xff]
        %v1980 = vld [vmem:[#allocation6 + $0xf0] sm:$0xff]
        %v1981 = vld [vmem:[#allocation6 + $0xf8] sm:$0xff]
        %v1982 = vld [vmem:[#allocation6 + $0x100] sm:$0xff]
        %v1983 = vld [vmem:[#allocation6 + $0x108] sm:$0xff]
        %v1984 = vld [vmem:[#allocation6 + $0x110] sm:$0xff]
        %v1985 = vld [vmem:[#allocation6 + $0x118] sm:$0xff]
        %v1986 = vld [vmem:[#allocation6 + $0x120] sm:$0xff]
        %v1987 = vld [vmem:[#allocation6 + $0x128] sm:$0xff]
        %v1988 = vld [vmem:[#allocation6 + $0x130] sm:$0xff]
        %v1989 = vld [vmem:[#allocation6 + $0x138] sm:$0xff]
        %v1990 = vld [vmem:[#allocation6 + $0x140] sm:$0xff]
        %v1991 = vld [vmem:[#allocation6 + $0x148] sm:$0xff]
        %v1992 = vld [vmem:[#allocation6 + $0x150] sm:$0xff]
        %v1993 = vld [vmem:[#allocation6 + $0x158] sm:$0xff]
        %v1994 = vld [vmem:[#allocation6 + $0x160] sm:$0xff]
        %v1995 = vld [vmem:[#allocation6 + $0x168] sm:$0xff]
        %v1996 = vld [vmem:[#allocation6 + $0x170] sm:$0xff]
        %v1997 = vld [vmem:[#allocation6 + $0x178] sm:$0xff]
        %v1998 = vld [vmem:[#allocation6 + $0x180] sm:$0xff]
        %v1999 = vld [vmem:[#allocation6 + $0x188] sm:$0xff]
        %v2000 = vld [vmem:[#allocation6 + $0x190] sm:$0xff]
        %v2001 = vld [vmem:[#allocation6 + $0x198] sm:$0xff]
        %v2002 = vld [vmem:[#allocation6 + $0x1a0] sm:$0xff]
        %v2003 = vld [vmem:[#allocation6 + $0x1a8] sm:$0xff]
        %v2004 = vld [vmem:[#allocation6 + $0x1b0] sm:$0xff]
        %v2005 = vld [vmem:[#allocation6 + $0x1b8] sm:$0xff]
        %v2006 = vld [vmem:[#allocation6 + $0x1c0] sm:$0xff]
        %v2007 = vld [vmem:[#allocation6 + $0x1c8] sm:$0xff]
        %v2008 = vld [vmem:[#allocation6 + $0x1d0] sm:$0xff]
        %v2009 = vld [vmem:[#allocation6 + $0x1d8] sm:$0xff]
        %v2010 = vld [vmem:[#allocation6 + $0x1e0] sm:$0xff]
        %v2011 = vld [vmem:[#allocation6 + $0x1e8] sm:$0xff]
        %v2012 = vld [vmem:[#allocation6 + $0x1f0] sm:$0xff]
        %v2013 = vld [vmem:[#allocation6 + $0x1f8] sm:$0xff]
        %2014 = vmatpush.msra.mxu0 %v1980
        %2015 = vmatpush.msra.mxu0 %v1978
        %2016 = vmatpush.msra.mxu0 %v1976
        %2017 = vmatpush.msra.mxu0 %v1974
        %2018 = vmatpush.msra.mxu0 %v1972
        %2019 = vmatpush.msra.mxu0 %v1970
        %2020 = vmatpush.msra.mxu0 %v1968
        %2021 = vmatpush.msra.mxu0 %v1966
        %2022 = vmatpush.msra.mxu0 %v1964
        %2023 = vmatpush.msra.mxu0 %v1962
        %2024 = vmatpush.msra.mxu0 %v1960
        %2025 = vmatpush.msra.mxu0 %v1958
        %2026 = vmatpush.msra.mxu0 %v1956
        %2027 = vmatpush.msra.mxu0 %v1954
        %2028 = vmatpush.msra.mxu0 %v1952
        %2029 = vmatpush.msra.mxu0 %v1950
        %2030 = vmatmul.f32.gmra.mxu0 %v1948
        %v2031 = vpop.f32.mrf.mxu0
        %v2032 = vadd.f32 0.0, %v2031
        %2033 = vdwg.mxu0
        %2034 = vmatpush.msra.mxu0 %v2012
        %2035 = vmatpush.msra.mxu0 %v2010
        %2036 = vmatpush.msra.mxu0 %v2008
        %2037 = vmatpush.msra.mxu0 %v2006
        %2038 = vmatpush.msra.mxu0 %v2004
        %2039 = vmatpush.msra.mxu0 %v2002
        %2040 = vmatpush.msra.mxu0 %v2000
        %2041 = vmatpush.msra.mxu0 %v1998
        %2042 = vmatpush.msra.mxu0 %v1996
        %2043 = vmatpush.msra.mxu0 %v1994
        %2044 = vmatpush.msra.mxu0 %v1992
        %2045 = vmatpush.msra.mxu0 %v1990
        %2046 = vmatpush.msra.mxu0 %v1988
        %2047 = vmatpush.msra.mxu0 %v1986
        %2048 = vmatpush.msra.mxu0 %v1984
        %2049 = vmatpush.msra.mxu0 %v1982
        %2050 = vmatmul.f32.gmra.mxu0 %v1949
        %v2051 = vpop.f32.mrf.mxu0
        %v2052 = vadd.f32 %v2032, %v2051
        %2053 = vdwg.mxu0
        %2054 = vmatpush.msra.mxu0 %v1981
        %2055 = vmatpush.msra.mxu0 %v1979
        %2056 = vmatpush.msra.mxu0 %v1977
        %2057 = vmatpush.msra.mxu0 %v1975
        %2058 = vmatpush.msra.mxu0 %v1973
        %2059 = vmatpush.msra.mxu0 %v1971
        %2060 = vmatpush.msra.mxu0 %v1969
        %2061 = vmatpush.msra.mxu0 %v1967
        %2062 = vmatpush.msra.mxu0 %v1965
        %2063 = vmatpush.msra.mxu0 %v1963
        %2064 = vmatpush.msra.mxu0 %v1961
        %2065 = vmatpush.msra.mxu0 %v1959
        %2066 = vmatpush.msra.mxu0 %v1957
        %2067 = vmatpush.msra.mxu0 %v1955
        %2068 = vmatpush.msra.mxu0 %v1953
        %2069 = vmatpush.msra.mxu0 %v1951
        %2070 = vmatmul.f32.gmra.mxu0 %v1948
        %v2071 = vpop.f32.mrf.mxu0
        %v2072 = vadd.f32 0.0, %v2071
        %2073 = vdwg.mxu0
        %2074 = vmatpush.msra.mxu0 %v2013
        %2075 = vmatpush.msra.mxu0 %v2011
        %2076 = vmatpush.msra.mxu0 %v2009
        %2077 = vmatpush.msra.mxu0 %v2007
        %2078 = vmatpush.msra.mxu0 %v2005
        %2079 = vmatpush.msra.mxu0 %v2003
        %2080 = vmatpush.msra.mxu0 %v2001
        %2081 = vmatpush.msra.mxu0 %v1999
        %2082 = vmatpush.msra.mxu0 %v1997
        %2083 = vmatpush.msra.mxu0 %v1995
        %2084 = vmatpush.msra.mxu0 %v1993
        %2085 = vmatpush.msra.mxu0 %v1991
        %2086 = vmatpush.msra.mxu0 %v1989
        %2087 = vmatpush.msra.mxu0 %v1987
        %2088 = vmatpush.msra.mxu0 %v1985
        %2089 = vmatpush.msra.mxu0 %v1983
        %2090 = vmatmul.f32.gmra.mxu0 %v1949
        %v2091 = vpop.f32.mrf.mxu0
        %v2092 = vadd.f32 %v2072, %v2091
        %2093 = vdwg.mxu0
        %s2094 = scalar_lea.vmem [#allocation6], 512
        %v2095 = vld [vmem:[%s2094] sm:$0xff]
        %v2096 = vld [vmem:[%s2094 + $0x8] sm:$0xff]
        %v2097 = vld [vmem:[%s2094 + $0x10] sm:$0xff]
        %v2098 = vld [vmem:[%s2094 + $0x18] sm:$0xff]
        %v2099 = vld [vmem:[%s2094 + $0x20] sm:$0xff]
        %v2100 = vld [vmem:[%s2094 + $0x28] sm:$0xff]
        %v2101 = vld [vmem:[%s2094 + $0x30] sm:$0xff]
        %v2102 = vld [vmem:[%s2094 + $0x38] sm:$0xff]
        %v2103 = vld [vmem:[%s2094 + $0x40] sm:$0xff]
        %v2104 = vld [vmem:[%s2094 + $0x48] sm:$0xff]
        %v2105 = vld [vmem:[%s2094 + $0x50] sm:$0xff]
        %v2106 = vld [vmem:[%s2094 + $0x58] sm:$0xff]
        %v2107 = vld [vmem:[%s2094 + $0x60] sm:$0xff]
        %v2108 = vld [vmem:[%s2094 + $0x68] sm:$0xff]
        %v2109 = vld [vmem:[%s2094 + $0x70] sm:$0xff]
        %v2110 = vld [vmem:[%s2094 + $0x78] sm:$0xff]
        %v2111 = vld [vmem:[%s2094 + $0x80] sm:$0xff]
        %v2112 = vld [vmem:[%s2094 + $0x88] sm:$0xff]
        %v2113 = vld [vmem:[%s2094 + $0x90] sm:$0xff]
        %v2114 = vld [vmem:[%s2094 + $0x98] sm:$0xff]
        %v2115 = vld [vmem:[%s2094 + $0xa0] sm:$0xff]
        %v2116 = vld [vmem:[%s2094 + $0xa8] sm:$0xff]
        %v2117 = vld [vmem:[%s2094 + $0xb0] sm:$0xff]
        %v2118 = vld [vmem:[%s2094 + $0xb8] sm:$0xff]
        %v2119 = vld [vmem:[%s2094 + $0xc0] sm:$0xff]
        %v2120 = vld [vmem:[%s2094 + $0xc8] sm:$0xff]
        %v2121 = vld [vmem:[%s2094 + $0xd0] sm:$0xff]
        %v2122 = vld [vmem:[%s2094 + $0xd8] sm:$0xff]
        %v2123 = vld [vmem:[%s2094 + $0xe0] sm:$0xff]
        %v2124 = vld [vmem:[%s2094 + $0xe8] sm:$0xff]
        %v2125 = vld [vmem:[%s2094 + $0xf0] sm:$0xff]
        %v2126 = vld [vmem:[%s2094 + $0xf8] sm:$0xff]
        %v2127 = vld [vmem:[%s2094 + $0x100] sm:$0xff]
        %v2128 = vld [vmem:[%s2094 + $0x108] sm:$0xff]
        %v2129 = vld [vmem:[%s2094 + $0x110] sm:$0xff]
        %v2130 = vld [vmem:[%s2094 + $0x118] sm:$0xff]
        %v2131 = vld [vmem:[%s2094 + $0x120] sm:$0xff]
        %v2132 = vld [vmem:[%s2094 + $0x128] sm:$0xff]
        %v2133 = vld [vmem:[%s2094 + $0x130] sm:$0xff]
        %v2134 = vld [vmem:[%s2094 + $0x138] sm:$0xff]
        %v2135 = vld [vmem:[%s2094 + $0x140] sm:$0xff]
        %v2136 = vld [vmem:[%s2094 + $0x148] sm:$0xff]
        %v2137 = vld [vmem:[%s2094 + $0x150] sm:$0xff]
        %v2138 = vld [vmem:[%s2094 + $0x158] sm:$0xff]
        %v2139 = vld [vmem:[%s2094 + $0x160] sm:$0xff]
        %v2140 = vld [vmem:[%s2094 + $0x168] sm:$0xff]
        %v2141 = vld [vmem:[%s2094 + $0x170] sm:$0xff]
        %v2142 = vld [vmem:[%s2094 + $0x178] sm:$0xff]
        %v2143 = vld [vmem:[%s2094 + $0x180] sm:$0xff]
        %v2144 = vld [vmem:[%s2094 + $0x188] sm:$0xff]
        %v2145 = vld [vmem:[%s2094 + $0x190] sm:$0xff]
        %v2146 = vld [vmem:[%s2094 + $0x198] sm:$0xff]
        %v2147 = vld [vmem:[%s2094 + $0x1a0] sm:$0xff]
        %v2148 = vld [vmem:[%s2094 + $0x1a8] sm:$0xff]
        %v2149 = vld [vmem:[%s2094 + $0x1b0] sm:$0xff]
        %v2150 = vld [vmem:[%s2094 + $0x1b8] sm:$0xff]
        %v2151 = vld [vmem:[%s2094 + $0x1c0] sm:$0xff]
        %v2152 = vld [vmem:[%s2094 + $0x1c8] sm:$0xff]
        %v2153 = vld [vmem:[%s2094 + $0x1d0] sm:$0xff]
        %v2154 = vld [vmem:[%s2094 + $0x1d8] sm:$0xff]
        %v2155 = vld [vmem:[%s2094 + $0x1e0] sm:$0xff]
        %v2156 = vld [vmem:[%s2094 + $0x1e8] sm:$0xff]
        %v2157 = vld [vmem:[%s2094 + $0x1f0] sm:$0xff]
        %v2158 = vld [vmem:[%s2094 + $0x1f8] sm:$0xff]
        %2159 = vmatpush.msra.mxu0 %v2125
        %2160 = vmatpush.msra.mxu0 %v2123
        %2161 = vmatpush.msra.mxu0 %v2121
        %2162 = vmatpush.msra.mxu0 %v2119
        %2163 = vmatpush.msra.mxu0 %v2117
        %2164 = vmatpush.msra.mxu0 %v2115
        %2165 = vmatpush.msra.mxu0 %v2113
        %2166 = vmatpush.msra.mxu0 %v2111
        %2167 = vmatpush.msra.mxu0 %v2109
        %2168 = vmatpush.msra.mxu0 %v2107
        %2169 = vmatpush.msra.mxu0 %v2105
        %2170 = vmatpush.msra.mxu0 %v2103
        %2171 = vmatpush.msra.mxu0 %v2101
        %2172 = vmatpush.msra.mxu0 %v2099
        %2173 = vmatpush.msra.mxu0 %v2097
        %2174 = vmatpush.msra.mxu0 %v2095
        %2175 = vmatmul.f32.gmra.mxu0 %v1948
        %v2176 = vpop.f32.mrf.mxu0
        %v2177 = vadd.f32 0.0, %v2176
        %2178 = vdwg.mxu0
        %2179 = vmatpush.msra.mxu0 %v2157
        %2180 = vmatpush.msra.mxu0 %v2155
        %2181 = vmatpush.msra.mxu0 %v2153
        %2182 = vmatpush.msra.mxu0 %v2151
        %2183 = vmatpush.msra.mxu0 %v2149
        %2184 = vmatpush.msra.mxu0 %v2147
        %2185 = vmatpush.msra.mxu0 %v2145
        %2186 = vmatpush.msra.mxu0 %v2143
        %2187 = vmatpush.msra.mxu0 %v2141
        %2188 = vmatpush.msra.mxu0 %v2139
        %2189 = vmatpush.msra.mxu0 %v2137
        %2190 = vmatpush.msra.mxu0 %v2135
        %2191 = vmatpush.msra.mxu0 %v2133
        %2192 = vmatpush.msra.mxu0 %v2131
        %2193 = vmatpush.msra.mxu0 %v2129
        %2194 = vmatpush.msra.mxu0 %v2127
        %2195 = vmatmul.f32.gmra.mxu0 %v1949
        %v2196 = vpop.f32.mrf.mxu0
        %v2197 = vadd.f32 %v2177, %v2196
        %2198 = vdwg.mxu0
        %2199 = vmatpush.msra.mxu0 %v2126
        %2200 = vmatpush.msra.mxu0 %v2124
        %2201 = vmatpush.msra.mxu0 %v2122
        %2202 = vmatpush.msra.mxu0 %v2120
        %2203 = vmatpush.msra.mxu0 %v2118
        %2204 = vmatpush.msra.mxu0 %v2116
        %2205 = vmatpush.msra.mxu0 %v2114
        %2206 = vmatpush.msra.mxu0 %v2112
        %2207 = vmatpush.msra.mxu0 %v2110
        %2208 = vmatpush.msra.mxu0 %v2108
        %2209 = vmatpush.msra.mxu0 %v2106
        %2210 = vmatpush.msra.mxu0 %v2104
        %2211 = vmatpush.msra.mxu0 %v2102
        %2212 = vmatpush.msra.mxu0 %v2100
        %2213 = vmatpush.msra.mxu0 %v2098
        %2214 = vmatpush.msra.mxu0 %v2096
        %2215 = vmatmul.f32.gmra.mxu0 %v1948
        %v2216 = vpop.f32.mrf.mxu0
        %v2217 = vadd.f32 0.0, %v2216
        %2218 = vdwg.mxu0
        %2219 = vmatpush.msra.mxu0 %v2158
        %2220 = vmatpush.msra.mxu0 %v2156
        %2221 = vmatpush.msra.mxu0 %v2154
        %2222 = vmatpush.msra.mxu0 %v2152
        %2223 = vmatpush.msra.mxu0 %v2150
        %2224 = vmatpush.msra.mxu0 %v2148
        %2225 = vmatpush.msra.mxu0 %v2146
        %2226 = vmatpush.msra.mxu0 %v2144
        %2227 = vmatpush.msra.mxu0 %v2142
        %2228 = vmatpush.msra.mxu0 %v2140
        %2229 = vmatpush.msra.mxu0 %v2138
        %2230 = vmatpush.msra.mxu0 %v2136
        %2231 = vmatpush.msra.mxu0 %v2134
        %2232 = vmatpush.msra.mxu0 %v2132
        %2233 = vmatpush.msra.mxu0 %v2130
        %2234 = vmatpush.msra.mxu0 %v2128
        %2235 = vmatmul.f32.gmra.mxu0 %v1949
        %v2236 = vpop.f32.mrf.mxu0
        %v2237 = vadd.f32 %v2217, %v2236
        %2238 = vdwg.mxu0
        %s2239 = scalar_lea.vmem [#allocation6], 1024
        %v2240 = vld [vmem:[%s2239] sm:$0xff]
        %v2241 = vld [vmem:[%s2239 + $0x8] sm:$0xff]
        %v2242 = vld [vmem:[%s2239 + $0x10] sm:$0xff]
        %v2243 = vld [vmem:[%s2239 + $0x18] sm:$0xff]
        %v2244 = vld [vmem:[%s2239 + $0x20] sm:$0xff]
        %v2245 = vld [vmem:[%s2239 + $0x28] sm:$0xff]
        %v2246 = vld [vmem:[%s2239 + $0x30] sm:$0xff]
        %v2247 = vld [vmem:[%s2239 + $0x38] sm:$0xff]
        %v2248 = vld [vmem:[%s2239 + $0x40] sm:$0xff]
        %v2249 = vld [vmem:[%s2239 + $0x48] sm:$0xff]
        %v2250 = vld [vmem:[%s2239 + $0x50] sm:$0xff]
        %v2251 = vld [vmem:[%s2239 + $0x58] sm:$0xff]
        %v2252 = vld [vmem:[%s2239 + $0x60] sm:$0xff]
        %v2253 = vld [vmem:[%s2239 + $0x68] sm:$0xff]
        %v2254 = vld [vmem:[%s2239 + $0x70] sm:$0xff]
        %v2255 = vld [vmem:[%s2239 + $0x78] sm:$0xff]
        %v2256 = vld [vmem:[%s2239 + $0x80] sm:$0xff]
        %v2257 = vld [vmem:[%s2239 + $0x88] sm:$0xff]
        %v2258 = vld [vmem:[%s2239 + $0x90] sm:$0xff]
        %v2259 = vld [vmem:[%s2239 + $0x98] sm:$0xff]
        %v2260 = vld [vmem:[%s2239 + $0xa0] sm:$0xff]
        %v2261 = vld [vmem:[%s2239 + $0xa8] sm:$0xff]
        %v2262 = vld [vmem:[%s2239 + $0xb0] sm:$0xff]
        %v2263 = vld [vmem:[%s2239 + $0xb8] sm:$0xff]
        %v2264 = vld [vmem:[%s2239 + $0xc0] sm:$0xff]
        %v2265 = vld [vmem:[%s2239 + $0xc8] sm:$0xff]
        %v2266 = vld [vmem:[%s2239 + $0xd0] sm:$0xff]
        %v2267 = vld [vmem:[%s2239 + $0xd8] sm:$0xff]
        %v2268 = vld [vmem:[%s2239 + $0xe0] sm:$0xff]
        %v2269 = vld [vmem:[%s2239 + $0xe8] sm:$0xff]
        %v2270 = vld [vmem:[%s2239 + $0xf0] sm:$0xff]
        %v2271 = vld [vmem:[%s2239 + $0xf8] sm:$0xff]
        %v2272 = vld [vmem:[%s2239 + $0x100] sm:$0xff]
        %v2273 = vld [vmem:[%s2239 + $0x108] sm:$0xff]
        %v2274 = vld [vmem:[%s2239 + $0x110] sm:$0xff]
        %v2275 = vld [vmem:[%s2239 + $0x118] sm:$0xff]
        %v2276 = vld [vmem:[%s2239 + $0x120] sm:$0xff]
        %v2277 = vld [vmem:[%s2239 + $0x128] sm:$0xff]
        %v2278 = vld [vmem:[%s2239 + $0x130] sm:$0xff]
        %v2279 = vld [vmem:[%s2239 + $0x138] sm:$0xff]
        %v2280 = vld [vmem:[%s2239 + $0x140] sm:$0xff]
        %v2281 = vld [vmem:[%s2239 + $0x148] sm:$0xff]
        %v2282 = vld [vmem:[%s2239 + $0x150] sm:$0xff]
        %v2283 = vld [vmem:[%s2239 + $0x158] sm:$0xff]
        %v2284 = vld [vmem:[%s2239 + $0x160] sm:$0xff]
        %v2285 = vld [vmem:[%s2239 + $0x168] sm:$0xff]
        %v2286 = vld [vmem:[%s2239 + $0x170] sm:$0xff]
        %v2287 = vld [vmem:[%s2239 + $0x178] sm:$0xff]
        %v2288 = vld [vmem:[%s2239 + $0x180] sm:$0xff]
        %v2289 = vld [vmem:[%s2239 + $0x188] sm:$0xff]
        %v2290 = vld [vmem:[%s2239 + $0x190] sm:$0xff]
        %v2291 = vld [vmem:[%s2239 + $0x198] sm:$0xff]
        %v2292 = vld [vmem:[%s2239 + $0x1a0] sm:$0xff]
        %v2293 = vld [vmem:[%s2239 + $0x1a8] sm:$0xff]
        %v2294 = vld [vmem:[%s2239 + $0x1b0] sm:$0xff]
        %v2295 = vld [vmem:[%s2239 + $0x1b8] sm:$0xff]
        %v2296 = vld [vmem:[%s2239 + $0x1c0] sm:$0xff]
        %v2297 = vld [vmem:[%s2239 + $0x1c8] sm:$0xff]
        %v2298 = vld [vmem:[%s2239 + $0x1d0] sm:$0xff]
        %v2299 = vld [vmem:[%s2239 + $0x1d8] sm:$0xff]
        %v2300 = vld [vmem:[%s2239 + $0x1e0] sm:$0xff]
        %v2301 = vld [vmem:[%s2239 + $0x1e8] sm:$0xff]
        %v2302 = vld [vmem:[%s2239 + $0x1f0] sm:$0xff]
        %v2303 = vld [vmem:[%s2239 + $0x1f8] sm:$0xff]
        %2304 = vmatpush.msra.mxu0 %v2270
        %2305 = vmatpush.msra.mxu0 %v2268
        %2306 = vmatpush.msra.mxu0 %v2266
        %2307 = vmatpush.msra.mxu0 %v2264
        %2308 = vmatpush.msra.mxu0 %v2262
        %2309 = vmatpush.msra.mxu0 %v2260
        %2310 = vmatpush.msra.mxu0 %v2258
        %2311 = vmatpush.msra.mxu0 %v2256
        %2312 = vmatpush.msra.mxu0 %v2254
        %2313 = vmatpush.msra.mxu0 %v2252
        %2314 = vmatpush.msra.mxu0 %v2250
        %2315 = vmatpush.msra.mxu0 %v2248
        %2316 = vmatpush.msra.mxu0 %v2246
        %2317 = vmatpush.msra.mxu0 %v2244
        %2318 = vmatpush.msra.mxu0 %v2242
        %2319 = vmatpush.msra.mxu0 %v2240
        %2320 = vmatmul.f32.gmra.mxu0 %v1948
        %v2321 = vpop.f32.mrf.mxu0
        %v2322 = vadd.f32 0.0, %v2321
        %2323 = vdwg.mxu0
        %2324 = vmatpush.msra.mxu0 %v2302
        %2325 = vmatpush.msra.mxu0 %v2300
        %2326 = vmatpush.msra.mxu0 %v2298
        %2327 = vmatpush.msra.mxu0 %v2296
        %2328 = vmatpush.msra.mxu0 %v2294
        %2329 = vmatpush.msra.mxu0 %v2292
        %2330 = vmatpush.msra.mxu0 %v2290
        %2331 = vmatpush.msra.mxu0 %v2288
        %2332 = vmatpush.msra.mxu0 %v2286
        %2333 = vmatpush.msra.mxu0 %v2284
        %2334 = vmatpush.msra.mxu0 %v2282
        %2335 = vmatpush.msra.mxu0 %v2280
        %2336 = vmatpush.msra.mxu0 %v2278
        %2337 = vmatpush.msra.mxu0 %v2276
        %2338 = vmatpush.msra.mxu0 %v2274
        %2339 = vmatpush.msra.mxu0 %v2272
        %2340 = vmatmul.f32.gmra.mxu0 %v1949
        %v2341 = vpop.f32.mrf.mxu0
        %v2342 = vadd.f32 %v2322, %v2341
        %2343 = vdwg.mxu0
        %2344 = vmatpush.msra.mxu0 %v2271
        %2345 = vmatpush.msra.mxu0 %v2269
        %2346 = vmatpush.msra.mxu0 %v2267
        %2347 = vmatpush.msra.mxu0 %v2265
        %2348 = vmatpush.msra.mxu0 %v2263
        %2349 = vmatpush.msra.mxu0 %v2261
        %2350 = vmatpush.msra.mxu0 %v2259
        %2351 = vmatpush.msra.mxu0 %v2257
        %2352 = vmatpush.msra.mxu0 %v2255
        %2353 = vmatpush.msra.mxu0 %v2253
        %2354 = vmatpush.msra.mxu0 %v2251
        %2355 = vmatpush.msra.mxu0 %v2249
        %2356 = vmatpush.msra.mxu0 %v2247
        %2357 = vmatpush.msra.mxu0 %v2245
        %2358 = vmatpush.msra.mxu0 %v2243
        %2359 = vmatpush.msra.mxu0 %v2241
        %2360 = vmatmul.f32.gmra.mxu0 %v1948
        %v2361 = vpop.f32.mrf.mxu0
        %v2362 = vadd.f32 0.0, %v2361
        %2363 = vdwg.mxu0
        %2364 = vmatpush.msra.mxu0 %v2303
        %2365 = vmatpush.msra.mxu0 %v2301
        %2366 = vmatpush.msra.mxu0 %v2299
        %2367 = vmatpush.msra.mxu0 %v2297
        %2368 = vmatpush.msra.mxu0 %v2295
        %2369 = vmatpush.msra.mxu0 %v2293
        %2370 = vmatpush.msra.mxu0 %v2291
        %2371 = vmatpush.msra.mxu0 %v2289
        %2372 = vmatpush.msra.mxu0 %v2287
        %2373 = vmatpush.msra.mxu0 %v2285
        %2374 = vmatpush.msra.mxu0 %v2283
        %2375 = vmatpush.msra.mxu0 %v2281
        %2376 = vmatpush.msra.mxu0 %v2279
        %2377 = vmatpush.msra.mxu0 %v2277
        %2378 = vmatpush.msra.mxu0 %v2275
        %2379 = vmatpush.msra.mxu0 %v2273
        %2380 = vmatmul.f32.gmra.mxu0 %v1949
        %v2381 = vpop.f32.mrf.mxu0
        %v2382 = vadd.f32 %v2362, %v2381
        %2383 = vdwg.mxu0
        %s2384 = scalar_lea.vmem [#allocation6], 1536
        %v2385 = vld [vmem:[%s2384] sm:$0xff]
        %v2386 = vld [vmem:[%s2384 + $0x8] sm:$0xff]
        %v2387 = vld [vmem:[%s2384 + $0x10] sm:$0xff]
        %v2388 = vld [vmem:[%s2384 + $0x18] sm:$0xff]
        %v2389 = vld [vmem:[%s2384 + $0x20] sm:$0xff]
        %v2390 = vld [vmem:[%s2384 + $0x28] sm:$0xff]
        %v2391 = vld [vmem:[%s2384 + $0x30] sm:$0xff]
        %v2392 = vld [vmem:[%s2384 + $0x38] sm:$0xff]
        %v2393 = vld [vmem:[%s2384 + $0x40] sm:$0xff]
        %v2394 = vld [vmem:[%s2384 + $0x48] sm:$0xff]
        %v2395 = vld [vmem:[%s2384 + $0x50] sm:$0xff]
        %v2396 = vld [vmem:[%s2384 + $0x58] sm:$0xff]
        %v2397 = vld [vmem:[%s2384 + $0x60] sm:$0xff]
        %v2398 = vld [vmem:[%s2384 + $0x68] sm:$0xff]
        %v2399 = vld [vmem:[%s2384 + $0x70] sm:$0xff]
        %v2400 = vld [vmem:[%s2384 + $0x78] sm:$0xff]
        %v2401 = vld [vmem:[%s2384 + $0x80] sm:$0xff]
        %v2402 = vld [vmem:[%s2384 + $0x88] sm:$0xff]
        %v2403 = vld [vmem:[%s2384 + $0x90] sm:$0xff]
        %v2404 = vld [vmem:[%s2384 + $0x98] sm:$0xff]
        %v2405 = vld [vmem:[%s2384 + $0xa0] sm:$0xff]
        %v2406 = vld [vmem:[%s2384 + $0xa8] sm:$0xff]
        %v2407 = vld [vmem:[%s2384 + $0xb0] sm:$0xff]
        %v2408 = vld [vmem:[%s2384 + $0xb8] sm:$0xff]
        %v2409 = vld [vmem:[%s2384 + $0xc0] sm:$0xff]
        %v2410 = vld [vmem:[%s2384 + $0xc8] sm:$0xff]
        %v2411 = vld [vmem:[%s2384 + $0xd0] sm:$0xff]
        %v2412 = vld [vmem:[%s2384 + $0xd8] sm:$0xff]
        %v2413 = vld [vmem:[%s2384 + $0xe0] sm:$0xff]
        %v2414 = vld [vmem:[%s2384 + $0xe8] sm:$0xff]
        %v2415 = vld [vmem:[%s2384 + $0xf0] sm:$0xff]
        %v2416 = vld [vmem:[%s2384 + $0xf8] sm:$0xff]
        %v2417 = vld [vmem:[%s2384 + $0x100] sm:$0xff]
        %v2418 = vld [vmem:[%s2384 + $0x108] sm:$0xff]
        %v2419 = vld [vmem:[%s2384 + $0x110] sm:$0xff]
        %v2420 = vld [vmem:[%s2384 + $0x118] sm:$0xff]
        %v2421 = vld [vmem:[%s2384 + $0x120] sm:$0xff]
        %v2422 = vld [vmem:[%s2384 + $0x128] sm:$0xff]
        %v2423 = vld [vmem:[%s2384 + $0x130] sm:$0xff]
        %v2424 = vld [vmem:[%s2384 + $0x138] sm:$0xff]
        %v2425 = vld [vmem:[%s2384 + $0x140] sm:$0xff]
        %v2426 = vld [vmem:[%s2384 + $0x148] sm:$0xff]
        %v2427 = vld [vmem:[%s2384 + $0x150] sm:$0xff]
        %v2428 = vld [vmem:[%s2384 + $0x158] sm:$0xff]
        %v2429 = vld [vmem:[%s2384 + $0x160] sm:$0xff]
        %v2430 = vld [vmem:[%s2384 + $0x168] sm:$0xff]
        %v2431 = vld [vmem:[%s2384 + $0x170] sm:$0xff]
        %v2432 = vld [vmem:[%s2384 + $0x178] sm:$0xff]
        %v2433 = vld [vmem:[%s2384 + $0x180] sm:$0xff]
        %v2434 = vld [vmem:[%s2384 + $0x188] sm:$0xff]
        %v2435 = vld [vmem:[%s2384 + $0x190] sm:$0xff]
        %v2436 = vld [vmem:[%s2384 + $0x198] sm:$0xff]
        %v2437 = vld [vmem:[%s2384 + $0x1a0] sm:$0xff]
        %v2438 = vld [vmem:[%s2384 + $0x1a8] sm:$0xff]
        %v2439 = vld [vmem:[%s2384 + $0x1b0] sm:$0xff]
        %v2440 = vld [vmem:[%s2384 + $0x1b8] sm:$0xff]
        %v2441 = vld [vmem:[%s2384 + $0x1c0] sm:$0xff]
        %v2442 = vld [vmem:[%s2384 + $0x1c8] sm:$0xff]
        %v2443 = vld [vmem:[%s2384 + $0x1d0] sm:$0xff]
        %v2444 = vld [vmem:[%s2384 + $0x1d8] sm:$0xff]
        %v2445 = vld [vmem:[%s2384 + $0x1e0] sm:$0xff]
        %v2446 = vld [vmem:[%s2384 + $0x1e8] sm:$0xff]
        %v2447 = vld [vmem:[%s2384 + $0x1f0] sm:$0xff]
        %v2448 = vld [vmem:[%s2384 + $0x1f8] sm:$0xff]
        %2449 = vmatpush.msra.mxu0 %v2415
        %2450 = vmatpush.msra.mxu0 %v2413
        %2451 = vmatpush.msra.mxu0 %v2411
        %2452 = vmatpush.msra.mxu0 %v2409
        %2453 = vmatpush.msra.mxu0 %v2407
        %2454 = vmatpush.msra.mxu0 %v2405
        %2455 = vmatpush.msra.mxu0 %v2403
        %2456 = vmatpush.msra.mxu0 %v2401
        %2457 = vmatpush.msra.mxu0 %v2399
        %2458 = vmatpush.msra.mxu0 %v2397
        %2459 = vmatpush.msra.mxu0 %v2395
        %2460 = vmatpush.msra.mxu0 %v2393
        %2461 = vmatpush.msra.mxu0 %v2391
        %2462 = vmatpush.msra.mxu0 %v2389
        %2463 = vmatpush.msra.mxu0 %v2387
        %2464 = vmatpush.msra.mxu0 %v2385
        %2465 = vmatmul.f32.gmra.mxu0 %v1948
        %v2466 = vpop.f32.mrf.mxu0
        %v2467 = vadd.f32 0.0, %v2466
        %2468 = vdwg.mxu0
        %2469 = vmatpush.msra.mxu0 %v2447
        %2470 = vmatpush.msra.mxu0 %v2445
        %2471 = vmatpush.msra.mxu0 %v2443
        %2472 = vmatpush.msra.mxu0 %v2441
        %2473 = vmatpush.msra.mxu0 %v2439
        %2474 = vmatpush.msra.mxu0 %v2437
        %2475 = vmatpush.msra.mxu0 %v2435
        %2476 = vmatpush.msra.mxu0 %v2433
        %2477 = vmatpush.msra.mxu0 %v2431
        %2478 = vmatpush.msra.mxu0 %v2429
        %2479 = vmatpush.msra.mxu0 %v2427
        %2480 = vmatpush.msra.mxu0 %v2425
        %2481 = vmatpush.msra.mxu0 %v2423
        %2482 = vmatpush.msra.mxu0 %v2421
        %2483 = vmatpush.msra.mxu0 %v2419
        %2484 = vmatpush.msra.mxu0 %v2417
        %2485 = vmatmul.f32.gmra.mxu0 %v1949
        %v2486 = vpop.f32.mrf.mxu0
        %v2487 = vadd.f32 %v2467, %v2486
        %2488 = vdwg.mxu0
        %2489 = vmatpush.msra.mxu0 %v2416
        %2490 = vmatpush.msra.mxu0 %v2414
        %2491 = vmatpush.msra.mxu0 %v2412
        %2492 = vmatpush.msra.mxu0 %v2410
        %2493 = vmatpush.msra.mxu0 %v2408
        %2494 = vmatpush.msra.mxu0 %v2406
        %2495 = vmatpush.msra.mxu0 %v2404
        %2496 = vmatpush.msra.mxu0 %v2402
        %2497 = vmatpush.msra.mxu0 %v2400
        %2498 = vmatpush.msra.mxu0 %v2398
        %2499 = vmatpush.msra.mxu0 %v2396
        %2500 = vmatpush.msra.mxu0 %v2394
        %2501 = vmatpush.msra.mxu0 %v2392
        %2502 = vmatpush.msra.mxu0 %v2390
        %2503 = vmatpush.msra.mxu0 %v2388
        %2504 = vmatpush.msra.mxu0 %v2386
        %2505 = vmatmul.f32.gmra.mxu0 %v1948
        %v2506 = vpop.f32.mrf.mxu0
        %v2507 = vadd.f32 0.0, %v2506
        %2508 = vdwg.mxu0
        %2509 = vmatpush.msra.mxu0 %v2448
        %2510 = vmatpush.msra.mxu0 %v2446
        %2511 = vmatpush.msra.mxu0 %v2444
        %2512 = vmatpush.msra.mxu0 %v2442
        %2513 = vmatpush.msra.mxu0 %v2440
        %2514 = vmatpush.msra.mxu0 %v2438
        %2515 = vmatpush.msra.mxu0 %v2436
        %2516 = vmatpush.msra.mxu0 %v2434
        %2517 = vmatpush.msra.mxu0 %v2432
        %2518 = vmatpush.msra.mxu0 %v2430
        %2519 = vmatpush.msra.mxu0 %v2428
        %2520 = vmatpush.msra.mxu0 %v2426
        %2521 = vmatpush.msra.mxu0 %v2424
        %2522 = vmatpush.msra.mxu0 %v2422
        %2523 = vmatpush.msra.mxu0 %v2420
        %2524 = vmatpush.msra.mxu0 %v2418
        %2525 = vmatmul.f32.gmra.mxu0 %v1949
        %v2526 = vpop.f32.mrf.mxu0
        %v2527 = vadd.f32 %v2507, %v2526
        %2528 = vdwg.mxu0
        %s2529 = scalar_lea.vmem [#allocation6], 2048
        %v2530 = vld [vmem:[%s2529] sm:$0xff]
        %v2531 = vld [vmem:[%s2529 + $0x8] sm:$0xff]
        %v2532 = vld [vmem:[%s2529 + $0x10] sm:$0xff]
        %v2533 = vld [vmem:[%s2529 + $0x18] sm:$0xff]
        %v2534 = vld [vmem:[%s2529 + $0x20] sm:$0xff]
        %v2535 = vld [vmem:[%s2529 + $0x28] sm:$0xff]
        %v2536 = vld [vmem:[%s2529 + $0x30] sm:$0xff]
        %v2537 = vld [vmem:[%s2529 + $0x38] sm:$0xff]
        %v2538 = vld [vmem:[%s2529 + $0x40] sm:$0xff]
        %v2539 = vld [vmem:[%s2529 + $0x48] sm:$0xff]
        %v2540 = vld [vmem:[%s2529 + $0x50] sm:$0xff]
        %v2541 = vld [vmem:[%s2529 + $0x58] sm:$0xff]
        %v2542 = vld [vmem:[%s2529 + $0x60] sm:$0xff]
        %v2543 = vld [vmem:[%s2529 + $0x68] sm:$0xff]
        %v2544 = vld [vmem:[%s2529 + $0x70] sm:$0xff]
        %v2545 = vld [vmem:[%s2529 + $0x78] sm:$0xff]
        %v2546 = vld [vmem:[%s2529 + $0x80] sm:$0xff]
        %v2547 = vld [vmem:[%s2529 + $0x88] sm:$0xff]
        %v2548 = vld [vmem:[%s2529 + $0x90] sm:$0xff]
        %v2549 = vld [vmem:[%s2529 + $0x98] sm:$0xff]
        %v2550 = vld [vmem:[%s2529 + $0xa0] sm:$0xff]
        %v2551 = vld [vmem:[%s2529 + $0xa8] sm:$0xff]
        %v2552 = vld [vmem:[%s2529 + $0xb0] sm:$0xff]
        %v2553 = vld [vmem:[%s2529 + $0xb8] sm:$0xff]
        %v2554 = vld [vmem:[%s2529 + $0xc0] sm:$0xff]
        %v2555 = vld [vmem:[%s2529 + $0xc8] sm:$0xff]
        %v2556 = vld [vmem:[%s2529 + $0xd0] sm:$0xff]
        %v2557 = vld [vmem:[%s2529 + $0xd8] sm:$0xff]
        %v2558 = vld [vmem:[%s2529 + $0xe0] sm:$0xff]
        %v2559 = vld [vmem:[%s2529 + $0xe8] sm:$0xff]
        %v2560 = vld [vmem:[%s2529 + $0xf0] sm:$0xff]
        %v2561 = vld [vmem:[%s2529 + $0xf8] sm:$0xff]
        %v2562 = vld [vmem:[%s2529 + $0x100] sm:$0xff]
        %v2563 = vld [vmem:[%s2529 + $0x108] sm:$0xff]
        %v2564 = vld [vmem:[%s2529 + $0x110] sm:$0xff]
        %v2565 = vld [vmem:[%s2529 + $0x118] sm:$0xff]
        %v2566 = vld [vmem:[%s2529 + $0x120] sm:$0xff]
        %v2567 = vld [vmem:[%s2529 + $0x128] sm:$0xff]
        %v2568 = vld [vmem:[%s2529 + $0x130] sm:$0xff]
        %v2569 = vld [vmem:[%s2529 + $0x138] sm:$0xff]
        %v2570 = vld [vmem:[%s2529 + $0x140] sm:$0xff]
        %v2571 = vld [vmem:[%s2529 + $0x148] sm:$0xff]
        %v2572 = vld [vmem:[%s2529 + $0x150] sm:$0xff]
        %v2573 = vld [vmem:[%s2529 + $0x158] sm:$0xff]
        %v2574 = vld [vmem:[%s2529 + $0x160] sm:$0xff]
        %v2575 = vld [vmem:[%s2529 + $0x168] sm:$0xff]
        %v2576 = vld [vmem:[%s2529 + $0x170] sm:$0xff]
        %v2577 = vld [vmem:[%s2529 + $0x178] sm:$0xff]
        %v2578 = vld [vmem:[%s2529 + $0x180] sm:$0xff]
        %v2579 = vld [vmem:[%s2529 + $0x188] sm:$0xff]
        %v2580 = vld [vmem:[%s2529 + $0x190] sm:$0xff]
        %v2581 = vld [vmem:[%s2529 + $0x198] sm:$0xff]
        %v2582 = vld [vmem:[%s2529 + $0x1a0] sm:$0xff]
        %v2583 = vld [vmem:[%s2529 + $0x1a8] sm:$0xff]
        %v2584 = vld [vmem:[%s2529 + $0x1b0] sm:$0xff]
        %v2585 = vld [vmem:[%s2529 + $0x1b8] sm:$0xff]
        %v2586 = vld [vmem:[%s2529 + $0x1c0] sm:$0xff]
        %v2587 = vld [vmem:[%s2529 + $0x1c8] sm:$0xff]
        %v2588 = vld [vmem:[%s2529 + $0x1d0] sm:$0xff]
        %v2589 = vld [vmem:[%s2529 + $0x1d8] sm:$0xff]
        %v2590 = vld [vmem:[%s2529 + $0x1e0] sm:$0xff]
        %v2591 = vld [vmem:[%s2529 + $0x1e8] sm:$0xff]
        %v2592 = vld [vmem:[%s2529 + $0x1f0] sm:$0xff]
        %v2593 = vld [vmem:[%s2529 + $0x1f8] sm:$0xff]
        %2594 = vmatpush.msra.mxu0 %v2560
        %2595 = vmatpush.msra.mxu0 %v2558
        %2596 = vmatpush.msra.mxu0 %v2556
        %2597 = vmatpush.msra.mxu0 %v2554
        %2598 = vmatpush.msra.mxu0 %v2552
        %2599 = vmatpush.msra.mxu0 %v2550
        %2600 = vmatpush.msra.mxu0 %v2548
        %2601 = vmatpush.msra.mxu0 %v2546
        %2602 = vmatpush.msra.mxu0 %v2544
        %2603 = vmatpush.msra.mxu0 %v2542
        %2604 = vmatpush.msra.mxu0 %v2540
        %2605 = vmatpush.msra.mxu0 %v2538
        %2606 = vmatpush.msra.mxu0 %v2536
        %2607 = vmatpush.msra.mxu0 %v2534
        %2608 = vmatpush.msra.mxu0 %v2532
        %2609 = vmatpush.msra.mxu0 %v2530
        %2610 = vmatmul.f32.gmra.mxu0 %v1948
        %v2611 = vpop.f32.mrf.mxu0
        %v2612 = vadd.f32 0.0, %v2611
        %2613 = vdwg.mxu0
        %2614 = vmatpush.msra.mxu0 %v2592
        %2615 = vmatpush.msra.mxu0 %v2590
        %2616 = vmatpush.msra.mxu0 %v2588
        %2617 = vmatpush.msra.mxu0 %v2586
        %2618 = vmatpush.msra.mxu0 %v2584
        %2619 = vmatpush.msra.mxu0 %v2582
        %2620 = vmatpush.msra.mxu0 %v2580
        %2621 = vmatpush.msra.mxu0 %v2578
        %2622 = vmatpush.msra.mxu0 %v2576
        %2623 = vmatpush.msra.mxu0 %v2574
        %2624 = vmatpush.msra.mxu0 %v2572
        %2625 = vmatpush.msra.mxu0 %v2570
        %2626 = vmatpush.msra.mxu0 %v2568
        %2627 = vmatpush.msra.mxu0 %v2566
        %2628 = vmatpush.msra.mxu0 %v2564
        %2629 = vmatpush.msra.mxu0 %v2562
        %2630 = vmatmul.f32.gmra.mxu0 %v1949
        %v2631 = vpop.f32.mrf.mxu0
        %v2632 = vadd.f32 %v2612, %v2631
        %2633 = vdwg.mxu0
        %2634 = vmatpush.msra.mxu0 %v2561
        %2635 = vmatpush.msra.mxu0 %v2559
        %2636 = vmatpush.msra.mxu0 %v2557
        %2637 = vmatpush.msra.mxu0 %v2555
        %2638 = vmatpush.msra.mxu0 %v2553
        %2639 = vmatpush.msra.mxu0 %v2551
        %2640 = vmatpush.msra.mxu0 %v2549
        %2641 = vmatpush.msra.mxu0 %v2547
        %2642 = vmatpush.msra.mxu0 %v2545
        %2643 = vmatpush.msra.mxu0 %v2543
        %2644 = vmatpush.msra.mxu0 %v2541
        %2645 = vmatpush.msra.mxu0 %v2539
        %2646 = vmatpush.msra.mxu0 %v2537
        %2647 = vmatpush.msra.mxu0 %v2535
        %2648 = vmatpush.msra.mxu0 %v2533
        %2649 = vmatpush.msra.mxu0 %v2531
        %2650 = vmatmul.f32.gmra.mxu0 %v1948
        %v2651 = vpop.f32.mrf.mxu0
        %v2652 = vadd.f32 0.0, %v2651
        %2653 = vdwg.mxu0
        %2654 = vmatpush.msra.mxu0 %v2593
        %2655 = vmatpush.msra.mxu0 %v2591
        %2656 = vmatpush.msra.mxu0 %v2589
        %2657 = vmatpush.msra.mxu0 %v2587
        %2658 = vmatpush.msra.mxu0 %v2585
        %2659 = vmatpush.msra.mxu0 %v2583
        %2660 = vmatpush.msra.mxu0 %v2581
        %2661 = vmatpush.msra.mxu0 %v2579
        %2662 = vmatpush.msra.mxu0 %v2577
        %2663 = vmatpush.msra.mxu0 %v2575
        %2664 = vmatpush.msra.mxu0 %v2573
        %2665 = vmatpush.msra.mxu0 %v2571
        %2666 = vmatpush.msra.mxu0 %v2569
        %2667 = vmatpush.msra.mxu0 %v2567
        %2668 = vmatpush.msra.mxu0 %v2565
        %2669 = vmatpush.msra.mxu0 %v2563
        %2670 = vmatmul.f32.gmra.mxu0 %v1949
        %v2671 = vpop.f32.mrf.mxu0
        %v2672 = vadd.f32 %v2652, %v2671
        %2673 = vdwg.mxu0
        %s2674 = scalar_lea.vmem [#allocation6], 2560
        %v2675 = vld [vmem:[%s2674] sm:$0xff]
        %v2676 = vld [vmem:[%s2674 + $0x8] sm:$0xff]
        %v2677 = vld [vmem:[%s2674 + $0x10] sm:$0xff]
        %v2678 = vld [vmem:[%s2674 + $0x18] sm:$0xff]
        %v2679 = vld [vmem:[%s2674 + $0x20] sm:$0xff]
        %v2680 = vld [vmem:[%s2674 + $0x28] sm:$0xff]
        %v2681 = vld [vmem:[%s2674 + $0x30] sm:$0xff]
        %v2682 = vld [vmem:[%s2674 + $0x38] sm:$0xff]
        %v2683 = vld [vmem:[%s2674 + $0x40] sm:$0xff]
        %v2684 = vld [vmem:[%s2674 + $0x48] sm:$0xff]
        %v2685 = vld [vmem:[%s2674 + $0x50] sm:$0xff]
        %v2686 = vld [vmem:[%s2674 + $0x58] sm:$0xff]
        %v2687 = vld [vmem:[%s2674 + $0x60] sm:$0xff]
        %v2688 = vld [vmem:[%s2674 + $0x68] sm:$0xff]
        %v2689 = vld [vmem:[%s2674 + $0x70] sm:$0xff]
        %v2690 = vld [vmem:[%s2674 + $0x78] sm:$0xff]
        %v2691 = vld [vmem:[%s2674 + $0x80] sm:$0xff]
        %v2692 = vld [vmem:[%s2674 + $0x88] sm:$0xff]
        %v2693 = vld [vmem:[%s2674 + $0x90] sm:$0xff]
        %v2694 = vld [vmem:[%s2674 + $0x98] sm:$0xff]
        %v2695 = vld [vmem:[%s2674 + $0xa0] sm:$0xff]
        %v2696 = vld [vmem:[%s2674 + $0xa8] sm:$0xff]
        %v2697 = vld [vmem:[%s2674 + $0xb0] sm:$0xff]
        %v2698 = vld [vmem:[%s2674 + $0xb8] sm:$0xff]
        %v2699 = vld [vmem:[%s2674 + $0xc0] sm:$0xff]
        %v2700 = vld [vmem:[%s2674 + $0xc8] sm:$0xff]
        %v2701 = vld [vmem:[%s2674 + $0xd0] sm:$0xff]
        %v2702 = vld [vmem:[%s2674 + $0xd8] sm:$0xff]
        %v2703 = vld [vmem:[%s2674 + $0xe0] sm:$0xff]
        %v2704 = vld [vmem:[%s2674 + $0xe8] sm:$0xff]
        %v2705 = vld [vmem:[%s2674 + $0xf0] sm:$0xff]
        %v2706 = vld [vmem:[%s2674 + $0xf8] sm:$0xff]
        %v2707 = vld [vmem:[%s2674 + $0x100] sm:$0xff]
        %v2708 = vld [vmem:[%s2674 + $0x108] sm:$0xff]
        %v2709 = vld [vmem:[%s2674 + $0x110] sm:$0xff]
        %v2710 = vld [vmem:[%s2674 + $0x118] sm:$0xff]
        %v2711 = vld [vmem:[%s2674 + $0x120] sm:$0xff]
        %v2712 = vld [vmem:[%s2674 + $0x128] sm:$0xff]
        %v2713 = vld [vmem:[%s2674 + $0x130] sm:$0xff]
        %v2714 = vld [vmem:[%s2674 + $0x138] sm:$0xff]
        %v2715 = vld [vmem:[%s2674 + $0x140] sm:$0xff]
        %v2716 = vld [vmem:[%s2674 + $0x148] sm:$0xff]
        %v2717 = vld [vmem:[%s2674 + $0x150] sm:$0xff]
        %v2718 = vld [vmem:[%s2674 + $0x158] sm:$0xff]
        %v2719 = vld [vmem:[%s2674 + $0x160] sm:$0xff]
        %v2720 = vld [vmem:[%s2674 + $0x168] sm:$0xff]
        %v2721 = vld [vmem:[%s2674 + $0x170] sm:$0xff]
        %v2722 = vld [vmem:[%s2674 + $0x178] sm:$0xff]
        %v2723 = vld [vmem:[%s2674 + $0x180] sm:$0xff]
        %v2724 = vld [vmem:[%s2674 + $0x188] sm:$0xff]
        %v2725 = vld [vmem:[%s2674 + $0x190] sm:$0xff]
        %v2726 = vld [vmem:[%s2674 + $0x198] sm:$0xff]
        %v2727 = vld [vmem:[%s2674 + $0x1a0] sm:$0xff]
        %v2728 = vld [vmem:[%s2674 + $0x1a8] sm:$0xff]
        %v2729 = vld [vmem:[%s2674 + $0x1b0] sm:$0xff]
        %v2730 = vld [vmem:[%s2674 + $0x1b8] sm:$0xff]
        %v2731 = vld [vmem:[%s2674 + $0x1c0] sm:$0xff]
        %v2732 = vld [vmem:[%s2674 + $0x1c8] sm:$0xff]
        %v2733 = vld [vmem:[%s2674 + $0x1d0] sm:$0xff]
        %v2734 = vld [vmem:[%s2674 + $0x1d8] sm:$0xff]
        %v2735 = vld [vmem:[%s2674 + $0x1e0] sm:$0xff]
        %v2736 = vld [vmem:[%s2674 + $0x1e8] sm:$0xff]
        %v2737 = vld [vmem:[%s2674 + $0x1f0] sm:$0xff]
        %v2738 = vld [vmem:[%s2674 + $0x1f8] sm:$0xff]
        %2739 = vmatpush.msra.mxu0 %v2705
        %2740 = vmatpush.msra.mxu0 %v2703
        %2741 = vmatpush.msra.mxu0 %v2701
        %2742 = vmatpush.msra.mxu0 %v2699
        %2743 = vmatpush.msra.mxu0 %v2697
        %2744 = vmatpush.msra.mxu0 %v2695
        %2745 = vmatpush.msra.mxu0 %v2693
        %2746 = vmatpush.msra.mxu0 %v2691
        %2747 = vmatpush.msra.mxu0 %v2689
        %2748 = vmatpush.msra.mxu0 %v2687
        %2749 = vmatpush.msra.mxu0 %v2685
        %2750 = vmatpush.msra.mxu0 %v2683
        %2751 = vmatpush.msra.mxu0 %v2681
        %2752 = vmatpush.msra.mxu0 %v2679
        %2753 = vmatpush.msra.mxu0 %v2677
        %2754 = vmatpush.msra.mxu0 %v2675
        %2755 = vmatmul.f32.gmra.mxu0 %v1948
        %v2756 = vpop.f32.mrf.mxu0
        %v2757 = vadd.f32 0.0, %v2756
        %2758 = vdwg.mxu0
        %2759 = vmatpush.msra.mxu0 %v2737
        %2760 = vmatpush.msra.mxu0 %v2735
        %2761 = vmatpush.msra.mxu0 %v2733
        %2762 = vmatpush.msra.mxu0 %v2731
        %2763 = vmatpush.msra.mxu0 %v2729
        %2764 = vmatpush.msra.mxu0 %v2727
        %2765 = vmatpush.msra.mxu0 %v2725
        %2766 = vmatpush.msra.mxu0 %v2723
        %2767 = vmatpush.msra.mxu0 %v2721
        %2768 = vmatpush.msra.mxu0 %v2719
        %2769 = vmatpush.msra.mxu0 %v2717
        %2770 = vmatpush.msra.mxu0 %v2715
        %2771 = vmatpush.msra.mxu0 %v2713
        %2772 = vmatpush.msra.mxu0 %v2711
        %2773 = vmatpush.msra.mxu0 %v2709
        %2774 = vmatpush.msra.mxu0 %v2707
        %2775 = vmatmul.f32.gmra.mxu0 %v1949
        %v2776 = vpop.f32.mrf.mxu0
        %v2777 = vadd.f32 %v2757, %v2776
        %2778 = vdwg.mxu0
        %2779 = vmatpush.msra.mxu0 %v2706
        %2780 = vmatpush.msra.mxu0 %v2704
        %2781 = vmatpush.msra.mxu0 %v2702
        %2782 = vmatpush.msra.mxu0 %v2700
        %2783 = vmatpush.msra.mxu0 %v2698
        %2784 = vmatpush.msra.mxu0 %v2696
        %2785 = vmatpush.msra.mxu0 %v2694
        %2786 = vmatpush.msra.mxu0 %v2692
        %2787 = vmatpush.msra.mxu0 %v2690
        %2788 = vmatpush.msra.mxu0 %v2688
        %2789 = vmatpush.msra.mxu0 %v2686
        %2790 = vmatpush.msra.mxu0 %v2684
        %2791 = vmatpush.msra.mxu0 %v2682
        %2792 = vmatpush.msra.mxu0 %v2680
        %2793 = vmatpush.msra.mxu0 %v2678
        %2794 = vmatpush.msra.mxu0 %v2676
        %2795 = vmatmul.f32.gmra.mxu0 %v1948
        %v2796 = vpop.f32.mrf.mxu0
        %v2797 = vadd.f32 0.0, %v2796
        %2798 = vdwg.mxu0
        %2799 = vmatpush.msra.mxu0 %v2738
        %2800 = vmatpush.msra.mxu0 %v2736
        %2801 = vmatpush.msra.mxu0 %v2734
        %2802 = vmatpush.msra.mxu0 %v2732
        %2803 = vmatpush.msra.mxu0 %v2730
        %2804 = vmatpush.msra.mxu0 %v2728
        %2805 = vmatpush.msra.mxu0 %v2726
        %2806 = vmatpush.msra.mxu0 %v2724
        %2807 = vmatpush.msra.mxu0 %v2722
        %2808 = vmatpush.msra.mxu0 %v2720
        %2809 = vmatpush.msra.mxu0 %v2718
        %2810 = vmatpush.msra.mxu0 %v2716
        %2811 = vmatpush.msra.mxu0 %v2714
        %2812 = vmatpush.msra.mxu0 %v2712
        %2813 = vmatpush.msra.mxu0 %v2710
        %2814 = vmatpush.msra.mxu0 %v2708
        %2815 = vmatmul.f32.gmra.mxu0 %v1949
        %v2816 = vpop.f32.mrf.mxu0
        %v2817 = vadd.f32 %v2797, %v2816
        %2818 = vdwg.mxu0
        %s2819 = scalar_lea.vmem [#allocation6], 3072
        %v2820 = vld [vmem:[%s2819] sm:$0xff]
        %v2821 = vld [vmem:[%s2819 + $0x8] sm:$0xff]
        %v2822 = vld [vmem:[%s2819 + $0x10] sm:$0xff]
        %v2823 = vld [vmem:[%s2819 + $0x18] sm:$0xff]
        %v2824 = vld [vmem:[%s2819 + $0x20] sm:$0xff]
        %v2825 = vld [vmem:[%s2819 + $0x28] sm:$0xff]
        %v2826 = vld [vmem:[%s2819 + $0x30] sm:$0xff]
        %v2827 = vld [vmem:[%s2819 + $0x38] sm:$0xff]
        %v2828 = vld [vmem:[%s2819 + $0x40] sm:$0xff]
        %v2829 = vld [vmem:[%s2819 + $0x48] sm:$0xff]
        %v2830 = vld [vmem:[%s2819 + $0x50] sm:$0xff]
        %v2831 = vld [vmem:[%s2819 + $0x58] sm:$0xff]
        %v2832 = vld [vmem:[%s2819 + $0x60] sm:$0xff]
        %v2833 = vld [vmem:[%s2819 + $0x68] sm:$0xff]
        %v2834 = vld [vmem:[%s2819 + $0x70] sm:$0xff]
        %v2835 = vld [vmem:[%s2819 + $0x78] sm:$0xff]
        %v2836 = vld [vmem:[%s2819 + $0x80] sm:$0xff]
        %v2837 = vld [vmem:[%s2819 + $0x88] sm:$0xff]
        %v2838 = vld [vmem:[%s2819 + $0x90] sm:$0xff]
        %v2839 = vld [vmem:[%s2819 + $0x98] sm:$0xff]
        %v2840 = vld [vmem:[%s2819 + $0xa0] sm:$0xff]
        %v2841 = vld [vmem:[%s2819 + $0xa8] sm:$0xff]
        %v2842 = vld [vmem:[%s2819 + $0xb0] sm:$0xff]
        %v2843 = vld [vmem:[%s2819 + $0xb8] sm:$0xff]
        %v2844 = vld [vmem:[%s2819 + $0xc0] sm:$0xff]
        %v2845 = vld [vmem:[%s2819 + $0xc8] sm:$0xff]
        %v2846 = vld [vmem:[%s2819 + $0xd0] sm:$0xff]
        %v2847 = vld [vmem:[%s2819 + $0xd8] sm:$0xff]
        %v2848 = vld [vmem:[%s2819 + $0xe0] sm:$0xff]
        %v2849 = vld [vmem:[%s2819 + $0xe8] sm:$0xff]
        %v2850 = vld [vmem:[%s2819 + $0xf0] sm:$0xff]
        %v2851 = vld [vmem:[%s2819 + $0xf8] sm:$0xff]
        %v2852 = vld [vmem:[%s2819 + $0x100] sm:$0xff]
        %v2853 = vld [vmem:[%s2819 + $0x108] sm:$0xff]
        %v2854 = vld [vmem:[%s2819 + $0x110] sm:$0xff]
        %v2855 = vld [vmem:[%s2819 + $0x118] sm:$0xff]
        %v2856 = vld [vmem:[%s2819 + $0x120] sm:$0xff]
        %v2857 = vld [vmem:[%s2819 + $0x128] sm:$0xff]
        %v2858 = vld [vmem:[%s2819 + $0x130] sm:$0xff]
        %v2859 = vld [vmem:[%s2819 + $0x138] sm:$0xff]
        %v2860 = vld [vmem:[%s2819 + $0x140] sm:$0xff]
        %v2861 = vld [vmem:[%s2819 + $0x148] sm:$0xff]
        %v2862 = vld [vmem:[%s2819 + $0x150] sm:$0xff]
        %v2863 = vld [vmem:[%s2819 + $0x158] sm:$0xff]
        %v2864 = vld [vmem:[%s2819 + $0x160] sm:$0xff]
        %v2865 = vld [vmem:[%s2819 + $0x168] sm:$0xff]
        %v2866 = vld [vmem:[%s2819 + $0x170] sm:$0xff]
        %v2867 = vld [vmem:[%s2819 + $0x178] sm:$0xff]
        %v2868 = vld [vmem:[%s2819 + $0x180] sm:$0xff]
        %v2869 = vld [vmem:[%s2819 + $0x188] sm:$0xff]
        %v2870 = vld [vmem:[%s2819 + $0x190] sm:$0xff]
        %v2871 = vld [vmem:[%s2819 + $0x198] sm:$0xff]
        %v2872 = vld [vmem:[%s2819 + $0x1a0] sm:$0xff]
        %v2873 = vld [vmem:[%s2819 + $0x1a8] sm:$0xff]
        %v2874 = vld [vmem:[%s2819 + $0x1b0] sm:$0xff]
        %v2875 = vld [vmem:[%s2819 + $0x1b8] sm:$0xff]
        %v2876 = vld [vmem:[%s2819 + $0x1c0] sm:$0xff]
        %v2877 = vld [vmem:[%s2819 + $0x1c8] sm:$0xff]
        %v2878 = vld [vmem:[%s2819 + $0x1d0] sm:$0xff]
        %v2879 = vld [vmem:[%s2819 + $0x1d8] sm:$0xff]
        %v2880 = vld [vmem:[%s2819 + $0x1e0] sm:$0xff]
        %v2881 = vld [vmem:[%s2819 + $0x1e8] sm:$0xff]
        %v2882 = vld [vmem:[%s2819 + $0x1f0] sm:$0xff]
        %v2883 = vld [vmem:[%s2819 + $0x1f8] sm:$0xff]
        %2884 = vmatpush.msra.mxu0 %v2850
        %2885 = vmatpush.msra.mxu0 %v2848
        %2886 = vmatpush.msra.mxu0 %v2846
        %2887 = vmatpush.msra.mxu0 %v2844
        %2888 = vmatpush.msra.mxu0 %v2842
        %2889 = vmatpush.msra.mxu0 %v2840
        %2890 = vmatpush.msra.mxu0 %v2838
        %2891 = vmatpush.msra.mxu0 %v2836
        %2892 = vmatpush.msra.mxu0 %v2834
        %2893 = vmatpush.msra.mxu0 %v2832
        %2894 = vmatpush.msra.mxu0 %v2830
        %2895 = vmatpush.msra.mxu0 %v2828
        %2896 = vmatpush.msra.mxu0 %v2826
        %2897 = vmatpush.msra.mxu0 %v2824
        %2898 = vmatpush.msra.mxu0 %v2822
        %2899 = vmatpush.msra.mxu0 %v2820
        %2900 = vmatmul.f32.gmra.mxu0 %v1948
        %v2901 = vpop.f32.mrf.mxu0
        %v2902 = vadd.f32 0.0, %v2901
        %2903 = vdwg.mxu0
        %2904 = vmatpush.msra.mxu0 %v2882
        %2905 = vmatpush.msra.mxu0 %v2880
        %2906 = vmatpush.msra.mxu0 %v2878
        %2907 = vmatpush.msra.mxu0 %v2876
        %2908 = vmatpush.msra.mxu0 %v2874
        %2909 = vmatpush.msra.mxu0 %v2872
        %2910 = vmatpush.msra.mxu0 %v2870
        %2911 = vmatpush.msra.mxu0 %v2868
        %2912 = vmatpush.msra.mxu0 %v2866
        %2913 = vmatpush.msra.mxu0 %v2864
        %2914 = vmatpush.msra.mxu0 %v2862
        %2915 = vmatpush.msra.mxu0 %v2860
        %2916 = vmatpush.msra.mxu0 %v2858
        %2917 = vmatpush.msra.mxu0 %v2856
        %2918 = vmatpush.msra.mxu0 %v2854
        %2919 = vmatpush.msra.mxu0 %v2852
        %2920 = vmatmul.f32.gmra.mxu0 %v1949
        %v2921 = vpop.f32.mrf.mxu0
        %v2922 = vadd.f32 %v2902, %v2921
        %2923 = vdwg.mxu0
        %2924 = vmatpush.msra.mxu0 %v2851
        %2925 = vmatpush.msra.mxu0 %v2849
        %2926 = vmatpush.msra.mxu0 %v2847
        %2927 = vmatpush.msra.mxu0 %v2845
        %2928 = vmatpush.msra.mxu0 %v2843
        %2929 = vmatpush.msra.mxu0 %v2841
        %2930 = vmatpush.msra.mxu0 %v2839
        %2931 = vmatpush.msra.mxu0 %v2837
        %2932 = vmatpush.msra.mxu0 %v2835
        %2933 = vmatpush.msra.mxu0 %v2833
        %2934 = vmatpush.msra.mxu0 %v2831
        %2935 = vmatpush.msra.mxu0 %v2829
        %2936 = vmatpush.msra.mxu0 %v2827
        %2937 = vmatpush.msra.mxu0 %v2825
        %2938 = vmatpush.msra.mxu0 %v2823
        %2939 = vmatpush.msra.mxu0 %v2821
        %2940 = vmatmul.f32.gmra.mxu0 %v1948
        %v2941 = vpop.f32.mrf.mxu0
        %v2942 = vadd.f32 0.0, %v2941
        %2943 = vdwg.mxu0
        %2944 = vmatpush.msra.mxu0 %v2883
        %2945 = vmatpush.msra.mxu0 %v2881
        %2946 = vmatpush.msra.mxu0 %v2879
        %2947 = vmatpush.msra.mxu0 %v2877
        %2948 = vmatpush.msra.mxu0 %v2875
        %2949 = vmatpush.msra.mxu0 %v2873
        %2950 = vmatpush.msra.mxu0 %v2871
        %2951 = vmatpush.msra.mxu0 %v2869
        %2952 = vmatpush.msra.mxu0 %v2867
        %2953 = vmatpush.msra.mxu0 %v2865
        %2954 = vmatpush.msra.mxu0 %v2863
        %2955 = vmatpush.msra.mxu0 %v2861
        %2956 = vmatpush.msra.mxu0 %v2859
        %2957 = vmatpush.msra.mxu0 %v2857
        %2958 = vmatpush.msra.mxu0 %v2855
        %2959 = vmatpush.msra.mxu0 %v2853
        %2960 = vmatmul.f32.gmra.mxu0 %v1949
        %v2961 = vpop.f32.mrf.mxu0
        %v2962 = vadd.f32 %v2942, %v2961
        %2963 = vdwg.mxu0
        %s2964 = scalar_lea.vmem [#allocation6], 3584
        %v2965 = vld [vmem:[%s2964] sm:$0xff]
        %v2966 = vld [vmem:[%s2964 + $0x8] sm:$0xff]
        %v2967 = vld [vmem:[%s2964 + $0x10] sm:$0xff]
        %v2968 = vld [vmem:[%s2964 + $0x18] sm:$0xff]
        %v2969 = vld [vmem:[%s2964 + $0x20] sm:$0xff]
        %v2970 = vld [vmem:[%s2964 + $0x28] sm:$0xff]
        %v2971 = vld [vmem:[%s2964 + $0x30] sm:$0xff]
        %v2972 = vld [vmem:[%s2964 + $0x38] sm:$0xff]
        %v2973 = vld [vmem:[%s2964 + $0x40] sm:$0xff]
        %v2974 = vld [vmem:[%s2964 + $0x48] sm:$0xff]
        %v2975 = vld [vmem:[%s2964 + $0x50] sm:$0xff]
        %v2976 = vld [vmem:[%s2964 + $0x58] sm:$0xff]
        %v2977 = vld [vmem:[%s2964 + $0x60] sm:$0xff]
        %v2978 = vld [vmem:[%s2964 + $0x68] sm:$0xff]
        %v2979 = vld [vmem:[%s2964 + $0x70] sm:$0xff]
        %v2980 = vld [vmem:[%s2964 + $0x78] sm:$0xff]
        %v2981 = vld [vmem:[%s2964 + $0x80] sm:$0xff]
        %v2982 = vld [vmem:[%s2964 + $0x88] sm:$0xff]
        %v2983 = vld [vmem:[%s2964 + $0x90] sm:$0xff]
        %v2984 = vld [vmem:[%s2964 + $0x98] sm:$0xff]
        %v2985 = vld [vmem:[%s2964 + $0xa0] sm:$0xff]
        %v2986 = vld [vmem:[%s2964 + $0xa8] sm:$0xff]
        %v2987 = vld [vmem:[%s2964 + $0xb0] sm:$0xff]
        %v2988 = vld [vmem:[%s2964 + $0xb8] sm:$0xff]
        %v2989 = vld [vmem:[%s2964 + $0xc0] sm:$0xff]
        %v2990 = vld [vmem:[%s2964 + $0xc8] sm:$0xff]
        %v2991 = vld [vmem:[%s2964 + $0xd0] sm:$0xff]
        %v2992 = vld [vmem:[%s2964 + $0xd8] sm:$0xff]
        %v2993 = vld [vmem:[%s2964 + $0xe0] sm:$0xff]
        %v2994 = vld [vmem:[%s2964 + $0xe8] sm:$0xff]
        %v2995 = vld [vmem:[%s2964 + $0xf0] sm:$0xff]
        %v2996 = vld [vmem:[%s2964 + $0xf8] sm:$0xff]
        %v2997 = vld [vmem:[%s2964 + $0x100] sm:$0xff]
        %v2998 = vld [vmem:[%s2964 + $0x108] sm:$0xff]
        %v2999 = vld [vmem:[%s2964 + $0x110] sm:$0xff]
        %v3000 = vld [vmem:[%s2964 + $0x118] sm:$0xff]
        %v3001 = vld [vmem:[%s2964 + $0x120] sm:$0xff]
        %v3002 = vld [vmem:[%s2964 + $0x128] sm:$0xff]
        %v3003 = vld [vmem:[%s2964 + $0x130] sm:$0xff]
        %v3004 = vld [vmem:[%s2964 + $0x138] sm:$0xff]
        %v3005 = vld [vmem:[%s2964 + $0x140] sm:$0xff]
        %v3006 = vld [vmem:[%s2964 + $0x148] sm:$0xff]
        %v3007 = vld [vmem:[%s2964 + $0x150] sm:$0xff]
        %v3008 = vld [vmem:[%s2964 + $0x158] sm:$0xff]
        %v3009 = vld [vmem:[%s2964 + $0x160] sm:$0xff]
        %v3010 = vld [vmem:[%s2964 + $0x168] sm:$0xff]
        %v3011 = vld [vmem:[%s2964 + $0x170] sm:$0xff]
        %v3012 = vld [vmem:[%s2964 + $0x178] sm:$0xff]
        %v3013 = vld [vmem:[%s2964 + $0x180] sm:$0xff]
        %v3014 = vld [vmem:[%s2964 + $0x188] sm:$0xff]
        %v3015 = vld [vmem:[%s2964 + $0x190] sm:$0xff]
        %v3016 = vld [vmem:[%s2964 + $0x198] sm:$0xff]
        %v3017 = vld [vmem:[%s2964 + $0x1a0] sm:$0xff]
        %v3018 = vld [vmem:[%s2964 + $0x1a8] sm:$0xff]
        %v3019 = vld [vmem:[%s2964 + $0x1b0] sm:$0xff]
        %v3020 = vld [vmem:[%s2964 + $0x1b8] sm:$0xff]
        %v3021 = vld [vmem:[%s2964 + $0x1c0] sm:$0xff]
        %v3022 = vld [vmem:[%s2964 + $0x1c8] sm:$0xff]
        %v3023 = vld [vmem:[%s2964 + $0x1d0] sm:$0xff]
        %v3024 = vld [vmem:[%s2964 + $0x1d8] sm:$0xff]
        %v3025 = vld [vmem:[%s2964 + $0x1e0] sm:$0xff]
        %v3026 = vld [vmem:[%s2964 + $0x1e8] sm:$0xff]
        %v3027 = vld [vmem:[%s2964 + $0x1f0] sm:$0xff]
        %v3028 = vld [vmem:[%s2964 + $0x1f8] sm:$0xff]
        %3029 = vmatpush.msra.mxu0 %v2995
        %3030 = vmatpush.msra.mxu0 %v2993
        %3031 = vmatpush.msra.mxu0 %v2991
        %3032 = vmatpush.msra.mxu0 %v2989
        %3033 = vmatpush.msra.mxu0 %v2987
        %3034 = vmatpush.msra.mxu0 %v2985
        %3035 = vmatpush.msra.mxu0 %v2983
        %3036 = vmatpush.msra.mxu0 %v2981
        %3037 = vmatpush.msra.mxu0 %v2979
        %3038 = vmatpush.msra.mxu0 %v2977
        %3039 = vmatpush.msra.mxu0 %v2975
        %3040 = vmatpush.msra.mxu0 %v2973
        %3041 = vmatpush.msra.mxu0 %v2971
        %3042 = vmatpush.msra.mxu0 %v2969
        %3043 = vmatpush.msra.mxu0 %v2967
        %3044 = vmatpush.msra.mxu0 %v2965
        %3045 = vmatmul.f32.gmra.mxu0 %v1948
        %v3046 = vpop.f32.mrf.mxu0
        %v3047 = vadd.f32 0.0, %v3046
        %3048 = vdwg.mxu0
        %3049 = vmatpush.msra.mxu0 %v3027
        %3050 = vmatpush.msra.mxu0 %v3025
        %3051 = vmatpush.msra.mxu0 %v3023
        %3052 = vmatpush.msra.mxu0 %v3021
        %3053 = vmatpush.msra.mxu0 %v3019
        %3054 = vmatpush.msra.mxu0 %v3017
        %3055 = vmatpush.msra.mxu0 %v3015
        %3056 = vmatpush.msra.mxu0 %v3013
        %3057 = vmatpush.msra.mxu0 %v3011
        %3058 = vmatpush.msra.mxu0 %v3009
        %3059 = vmatpush.msra.mxu0 %v3007
        %3060 = vmatpush.msra.mxu0 %v3005
        %3061 = vmatpush.msra.mxu0 %v3003
        %3062 = vmatpush.msra.mxu0 %v3001
        %3063 = vmatpush.msra.mxu0 %v2999
        %3064 = vmatpush.msra.mxu0 %v2997
        %3065 = vmatmul.f32.gmra.mxu0 %v1949
        %v3066 = vpop.f32.mrf.mxu0
        %v3067 = vadd.f32 %v3047, %v3066
        %3068 = vdwg.mxu0
        %3069 = vmatpush.msra.mxu0 %v2996
        %3070 = vmatpush.msra.mxu0 %v2994
        %3071 = vmatpush.msra.mxu0 %v2992
        %3072 = vmatpush.msra.mxu0 %v2990
        %3073 = vmatpush.msra.mxu0 %v2988
        %3074 = vmatpush.msra.mxu0 %v2986
        %3075 = vmatpush.msra.mxu0 %v2984
        %3076 = vmatpush.msra.mxu0 %v2982
        %3077 = vmatpush.msra.mxu0 %v2980
        %3078 = vmatpush.msra.mxu0 %v2978
        %3079 = vmatpush.msra.mxu0 %v2976
        %3080 = vmatpush.msra.mxu0 %v2974
        %3081 = vmatpush.msra.mxu0 %v2972
        %3082 = vmatpush.msra.mxu0 %v2970
        %3083 = vmatpush.msra.mxu0 %v2968
        %3084 = vmatpush.msra.mxu0 %v2966
        %3085 = vmatmul.f32.gmra.mxu0 %v1948
        %v3086 = vpop.f32.mrf.mxu0
        %v3087 = vadd.f32 0.0, %v3086
        %3088 = vdwg.mxu0
        %3089 = vmatpush.msra.mxu0 %v3028
        %3090 = vmatpush.msra.mxu0 %v3026
        %3091 = vmatpush.msra.mxu0 %v3024
        %3092 = vmatpush.msra.mxu0 %v3022
        %3093 = vmatpush.msra.mxu0 %v3020
        %3094 = vmatpush.msra.mxu0 %v3018
        %3095 = vmatpush.msra.mxu0 %v3016
        %3096 = vmatpush.msra.mxu0 %v3014
        %3097 = vmatpush.msra.mxu0 %v3012
        %3098 = vmatpush.msra.mxu0 %v3010
        %3099 = vmatpush.msra.mxu0 %v3008
        %3100 = vmatpush.msra.mxu0 %v3006
        %3101 = vmatpush.msra.mxu0 %v3004
        %3102 = vmatpush.msra.mxu0 %v3002
        %3103 = vmatpush.msra.mxu0 %v3000
        %3104 = vmatpush.msra.mxu0 %v2998
        %3105 = vmatmul.f32.gmra.mxu0 %v1949
        %v3106 = vpop.f32.mrf.mxu0
        %v3107 = vadd.f32 %v3087, %v3106
        %3108 = vdwg.mxu0
        %s3109 = scalar_lea.vmem [#allocation6], 4096
        %v3110 = vld [vmem:[%s3109] sm:$0xff]
        %v3111 = vld [vmem:[%s3109 + $0x8] sm:$0xff]
        %v3112 = vld [vmem:[%s3109 + $0x10] sm:$0xff]
        %v3113 = vld [vmem:[%s3109 + $0x18] sm:$0xff]
        %v3114 = vld [vmem:[%s3109 + $0x20] sm:$0xff]
        %v3115 = vld [vmem:[%s3109 + $0x28] sm:$0xff]
        %v3116 = vld [vmem:[%s3109 + $0x30] sm:$0xff]
        %v3117 = vld [vmem:[%s3109 + $0x38] sm:$0xff]
        %v3118 = vld [vmem:[%s3109 + $0x40] sm:$0xff]
        %v3119 = vld [vmem:[%s3109 + $0x48] sm:$0xff]
        %v3120 = vld [vmem:[%s3109 + $0x50] sm:$0xff]
        %v3121 = vld [vmem:[%s3109 + $0x58] sm:$0xff]
        %v3122 = vld [vmem:[%s3109 + $0x60] sm:$0xff]
        %v3123 = vld [vmem:[%s3109 + $0x68] sm:$0xff]
        %v3124 = vld [vmem:[%s3109 + $0x70] sm:$0xff]
        %v3125 = vld [vmem:[%s3109 + $0x78] sm:$0xff]
        %v3126 = vld [vmem:[%s3109 + $0x80] sm:$0xff]
        %v3127 = vld [vmem:[%s3109 + $0x88] sm:$0xff]
        %v3128 = vld [vmem:[%s3109 + $0x90] sm:$0xff]
        %v3129 = vld [vmem:[%s3109 + $0x98] sm:$0xff]
        %v3130 = vld [vmem:[%s3109 + $0xa0] sm:$0xff]
        %v3131 = vld [vmem:[%s3109 + $0xa8] sm:$0xff]
        %v3132 = vld [vmem:[%s3109 + $0xb0] sm:$0xff]
        %v3133 = vld [vmem:[%s3109 + $0xb8] sm:$0xff]
        %v3134 = vld [vmem:[%s3109 + $0xc0] sm:$0xff]
        %v3135 = vld [vmem:[%s3109 + $0xc8] sm:$0xff]
        %v3136 = vld [vmem:[%s3109 + $0xd0] sm:$0xff]
        %v3137 = vld [vmem:[%s3109 + $0xd8] sm:$0xff]
        %v3138 = vld [vmem:[%s3109 + $0xe0] sm:$0xff]
        %v3139 = vld [vmem:[%s3109 + $0xe8] sm:$0xff]
        %v3140 = vld [vmem:[%s3109 + $0xf0] sm:$0xff]
        %v3141 = vld [vmem:[%s3109 + $0xf8] sm:$0xff]
        %v3142 = vld [vmem:[%s3109 + $0x100] sm:$0xff]
        %v3143 = vld [vmem:[%s3109 + $0x108] sm:$0xff]
        %v3144 = vld [vmem:[%s3109 + $0x110] sm:$0xff]
        %v3145 = vld [vmem:[%s3109 + $0x118] sm:$0xff]
        %v3146 = vld [vmem:[%s3109 + $0x120] sm:$0xff]
        %v3147 = vld [vmem:[%s3109 + $0x128] sm:$0xff]
        %v3148 = vld [vmem:[%s3109 + $0x130] sm:$0xff]
        %v3149 = vld [vmem:[%s3109 + $0x138] sm:$0xff]
        %v3150 = vld [vmem:[%s3109 + $0x140] sm:$0xff]
        %v3151 = vld [vmem:[%s3109 + $0x148] sm:$0xff]
        %v3152 = vld [vmem:[%s3109 + $0x150] sm:$0xff]
        %v3153 = vld [vmem:[%s3109 + $0x158] sm:$0xff]
        %v3154 = vld [vmem:[%s3109 + $0x160] sm:$0xff]
        %v3155 = vld [vmem:[%s3109 + $0x168] sm:$0xff]
        %v3156 = vld [vmem:[%s3109 + $0x170] sm:$0xff]
        %v3157 = vld [vmem:[%s3109 + $0x178] sm:$0xff]
        %v3158 = vld [vmem:[%s3109 + $0x180] sm:$0xff]
        %v3159 = vld [vmem:[%s3109 + $0x188] sm:$0xff]
        %v3160 = vld [vmem:[%s3109 + $0x190] sm:$0xff]
        %v3161 = vld [vmem:[%s3109 + $0x198] sm:$0xff]
        %v3162 = vld [vmem:[%s3109 + $0x1a0] sm:$0xff]
        %v3163 = vld [vmem:[%s3109 + $0x1a8] sm:$0xff]
        %v3164 = vld [vmem:[%s3109 + $0x1b0] sm:$0xff]
        %v3165 = vld [vmem:[%s3109 + $0x1b8] sm:$0xff]
        %v3166 = vld [vmem:[%s3109 + $0x1c0] sm:$0xff]
        %v3167 = vld [vmem:[%s3109 + $0x1c8] sm:$0xff]
        %v3168 = vld [vmem:[%s3109 + $0x1d0] sm:$0xff]
        %v3169 = vld [vmem:[%s3109 + $0x1d8] sm:$0xff]
        %v3170 = vld [vmem:[%s3109 + $0x1e0] sm:$0xff]
        %v3171 = vld [vmem:[%s3109 + $0x1e8] sm:$0xff]
        %v3172 = vld [vmem:[%s3109 + $0x1f0] sm:$0xff]
        %v3173 = vld [vmem:[%s3109 + $0x1f8] sm:$0xff]
        %3174 = vmatpush.msra.mxu0 %v3140
        %3175 = vmatpush.msra.mxu0 %v3138
        %3176 = vmatpush.msra.mxu0 %v3136
        %3177 = vmatpush.msra.mxu0 %v3134
        %3178 = vmatpush.msra.mxu0 %v3132
        %3179 = vmatpush.msra.mxu0 %v3130
        %3180 = vmatpush.msra.mxu0 %v3128
        %3181 = vmatpush.msra.mxu0 %v3126
        %3182 = vmatpush.msra.mxu0 %v3124
        %3183 = vmatpush.msra.mxu0 %v3122
        %3184 = vmatpush.msra.mxu0 %v3120
        %3185 = vmatpush.msra.mxu0 %v3118
        %3186 = vmatpush.msra.mxu0 %v3116
        %3187 = vmatpush.msra.mxu0 %v3114
        %3188 = vmatpush.msra.mxu0 %v3112
        %3189 = vmatpush.msra.mxu0 %v3110
        %3190 = vmatmul.f32.gmra.mxu0 %v1948
        %v3191 = vpop.f32.mrf.mxu0
        %v3192 = vadd.f32 0.0, %v3191
        %3193 = vdwg.mxu0
        %3194 = vmatpush.msra.mxu0 %v3172
        %3195 = vmatpush.msra.mxu0 %v3170
        %3196 = vmatpush.msra.mxu0 %v3168
        %3197 = vmatpush.msra.mxu0 %v3166
        %3198 = vmatpush.msra.mxu0 %v3164
        %3199 = vmatpush.msra.mxu0 %v3162
        %3200 = vmatpush.msra.mxu0 %v3160
        %3201 = vmatpush.msra.mxu0 %v3158
        %3202 = vmatpush.msra.mxu0 %v3156
        %3203 = vmatpush.msra.mxu0 %v3154
        %3204 = vmatpush.msra.mxu0 %v3152
        %3205 = vmatpush.msra.mxu0 %v3150
        %3206 = vmatpush.msra.mxu0 %v3148
        %3207 = vmatpush.msra.mxu0 %v3146
        %3208 = vmatpush.msra.mxu0 %v3144
        %3209 = vmatpush.msra.mxu0 %v3142
        %3210 = vmatmul.f32.gmra.mxu0 %v1949
        %v3211 = vpop.f32.mrf.mxu0
        %v3212 = vadd.f32 %v3192, %v3211
        %3213 = vdwg.mxu0
        %3214 = vmatpush.msra.mxu0 %v3141
        %3215 = vmatpush.msra.mxu0 %v3139
        %3216 = vmatpush.msra.mxu0 %v3137
        %3217 = vmatpush.msra.mxu0 %v3135
        %3218 = vmatpush.msra.mxu0 %v3133
        %3219 = vmatpush.msra.mxu0 %v3131
        %3220 = vmatpush.msra.mxu0 %v3129
        %3221 = vmatpush.msra.mxu0 %v3127
        %3222 = vmatpush.msra.mxu0 %v3125
        %3223 = vmatpush.msra.mxu0 %v3123
        %3224 = vmatpush.msra.mxu0 %v3121
        %3225 = vmatpush.msra.mxu0 %v3119
        %3226 = vmatpush.msra.mxu0 %v3117
        %3227 = vmatpush.msra.mxu0 %v3115
        %3228 = vmatpush.msra.mxu0 %v3113
        %3229 = vmatpush.msra.mxu0 %v3111
        %3230 = vmatmul.f32.gmra.mxu0 %v1948
        %v3231 = vpop.f32.mrf.mxu0
        %v3232 = vadd.f32 0.0, %v3231
        %3233 = vdwg.mxu0
        %3234 = vmatpush.msra.mxu0 %v3173
        %3235 = vmatpush.msra.mxu0 %v3171
        %3236 = vmatpush.msra.mxu0 %v3169
        %3237 = vmatpush.msra.mxu0 %v3167
        %3238 = vmatpush.msra.mxu0 %v3165
        %3239 = vmatpush.msra.mxu0 %v3163
        %3240 = vmatpush.msra.mxu0 %v3161
        %3241 = vmatpush.msra.mxu0 %v3159
        %3242 = vmatpush.msra.mxu0 %v3157
        %3243 = vmatpush.msra.mxu0 %v3155
        %3244 = vmatpush.msra.mxu0 %v3153
        %3245 = vmatpush.msra.mxu0 %v3151
        %3246 = vmatpush.msra.mxu0 %v3149
        %3247 = vmatpush.msra.mxu0 %v3147
        %3248 = vmatpush.msra.mxu0 %v3145
        %3249 = vmatpush.msra.mxu0 %v3143
        %3250 = vmatmul.f32.gmra.mxu0 %v1949
        %v3251 = vpop.f32.mrf.mxu0
        %v3252 = vadd.f32 %v3232, %v3251
        %3253 = vdwg.mxu0
        %s3254 = scalar_lea.vmem [#allocation2], 24
        %v3255 = vld [vmem:[%s3254] sm:$0xff]
        %s3256 = scalar_lea.vmem [#allocation4], 48
        %v3257 = vld [vmem:[%s3256] sm:$0xff]
        %v3258 = vld [vmem:[%s3256 + $0x8] sm:$0xff]
        %v3260 = vsel %vm884, %v3255, 0
        %3262 = vmatpush.msra.mxu0 0.0
        %3263 = vmatpush.msra.mxu0 0.0
        %3264 = vmatpush.msra.mxu0 0.0
        %3265 = vmatpush.msra.mxu0 0.0
        %3266 = vmatpush.msra.mxu0 0.0
        %3267 = vmatpush.msra.mxu0 0.0
        %3268 = vmatpush.msra.mxu0 0.0
        %3269 = vmatpush.msra.mxu0 %v3212
        %3270 = vmatpush.msra.mxu0 %v3067
        %3271 = vmatpush.msra.mxu0 %v2922
        %3272 = vmatpush.msra.mxu0 %v2777
        %3273 = vmatpush.msra.mxu0 %v2632
        %3274 = vmatpush.msra.mxu0 %v2487
        %3275 = vmatpush.msra.mxu0 %v2342
        %3276 = vmatpush.msra.mxu0 %v2197
        %3277 = vmatpush.msra.mxu0 %v2052
        %3278 = vmatmul.f32.gmra.mxu0 %v3260
        %v3279 = vpop.f32.mrf.mxu0
        %v3280 = vadd.f32 %v3257, %v3279
        %3281 = vdwg.mxu0
        %3282 = vmatpush.msra.mxu0 0.0
        %3283 = vmatpush.msra.mxu0 0.0
        %3284 = vmatpush.msra.mxu0 0.0
        %3285 = vmatpush.msra.mxu0 0.0
        %3286 = vmatpush.msra.mxu0 0.0
        %3287 = vmatpush.msra.mxu0 0.0
        %3288 = vmatpush.msra.mxu0 0.0
        %3289 = vmatpush.msra.mxu0 %v3252
        %3290 = vmatpush.msra.mxu0 %v3107
        %3291 = vmatpush.msra.mxu0 %v2962
        %3292 = vmatpush.msra.mxu0 %v2817
        %3293 = vmatpush.msra.mxu0 %v2672
        %3294 = vmatpush.msra.mxu0 %v2527
        %3295 = vmatpush.msra.mxu0 %v2382
        %3296 = vmatpush.msra.mxu0 %v2237
        %3297 = vmatpush.msra.mxu0 %v2092
        %3298 = vmatmul.f32.gmra.mxu0 %v3260
        %v3299 = vpop.f32.mrf.mxu0
        %v3300 = vadd.f32 %v3258, %v3299
        %3301 = vdwg.mxu0
        %vm3302 = vcmp.ge.f32.partialorder %v3280, 0.0
        %vm3303 = vcmp.ge.f32.partialorder %v3300, 0.0
        %v3304 = vmul.f32 %v3280, 0.2
        %v3305 = vmul.f32 %v3300, 0.2
        %v3306 = vsel %vm3302, %v3280, %v3304
        %v3307 = vsel %vm3303, %v3300, %v3305
        %3308 = vmatpush.msra.mxu0 %v1980
        %3309 = vmatpush.msra.mxu0 %v1978
        %3310 = vmatpush.msra.mxu0 %v1976
        %3311 = vmatpush.msra.mxu0 %v1974
        %3312 = vmatpush.msra.mxu0 %v1972
        %3313 = vmatpush.msra.mxu0 %v1970
        %3314 = vmatpush.msra.mxu0 %v1968
        %3315 = vmatpush.msra.mxu0 %v1966
        %3316 = vmatpush.msra.mxu0 %v1964
        %3317 = vmatpush.msra.mxu0 %v1962
        %3318 = vmatpush.msra.mxu0 %v1960
        %3319 = vmatpush.msra.mxu0 %v1958
        %3320 = vmatpush.msra.mxu0 %v1956
        %3321 = vmatpush.msra.mxu0 %v1954
        %3322 = vmatpush.msra.mxu0 %v1952
        %3323 = vmatpush.msra.mxu0 %v1950
        %3324 = vmatmul.f32.gmra.mxu0 %v3306
        %v3325 = vpop.f32.mrf.mxu0
        %v3326 = vadd.f32 0.0, %v3325
        %3327 = vdwg.mxu0
        %3328 = vmatpush.msra.mxu0 %v2012
        %3329 = vmatpush.msra.mxu0 %v2010
        %3330 = vmatpush.msra.mxu0 %v2008
        %3331 = vmatpush.msra.mxu0 %v2006
        %3332 = vmatpush.msra.mxu0 %v2004
        %3333 = vmatpush.msra.mxu0 %v2002
        %3334 = vmatpush.msra.mxu0 %v2000
        %3335 = vmatpush.msra.mxu0 %v1998
        %3336 = vmatpush.msra.mxu0 %v1996
        %3337 = vmatpush.msra.mxu0 %v1994
        %3338 = vmatpush.msra.mxu0 %v1992
        %3339 = vmatpush.msra.mxu0 %v1990
        %3340 = vmatpush.msra.mxu0 %v1988
        %3341 = vmatpush.msra.mxu0 %v1986
        %3342 = vmatpush.msra.mxu0 %v1984
        %3343 = vmatpush.msra.mxu0 %v1982
        %3344 = vmatmul.f32.gmra.mxu0 %v3307
        %v3345 = vpop.f32.mrf.mxu0
        %v3346 = vadd.f32 %v3326, %v3345
        %3347 = vdwg.mxu0
        %3348 = vmatpush.msra.mxu0 %v1981
        %3349 = vmatpush.msra.mxu0 %v1979
        %3350 = vmatpush.msra.mxu0 %v1977
        %3351 = vmatpush.msra.mxu0 %v1975
        %3352 = vmatpush.msra.mxu0 %v1973
        %3353 = vmatpush.msra.mxu0 %v1971
        %3354 = vmatpush.msra.mxu0 %v1969
        %3355 = vmatpush.msra.mxu0 %v1967
        %3356 = vmatpush.msra.mxu0 %v1965
        %3357 = vmatpush.msra.mxu0 %v1963
        %3358 = vmatpush.msra.mxu0 %v1961
        %3359 = vmatpush.msra.mxu0 %v1959
        %3360 = vmatpush.msra.mxu0 %v1957
        %3361 = vmatpush.msra.mxu0 %v1955
        %3362 = vmatpush.msra.mxu0 %v1953
        %3363 = vmatpush.msra.mxu0 %v1951
        %3364 = vmatmul.f32.gmra.mxu0 %v3306
        %v3365 = vpop.f32.mrf.mxu0
        %v3366 = vadd.f32 0.0, %v3365
        %3367 = vdwg.mxu0
        %3368 = vmatpush.msra.mxu0 %v2013
        %3369 = vmatpush.msra.mxu0 %v2011
        %3370 = vmatpush.msra.mxu0 %v2009
        %3371 = vmatpush.msra.mxu0 %v2007
        %3372 = vmatpush.msra.mxu0 %v2005
        %3373 = vmatpush.msra.mxu0 %v2003
        %3374 = vmatpush.msra.mxu0 %v2001
        %3375 = vmatpush.msra.mxu0 %v1999
        %3376 = vmatpush.msra.mxu0 %v1997
        %3377 = vmatpush.msra.mxu0 %v1995
        %3378 = vmatpush.msra.mxu0 %v1993
        %3379 = vmatpush.msra.mxu0 %v1991
        %3380 = vmatpush.msra.mxu0 %v1989
        %3381 = vmatpush.msra.mxu0 %v1987
        %3382 = vmatpush.msra.mxu0 %v1985
        %3383 = vmatpush.msra.mxu0 %v1983
        %3384 = vmatmul.f32.gmra.mxu0 %v3307
        %v3385 = vpop.f32.mrf.mxu0
        %v3386 = vadd.f32 %v3366, %v3385
        %3387 = vdwg.mxu0
        %3388 = vmatpush.msra.mxu0 %v2125
        %3389 = vmatpush.msra.mxu0 %v2123
        %3390 = vmatpush.msra.mxu0 %v2121
        %3391 = vmatpush.msra.mxu0 %v2119
        %3392 = vmatpush.msra.mxu0 %v2117
        %3393 = vmatpush.msra.mxu0 %v2115
        %3394 = vmatpush.msra.mxu0 %v2113
        %3395 = vmatpush.msra.mxu0 %v2111
        %3396 = vmatpush.msra.mxu0 %v2109
        %3397 = vmatpush.msra.mxu0 %v2107
        %3398 = vmatpush.msra.mxu0 %v2105
        %3399 = vmatpush.msra.mxu0 %v2103
        %3400 = vmatpush.msra.mxu0 %v2101
        %3401 = vmatpush.msra.mxu0 %v2099
        %3402 = vmatpush.msra.mxu0 %v2097
        %3403 = vmatpush.msra.mxu0 %v2095
        %3404 = vmatmul.f32.gmra.mxu0 %v3306
        %v3405 = vpop.f32.mrf.mxu0
        %v3406 = vadd.f32 0.0, %v3405
        %3407 = vdwg.mxu0
        %3408 = vmatpush.msra.mxu0 %v2157
        %3409 = vmatpush.msra.mxu0 %v2155
        %3410 = vmatpush.msra.mxu0 %v2153
        %3411 = vmatpush.msra.mxu0 %v2151
        %3412 = vmatpush.msra.mxu0 %v2149
        %3413 = vmatpush.msra.mxu0 %v2147
        %3414 = vmatpush.msra.mxu0 %v2145
        %3415 = vmatpush.msra.mxu0 %v2143
        %3416 = vmatpush.msra.mxu0 %v2141
        %3417 = vmatpush.msra.mxu0 %v2139
        %3418 = vmatpush.msra.mxu0 %v2137
        %3419 = vmatpush.msra.mxu0 %v2135
        %3420 = vmatpush.msra.mxu0 %v2133
        %3421 = vmatpush.msra.mxu0 %v2131
        %3422 = vmatpush.msra.mxu0 %v2129
        %3423 = vmatpush.msra.mxu0 %v2127
        %3424 = vmatmul.f32.gmra.mxu0 %v3307
        %v3425 = vpop.f32.mrf.mxu0
        %v3426 = vadd.f32 %v3406, %v3425
        %3427 = vdwg.mxu0
        %3428 = vmatpush.msra.mxu0 %v2126
        %3429 = vmatpush.msra.mxu0 %v2124
        %3430 = vmatpush.msra.mxu0 %v2122
        %3431 = vmatpush.msra.mxu0 %v2120
        %3432 = vmatpush.msra.mxu0 %v2118
        %3433 = vmatpush.msra.mxu0 %v2116
        %3434 = vmatpush.msra.mxu0 %v2114
        %3435 = vmatpush.msra.mxu0 %v2112
        %3436 = vmatpush.msra.mxu0 %v2110
        %3437 = vmatpush.msra.mxu0 %v2108
        %3438 = vmatpush.msra.mxu0 %v2106
        %3439 = vmatpush.msra.mxu0 %v2104
        %3440 = vmatpush.msra.mxu0 %v2102
        %3441 = vmatpush.msra.mxu0 %v2100
        %3442 = vmatpush.msra.mxu0 %v2098
        %3443 = vmatpush.msra.mxu0 %v2096
        %3444 = vmatmul.f32.gmra.mxu0 %v3306
        %v3445 = vpop.f32.mrf.mxu0
        %v3446 = vadd.f32 0.0, %v3445
        %3447 = vdwg.mxu0
        %3448 = vmatpush.msra.mxu0 %v2158
        %3449 = vmatpush.msra.mxu0 %v2156
        %3450 = vmatpush.msra.mxu0 %v2154
        %3451 = vmatpush.msra.mxu0 %v2152
        %3452 = vmatpush.msra.mxu0 %v2150
        %3453 = vmatpush.msra.mxu0 %v2148
        %3454 = vmatpush.msra.mxu0 %v2146
        %3455 = vmatpush.msra.mxu0 %v2144
        %3456 = vmatpush.msra.mxu0 %v2142
        %3457 = vmatpush.msra.mxu0 %v2140
        %3458 = vmatpush.msra.mxu0 %v2138
        %3459 = vmatpush.msra.mxu0 %v2136
        %3460 = vmatpush.msra.mxu0 %v2134
        %3461 = vmatpush.msra.mxu0 %v2132
        %3462 = vmatpush.msra.mxu0 %v2130
        %3463 = vmatpush.msra.mxu0 %v2128
        %3464 = vmatmul.f32.gmra.mxu0 %v3307
        %v3465 = vpop.f32.mrf.mxu0
        %v3466 = vadd.f32 %v3446, %v3465
        %3467 = vdwg.mxu0
        %3468 = vmatpush.msra.mxu0 %v2270
        %3469 = vmatpush.msra.mxu0 %v2268
        %3470 = vmatpush.msra.mxu0 %v2266
        %3471 = vmatpush.msra.mxu0 %v2264
        %3472 = vmatpush.msra.mxu0 %v2262
        %3473 = vmatpush.msra.mxu0 %v2260
        %3474 = vmatpush.msra.mxu0 %v2258
        %3475 = vmatpush.msra.mxu0 %v2256
        %3476 = vmatpush.msra.mxu0 %v2254
        %3477 = vmatpush.msra.mxu0 %v2252
        %3478 = vmatpush.msra.mxu0 %v2250
        %3479 = vmatpush.msra.mxu0 %v2248
        %3480 = vmatpush.msra.mxu0 %v2246
        %3481 = vmatpush.msra.mxu0 %v2244
        %3482 = vmatpush.msra.mxu0 %v2242
        %3483 = vmatpush.msra.mxu0 %v2240
        %3484 = vmatmul.f32.gmra.mxu0 %v3306
        %v3485 = vpop.f32.mrf.mxu0
        %v3486 = vadd.f32 0.0, %v3485
        %3487 = vdwg.mxu0
        %3488 = vmatpush.msra.mxu0 %v2302
        %3489 = vmatpush.msra.mxu0 %v2300
        %3490 = vmatpush.msra.mxu0 %v2298
        %3491 = vmatpush.msra.mxu0 %v2296
        %3492 = vmatpush.msra.mxu0 %v2294
        %3493 = vmatpush.msra.mxu0 %v2292
        %3494 = vmatpush.msra.mxu0 %v2290
        %3495 = vmatpush.msra.mxu0 %v2288
        %3496 = vmatpush.msra.mxu0 %v2286
        %3497 = vmatpush.msra.mxu0 %v2284
        %3498 = vmatpush.msra.mxu0 %v2282
        %3499 = vmatpush.msra.mxu0 %v2280
        %3500 = vmatpush.msra.mxu0 %v2278
        %3501 = vmatpush.msra.mxu0 %v2276
        %3502 = vmatpush.msra.mxu0 %v2274
        %3503 = vmatpush.msra.mxu0 %v2272
        %3504 = vmatmul.f32.gmra.mxu0 %v3307
        %v3505 = vpop.f32.mrf.mxu0
        %v3506 = vadd.f32 %v3486, %v3505
        %3507 = vdwg.mxu0
        %3508 = vmatpush.msra.mxu0 %v2271
        %3509 = vmatpush.msra.mxu0 %v2269
        %3510 = vmatpush.msra.mxu0 %v2267
        %3511 = vmatpush.msra.mxu0 %v2265
        %3512 = vmatpush.msra.mxu0 %v2263
        %3513 = vmatpush.msra.mxu0 %v2261
        %3514 = vmatpush.msra.mxu0 %v2259
        %3515 = vmatpush.msra.mxu0 %v2257
        %3516 = vmatpush.msra.mxu0 %v2255
        %3517 = vmatpush.msra.mxu0 %v2253
        %3518 = vmatpush.msra.mxu0 %v2251
        %3519 = vmatpush.msra.mxu0 %v2249
        %3520 = vmatpush.msra.mxu0 %v2247
        %3521 = vmatpush.msra.mxu0 %v2245
        %3522 = vmatpush.msra.mxu0 %v2243
        %3523 = vmatpush.msra.mxu0 %v2241
        %3524 = vmatmul.f32.gmra.mxu0 %v3306
        %v3525 = vpop.f32.mrf.mxu0
        %v3526 = vadd.f32 0.0, %v3525
        %3527 = vdwg.mxu0
        %3528 = vmatpush.msra.mxu0 %v2303
        %3529 = vmatpush.msra.mxu0 %v2301
        %3530 = vmatpush.msra.mxu0 %v2299
        %3531 = vmatpush.msra.mxu0 %v2297
        %3532 = vmatpush.msra.mxu0 %v2295
        %3533 = vmatpush.msra.mxu0 %v2293
        %3534 = vmatpush.msra.mxu0 %v2291
        %3535 = vmatpush.msra.mxu0 %v2289
        %3536 = vmatpush.msra.mxu0 %v2287
        %3537 = vmatpush.msra.mxu0 %v2285
        %3538 = vmatpush.msra.mxu0 %v2283
        %3539 = vmatpush.msra.mxu0 %v2281
        %3540 = vmatpush.msra.mxu0 %v2279
        %3541 = vmatpush.msra.mxu0 %v2277
        %3542 = vmatpush.msra.mxu0 %v2275
        %3543 = vmatpush.msra.mxu0 %v2273
        %3544 = vmatmul.f32.gmra.mxu0 %v3307
        %v3545 = vpop.f32.mrf.mxu0
        %v3546 = vadd.f32 %v3526, %v3545
        %3547 = vdwg.mxu0
        %3548 = vmatpush.msra.mxu0 %v2415
        %3549 = vmatpush.msra.mxu0 %v2413
        %3550 = vmatpush.msra.mxu0 %v2411
        %3551 = vmatpush.msra.mxu0 %v2409
        %3552 = vmatpush.msra.mxu0 %v2407
        %3553 = vmatpush.msra.mxu0 %v2405
        %3554 = vmatpush.msra.mxu0 %v2403
        %3555 = vmatpush.msra.mxu0 %v2401
        %3556 = vmatpush.msra.mxu0 %v2399
        %3557 = vmatpush.msra.mxu0 %v2397
        %3558 = vmatpush.msra.mxu0 %v2395
        %3559 = vmatpush.msra.mxu0 %v2393
        %3560 = vmatpush.msra.mxu0 %v2391
        %3561 = vmatpush.msra.mxu0 %v2389
        %3562 = vmatpush.msra.mxu0 %v2387
        %3563 = vmatpush.msra.mxu0 %v2385
        %3564 = vmatmul.f32.gmra.mxu0 %v3306
        %v3565 = vpop.f32.mrf.mxu0
        %v3566 = vadd.f32 0.0, %v3565
        %3567 = vdwg.mxu0
        %3568 = vmatpush.msra.mxu0 %v2447
        %3569 = vmatpush.msra.mxu0 %v2445
        %3570 = vmatpush.msra.mxu0 %v2443
        %3571 = vmatpush.msra.mxu0 %v2441
        %3572 = vmatpush.msra.mxu0 %v2439
        %3573 = vmatpush.msra.mxu0 %v2437
        %3574 = vmatpush.msra.mxu0 %v2435
        %3575 = vmatpush.msra.mxu0 %v2433
        %3576 = vmatpush.msra.mxu0 %v2431
        %3577 = vmatpush.msra.mxu0 %v2429
        %3578 = vmatpush.msra.mxu0 %v2427
        %3579 = vmatpush.msra.mxu0 %v2425
        %3580 = vmatpush.msra.mxu0 %v2423
        %3581 = vmatpush.msra.mxu0 %v2421
        %3582 = vmatpush.msra.mxu0 %v2419
        %3583 = vmatpush.msra.mxu0 %v2417
        %3584 = vmatmul.f32.gmra.mxu0 %v3307
        %v3585 = vpop.f32.mrf.mxu0
        %v3586 = vadd.f32 %v3566, %v3585
        %3587 = vdwg.mxu0
        %3588 = vmatpush.msra.mxu0 %v2416
        %3589 = vmatpush.msra.mxu0 %v2414
        %3590 = vmatpush.msra.mxu0 %v2412
        %3591 = vmatpush.msra.mxu0 %v2410
        %3592 = vmatpush.msra.mxu0 %v2408
        %3593 = vmatpush.msra.mxu0 %v2406
        %3594 = vmatpush.msra.mxu0 %v2404
        %3595 = vmatpush.msra.mxu0 %v2402
        %3596 = vmatpush.msra.mxu0 %v2400
        %3597 = vmatpush.msra.mxu0 %v2398
        %3598 = vmatpush.msra.mxu0 %v2396
        %3599 = vmatpush.msra.mxu0 %v2394
        %3600 = vmatpush.msra.mxu0 %v2392
        %3601 = vmatpush.msra.mxu0 %v2390
        %3602 = vmatpush.msra.mxu0 %v2388
        %3603 = vmatpush.msra.mxu0 %v2386
        %3604 = vmatmul.f32.gmra.mxu0 %v3306
        %v3605 = vpop.f32.mrf.mxu0
        %v3606 = vadd.f32 0.0, %v3605
        %3607 = vdwg.mxu0
        %3608 = vmatpush.msra.mxu0 %v2448
        %3609 = vmatpush.msra.mxu0 %v2446
        %3610 = vmatpush.msra.mxu0 %v2444
        %3611 = vmatpush.msra.mxu0 %v2442
        %3612 = vmatpush.msra.mxu0 %v2440
        %3613 = vmatpush.msra.mxu0 %v2438
        %3614 = vmatpush.msra.mxu0 %v2436
        %3615 = vmatpush.msra.mxu0 %v2434
        %3616 = vmatpush.msra.mxu0 %v2432
        %3617 = vmatpush.msra.mxu0 %v2430
        %3618 = vmatpush.msra.mxu0 %v2428
        %3619 = vmatpush.msra.mxu0 %v2426
        %3620 = vmatpush.msra.mxu0 %v2424
        %3621 = vmatpush.msra.mxu0 %v2422
        %3622 = vmatpush.msra.mxu0 %v2420
        %3623 = vmatpush.msra.mxu0 %v2418
        %3624 = vmatmul.f32.gmra.mxu0 %v3307
        %v3625 = vpop.f32.mrf.mxu0
        %v3626 = vadd.f32 %v3606, %v3625
        %3627 = vdwg.mxu0
        %3628 = vmatpush.msra.mxu0 %v2560
        %3629 = vmatpush.msra.mxu0 %v2558
        %3630 = vmatpush.msra.mxu0 %v2556
        %3631 = vmatpush.msra.mxu0 %v2554
        %3632 = vmatpush.msra.mxu0 %v2552
        %3633 = vmatpush.msra.mxu0 %v2550
        %3634 = vmatpush.msra.mxu0 %v2548
        %3635 = vmatpush.msra.mxu0 %v2546
        %3636 = vmatpush.msra.mxu0 %v2544
        %3637 = vmatpush.msra.mxu0 %v2542
        %3638 = vmatpush.msra.mxu0 %v2540
        %3639 = vmatpush.msra.mxu0 %v2538
        %3640 = vmatpush.msra.mxu0 %v2536
        %3641 = vmatpush.msra.mxu0 %v2534
        %3642 = vmatpush.msra.mxu0 %v2532
        %3643 = vmatpush.msra.mxu0 %v2530
        %3644 = vmatmul.f32.gmra.mxu0 %v3306
        %v3645 = vpop.f32.mrf.mxu0
        %v3646 = vadd.f32 0.0, %v3645
        %3647 = vdwg.mxu0
        %3648 = vmatpush.msra.mxu0 %v2592
        %3649 = vmatpush.msra.mxu0 %v2590
        %3650 = vmatpush.msra.mxu0 %v2588
        %3651 = vmatpush.msra.mxu0 %v2586
        %3652 = vmatpush.msra.mxu0 %v2584
        %3653 = vmatpush.msra.mxu0 %v2582
        %3654 = vmatpush.msra.mxu0 %v2580
        %3655 = vmatpush.msra.mxu0 %v2578
        %3656 = vmatpush.msra.mxu0 %v2576
        %3657 = vmatpush.msra.mxu0 %v2574
        %3658 = vmatpush.msra.mxu0 %v2572
        %3659 = vmatpush.msra.mxu0 %v2570
        %3660 = vmatpush.msra.mxu0 %v2568
        %3661 = vmatpush.msra.mxu0 %v2566
        %3662 = vmatpush.msra.mxu0 %v2564
        %3663 = vmatpush.msra.mxu0 %v2562
        %3664 = vmatmul.f32.gmra.mxu0 %v3307
        %v3665 = vpop.f32.mrf.mxu0
        %v3666 = vadd.f32 %v3646, %v3665
        %3667 = vdwg.mxu0
        %3668 = vmatpush.msra.mxu0 %v2561
        %3669 = vmatpush.msra.mxu0 %v2559
        %3670 = vmatpush.msra.mxu0 %v2557
        %3671 = vmatpush.msra.mxu0 %v2555
        %3672 = vmatpush.msra.mxu0 %v2553
        %3673 = vmatpush.msra.mxu0 %v2551
        %3674 = vmatpush.msra.mxu0 %v2549
        %3675 = vmatpush.msra.mxu0 %v2547
        %3676 = vmatpush.msra.mxu0 %v2545
        %3677 = vmatpush.msra.mxu0 %v2543
        %3678 = vmatpush.msra.mxu0 %v2541
        %3679 = vmatpush.msra.mxu0 %v2539
        %3680 = vmatpush.msra.mxu0 %v2537
        %3681 = vmatpush.msra.mxu0 %v2535
        %3682 = vmatpush.msra.mxu0 %v2533
        %3683 = vmatpush.msra.mxu0 %v2531
        %3684 = vmatmul.f32.gmra.mxu0 %v3306
        %v3685 = vpop.f32.mrf.mxu0
        %v3686 = vadd.f32 0.0, %v3685
        %3687 = vdwg.mxu0
        %3688 = vmatpush.msra.mxu0 %v2593
        %3689 = vmatpush.msra.mxu0 %v2591
        %3690 = vmatpush.msra.mxu0 %v2589
        %3691 = vmatpush.msra.mxu0 %v2587
        %3692 = vmatpush.msra.mxu0 %v2585
        %3693 = vmatpush.msra.mxu0 %v2583
        %3694 = vmatpush.msra.mxu0 %v2581
        %3695 = vmatpush.msra.mxu0 %v2579
        %3696 = vmatpush.msra.mxu0 %v2577
        %3697 = vmatpush.msra.mxu0 %v2575
        %3698 = vmatpush.msra.mxu0 %v2573
        %3699 = vmatpush.msra.mxu0 %v2571
        %3700 = vmatpush.msra.mxu0 %v2569
        %3701 = vmatpush.msra.mxu0 %v2567
        %3702 = vmatpush.msra.mxu0 %v2565
        %3703 = vmatpush.msra.mxu0 %v2563
        %3704 = vmatmul.f32.gmra.mxu0 %v3307
        %v3705 = vpop.f32.mrf.mxu0
        %v3706 = vadd.f32 %v3686, %v3705
        %3707 = vdwg.mxu0
        %3708 = vmatpush.msra.mxu0 %v2705
        %3709 = vmatpush.msra.mxu0 %v2703
        %3710 = vmatpush.msra.mxu0 %v2701
        %3711 = vmatpush.msra.mxu0 %v2699
        %3712 = vmatpush.msra.mxu0 %v2697
        %3713 = vmatpush.msra.mxu0 %v2695
        %3714 = vmatpush.msra.mxu0 %v2693
        %3715 = vmatpush.msra.mxu0 %v2691
        %3716 = vmatpush.msra.mxu0 %v2689
        %3717 = vmatpush.msra.mxu0 %v2687
        %3718 = vmatpush.msra.mxu0 %v2685
        %3719 = vmatpush.msra.mxu0 %v2683
        %3720 = vmatpush.msra.mxu0 %v2681
        %3721 = vmatpush.msra.mxu0 %v2679
        %3722 = vmatpush.msra.mxu0 %v2677
        %3723 = vmatpush.msra.mxu0 %v2675
        %3724 = vmatmul.f32.gmra.mxu0 %v3306
        %v3725 = vpop.f32.mrf.mxu0
        %v3726 = vadd.f32 0.0, %v3725
        %3727 = vdwg.mxu0
        %3728 = vmatpush.msra.mxu0 %v2737
        %3729 = vmatpush.msra.mxu0 %v2735
        %3730 = vmatpush.msra.mxu0 %v2733
        %3731 = vmatpush.msra.mxu0 %v2731
        %3732 = vmatpush.msra.mxu0 %v2729
        %3733 = vmatpush.msra.mxu0 %v2727
        %3734 = vmatpush.msra.mxu0 %v2725
        %3735 = vmatpush.msra.mxu0 %v2723
        %3736 = vmatpush.msra.mxu0 %v2721
        %3737 = vmatpush.msra.mxu0 %v2719
        %3738 = vmatpush.msra.mxu0 %v2717
        %3739 = vmatpush.msra.mxu0 %v2715
        %3740 = vmatpush.msra.mxu0 %v2713
        %3741 = vmatpush.msra.mxu0 %v2711
        %3742 = vmatpush.msra.mxu0 %v2709
        %3743 = vmatpush.msra.mxu0 %v2707
        %3744 = vmatmul.f32.gmra.mxu0 %v3307
        %v3745 = vpop.f32.mrf.mxu0
        %v3746 = vadd.f32 %v3726, %v3745
        %3747 = vdwg.mxu0
        %3748 = vmatpush.msra.mxu0 %v2706
        %3749 = vmatpush.msra.mxu0 %v2704
        %3750 = vmatpush.msra.mxu0 %v2702
        %3751 = vmatpush.msra.mxu0 %v2700
        %3752 = vmatpush.msra.mxu0 %v2698
        %3753 = vmatpush.msra.mxu0 %v2696
        %3754 = vmatpush.msra.mxu0 %v2694
        %3755 = vmatpush.msra.mxu0 %v2692
        %3756 = vmatpush.msra.mxu0 %v2690
        %3757 = vmatpush.msra.mxu0 %v2688
        %3758 = vmatpush.msra.mxu0 %v2686
        %3759 = vmatpush.msra.mxu0 %v2684
        %3760 = vmatpush.msra.mxu0 %v2682
        %3761 = vmatpush.msra.mxu0 %v2680
        %3762 = vmatpush.msra.mxu0 %v2678
        %3763 = vmatpush.msra.mxu0 %v2676
        %3764 = vmatmul.f32.gmra.mxu0 %v3306
        %v3765 = vpop.f32.mrf.mxu0
        %v3766 = vadd.f32 0.0, %v3765
        %3767 = vdwg.mxu0
        %3768 = vmatpush.msra.mxu0 %v2738
        %3769 = vmatpush.msra.mxu0 %v2736
        %3770 = vmatpush.msra.mxu0 %v2734
        %3771 = vmatpush.msra.mxu0 %v2732
        %3772 = vmatpush.msra.mxu0 %v2730
        %3773 = vmatpush.msra.mxu0 %v2728
        %3774 = vmatpush.msra.mxu0 %v2726
        %3775 = vmatpush.msra.mxu0 %v2724
        %3776 = vmatpush.msra.mxu0 %v2722
        %3777 = vmatpush.msra.mxu0 %v2720
        %3778 = vmatpush.msra.mxu0 %v2718
        %3779 = vmatpush.msra.mxu0 %v2716
        %3780 = vmatpush.msra.mxu0 %v2714
        %3781 = vmatpush.msra.mxu0 %v2712
        %3782 = vmatpush.msra.mxu0 %v2710
        %3783 = vmatpush.msra.mxu0 %v2708
        %3784 = vmatmul.f32.gmra.mxu0 %v3307
        %v3785 = vpop.f32.mrf.mxu0
        %v3786 = vadd.f32 %v3766, %v3785
        %3787 = vdwg.mxu0
        %3788 = vmatpush.msra.mxu0 %v2850
        %3789 = vmatpush.msra.mxu0 %v2848
        %3790 = vmatpush.msra.mxu0 %v2846
        %3791 = vmatpush.msra.mxu0 %v2844
        %3792 = vmatpush.msra.mxu0 %v2842
        %3793 = vmatpush.msra.mxu0 %v2840
        %3794 = vmatpush.msra.mxu0 %v2838
        %3795 = vmatpush.msra.mxu0 %v2836
        %3796 = vmatpush.msra.mxu0 %v2834
        %3797 = vmatpush.msra.mxu0 %v2832
        %3798 = vmatpush.msra.mxu0 %v2830
        %3799 = vmatpush.msra.mxu0 %v2828
        %3800 = vmatpush.msra.mxu0 %v2826
        %3801 = vmatpush.msra.mxu0 %v2824
        %3802 = vmatpush.msra.mxu0 %v2822
        %3803 = vmatpush.msra.mxu0 %v2820
        %3804 = vmatmul.f32.gmra.mxu0 %v3306
        %v3805 = vpop.f32.mrf.mxu0
        %v3806 = vadd.f32 0.0, %v3805
        %3807 = vdwg.mxu0
        %3808 = vmatpush.msra.mxu0 %v2882
        %3809 = vmatpush.msra.mxu0 %v2880
        %3810 = vmatpush.msra.mxu0 %v2878
        %3811 = vmatpush.msra.mxu0 %v2876
        %3812 = vmatpush.msra.mxu0 %v2874
        %3813 = vmatpush.msra.mxu0 %v2872
        %3814 = vmatpush.msra.mxu0 %v2870
        %3815 = vmatpush.msra.mxu0 %v2868
        %3816 = vmatpush.msra.mxu0 %v2866
        %3817 = vmatpush.msra.mxu0 %v2864
        %3818 = vmatpush.msra.mxu0 %v2862
        %3819 = vmatpush.msra.mxu0 %v2860
        %3820 = vmatpush.msra.mxu0 %v2858
        %3821 = vmatpush.msra.mxu0 %v2856
        %3822 = vmatpush.msra.mxu0 %v2854
        %3823 = vmatpush.msra.mxu0 %v2852
        %3824 = vmatmul.f32.gmra.mxu0 %v3307
        %v3825 = vpop.f32.mrf.mxu0
        %v3826 = vadd.f32 %v3806, %v3825
        %3827 = vdwg.mxu0
        %3828 = vmatpush.msra.mxu0 %v2851
        %3829 = vmatpush.msra.mxu0 %v2849
        %3830 = vmatpush.msra.mxu0 %v2847
        %3831 = vmatpush.msra.mxu0 %v2845
        %3832 = vmatpush.msra.mxu0 %v2843
        %3833 = vmatpush.msra.mxu0 %v2841
        %3834 = vmatpush.msra.mxu0 %v2839
        %3835 = vmatpush.msra.mxu0 %v2837
        %3836 = vmatpush.msra.mxu0 %v2835
        %3837 = vmatpush.msra.mxu0 %v2833
        %3838 = vmatpush.msra.mxu0 %v2831
        %3839 = vmatpush.msra.mxu0 %v2829
        %3840 = vmatpush.msra.mxu0 %v2827
        %3841 = vmatpush.msra.mxu0 %v2825
        %3842 = vmatpush.msra.mxu0 %v2823
        %3843 = vmatpush.msra.mxu0 %v2821
        %3844 = vmatmul.f32.gmra.mxu0 %v3306
        %v3845 = vpop.f32.mrf.mxu0
        %v3846 = vadd.f32 0.0, %v3845
        %3847 = vdwg.mxu0
        %3848 = vmatpush.msra.mxu0 %v2883
        %3849 = vmatpush.msra.mxu0 %v2881
        %3850 = vmatpush.msra.mxu0 %v2879
        %3851 = vmatpush.msra.mxu0 %v2877
        %3852 = vmatpush.msra.mxu0 %v2875
        %3853 = vmatpush.msra.mxu0 %v2873
        %3854 = vmatpush.msra.mxu0 %v2871
        %3855 = vmatpush.msra.mxu0 %v2869
        %3856 = vmatpush.msra.mxu0 %v2867
        %3857 = vmatpush.msra.mxu0 %v2865
        %3858 = vmatpush.msra.mxu0 %v2863
        %3859 = vmatpush.msra.mxu0 %v2861
        %3860 = vmatpush.msra.mxu0 %v2859
        %3861 = vmatpush.msra.mxu0 %v2857
        %3862 = vmatpush.msra.mxu0 %v2855
        %3863 = vmatpush.msra.mxu0 %v2853
        %3864 = vmatmul.f32.gmra.mxu0 %v3307
        %v3865 = vpop.f32.mrf.mxu0
        %v3866 = vadd.f32 %v3846, %v3865
        %3867 = vdwg.mxu0
        %3868 = vmatpush.msra.mxu0 %v2995
        %3869 = vmatpush.msra.mxu0 %v2993
        %3870 = vmatpush.msra.mxu0 %v2991
        %3871 = vmatpush.msra.mxu0 %v2989
        %3872 = vmatpush.msra.mxu0 %v2987
        %3873 = vmatpush.msra.mxu0 %v2985
        %3874 = vmatpush.msra.mxu0 %v2983
        %3875 = vmatpush.msra.mxu0 %v2981
        %3876 = vmatpush.msra.mxu0 %v2979
        %3877 = vmatpush.msra.mxu0 %v2977
        %3878 = vmatpush.msra.mxu0 %v2975
        %3879 = vmatpush.msra.mxu0 %v2973
        %3880 = vmatpush.msra.mxu0 %v2971
        %3881 = vmatpush.msra.mxu0 %v2969
        %3882 = vmatpush.msra.mxu0 %v2967
        %3883 = vmatpush.msra.mxu0 %v2965
        %3884 = vmatmul.f32.gmra.mxu0 %v3306
        %v3885 = vpop.f32.mrf.mxu0
        %v3886 = vadd.f32 0.0, %v3885
        %3887 = vdwg.mxu0
        %3888 = vmatpush.msra.mxu0 %v3027
        %3889 = vmatpush.msra.mxu0 %v3025
        %3890 = vmatpush.msra.mxu0 %v3023
        %3891 = vmatpush.msra.mxu0 %v3021
        %3892 = vmatpush.msra.mxu0 %v3019
        %3893 = vmatpush.msra.mxu0 %v3017
        %3894 = vmatpush.msra.mxu0 %v3015
        %3895 = vmatpush.msra.mxu0 %v3013
        %3896 = vmatpush.msra.mxu0 %v3011
        %3897 = vmatpush.msra.mxu0 %v3009
        %3898 = vmatpush.msra.mxu0 %v3007
        %3899 = vmatpush.msra.mxu0 %v3005
        %3900 = vmatpush.msra.mxu0 %v3003
        %3901 = vmatpush.msra.mxu0 %v3001
        %3902 = vmatpush.msra.mxu0 %v2999
        %3903 = vmatpush.msra.mxu0 %v2997
        %3904 = vmatmul.f32.gmra.mxu0 %v3307
        %v3905 = vpop.f32.mrf.mxu0
        %v3906 = vadd.f32 %v3886, %v3905
        %3907 = vdwg.mxu0
        %3908 = vmatpush.msra.mxu0 %v2996
        %3909 = vmatpush.msra.mxu0 %v2994
        %3910 = vmatpush.msra.mxu0 %v2992
        %3911 = vmatpush.msra.mxu0 %v2990
        %3912 = vmatpush.msra.mxu0 %v2988
        %3913 = vmatpush.msra.mxu0 %v2986
        %3914 = vmatpush.msra.mxu0 %v2984
        %3915 = vmatpush.msra.mxu0 %v2982
        %3916 = vmatpush.msra.mxu0 %v2980
        %3917 = vmatpush.msra.mxu0 %v2978
        %3918 = vmatpush.msra.mxu0 %v2976
        %3919 = vmatpush.msra.mxu0 %v2974
        %3920 = vmatpush.msra.mxu0 %v2972
        %3921 = vmatpush.msra.mxu0 %v2970
        %3922 = vmatpush.msra.mxu0 %v2968
        %3923 = vmatpush.msra.mxu0 %v2966
        %3924 = vmatmul.f32.gmra.mxu0 %v3306
        %v3925 = vpop.f32.mrf.mxu0
        %v3926 = vadd.f32 0.0, %v3925
        %3927 = vdwg.mxu0
        %3928 = vmatpush.msra.mxu0 %v3028
        %3929 = vmatpush.msra.mxu0 %v3026
        %3930 = vmatpush.msra.mxu0 %v3024
        %3931 = vmatpush.msra.mxu0 %v3022
        %3932 = vmatpush.msra.mxu0 %v3020
        %3933 = vmatpush.msra.mxu0 %v3018
        %3934 = vmatpush.msra.mxu0 %v3016
        %3935 = vmatpush.msra.mxu0 %v3014
        %3936 = vmatpush.msra.mxu0 %v3012
        %3937 = vmatpush.msra.mxu0 %v3010
        %3938 = vmatpush.msra.mxu0 %v3008
        %3939 = vmatpush.msra.mxu0 %v3006
        %3940 = vmatpush.msra.mxu0 %v3004
        %3941 = vmatpush.msra.mxu0 %v3002
        %3942 = vmatpush.msra.mxu0 %v3000
        %3943 = vmatpush.msra.mxu0 %v2998
        %3944 = vmatmul.f32.gmra.mxu0 %v3307
        %v3945 = vpop.f32.mrf.mxu0
        %v3946 = vadd.f32 %v3926, %v3945
        %3947 = vdwg.mxu0
        %3948 = vmatpush.msra.mxu0 %v3140
        %3949 = vmatpush.msra.mxu0 %v3138
        %3950 = vmatpush.msra.mxu0 %v3136
        %3951 = vmatpush.msra.mxu0 %v3134
        %3952 = vmatpush.msra.mxu0 %v3132
        %3953 = vmatpush.msra.mxu0 %v3130
        %3954 = vmatpush.msra.mxu0 %v3128
        %3955 = vmatpush.msra.mxu0 %v3126
        %3956 = vmatpush.msra.mxu0 %v3124
        %3957 = vmatpush.msra.mxu0 %v3122
        %3958 = vmatpush.msra.mxu0 %v3120
        %3959 = vmatpush.msra.mxu0 %v3118
        %3960 = vmatpush.msra.mxu0 %v3116
        %3961 = vmatpush.msra.mxu0 %v3114
        %3962 = vmatpush.msra.mxu0 %v3112
        %3963 = vmatpush.msra.mxu0 %v3110
        %3964 = vmatmul.f32.gmra.mxu0 %v3306
        %v3965 = vpop.f32.mrf.mxu0
        %v3966 = vadd.f32 0.0, %v3965
        %3967 = vdwg.mxu0
        %3968 = vmatpush.msra.mxu0 %v3172
        %3969 = vmatpush.msra.mxu0 %v3170
        %3970 = vmatpush.msra.mxu0 %v3168
        %3971 = vmatpush.msra.mxu0 %v3166
        %3972 = vmatpush.msra.mxu0 %v3164
        %3973 = vmatpush.msra.mxu0 %v3162
        %3974 = vmatpush.msra.mxu0 %v3160
        %3975 = vmatpush.msra.mxu0 %v3158
        %3976 = vmatpush.msra.mxu0 %v3156
        %3977 = vmatpush.msra.mxu0 %v3154
        %3978 = vmatpush.msra.mxu0 %v3152
        %3979 = vmatpush.msra.mxu0 %v3150
        %3980 = vmatpush.msra.mxu0 %v3148
        %3981 = vmatpush.msra.mxu0 %v3146
        %3982 = vmatpush.msra.mxu0 %v3144
        %3983 = vmatpush.msra.mxu0 %v3142
        %3984 = vmatmul.f32.gmra.mxu0 %v3307
        %v3985 = vpop.f32.mrf.mxu0
        %v3986 = vadd.f32 %v3966, %v3985
        %3987 = vdwg.mxu0
        %3988 = vmatpush.msra.mxu0 %v3141
        %3989 = vmatpush.msra.mxu0 %v3139
        %3990 = vmatpush.msra.mxu0 %v3137
        %3991 = vmatpush.msra.mxu0 %v3135
        %3992 = vmatpush.msra.mxu0 %v3133
        %3993 = vmatpush.msra.mxu0 %v3131
        %3994 = vmatpush.msra.mxu0 %v3129
        %3995 = vmatpush.msra.mxu0 %v3127
        %3996 = vmatpush.msra.mxu0 %v3125
        %3997 = vmatpush.msra.mxu0 %v3123
        %3998 = vmatpush.msra.mxu0 %v3121
        %3999 = vmatpush.msra.mxu0 %v3119
        %4000 = vmatpush.msra.mxu0 %v3117
        %4001 = vmatpush.msra.mxu0 %v3115
        %4002 = vmatpush.msra.mxu0 %v3113
        %4003 = vmatpush.msra.mxu0 %v3111
        %4004 = vmatmul.f32.gmra.mxu0 %v3306
        %v4005 = vpop.f32.mrf.mxu0
        %v4006 = vadd.f32 0.0, %v4005
        %4007 = vdwg.mxu0
        %4008 = vmatpush.msra.mxu0 %v3173
        %4009 = vmatpush.msra.mxu0 %v3171
        %4010 = vmatpush.msra.mxu0 %v3169
        %4011 = vmatpush.msra.mxu0 %v3167
        %4012 = vmatpush.msra.mxu0 %v3165
        %4013 = vmatpush.msra.mxu0 %v3163
        %4014 = vmatpush.msra.mxu0 %v3161
        %4015 = vmatpush.msra.mxu0 %v3159
        %4016 = vmatpush.msra.mxu0 %v3157
        %4017 = vmatpush.msra.mxu0 %v3155
        %4018 = vmatpush.msra.mxu0 %v3153
        %4019 = vmatpush.msra.mxu0 %v3151
        %4020 = vmatpush.msra.mxu0 %v3149
        %4021 = vmatpush.msra.mxu0 %v3147
        %4022 = vmatpush.msra.mxu0 %v3145
        %4023 = vmatpush.msra.mxu0 %v3143
        %4024 = vmatmul.f32.gmra.mxu0 %v3307
        %v4025 = vpop.f32.mrf.mxu0
        %v4026 = vadd.f32 %v4006, %v4025
        %4027 = vdwg.mxu0
        %s4028 = scalar_lea.vmem [#allocation2], 32
        %v4029 = vld [vmem:[%s4028] sm:$0xff]
        %s4030 = scalar_lea.vmem [#allocation4], 64
        %v4031 = vld [vmem:[%s4030] sm:$0xff]
        %v4032 = vld [vmem:[%s4030 + $0x8] sm:$0xff]
        %v4034 = vsel %vm884, %v4029, 0
        %4036 = vmatpush.msra.mxu0 0.0
        %4037 = vmatpush.msra.mxu0 0.0
        %4038 = vmatpush.msra.mxu0 0.0
        %4039 = vmatpush.msra.mxu0 0.0
        %4040 = vmatpush.msra.mxu0 0.0
        %4041 = vmatpush.msra.mxu0 0.0
        %4042 = vmatpush.msra.mxu0 0.0
        %4043 = vmatpush.msra.mxu0 %v3986
        %4044 = vmatpush.msra.mxu0 %v3906
        %4045 = vmatpush.msra.mxu0 %v3826
        %4046 = vmatpush.msra.mxu0 %v3746
        %4047 = vmatpush.msra.mxu0 %v3666
        %4048 = vmatpush.msra.mxu0 %v3586
        %4049 = vmatpush.msra.mxu0 %v3506
        %4050 = vmatpush.msra.mxu0 %v3426
        %4051 = vmatpush.msra.mxu0 %v3346
        %4052 = vmatmul.f32.gmra.mxu0 %v4034
        %v4053 = vpop.f32.mrf.mxu0
        %v4054 = vadd.f32 %v4031, %v4053
        %4055 = vdwg.mxu0
        %4056 = vmatpush.msra.mxu0 0.0
        %4057 = vmatpush.msra.mxu0 0.0
        %4058 = vmatpush.msra.mxu0 0.0
        %4059 = vmatpush.msra.mxu0 0.0
        %4060 = vmatpush.msra.mxu0 0.0
        %4061 = vmatpush.msra.mxu0 0.0
        %4062 = vmatpush.msra.mxu0 0.0
        %4063 = vmatpush.msra.mxu0 %v4026
        %4064 = vmatpush.msra.mxu0 %v3946
        %4065 = vmatpush.msra.mxu0 %v3866
        %4066 = vmatpush.msra.mxu0 %v3786
        %4067 = vmatpush.msra.mxu0 %v3706
        %4068 = vmatpush.msra.mxu0 %v3626
        %4069 = vmatpush.msra.mxu0 %v3546
        %4070 = vmatpush.msra.mxu0 %v3466
        %4071 = vmatpush.msra.mxu0 %v3386
        %4072 = vmatmul.f32.gmra.mxu0 %v4034
        %v4073 = vpop.f32.mrf.mxu0
        %v4074 = vadd.f32 %v4032, %v4073
        %4075 = vdwg.mxu0
        %vm4076 = vcmp.ge.f32.partialorder %v4054, 0.0
        %vm4077 = vcmp.ge.f32.partialorder %v4074, 0.0
        %v4078 = vmul.f32 %v4054, 0.2
        %v4079 = vmul.f32 %v4074, 0.2
        %v4080 = vsel %vm4076, %v4054, %v4078
        %v4081 = vsel %vm4077, %v4074, %v4079
        %v4082 = vmul.f32 %v1660, 0.35355338
        %4083 = vxpose.xlu0.b32.start [1/16] %v4080, 128
        %4084 = vxpose.xlu0.b32.cont [2/16] 0.0, 128
        %4085 = vxpose.xlu0.b32.cont [3/16] 0.0, 128
        %4086 = vxpose.xlu0.b32.cont [4/16] 0.0, 128
        %4087 = vxpose.xlu0.b32.cont [5/16] 0.0, 128
        %4088 = vxpose.xlu0.b32.cont [6/16] 0.0, 128
        %4089 = vxpose.xlu0.b32.cont [7/16] 0.0, 128
        %4090 = vxpose.xlu0.b32.cont [8/16] 0.0, 128
        %4091 = vxpose.xlu0.b32.cont [9/16] 0.0, 128
        %4092 = vxpose.xlu0.b32.cont [10/16] 0.0, 128
        %4093 = vxpose.xlu0.b32.cont [11/16] 0.0, 128
        %4094 = vxpose.xlu0.b32.cont [12/16] 0.0, 128
        %4095 = vxpose.xlu0.b32.cont [13/16] 0.0, 128
        %4096 = vxpose.xlu0.b32.cont [14/16] 0.0, 128
        %4097 = vxpose.xlu0.b32.cont [15/16] 0.0, 128
        %4098 = vxpose.xlu0.b32.end [16/16] 0.0, 128
        %v4099 = vpop.trf.xlu0
        %v4100 = vpop.trf.xlu0
        %v4101 = vpop.trf.xlu0
        %v4102 = vpop.trf.xlu0
        %v4103 = vpop.trf.xlu0
        %v4104 = vpop.trf.xlu0
        %v4105 = vpop.trf.xlu0
        %v4106 = vpop.trf.xlu0
        %v4107 = vpop.trf.xlu0
        %v4108 = vpop.trf.xlu0
        %v4109 = vpop.trf.xlu0
        %v4110 = vpop.trf.xlu0
        %v4111 = vpop.trf.xlu0
        %v4112 = vpop.trf.xlu0
        %v4113 = vpop.trf.xlu0
        %v4114 = vpop.trf.xlu0
        %4115 = vxpose.xlu0.b32.start [1/16] %v4081, 128
        %4116 = vxpose.xlu0.b32.cont [2/16] 0.0, 128
        %4117 = vxpose.xlu0.b32.cont [3/16] 0.0, 128
        %4118 = vxpose.xlu0.b32.cont [4/16] 0.0, 128
        %4119 = vxpose.xlu0.b32.cont [5/16] 0.0, 128
        %4120 = vxpose.xlu0.b32.cont [6/16] 0.0, 128
        %4121 = vxpose.xlu0.b32.cont [7/16] 0.0, 128
        %4122 = vxpose.xlu0.b32.cont [8/16] 0.0, 128
        %4123 = vxpose.xlu0.b32.cont [9/16] 0.0, 128
        %4124 = vxpose.xlu0.b32.cont [10/16] 0.0, 128
        %4125 = vxpose.xlu0.b32.cont [11/16] 0.0, 128
        %4126 = vxpose.xlu0.b32.cont [12/16] 0.0, 128
        %4127 = vxpose.xlu0.b32.cont [13/16] 0.0, 128
        %4128 = vxpose.xlu0.b32.cont [14/16] 0.0, 128
        %4129 = vxpose.xlu0.b32.cont [15/16] 0.0, 128
        %4130 = vxpose.xlu0.b32.end [16/16] 0.0, 128
        %v4131 = vpop.trf.xlu0
        %v4132 = vpop.trf.xlu0
        %v4133 = vpop.trf.xlu0
        %v4134 = vpop.trf.xlu0
        %v4135 = vpop.trf.xlu0
        %v4136 = vpop.trf.xlu0
        %v4137 = vpop.trf.xlu0
        %v4138 = vpop.trf.xlu0
        %v4139 = vpop.trf.xlu0
        %v4140 = vpop.trf.xlu0
        %v4141 = vpop.trf.xlu0
        %v4142 = vpop.trf.xlu0
        %v4143 = vpop.trf.xlu0
        %v4144 = vpop.trf.xlu0
        %v4145 = vpop.trf.xlu0
        %v4146 = vpop.trf.xlu0
        %v4148 = vsel %vm944, %v4099, 0
        %v4151 = vsel %vm944, %v4100, 0
        %v4154 = vsel %vm944, %v4101, 0
        %v4157 = vsel %vm944, %v4102, 0
        %v4160 = vsel %vm944, %v4103, 0
        %v4163 = vsel %vm944, %v4104, 0
        %v4166 = vsel %vm944, %v4105, 0
        %v4169 = vsel %vm944, %v4106, 0
        %v4172 = vsel %vm944, %v4107, 0
        %v4175 = vsel %vm944, %v4108, 0
        %v4178 = vsel %vm944, %v4109, 0
        %v4181 = vsel %vm944, %v4110, 0
        %v4184 = vsel %vm944, %v4111, 0
        %v4187 = vsel %vm944, %v4112, 0
        %v4190 = vsel %vm944, %v4113, 0
        %v4193 = vsel %vm944, %v4114, 0
        %v4196 = vsel %vm944, %v4131, 0
        %v4199 = vsel %vm944, %v4132, 0
        %v4202 = vsel %vm944, %v4133, 0
        %v4205 = vsel %vm944, %v4134, 0
        %v4208 = vsel %vm944, %v4135, 0
        %v4211 = vsel %vm944, %v4136, 0
        %v4214 = vsel %vm944, %v4137, 0
        %v4217 = vsel %vm944, %v4138, 0
        %v4220 = vsel %vm944, %v4139, 0
        %v4223 = vsel %vm944, %v4140, 0
        %v4226 = vsel %vm944, %v4141, 0
        %v4229 = vsel %vm944, %v4142, 0
        %v4232 = vsel %vm944, %v4143, 0
        %v4235 = vsel %vm944, %v4144, 0
        %v4238 = vsel %vm944, %v4145, 0
        %v4241 = vsel %vm944, %v4146, 0
        %4243 = vmatpush.msra.mxu0 0.0
        %4244 = vmatpush.msra.mxu0 0.0
        %4245 = vmatpush.msra.mxu0 0.0
        %4246 = vmatpush.msra.mxu0 0.0
        %4247 = vmatpush.msra.mxu0 0.0
        %4248 = vmatpush.msra.mxu0 0.0
        %4249 = vmatpush.msra.mxu0 0.0
        %4250 = vmatpush.msra.mxu0 0.0
        %4251 = vmatpush.msra.mxu0 0.0
        %4252 = vmatpush.msra.mxu0 0.0
        %4253 = vmatpush.msra.mxu0 0.0
        %4254 = vmatpush.msra.mxu0 0.0
        %4255 = vmatpush.msra.mxu0 0.0
        %4256 = vmatpush.msra.mxu0 0.0
        %4257 = vmatpush.msra.mxu0 0.0
        %4258 = vmatpush.msra.mxu0 %v4082
        %4259 = vmatmul.f32.gmra.mxu0 %v4148
        %v4260 = vpop.f32.mrf.mxu0
        %v4261 = vadd.f32 0.0, %v4260
        %4262 = vmatmul.f32.gmra.mxu0 %v4151
        %v4263 = vpop.f32.mrf.mxu0
        %v4264 = vadd.f32 0.0, %v4263
        %4265 = vmatmul.f32.gmra.mxu0 %v4154
        %v4266 = vpop.f32.mrf.mxu0
        %v4267 = vadd.f32 0.0, %v4266
        %4268 = vmatmul.f32.gmra.mxu0 %v4157
        %v4269 = vpop.f32.mrf.mxu0
        %v4270 = vadd.f32 0.0, %v4269
        %4271 = vmatmul.f32.gmra.mxu0 %v4160
        %v4272 = vpop.f32.mrf.mxu0
        %v4273 = vadd.f32 0.0, %v4272
        %4274 = vmatmul.f32.gmra.mxu0 %v4163
        %v4275 = vpop.f32.mrf.mxu0
        %v4276 = vadd.f32 0.0, %v4275
        %4277 = vmatmul.f32.gmra.mxu0 %v4166
        %v4278 = vpop.f32.mrf.mxu0
        %v4279 = vadd.f32 0.0, %v4278
        %4280 = vmatmul.f32.gmra.mxu0 %v4169
        %v4281 = vpop.f32.mrf.mxu0
        %v4282 = vadd.f32 0.0, %v4281
        %4283 = vmatmul.f32.gmra.mxu0 %v4172
        %v4284 = vpop.f32.mrf.mxu0
        %v4285 = vadd.f32 0.0, %v4284
        %4286 = vmatmul.f32.gmra.mxu0 %v4175
        %v4287 = vpop.f32.mrf.mxu0
        %v4288 = vadd.f32 0.0, %v4287
        %4289 = vmatmul.f32.gmra.mxu0 %v4178
        %v4290 = vpop.f32.mrf.mxu0
        %v4291 = vadd.f32 0.0, %v4290
        %4292 = vmatmul.f32.gmra.mxu0 %v4181
        %v4293 = vpop.f32.mrf.mxu0
        %v4294 = vadd.f32 0.0, %v4293
        %4295 = vmatmul.f32.gmra.mxu0 %v4184
        %v4296 = vpop.f32.mrf.mxu0
        %v4297 = vadd.f32 0.0, %v4296
        %4298 = vmatmul.f32.gmra.mxu0 %v4187
        %v4299 = vpop.f32.mrf.mxu0
        %v4300 = vadd.f32 0.0, %v4299
        %4301 = vmatmul.f32.gmra.mxu0 %v4190
        %v4302 = vpop.f32.mrf.mxu0
        %v4303 = vadd.f32 0.0, %v4302
        %4304 = vmatmul.f32.gmra.mxu0 %v4193
        %v4305 = vpop.f32.mrf.mxu0
        %v4306 = vadd.f32 0.0, %v4305
        %4307 = vmatmul.f32.gmra.mxu0 %v4196
        %v4308 = vpop.f32.mrf.mxu0
        %v4309 = vadd.f32 0.0, %v4308
        %4310 = vmatmul.f32.gmra.mxu0 %v4199
        %v4311 = vpop.f32.mrf.mxu0
        %v4312 = vadd.f32 0.0, %v4311
        %4313 = vmatmul.f32.gmra.mxu0 %v4202
        %v4314 = vpop.f32.mrf.mxu0
        %v4315 = vadd.f32 0.0, %v4314
        %4316 = vmatmul.f32.gmra.mxu0 %v4205
        %v4317 = vpop.f32.mrf.mxu0
        %v4318 = vadd.f32 0.0, %v4317
        %4319 = vmatmul.f32.gmra.mxu0 %v4208
        %v4320 = vpop.f32.mrf.mxu0
        %v4321 = vadd.f32 0.0, %v4320
        %4322 = vmatmul.f32.gmra.mxu0 %v4211
        %v4323 = vpop.f32.mrf.mxu0
        %v4324 = vadd.f32 0.0, %v4323
        %4325 = vmatmul.f32.gmra.mxu0 %v4214
        %v4326 = vpop.f32.mrf.mxu0
        %v4327 = vadd.f32 0.0, %v4326
        %4328 = vmatmul.f32.gmra.mxu0 %v4217
        %v4329 = vpop.f32.mrf.mxu0
        %v4330 = vadd.f32 0.0, %v4329
        %4331 = vmatmul.f32.gmra.mxu0 %v4220
        %v4332 = vpop.f32.mrf.mxu0
        %v4333 = vadd.f32 0.0, %v4332
        %4334 = vmatmul.f32.gmra.mxu0 %v4223
        %v4335 = vpop.f32.mrf.mxu0
        %v4336 = vadd.f32 0.0, %v4335
        %4337 = vmatmul.f32.gmra.mxu0 %v4226
        %v4338 = vpop.f32.mrf.mxu0
        %v4339 = vadd.f32 0.0, %v4338
        %4340 = vmatmul.f32.gmra.mxu0 %v4229
        %v4341 = vpop.f32.mrf.mxu0
        %v4342 = vadd.f32 0.0, %v4341
        %4343 = vmatmul.f32.gmra.mxu0 %v4232
        %v4344 = vpop.f32.mrf.mxu0
        %v4345 = vadd.f32 0.0, %v4344
        %4346 = vmatmul.f32.gmra.mxu0 %v4235
        %v4347 = vpop.f32.mrf.mxu0
        %v4348 = vadd.f32 0.0, %v4347
        %4349 = vmatmul.f32.gmra.mxu0 %v4238
        %v4350 = vpop.f32.mrf.mxu0
        %v4351 = vadd.f32 0.0, %v4350
        %4352 = vmatmul.f32.gmra.mxu0 %v4241
        %v4353 = vpop.f32.mrf.mxu0
        %v4354 = vadd.f32 0.0, %v4353
        %4355 = vdwg.mxu0
        %v4356 = vsel %vm1317, %v4261, -inf
        %v4357 = vsel %vm1317, %v4264, -inf
        %v4358 = vsel %vm1317, %v4267, -inf
        %v4359 = vsel %vm1317, %v4270, -inf
        %v4360 = vsel %vm1317, %v4273, -inf
        %v4361 = vmax.f32 %v4356, %v4360
        %v4362 = vsel %vm1317, %v4276, -inf
        %v4363 = vmax.f32 %v4357, %v4362
        %v4364 = vsel %vm1317, %v4279, -inf
        %v4365 = vmax.f32 %v4358, %v4364
        %v4366 = vsel %vm1317, %v4282, -inf
        %v4367 = vmax.f32 %v4359, %v4366
        %v4368 = vsel %vm1317, %v4285, -inf
        %v4369 = vmax.f32 %v4361, %v4368
        %v4370 = vsel %vm1317, %v4288, -inf
        %v4371 = vmax.f32 %v4363, %v4370
        %v4372 = vsel %vm1317, %v4291, -inf
        %v4373 = vmax.f32 %v4365, %v4372
        %v4374 = vsel %vm1317, %v4294, -inf
        %v4375 = vmax.f32 %v4367, %v4374
        %v4376 = vsel %vm1317, %v4297, -inf
        %v4377 = vmax.f32 %v4369, %v4376
        %v4378 = vsel %vm1317, %v4300, -inf
        %v4379 = vmax.f32 %v4371, %v4378
        %v4380 = vsel %vm1317, %v4303, -inf
        %v4381 = vmax.f32 %v4373, %v4380
        %v4382 = vsel %vm1317, %v4306, -inf
        %v4383 = vmax.f32 %v4375, %v4382
        %v4384 = vsel %vm1317, %v4309, -inf
        %v4385 = vmax.f32 %v4377, %v4384
        %v4386 = vsel %vm1317, %v4312, -inf
        %v4387 = vmax.f32 %v4379, %v4386
        %v4388 = vsel %vm1317, %v4315, -inf
        %v4389 = vmax.f32 %v4381, %v4388
        %v4390 = vsel %vm1317, %v4318, -inf
        %v4391 = vmax.f32 %v4383, %v4390
        %v4392 = vsel %vm1317, %v4321, -inf
        %v4393 = vmax.f32 %v4385, %v4392
        %v4394 = vsel %vm1317, %v4324, -inf
        %v4395 = vmax.f32 %v4387, %v4394
        %v4396 = vsel %vm1317, %v4327, -inf
        %v4397 = vmax.f32 %v4389, %v4396
        %v4398 = vsel %vm1317, %v4330, -inf
        %v4399 = vmax.f32 %v4391, %v4398
        %v4400 = vsel %vm1317, %v4333, -inf
        %v4401 = vmax.f32 %v4393, %v4400
        %v4402 = vsel %vm1317, %v4336, -inf
        %v4403 = vmax.f32 %v4395, %v4402
        %v4404 = vsel %vm1317, %v4339, -inf
        %v4405 = vmax.f32 %v4397, %v4404
        %v4406 = vsel %vm1317, %v4342, -inf
        %v4407 = vmax.f32 %v4399, %v4406
        %v4408 = vsel %vm1317, %v4345, -inf
        %v4409 = vmax.f32 %v4401, %v4408
        %v4410 = vsel %vm1317, %v4348, -inf
        %v4411 = vmax.f32 %v4403, %v4410
        %v4412 = vsel %vm1317, %v4351, -inf
        %v4413 = vmax.f32 %v4405, %v4412
        %v4414 = vsel %vm1317, %v4354, -inf
        %v4415 = vmax.f32 %v4407, %v4414
        %v4416 = vmax.f32 %v4409, %v4411
        %v4417 = vmax.f32 %v4413, %v4415
        %v4418 = vmax.f32 %v4416, %v4417
        %v4419 = vrot.slane %v4418, 4
        %v4420 = vmax.f32 %v4418, %v4419
        %v4421 = vrot.slane %v4420, 2
        %v4422 = vmax.f32 %v4420, %v4421
        %v4423 = vrot.slane %v4422, 1
        %v4424 = vmax.f32 %v4422, %v4423
        %v4425 = vsub.f32 %v4261, %v4424
        %v4426 = vsub.f32 %v4264, %v4424
        %v4427 = vsub.f32 %v4267, %v4424
        %v4428 = vsub.f32 %v4270, %v4424
        %v4429 = vsub.f32 %v4273, %v4424
        %v4430 = vsub.f32 %v4276, %v4424
        %v4431 = vsub.f32 %v4279, %v4424
        %v4432 = vsub.f32 %v4282, %v4424
        %v4433 = vsub.f32 %v4285, %v4424
        %v4434 = vsub.f32 %v4288, %v4424
        %v4435 = vsub.f32 %v4291, %v4424
        %v4436 = vsub.f32 %v4294, %v4424
        %v4437 = vsub.f32 %v4297, %v4424
        %v4438 = vsub.f32 %v4300, %v4424
        %v4439 = vsub.f32 %v4303, %v4424
        %v4440 = vsub.f32 %v4306, %v4424
        %v4441 = vsub.f32 %v4309, %v4424
        %v4442 = vsub.f32 %v4312, %v4424
        %v4443 = vsub.f32 %v4315, %v4424
        %v4444 = vsub.f32 %v4318, %v4424
        %v4445 = vsub.f32 %v4321, %v4424
        %v4446 = vsub.f32 %v4324, %v4424
        %v4447 = vsub.f32 %v4327, %v4424
        %v4448 = vsub.f32 %v4330, %v4424
        %v4449 = vsub.f32 %v4333, %v4424
        %v4450 = vsub.f32 %v4336, %v4424
        %v4451 = vsub.f32 %v4339, %v4424
        %v4452 = vsub.f32 %v4342, %v4424
        %v4453 = vsub.f32 %v4345, %v4424
        %v4454 = vsub.f32 %v4348, %v4424
        %v4455 = vsub.f32 %v4351, %v4424
        %v4456 = vsub.f32 %v4354, %v4424
        %v4457 = vmul.f32 %v4425, 1.442695
        %v4458 = vpow.pop %v4457
        %v4459 = vmul.f32 %v4426, 1.442695
        %v4460 = vpow.pop %v4459
        %v4461 = vmul.f32 %v4427, 1.442695
        %v4462 = vpow.pop %v4461
        %v4463 = vmul.f32 %v4428, 1.442695
        %v4464 = vpow.pop %v4463
        %v4465 = vmul.f32 %v4429, 1.442695
        %v4466 = vpow.pop %v4465
        %v4467 = vmul.f32 %v4430, 1.442695
        %v4468 = vpow.pop %v4467
        %v4469 = vmul.f32 %v4431, 1.442695
        %v4470 = vpow.pop %v4469
        %v4471 = vmul.f32 %v4432, 1.442695
        %v4472 = vpow.pop %v4471
        %v4473 = vmul.f32 %v4433, 1.442695
        %v4474 = vpow.pop %v4473
        %v4475 = vmul.f32 %v4434, 1.442695
        %v4476 = vpow.pop %v4475
        %v4477 = vmul.f32 %v4435, 1.442695
        %v4478 = vpow.pop %v4477
        %v4479 = vmul.f32 %v4436, 1.442695
        %v4480 = vpow.pop %v4479
        %v4481 = vmul.f32 %v4437, 1.442695
        %v4482 = vpow.pop %v4481
        %v4483 = vmul.f32 %v4438, 1.442695
        %v4484 = vpow.pop %v4483
        %v4485 = vmul.f32 %v4439, 1.442695
        %v4486 = vpow.pop %v4485
        %v4487 = vmul.f32 %v4440, 1.442695
        %v4488 = vpow.pop %v4487
        %v4489 = vmul.f32 %v4441, 1.442695
        %v4490 = vpow.pop %v4489
        %v4491 = vmul.f32 %v4442, 1.442695
        %v4492 = vpow.pop %v4491
        %v4493 = vmul.f32 %v4443, 1.442695
        %v4494 = vpow.pop %v4493
        %v4495 = vmul.f32 %v4444, 1.442695
        %v4496 = vpow.pop %v4495
        %v4497 = vmul.f32 %v4445, 1.442695
        %v4498 = vpow.pop %v4497
        %v4499 = vmul.f32 %v4446, 1.442695
        %v4500 = vpow.pop %v4499
        %v4501 = vmul.f32 %v4447, 1.442695
        %v4502 = vpow.pop %v4501
        %v4503 = vmul.f32 %v4448, 1.442695
        %v4504 = vpow.pop %v4503
        %v4505 = vmul.f32 %v4449, 1.442695
        %v4506 = vpow.pop %v4505
        %v4507 = vmul.f32 %v4450, 1.442695
        %v4508 = vpow.pop %v4507
        %v4509 = vmul.f32 %v4451, 1.442695
        %v4510 = vpow.pop %v4509
        %v4511 = vmul.f32 %v4452, 1.442695
        %v4512 = vpow.pop %v4511
        %v4513 = vmul.f32 %v4453, 1.442695
        %v4514 = vpow.pop %v4513
        %v4515 = vmul.f32 %v4454, 1.442695
        %v4516 = vpow.pop %v4515
        %v4517 = vmul.f32 %v4455, 1.442695
        %v4518 = vpow.pop %v4517
        %v4519 = vmul.f32 %v4456, 1.442695
        %v4520 = vpow.pop %v4519
        %v4521 = vsel %vm1317, %v4458, 0.0
        %v4522 = vsel %vm1317, %v4460, 0.0
        %v4523 = vadd.f32 %v4521, %v4522
        %v4524 = vsel %vm1317, %v4462, 0.0
        %v4525 = vadd.f32 %v4523, %v4524
        %v4526 = vsel %vm1317, %v4464, 0.0
        %v4527 = vadd.f32 %v4525, %v4526
        %v4528 = vsel %vm1317, %v4466, 0.0
        %v4529 = vadd.f32 %v4527, %v4528
        %v4530 = vsel %vm1317, %v4468, 0.0
        %v4531 = vadd.f32 %v4529, %v4530
        %v4532 = vsel %vm1317, %v4470, 0.0
        %v4533 = vadd.f32 %v4531, %v4532
        %v4534 = vsel %vm1317, %v4472, 0.0
        %v4535 = vadd.f32 %v4533, %v4534
        %v4536 = vsel %vm1317, %v4474, 0.0
        %v4537 = vadd.f32 %v4535, %v4536
        %v4538 = vsel %vm1317, %v4476, 0.0
        %v4539 = vadd.f32 %v4537, %v4538
        %v4540 = vsel %vm1317, %v4478, 0.0
        %v4541 = vadd.f32 %v4539, %v4540
        %v4542 = vsel %vm1317, %v4480, 0.0
        %v4543 = vadd.f32 %v4541, %v4542
        %v4544 = vsel %vm1317, %v4482, 0.0
        %v4545 = vadd.f32 %v4543, %v4544
        %v4546 = vsel %vm1317, %v4484, 0.0
        %v4547 = vadd.f32 %v4545, %v4546
        %v4548 = vsel %vm1317, %v4486, 0.0
        %v4549 = vadd.f32 %v4547, %v4548
        %v4550 = vsel %vm1317, %v4488, 0.0
        %v4551 = vadd.f32 %v4549, %v4550
        %v4552 = vsel %vm1317, %v4490, 0.0
        %v4553 = vadd.f32 %v4551, %v4552
        %v4554 = vsel %vm1317, %v4492, 0.0
        %v4555 = vadd.f32 %v4553, %v4554
        %v4556 = vsel %vm1317, %v4494, 0.0
        %v4557 = vadd.f32 %v4555, %v4556
        %v4558 = vsel %vm1317, %v4496, 0.0
        %v4559 = vadd.f32 %v4557, %v4558
        %v4560 = vsel %vm1317, %v4498, 0.0
        %v4561 = vadd.f32 %v4559, %v4560
        %v4562 = vsel %vm1317, %v4500, 0.0
        %v4563 = vadd.f32 %v4561, %v4562
        %v4564 = vsel %vm1317, %v4502, 0.0
        %v4565 = vadd.f32 %v4563, %v4564
        %v4566 = vsel %vm1317, %v4504, 0.0
        %v4567 = vadd.f32 %v4565, %v4566
        %v4568 = vsel %vm1317, %v4506, 0.0
        %v4569 = vadd.f32 %v4567, %v4568
        %v4570 = vsel %vm1317, %v4508, 0.0
        %v4571 = vadd.f32 %v4569, %v4570
        %v4572 = vsel %vm1317, %v4510, 0.0
        %v4573 = vadd.f32 %v4571, %v4572
        %v4574 = vsel %vm1317, %v4512, 0.0
        %v4575 = vadd.f32 %v4573, %v4574
        %v4576 = vsel %vm1317, %v4514, 0.0
        %v4577 = vadd.f32 %v4575, %v4576
        %v4578 = vsel %vm1317, %v4516, 0.0
        %v4579 = vadd.f32 %v4577, %v4578
        %v4580 = vsel %vm1317, %v4518, 0.0
        %v4581 = vadd.f32 %v4579, %v4580
        %v4582 = vsel %vm1317, %v4520, 0.0
        %v4583 = vadd.f32 %v4581, %v4582
        %v4584 = vrot.slane %v4583, 4
        %v4585 = vadd.f32 %v4583, %v4584
        %v4586 = vrot.slane %v4585, 2
        %v4587 = vadd.f32 %v4585, %v4586
        %v4588 = vrot.slane %v4587, 1
        %v4589 = vadd.f32 %v4587, %v4588
        %v4590 = vrcp.pop %v4589
        %4591 = vmatpush.msra.mxu0 %v4488
        %4592 = vmatpush.msra.mxu0 %v4486
        %4593 = vmatpush.msra.mxu0 %v4484
        %4594 = vmatpush.msra.mxu0 %v4482
        %4595 = vmatpush.msra.mxu0 %v4480
        %4596 = vmatpush.msra.mxu0 %v4478
        %4597 = vmatpush.msra.mxu0 %v4476
        %4598 = vmatpush.msra.mxu0 %v4474
        %4599 = vmatpush.msra.mxu0 %v4472
        %4600 = vmatpush.msra.mxu0 %v4470
        %4601 = vmatpush.msra.mxu0 %v4468
        %4602 = vmatpush.msra.mxu0 %v4466
        %4603 = vmatpush.msra.mxu0 %v4464
        %4604 = vmatpush.msra.mxu0 %v4462
        %4605 = vmatpush.msra.mxu0 %v4460
        %4606 = vmatpush.msra.mxu0 %v4458
        %4607 = vmatmul.f32.gmra.mxu0 %v4080
        %v4608 = vpop.f32.mrf.mxu0
        %v4609 = vadd.f32 0.0, %v4608
        %4610 = vdwg.mxu0
        %4611 = vmatpush.msra.mxu0 %v4520
        %4612 = vmatpush.msra.mxu0 %v4518
        %4613 = vmatpush.msra.mxu0 %v4516
        %4614 = vmatpush.msra.mxu0 %v4514
        %4615 = vmatpush.msra.mxu0 %v4512
        %4616 = vmatpush.msra.mxu0 %v4510
        %4617 = vmatpush.msra.mxu0 %v4508
        %4618 = vmatpush.msra.mxu0 %v4506
        %4619 = vmatpush.msra.mxu0 %v4504
        %4620 = vmatpush.msra.mxu0 %v4502
        %4621 = vmatpush.msra.mxu0 %v4500
        %4622 = vmatpush.msra.mxu0 %v4498
        %4623 = vmatpush.msra.mxu0 %v4496
        %4624 = vmatpush.msra.mxu0 %v4494
        %4625 = vmatpush.msra.mxu0 %v4492
        %4626 = vmatpush.msra.mxu0 %v4490
        %4627 = vmatmul.f32.gmra.mxu0 %v4081
        %v4628 = vpop.f32.mrf.mxu0
        %v4629 = vadd.f32 %v4609, %v4628
        %4630 = vdwg.mxu0
        %v4631 = vmul.f32 %v4629, %v4590
        %v4632 = vadd.f32 %v1660, %v4631
        %v4634 = vsel %vm1317, %v4632, 0
        %4636 = vmatpush.msra.mxu0 0.0
        %4637 = vmatpush.msra.mxu0 0.0
        %4638 = vmatpush.msra.mxu0 0.0
        %4639 = vmatpush.msra.mxu0 0.0
        %4640 = vmatpush.msra.mxu0 0.0
        %4641 = vmatpush.msra.mxu0 0.0
        %4642 = vmatpush.msra.mxu0 0.0
        %4643 = vmatpush.msra.mxu0 0.0
        %4644 = vmatpush.msra.mxu0 %v1375
        %4645 = vmatpush.msra.mxu0 %v1374
        %4646 = vmatpush.msra.mxu0 %v1373
        %4647 = vmatpush.msra.mxu0 %v1372
        %4648 = vmatpush.msra.mxu0 %v1371
        %4649 = vmatpush.msra.mxu0 %v1370
        %4650 = vmatpush.msra.mxu0 %v1369
        %4651 = vmatpush.msra.mxu0 %v1368
        %4652 = vmatmul.f32.gmra.mxu0 %v4634
        %v4653 = vpop.f32.mrf.mxu0
        %v4654 = vadd.f32 0.0, %v4653
        %4655 = vdwg.mxu0
        %4656 = vmatpush.msra.mxu0 0.0
        %4657 = vmatpush.msra.mxu0 0.0
        %4658 = vmatpush.msra.mxu0 0.0
        %4659 = vmatpush.msra.mxu0 0.0
        %4660 = vmatpush.msra.mxu0 0.0
        %4661 = vmatpush.msra.mxu0 0.0
        %4662 = vmatpush.msra.mxu0 0.0
        %4663 = vmatpush.msra.mxu0 0.0
        %4664 = vmatpush.msra.mxu0 %v1407
        %4665 = vmatpush.msra.mxu0 %v1406
        %4666 = vmatpush.msra.mxu0 %v1405
        %4667 = vmatpush.msra.mxu0 %v1404
        %4668 = vmatpush.msra.mxu0 %v1403
        %4669 = vmatpush.msra.mxu0 %v1402
        %4670 = vmatpush.msra.mxu0 %v1401
        %4671 = vmatpush.msra.mxu0 %v1400
        %4672 = vmatmul.f32.gmra.mxu0 %v4634
        %v4673 = vpop.f32.mrf.mxu0
        %v4674 = vadd.f32 0.0, %v4673
        %4675 = vdwg.mxu0
        %4676 = vmatpush.msra.mxu0 0.0
        %4677 = vmatpush.msra.mxu0 0.0
        %4678 = vmatpush.msra.mxu0 0.0
        %4679 = vmatpush.msra.mxu0 0.0
        %4680 = vmatpush.msra.mxu0 0.0
        %4681 = vmatpush.msra.mxu0 0.0
        %4682 = vmatpush.msra.mxu0 0.0
        %4683 = vmatpush.msra.mxu0 0.0
        %4684 = vmatpush.msra.mxu0 %v1436
        %4685 = vmatpush.msra.mxu0 %v1435
        %4686 = vmatpush.msra.mxu0 %v1434
        %4687 = vmatpush.msra.mxu0 %v1433
        %4688 = vmatpush.msra.mxu0 %v1432
        %4689 = vmatpush.msra.mxu0 %v1431
        %4690 = vmatpush.msra.mxu0 %v1430
        %4691 = vmatpush.msra.mxu0 %v1429
        %4692 = vmatmul.f32.gmra.mxu0 %v4634
        %v4693 = vpop.f32.mrf.mxu0
        %v4694 = vadd.f32 0.0, %v4693
        %4695 = vdwg.mxu0
        %4696 = vmatpush.msra.mxu0 0.0
        %4697 = vmatpush.msra.mxu0 0.0
        %4698 = vmatpush.msra.mxu0 0.0
        %4699 = vmatpush.msra.mxu0 0.0
        %4700 = vmatpush.msra.mxu0 0.0
        %4701 = vmatpush.msra.mxu0 0.0
        %4702 = vmatpush.msra.mxu0 0.0
        %4703 = vmatpush.msra.mxu0 0.0
        %4704 = vmatpush.msra.mxu0 %v1465
        %4705 = vmatpush.msra.mxu0 %v1464
        %4706 = vmatpush.msra.mxu0 %v1463
        %4707 = vmatpush.msra.mxu0 %v1462
        %4708 = vmatpush.msra.mxu0 %v1461
        %4709 = vmatpush.msra.mxu0 %v1460
        %4710 = vmatpush.msra.mxu0 %v1459
        %4711 = vmatpush.msra.mxu0 %v1458
        %4712 = vmatmul.f32.gmra.mxu0 %v4634
        %v4713 = vpop.f32.mrf.mxu0
        %v4714 = vadd.f32 0.0, %v4713
        %4715 = vdwg.mxu0
        %4716 = vmatpush.msra.mxu0 0.0
        %4717 = vmatpush.msra.mxu0 0.0
        %4718 = vmatpush.msra.mxu0 0.0
        %4719 = vmatpush.msra.mxu0 0.0
        %4720 = vmatpush.msra.mxu0 0.0
        %4721 = vmatpush.msra.mxu0 0.0
        %4722 = vmatpush.msra.mxu0 0.0
        %4723 = vmatpush.msra.mxu0 0.0
        %4724 = vmatpush.msra.mxu0 %v1494
        %4725 = vmatpush.msra.mxu0 %v1493
        %4726 = vmatpush.msra.mxu0 %v1492
        %4727 = vmatpush.msra.mxu0 %v1491
        %4728 = vmatpush.msra.mxu0 %v1490
        %4729 = vmatpush.msra.mxu0 %v1489
        %4730 = vmatpush.msra.mxu0 %v1488
        %4731 = vmatpush.msra.mxu0 %v1487
        %4732 = vmatmul.f32.gmra.mxu0 %v4634
        %v4733 = vpop.f32.mrf.mxu0
        %v4734 = vadd.f32 0.0, %v4733
        %4735 = vdwg.mxu0
        %4736 = vmatpush.msra.mxu0 0.0
        %4737 = vmatpush.msra.mxu0 0.0
        %4738 = vmatpush.msra.mxu0 0.0
        %4739 = vmatpush.msra.mxu0 0.0
        %4740 = vmatpush.msra.mxu0 0.0
        %4741 = vmatpush.msra.mxu0 0.0
        %4742 = vmatpush.msra.mxu0 0.0
        %4743 = vmatpush.msra.mxu0 0.0
        %4744 = vmatpush.msra.mxu0 %v1523
        %4745 = vmatpush.msra.mxu0 %v1522
        %4746 = vmatpush.msra.mxu0 %v1521
        %4747 = vmatpush.msra.mxu0 %v1520
        %4748 = vmatpush.msra.mxu0 %v1519
        %4749 = vmatpush.msra.mxu0 %v1518
        %4750 = vmatpush.msra.mxu0 %v1517
        %4751 = vmatpush.msra.mxu0 %v1516
        %4752 = vmatmul.f32.gmra.mxu0 %v4634
        %v4753 = vpop.f32.mrf.mxu0
        %v4754 = vadd.f32 0.0, %v4753
        %4755 = vdwg.mxu0
        %4756 = vmatpush.msra.mxu0 0.0
        %4757 = vmatpush.msra.mxu0 0.0
        %4758 = vmatpush.msra.mxu0 0.0
        %4759 = vmatpush.msra.mxu0 0.0
        %4760 = vmatpush.msra.mxu0 0.0
        %4761 = vmatpush.msra.mxu0 0.0
        %4762 = vmatpush.msra.mxu0 0.0
        %4763 = vmatpush.msra.mxu0 0.0
        %4764 = vmatpush.msra.mxu0 %v1552
        %4765 = vmatpush.msra.mxu0 %v1551
        %4766 = vmatpush.msra.mxu0 %v1550
        %4767 = vmatpush.msra.mxu0 %v1549
        %4768 = vmatpush.msra.mxu0 %v1548
        %4769 = vmatpush.msra.mxu0 %v1547
        %4770 = vmatpush.msra.mxu0 %v1546
        %4771 = vmatpush.msra.mxu0 %v1545
        %4772 = vmatmul.f32.gmra.mxu0 %v4634
        %v4773 = vpop.f32.mrf.mxu0
        %v4774 = vadd.f32 0.0, %v4773
        %4775 = vdwg.mxu0
        %4776 = vmatpush.msra.mxu0 0.0
        %4777 = vmatpush.msra.mxu0 0.0
        %4778 = vmatpush.msra.mxu0 0.0
        %4779 = vmatpush.msra.mxu0 0.0
        %4780 = vmatpush.msra.mxu0 0.0
        %4781 = vmatpush.msra.mxu0 0.0
        %4782 = vmatpush.msra.mxu0 0.0
        %4783 = vmatpush.msra.mxu0 0.0
        %4784 = vmatpush.msra.mxu0 %v1581
        %4785 = vmatpush.msra.mxu0 %v1580
        %4786 = vmatpush.msra.mxu0 %v1579
        %4787 = vmatpush.msra.mxu0 %v1578
        %4788 = vmatpush.msra.mxu0 %v1577
        %4789 = vmatpush.msra.mxu0 %v1576
        %4790 = vmatpush.msra.mxu0 %v1575
        %4791 = vmatpush.msra.mxu0 %v1574
        %4792 = vmatmul.f32.gmra.mxu0 %v4634
        %v4793 = vpop.f32.mrf.mxu0
        %v4794 = vadd.f32 0.0, %v4793
        %4795 = vdwg.mxu0
        %4796 = vmatpush.msra.mxu0 0.0
        %4797 = vmatpush.msra.mxu0 0.0
        %4798 = vmatpush.msra.mxu0 0.0
        %4799 = vmatpush.msra.mxu0 0.0
        %4800 = vmatpush.msra.mxu0 0.0
        %4801 = vmatpush.msra.mxu0 0.0
        %4802 = vmatpush.msra.mxu0 0.0
        %4803 = vmatpush.msra.mxu0 0.0
        %4804 = vmatpush.msra.mxu0 %v1610
        %4805 = vmatpush.msra.mxu0 %v1609
        %4806 = vmatpush.msra.mxu0 %v1608
        %4807 = vmatpush.msra.mxu0 %v1607
        %4808 = vmatpush.msra.mxu0 %v1606
        %4809 = vmatpush.msra.mxu0 %v1605
        %4810 = vmatpush.msra.mxu0 %v1604
        %4811 = vmatpush.msra.mxu0 %v1603
        %4812 = vmatmul.f32.gmra.mxu0 %v4634
        %v4813 = vpop.f32.mrf.mxu0
        %v4814 = vadd.f32 0.0, %v4813
        %4815 = vdwg.mxu0
        %s4816 = scalar_lea.vmem [#allocation2], 40
        %v4817 = vld [vmem:[%s4816] sm:$0xff]
        %s4818 = scalar_lea.vmem [#allocation4], 80
        %v4819 = vld [vmem:[%s4818] sm:$0xff]
        %v4821 = vsel %vm884, %v4817, 0
        %4823 = vmatpush.msra.mxu0 0.0
        %4824 = vmatpush.msra.mxu0 0.0
        %4825 = vmatpush.msra.mxu0 0.0
        %4826 = vmatpush.msra.mxu0 0.0
        %4827 = vmatpush.msra.mxu0 0.0
        %4828 = vmatpush.msra.mxu0 0.0
        %4829 = vmatpush.msra.mxu0 0.0
        %4830 = vmatpush.msra.mxu0 %v4814
        %4831 = vmatpush.msra.mxu0 %v4794
        %4832 = vmatpush.msra.mxu0 %v4774
        %4833 = vmatpush.msra.mxu0 %v4754
        %4834 = vmatpush.msra.mxu0 %v4734
        %4835 = vmatpush.msra.mxu0 %v4714
        %4836 = vmatpush.msra.mxu0 %v4694
        %4837 = vmatpush.msra.mxu0 %v4674
        %4838 = vmatpush.msra.mxu0 %v4654
        %4839 = vmatmul.f32.gmra.mxu0 %v4821
        %v4840 = vpop.f32.mrf.mxu0
        %v4841 = vadd.f32 %v4819, %v4840
        %4842 = vdwg.mxu0
        %vm4843 = vcmp.ge.f32.partialorder %v4841, 0.0
        %v4844 = vmul.f32 %v4841, 0.2
        %v4845 = vsel %vm4843, %v4841, %v4844
        %v4846 = vmul.f32 %v1254, 0.35355338
        %4847 = vxpose.xlu0.b32.start [1/16] %v4845, 128
        %4848 = vxpose.xlu0.b32.cont [2/16] 0.0, 128
        %4849 = vxpose.xlu0.b32.cont [3/16] 0.0, 128
        %4850 = vxpose.xlu0.b32.cont [4/16] 0.0, 128
        %4851 = vxpose.xlu0.b32.cont [5/16] 0.0, 128
        %4852 = vxpose.xlu0.b32.cont [6/16] 0.0, 128
        %4853 = vxpose.xlu0.b32.cont [7/16] 0.0, 128
        %4854 = vxpose.xlu0.b32.cont [8/16] 0.0, 128
        %4855 = vxpose.xlu0.b32.cont [9/16] 0.0, 128
        %4856 = vxpose.xlu0.b32.cont [10/16] 0.0, 128
        %4857 = vxpose.xlu0.b32.cont [11/16] 0.0, 128
        %4858 = vxpose.xlu0.b32.cont [12/16] 0.0, 128
        %4859 = vxpose.xlu0.b32.cont [13/16] 0.0, 128
        %4860 = vxpose.xlu0.b32.cont [14/16] 0.0, 128
        %4861 = vxpose.xlu0.b32.cont [15/16] 0.0, 128
        %4862 = vxpose.xlu0.b32.end [16/16] 0.0, 128
        %v4863 = vpop.trf.xlu0
        %v4864 = vpop.trf.xlu0
        %v4865 = vpop.trf.xlu0
        %v4866 = vpop.trf.xlu0
        %v4867 = vpop.trf.xlu0
        %v4868 = vpop.trf.xlu0
        %v4869 = vpop.trf.xlu0
        %v4870 = vpop.trf.xlu0
        %v4871 = vpop.trf.xlu0
        %v4872 = vpop.trf.xlu0
        %v4873 = vpop.trf.xlu0
        %v4874 = vpop.trf.xlu0
        %v4875 = vpop.trf.xlu0
        %v4876 = vpop.trf.xlu0
        %v4877 = vpop.trf.xlu0
        %v4878 = vpop.trf.xlu0
        %v4880 = vsel %vm944, %v4863, 0
        %v4883 = vsel %vm944, %v4864, 0
        %v4886 = vsel %vm944, %v4865, 0
        %v4889 = vsel %vm944, %v4866, 0
        %v4892 = vsel %vm944, %v4867, 0
        %v4895 = vsel %vm944, %v4868, 0
        %v4898 = vsel %vm944, %v4869, 0
        %v4901 = vsel %vm944, %v4870, 0
        %4903 = vmatpush.msra.mxu0 0.0
        %4904 = vmatpush.msra.mxu0 0.0
        %4905 = vmatpush.msra.mxu0 0.0
        %4906 = vmatpush.msra.mxu0 0.0
        %4907 = vmatpush.msra.mxu0 0.0
        %4908 = vmatpush.msra.mxu0 0.0
        %4909 = vmatpush.msra.mxu0 0.0
        %4910 = vmatpush.msra.mxu0 0.0
        %4911 = vmatpush.msra.mxu0 0.0
        %4912 = vmatpush.msra.mxu0 0.0
        %4913 = vmatpush.msra.mxu0 0.0
        %4914 = vmatpush.msra.mxu0 0.0
        %4915 = vmatpush.msra.mxu0 0.0
        %4916 = vmatpush.msra.mxu0 0.0
        %4917 = vmatpush.msra.mxu0 0.0
        %4918 = vmatpush.msra.mxu0 %v4846
        %4919 = vmatmul.f32.gmra.mxu0 %v4880
        %v4920 = vpop.f32.mrf.mxu0
        %v4921 = vadd.f32 0.0, %v4920
        %4922 = vmatmul.f32.gmra.mxu0 %v4883
        %v4923 = vpop.f32.mrf.mxu0
        %v4924 = vadd.f32 0.0, %v4923
        %4925 = vmatmul.f32.gmra.mxu0 %v4886
        %v4926 = vpop.f32.mrf.mxu0
        %v4927 = vadd.f32 0.0, %v4926
        %4928 = vmatmul.f32.gmra.mxu0 %v4889
        %v4929 = vpop.f32.mrf.mxu0
        %v4930 = vadd.f32 0.0, %v4929
        %4931 = vmatmul.f32.gmra.mxu0 %v4892
        %v4932 = vpop.f32.mrf.mxu0
        %v4933 = vadd.f32 0.0, %v4932
        %4934 = vmatmul.f32.gmra.mxu0 %v4895
        %v4935 = vpop.f32.mrf.mxu0
        %v4936 = vadd.f32 0.0, %v4935
        %4937 = vmatmul.f32.gmra.mxu0 %v4898
        %v4938 = vpop.f32.mrf.mxu0
        %v4939 = vadd.f32 0.0, %v4938
        %4940 = vmatmul.f32.gmra.mxu0 %v4901
        %v4941 = vpop.f32.mrf.mxu0
        %v4942 = vadd.f32 0.0, %v4941
        %4943 = vdwg.mxu0
        %v4944 = vsel %vm1017, %v4921, -inf
        %v4945 = vsel %vm1017, %v4924, -inf
        %v4946 = vsel %vm1017, %v4927, -inf
        %v4947 = vsel %vm1017, %v4930, -inf
        %v4948 = vsel %vm1017, %v4933, -inf
        %v4949 = vmax.f32 %v4944, %v4948
        %v4950 = vsel %vm1017, %v4936, -inf
        %v4951 = vmax.f32 %v4945, %v4950
        %v4952 = vsel %vm1017, %v4939, -inf
        %v4953 = vmax.f32 %v4946, %v4952
        %v4954 = vsel %vm1017, %v4942, -inf
        %v4955 = vmax.f32 %v4947, %v4954
        %v4956 = vmax.f32 %v4949, %v4951
        %v4957 = vmax.f32 %v4953, %v4955
        %v4958 = vmax.f32 %v4956, %v4957
        %v4959 = vrot.slane %v4958, 4
        %v4960 = vmax.f32 %v4958, %v4959
        %v4961 = vrot.slane %v4960, 2
        %v4962 = vmax.f32 %v4960, %v4961
        %v4963 = vrot.slane %v4962, 1
        %v4964 = vmax.f32 %v4962, %v4963
        %v4965 = vsub.f32 %v4921, %v4964
        %v4966 = vsub.f32 %v4924, %v4964
        %v4967 = vsub.f32 %v4927, %v4964
        %v4968 = vsub.f32 %v4930, %v4964
        %v4969 = vsub.f32 %v4933, %v4964
        %v4970 = vsub.f32 %v4936, %v4964
        %v4971 = vsub.f32 %v4939, %v4964
        %v4972 = vsub.f32 %v4942, %v4964
        %v4973 = vmul.f32 %v4965, 1.442695
        %v4974 = vpow.pop %v4973
        %v4975 = vmul.f32 %v4966, 1.442695
        %v4976 = vpow.pop %v4975
        %v4977 = vmul.f32 %v4967, 1.442695
        %v4978 = vpow.pop %v4977
        %v4979 = vmul.f32 %v4968, 1.442695
        %v4980 = vpow.pop %v4979
        %v4981 = vmul.f32 %v4969, 1.442695
        %v4982 = vpow.pop %v4981
        %v4983 = vmul.f32 %v4970, 1.442695
        %v4984 = vpow.pop %v4983
        %v4985 = vmul.f32 %v4971, 1.442695
        %v4986 = vpow.pop %v4985
        %v4987 = vmul.f32 %v4972, 1.442695
        %v4988 = vpow.pop %v4987
        %v4989 = vsel %vm1017, %v4974, 0.0
        %v4990 = vsel %vm1017, %v4976, 0.0
        %v4991 = vadd.f32 %v4989, %v4990
        %v4992 = vsel %vm1017, %v4978, 0.0
        %v4993 = vadd.f32 %v4991, %v4992
        %v4994 = vsel %vm1017, %v4980, 0.0
        %v4995 = vadd.f32 %v4993, %v4994
        %v4996 = vsel %vm1017, %v4982, 0.0
        %v4997 = vadd.f32 %v4995, %v4996
        %v4998 = vsel %vm1017, %v4984, 0.0
        %v4999 = vadd.f32 %v4997, %v4998
        %v5000 = vsel %vm1017, %v4986, 0.0
        %v5001 = vadd.f32 %v4999, %v5000
        %v5002 = vsel %vm1017, %v4988, 0.0
        %v5003 = vadd.f32 %v5001, %v5002
        %v5004 = vrot.slane %v5003, 4
        %v5005 = vadd.f32 %v5003, %v5004
        %v5006 = vrot.slane %v5005, 2
        %v5007 = vadd.f32 %v5005, %v5006
        %v5008 = vrot.slane %v5007, 1
        %v5009 = vadd.f32 %v5007, %v5008
        %v5010 = vrcp.pop %v5009
        %v5012 = vsel %vm1317, %v4845, 0
        %5014 = vmatpush.msra.mxu0 0.0
        %5015 = vmatpush.msra.mxu0 0.0
        %5016 = vmatpush.msra.mxu0 0.0
        %5017 = vmatpush.msra.mxu0 0.0
        %5018 = vmatpush.msra.mxu0 0.0
        %5019 = vmatpush.msra.mxu0 0.0
        %5020 = vmatpush.msra.mxu0 0.0
        %5021 = vmatpush.msra.mxu0 0.0
        %5022 = vmatpush.msra.mxu0 %v4988
        %5023 = vmatpush.msra.mxu0 %v4986
        %5024 = vmatpush.msra.mxu0 %v4984
        %5025 = vmatpush.msra.mxu0 %v4982
        %5026 = vmatpush.msra.mxu0 %v4980
        %5027 = vmatpush.msra.mxu0 %v4978
        %5028 = vmatpush.msra.mxu0 %v4976
        %5029 = vmatpush.msra.mxu0 %v4974
        %5030 = vmatmul.f32.gmra.mxu0 %v5012
        %v5031 = vpop.f32.mrf.mxu0
        %v5032 = vadd.f32 0.0, %v5031
        %5033 = vdwg.mxu0
        %v5034 = vmul.f32 %v5032, %v5010
        %v5035 = vadd.f32 %v1254, %v5034
        %v5037 = vsel %vm1017, %v5035, 0
        %5039 = vmatpush.msra.mxu0 0.0
        %5040 = vmatpush.msra.mxu0 0.0
        %5041 = vmatpush.msra.mxu0 0.0
        %5042 = vmatpush.msra.mxu0 0.0
        %5043 = vmatpush.msra.mxu0 0.0
        %5044 = vmatpush.msra.mxu0 0.0
        %5045 = vmatpush.msra.mxu0 0.0
        %5046 = vmatpush.msra.mxu0 0.0
        %5047 = vmatpush.msra.mxu0 0.0
        %5048 = vmatpush.msra.mxu0 0.0
        %5049 = vmatpush.msra.mxu0 0.0
        %5050 = vmatpush.msra.mxu0 0.0
        %5051 = vmatpush.msra.mxu0 0.0
        %5052 = vmatpush.msra.mxu0 0.0
        %5053 = vmatpush.msra.mxu0 %v1016
        %5054 = vmatpush.msra.mxu0 %v1015
        %5055 = vmatmul.f32.gmra.mxu0 %v5037
        %v5056 = vpop.f32.mrf.mxu0
        %v5057 = vadd.f32 0.0, %v5056
        %5058 = vdwg.mxu0
        %5059 = vmatpush.msra.mxu0 0.0
        %5060 = vmatpush.msra.mxu0 0.0
        %5061 = vmatpush.msra.mxu0 0.0
        %5062 = vmatpush.msra.mxu0 0.0
        %5063 = vmatpush.msra.mxu0 0.0
        %5064 = vmatpush.msra.mxu0 0.0
        %5065 = vmatpush.msra.mxu0 0.0
        %5066 = vmatpush.msra.mxu0 0.0
        %5067 = vmatpush.msra.mxu0 0.0
        %5068 = vmatpush.msra.mxu0 0.0
        %5069 = vmatpush.msra.mxu0 0.0
        %5070 = vmatpush.msra.mxu0 0.0
        %5071 = vmatpush.msra.mxu0 0.0
        %5072 = vmatpush.msra.mxu0 0.0
        %5073 = vmatpush.msra.mxu0 %v1043
        %5074 = vmatpush.msra.mxu0 %v1042
        %5075 = vmatmul.f32.gmra.mxu0 %v5037
        %v5076 = vpop.f32.mrf.mxu0
        %v5077 = vadd.f32 0.0, %v5076
        %5078 = vdwg.mxu0
        %5079 = vmatpush.msra.mxu0 0.0
        %5080 = vmatpush.msra.mxu0 0.0
        %5081 = vmatpush.msra.mxu0 0.0
        %5082 = vmatpush.msra.mxu0 0.0
        %5083 = vmatpush.msra.mxu0 0.0
        %5084 = vmatpush.msra.mxu0 0.0
        %5085 = vmatpush.msra.mxu0 0.0
        %5086 = vmatpush.msra.mxu0 0.0
        %5087 = vmatpush.msra.mxu0 0.0
        %5088 = vmatpush.msra.mxu0 0.0
        %5089 = vmatpush.msra.mxu0 0.0
        %5090 = vmatpush.msra.mxu0 0.0
        %5091 = vmatpush.msra.mxu0 0.0
        %5092 = vmatpush.msra.mxu0 0.0
        %5093 = vmatpush.msra.mxu0 %v1066
        %5094 = vmatpush.msra.mxu0 %v1065
        %5095 = vmatmul.f32.gmra.mxu0 %v5037
        %v5096 = vpop.f32.mrf.mxu0
        %v5097 = vadd.f32 0.0, %v5096
        %5098 = vdwg.mxu0
        %5099 = vmatpush.msra.mxu0 0.0
        %5100 = vmatpush.msra.mxu0 0.0
        %5101 = vmatpush.msra.mxu0 0.0
        %5102 = vmatpush.msra.mxu0 0.0
        %5103 = vmatpush.msra.mxu0 0.0
        %5104 = vmatpush.msra.mxu0 0.0
        %5105 = vmatpush.msra.mxu0 0.0
        %5106 = vmatpush.msra.mxu0 0.0
        %5107 = vmatpush.msra.mxu0 0.0
        %5108 = vmatpush.msra.mxu0 0.0
        %5109 = vmatpush.msra.mxu0 0.0
        %5110 = vmatpush.msra.mxu0 0.0
        %5111 = vmatpush.msra.mxu0 0.0
        %5112 = vmatpush.msra.mxu0 0.0
        %5113 = vmatpush.msra.mxu0 %v1089
        %5114 = vmatpush.msra.mxu0 %v1088
        %5115 = vmatmul.f32.gmra.mxu0 %v5037
        %v5116 = vpop.f32.mrf.mxu0
        %v5117 = vadd.f32 0.0, %v5116
        %5118 = vdwg.mxu0
        %5119 = vmatpush.msra.mxu0 0.0
        %5120 = vmatpush.msra.mxu0 0.0
        %5121 = vmatpush.msra.mxu0 0.0
        %5122 = vmatpush.msra.mxu0 0.0
        %5123 = vmatpush.msra.mxu0 0.0
        %5124 = vmatpush.msra.mxu0 0.0
        %5125 = vmatpush.msra.mxu0 0.0
        %5126 = vmatpush.msra.mxu0 0.0
        %5127 = vmatpush.msra.mxu0 0.0
        %5128 = vmatpush.msra.mxu0 0.0
        %5129 = vmatpush.msra.mxu0 0.0
        %5130 = vmatpush.msra.mxu0 0.0
        %5131 = vmatpush.msra.mxu0 0.0
        %5132 = vmatpush.msra.mxu0 0.0
        %5133 = vmatpush.msra.mxu0 %v1112
        %5134 = vmatpush.msra.mxu0 %v1111
        %5135 = vmatmul.f32.gmra.mxu0 %v5037
        %v5136 = vpop.f32.mrf.mxu0
        %v5137 = vadd.f32 0.0, %v5136
        %5138 = vdwg.mxu0
        %5139 = vmatpush.msra.mxu0 0.0
        %5140 = vmatpush.msra.mxu0 0.0
        %5141 = vmatpush.msra.mxu0 0.0
        %5142 = vmatpush.msra.mxu0 0.0
        %5143 = vmatpush.msra.mxu0 0.0
        %5144 = vmatpush.msra.mxu0 0.0
        %5145 = vmatpush.msra.mxu0 0.0
        %5146 = vmatpush.msra.mxu0 0.0
        %5147 = vmatpush.msra.mxu0 0.0
        %5148 = vmatpush.msra.mxu0 0.0
        %5149 = vmatpush.msra.mxu0 0.0
        %5150 = vmatpush.msra.mxu0 0.0
        %5151 = vmatpush.msra.mxu0 0.0
        %5152 = vmatpush.msra.mxu0 0.0
        %5153 = vmatpush.msra.mxu0 %v1135
        %5154 = vmatpush.msra.mxu0 %v1134
        %5155 = vmatmul.f32.gmra.mxu0 %v5037
        %v5156 = vpop.f32.mrf.mxu0
        %v5157 = vadd.f32 0.0, %v5156
        %5158 = vdwg.mxu0
        %5159 = vmatpush.msra.mxu0 0.0
        %5160 = vmatpush.msra.mxu0 0.0
        %5161 = vmatpush.msra.mxu0 0.0
        %5162 = vmatpush.msra.mxu0 0.0
        %5163 = vmatpush.msra.mxu0 0.0
        %5164 = vmatpush.msra.mxu0 0.0
        %5165 = vmatpush.msra.mxu0 0.0
        %5166 = vmatpush.msra.mxu0 0.0
        %5167 = vmatpush.msra.mxu0 0.0
        %5168 = vmatpush.msra.mxu0 0.0
        %5169 = vmatpush.msra.mxu0 0.0
        %5170 = vmatpush.msra.mxu0 0.0
        %5171 = vmatpush.msra.mxu0 0.0
        %5172 = vmatpush.msra.mxu0 0.0
        %5173 = vmatpush.msra.mxu0 %v1158
        %5174 = vmatpush.msra.mxu0 %v1157
        %5175 = vmatmul.f32.gmra.mxu0 %v5037
        %v5176 = vpop.f32.mrf.mxu0
        %v5177 = vadd.f32 0.0, %v5176
        %5178 = vdwg.mxu0
        %5179 = vmatpush.msra.mxu0 0.0
        %5180 = vmatpush.msra.mxu0 0.0
        %5181 = vmatpush.msra.mxu0 0.0
        %5182 = vmatpush.msra.mxu0 0.0
        %5183 = vmatpush.msra.mxu0 0.0
        %5184 = vmatpush.msra.mxu0 0.0
        %5185 = vmatpush.msra.mxu0 0.0
        %5186 = vmatpush.msra.mxu0 0.0
        %5187 = vmatpush.msra.mxu0 0.0
        %5188 = vmatpush.msra.mxu0 0.0
        %5189 = vmatpush.msra.mxu0 0.0
        %5190 = vmatpush.msra.mxu0 0.0
        %5191 = vmatpush.msra.mxu0 0.0
        %5192 = vmatpush.msra.mxu0 0.0
        %5193 = vmatpush.msra.mxu0 %v1181
        %5194 = vmatpush.msra.mxu0 %v1180
        %5195 = vmatmul.f32.gmra.mxu0 %v5037
        %v5196 = vpop.f32.mrf.mxu0
        %v5197 = vadd.f32 0.0, %v5196
        %5198 = vdwg.mxu0
        %5199 = vmatpush.msra.mxu0 0.0
        %5200 = vmatpush.msra.mxu0 0.0
        %5201 = vmatpush.msra.mxu0 0.0
        %5202 = vmatpush.msra.mxu0 0.0
        %5203 = vmatpush.msra.mxu0 0.0
        %5204 = vmatpush.msra.mxu0 0.0
        %5205 = vmatpush.msra.mxu0 0.0
        %5206 = vmatpush.msra.mxu0 0.0
        %5207 = vmatpush.msra.mxu0 0.0
        %5208 = vmatpush.msra.mxu0 0.0
        %5209 = vmatpush.msra.mxu0 0.0
        %5210 = vmatpush.msra.mxu0 0.0
        %5211 = vmatpush.msra.mxu0 0.0
        %5212 = vmatpush.msra.mxu0 0.0
        %5213 = vmatpush.msra.mxu0 %v1204
        %5214 = vmatpush.msra.mxu0 %v1203
        %5215 = vmatmul.f32.gmra.mxu0 %v5037
        %v5216 = vpop.f32.mrf.mxu0
        %v5217 = vadd.f32 0.0, %v5216
        %5218 = vdwg.mxu0
        %s5219 = scalar_lea.vmem [#allocation2], 48
        %v5220 = vld [vmem:[%s5219] sm:$0xff]
        %s5221 = scalar_lea.vmem [#allocation4], 96
        %v5222 = vld [vmem:[%s5221] sm:$0xff]
        %v5224 = vsel %vm884, %v5220, 0
        %5226 = vmatpush.msra.mxu0 0.0
        %5227 = vmatpush.msra.mxu0 0.0
        %5228 = vmatpush.msra.mxu0 0.0
        %5229 = vmatpush.msra.mxu0 0.0
        %5230 = vmatpush.msra.mxu0 0.0
        %5231 = vmatpush.msra.mxu0 0.0
        %5232 = vmatpush.msra.mxu0 0.0
        %5233 = vmatpush.msra.mxu0 %v5217
        %5234 = vmatpush.msra.mxu0 %v5197
        %5235 = vmatpush.msra.mxu0 %v5177
        %5236 = vmatpush.msra.mxu0 %v5157
        %5237 = vmatpush.msra.mxu0 %v5137
        %5238 = vmatpush.msra.mxu0 %v5117
        %5239 = vmatpush.msra.mxu0 %v5097
        %5240 = vmatpush.msra.mxu0 %v5077
        %5241 = vmatpush.msra.mxu0 %v5057
        %5242 = vmatmul.f32.gmra.mxu0 %v5224
        %v5243 = vpop.f32.mrf.mxu0
        %v5244 = vadd.f32 %v5222, %v5243
        %5245 = vdwg.mxu0
        %vm5246 = vcmp.ge.f32.partialorder %v5244, 0.0
        %v5247 = vmul.f32 %v5244, 0.2
        %v5248 = vsel %vm5246, %v5244, %v5247
        %5249 = vxpose.xlu0.b32.start [1/16] %v5248, 128
        %5250 = vxpose.xlu0.b32.cont [2/16] 0.0, 128
        %5251 = vxpose.xlu0.b32.cont [3/16] 0.0, 128
        %5252 = vxpose.xlu0.b32.cont [4/16] 0.0, 128
        %5253 = vxpose.xlu0.b32.cont [5/16] 0.0, 128
        %5254 = vxpose.xlu0.b32.cont [6/16] 0.0, 128
        %5255 = vxpose.xlu0.b32.cont [7/16] 0.0, 128
        %5256 = vxpose.xlu0.b32.cont [8/16] 0.0, 128
        %5257 = vxpose.xlu0.b32.cont [9/16] 0.0, 128
        %5258 = vxpose.xlu0.b32.cont [10/16] 0.0, 128
        %5259 = vxpose.xlu0.b32.cont [11/16] 0.0, 128
        %5260 = vxpose.xlu0.b32.cont [12/16] 0.0, 128
        %5261 = vxpose.xlu0.b32.cont [13/16] 0.0, 128
        %5262 = vxpose.xlu0.b32.cont [14/16] 0.0, 128
        %5263 = vxpose.xlu0.b32.cont [15/16] 0.0, 128
        %5264 = vxpose.xlu0.b32.end [16/16] 0.0, 128
        %v5265 = vpop.trf.xlu0
        %v5266 = vpop.trf.xlu0
        %v5267 = vpop.trf.xlu0
        %v5268 = vpop.trf.xlu0
        %v5269 = vpop.trf.xlu0
        %v5270 = vpop.trf.xlu0
        %v5271 = vpop.trf.xlu0
        %v5272 = vpop.trf.xlu0
        %v5273 = vpop.trf.xlu0
        %v5274 = vpop.trf.xlu0
        %v5275 = vpop.trf.xlu0
        %v5276 = vpop.trf.xlu0
        %v5277 = vpop.trf.xlu0
        %v5278 = vpop.trf.xlu0
        %v5279 = vpop.trf.xlu0
        %v5280 = vpop.trf.xlu0
        %v5282 = vsel %vm944, %v5265, 0
        %v5285 = vsel %vm944, %v5266, 0
        %5287 = vmatpush.msra.mxu0 0.0
        %5288 = vmatpush.msra.mxu0 0.0
        %5289 = vmatpush.msra.mxu0 0.0
        %5290 = vmatpush.msra.mxu0 0.0
        %5291 = vmatpush.msra.mxu0 0.0
        %5292 = vmatpush.msra.mxu0 0.0
        %5293 = vmatpush.msra.mxu0 0.0
        %5294 = vmatpush.msra.mxu0 0.0
        %5295 = vmatpush.msra.mxu0 0.0
        %5296 = vmatpush.msra.mxu0 0.0
        %5297 = vmatpush.msra.mxu0 0.0
        %5298 = vmatpush.msra.mxu0 0.0
        %5299 = vmatpush.msra.mxu0 0.0
        %5300 = vmatpush.msra.mxu0 0.0
        %5301 = vmatpush.msra.mxu0 0.0
        %5302 = vmatpush.msra.mxu0 %v4846
        %5303 = vmatmul.f32.gmra.mxu0 %v5282
        %v5304 = vpop.f32.mrf.mxu0
        %v5305 = vadd.f32 0.0, %v5304
        %5306 = vmatmul.f32.gmra.mxu0 %v5285
        %v5307 = vpop.f32.mrf.mxu0
        %v5308 = vadd.f32 0.0, %v5307
        %5309 = vdwg.mxu0
        %v5310 = vsel %vm1017, %v5305, -inf
        %v5311 = vsel %vm1017, %v5308, -inf
        %v5312 = vmax.f32 %v5310, %v5311
        %v5313 = vrot.slane %v5312, 4
        %v5314 = vmax.f32 %v5312, %v5313
        %v5315 = vrot.slane %v5314, 2
        %v5316 = vmax.f32 %v5314, %v5315
        %v5317 = vrot.slane %v5316, 1
        %v5318 = vmax.f32 %v5316, %v5317
        %v5319 = vsub.f32 %v5305, %v5318
        %v5320 = vsub.f32 %v5308, %v5318
        %v5321 = vmul.f32 %v5319, 1.442695
        %v5322 = vpow.pop %v5321
        %v5323 = vmul.f32 %v5320, 1.442695
        %v5324 = vpow.pop %v5323
        %v5325 = vsel %vm1017, %v5322, 0.0
        %v5326 = vsel %vm1017, %v5324, 0.0
        %v5327 = vadd.f32 %v5325, %v5326
        %v5328 = vrot.slane %v5327, 4
        %v5329 = vadd.f32 %v5327, %v5328
        %v5330 = vrot.slane %v5329, 2
        %v5331 = vadd.f32 %v5329, %v5330
        %v5332 = vrot.slane %v5331, 1
        %v5333 = vadd.f32 %v5331, %v5332
        %v5334 = vrcp.pop %v5333
        %v5336 = vsel %vm1017, %v5248, 0
        %5338 = vmatpush.msra.mxu0 0.0
        %5339 = vmatpush.msra.mxu0 0.0
        %5340 = vmatpush.msra.mxu0 0.0
        %5341 = vmatpush.msra.mxu0 0.0
        %5342 = vmatpush.msra.mxu0 0.0
        %5343 = vmatpush.msra.mxu0 0.0
        %5344 = vmatpush.msra.mxu0 0.0
        %5345 = vmatpush.msra.mxu0 0.0
        %5346 = vmatpush.msra.mxu0 0.0
        %5347 = vmatpush.msra.mxu0 0.0
        %5348 = vmatpush.msra.mxu0 0.0
        %5349 = vmatpush.msra.mxu0 0.0
        %5350 = vmatpush.msra.mxu0 0.0
        %5351 = vmatpush.msra.mxu0 0.0
        %5352 = vmatpush.msra.mxu0 %v5324
        %5353 = vmatpush.msra.mxu0 %v5322
        %5354 = vmatmul.f32.gmra.mxu0 %v5336
        %v5355 = vpop.f32.mrf.mxu0
        %v5356 = vadd.f32 0.0, %v5355
        %5357 = vdwg.mxu0
        %v5358 = vmul.f32 %v5356, %v5334
        %v5359 = vadd.f32 %v1254, %v5358
        %v5361 = vsel %vm1017, %v5359, 0
        %5363 = vmatpush.msra.mxu0 0.0
        %5364 = vmatpush.msra.mxu0 0.0
        %5365 = vmatpush.msra.mxu0 0.0
        %5366 = vmatpush.msra.mxu0 0.0
        %5367 = vmatpush.msra.mxu0 0.0
        %5368 = vmatpush.msra.mxu0 0.0
        %5369 = vmatpush.msra.mxu0 0.0
        %5370 = vmatpush.msra.mxu0 0.0
        %5371 = vmatpush.msra.mxu0 0.0
        %5372 = vmatpush.msra.mxu0 0.0
        %5373 = vmatpush.msra.mxu0 0.0
        %5374 = vmatpush.msra.mxu0 0.0
        %5375 = vmatpush.msra.mxu0 0.0
        %5376 = vmatpush.msra.mxu0 0.0
        %5377 = vmatpush.msra.mxu0 %v1016
        %5378 = vmatpush.msra.mxu0 %v1015
        %5379 = vmatmul.f32.gmra.mxu0 %v5361
        %v5380 = vpop.f32.mrf.mxu0
        %v5381 = vadd.f32 0.0, %v5380
        %5382 = vdwg.mxu0
        %5383 = vmatpush.msra.mxu0 0.0
        %5384 = vmatpush.msra.mxu0 0.0
        %5385 = vmatpush.msra.mxu0 0.0
        %5386 = vmatpush.msra.mxu0 0.0
        %5387 = vmatpush.msra.mxu0 0.0
        %5388 = vmatpush.msra.mxu0 0.0
        %5389 = vmatpush.msra.mxu0 0.0
        %5390 = vmatpush.msra.mxu0 0.0
        %5391 = vmatpush.msra.mxu0 0.0
        %5392 = vmatpush.msra.mxu0 0.0
        %5393 = vmatpush.msra.mxu0 0.0
        %5394 = vmatpush.msra.mxu0 0.0
        %5395 = vmatpush.msra.mxu0 0.0
        %5396 = vmatpush.msra.mxu0 0.0
        %5397 = vmatpush.msra.mxu0 %v1043
        %5398 = vmatpush.msra.mxu0 %v1042
        %5399 = vmatmul.f32.gmra.mxu0 %v5361
        %v5400 = vpop.f32.mrf.mxu0
        %v5401 = vadd.f32 0.0, %v5400
        %5402 = vdwg.mxu0
        %5403 = vmatpush.msra.mxu0 0.0
        %5404 = vmatpush.msra.mxu0 0.0
        %5405 = vmatpush.msra.mxu0 0.0
        %5406 = vmatpush.msra.mxu0 0.0
        %5407 = vmatpush.msra.mxu0 0.0
        %5408 = vmatpush.msra.mxu0 0.0
        %5409 = vmatpush.msra.mxu0 0.0
        %5410 = vmatpush.msra.mxu0 0.0
        %5411 = vmatpush.msra.mxu0 0.0
        %5412 = vmatpush.msra.mxu0 0.0
        %5413 = vmatpush.msra.mxu0 0.0
        %5414 = vmatpush.msra.mxu0 0.0
        %5415 = vmatpush.msra.mxu0 0.0
        %5416 = vmatpush.msra.mxu0 0.0
        %5417 = vmatpush.msra.mxu0 %v1066
        %5418 = vmatpush.msra.mxu0 %v1065
        %5419 = vmatmul.f32.gmra.mxu0 %v5361
        %v5420 = vpop.f32.mrf.mxu0
        %v5421 = vadd.f32 0.0, %v5420
        %5422 = vdwg.mxu0
        %5423 = vmatpush.msra.mxu0 0.0
        %5424 = vmatpush.msra.mxu0 0.0
        %5425 = vmatpush.msra.mxu0 0.0
        %5426 = vmatpush.msra.mxu0 0.0
        %5427 = vmatpush.msra.mxu0 0.0
        %5428 = vmatpush.msra.mxu0 0.0
        %5429 = vmatpush.msra.mxu0 0.0
        %5430 = vmatpush.msra.mxu0 0.0
        %5431 = vmatpush.msra.mxu0 0.0
        %5432 = vmatpush.msra.mxu0 0.0
        %5433 = vmatpush.msra.mxu0 0.0
        %5434 = vmatpush.msra.mxu0 0.0
        %5435 = vmatpush.msra.mxu0 0.0
        %5436 = vmatpush.msra.mxu0 0.0
        %5437 = vmatpush.msra.mxu0 %v1089
        %5438 = vmatpush.msra.mxu0 %v1088
        %5439 = vmatmul.f32.gmra.mxu0 %v5361
        %v5440 = vpop.f32.mrf.mxu0
        %v5441 = vadd.f32 0.0, %v5440
        %5442 = vdwg.mxu0
        %5443 = vmatpush.msra.mxu0 0.0
        %5444 = vmatpush.msra.mxu0 0.0
        %5445 = vmatpush.msra.mxu0 0.0
        %5446 = vmatpush.msra.mxu0 0.0
        %5447 = vmatpush.msra.mxu0 0.0
        %5448 = vmatpush.msra.mxu0 0.0
        %5449 = vmatpush.msra.mxu0 0.0
        %5450 = vmatpush.msra.mxu0 0.0
        %5451 = vmatpush.msra.mxu0 0.0
        %5452 = vmatpush.msra.mxu0 0.0
        %5453 = vmatpush.msra.mxu0 0.0
        %5454 = vmatpush.msra.mxu0 0.0
        %5455 = vmatpush.msra.mxu0 0.0
        %5456 = vmatpush.msra.mxu0 0.0
        %5457 = vmatpush.msra.mxu0 %v1112
        %5458 = vmatpush.msra.mxu0 %v1111
        %5459 = vmatmul.f32.gmra.mxu0 %v5361
        %v5460 = vpop.f32.mrf.mxu0
        %v5461 = vadd.f32 0.0, %v5460
        %5462 = vdwg.mxu0
        %5463 = vmatpush.msra.mxu0 0.0
        %5464 = vmatpush.msra.mxu0 0.0
        %5465 = vmatpush.msra.mxu0 0.0
        %5466 = vmatpush.msra.mxu0 0.0
        %5467 = vmatpush.msra.mxu0 0.0
        %5468 = vmatpush.msra.mxu0 0.0
        %5469 = vmatpush.msra.mxu0 0.0
        %5470 = vmatpush.msra.mxu0 0.0
        %5471 = vmatpush.msra.mxu0 0.0
        %5472 = vmatpush.msra.mxu0 0.0
        %5473 = vmatpush.msra.mxu0 0.0
        %5474 = vmatpush.msra.mxu0 0.0
        %5475 = vmatpush.msra.mxu0 0.0
        %5476 = vmatpush.msra.mxu0 0.0
        %5477 = vmatpush.msra.mxu0 %v1135
        %5478 = vmatpush.msra.mxu0 %v1134
        %5479 = vmatmul.f32.gmra.mxu0 %v5361
        %v5480 = vpop.f32.mrf.mxu0
        %v5481 = vadd.f32 0.0, %v5480
        %5482 = vdwg.mxu0
        %5483 = vmatpush.msra.mxu0 0.0
        %5484 = vmatpush.msra.mxu0 0.0
        %5485 = vmatpush.msra.mxu0 0.0
        %5486 = vmatpush.msra.mxu0 0.0
        %5487 = vmatpush.msra.mxu0 0.0
        %5488 = vmatpush.msra.mxu0 0.0
        %5489 = vmatpush.msra.mxu0 0.0
        %5490 = vmatpush.msra.mxu0 0.0
        %5491 = vmatpush.msra.mxu0 0.0
        %5492 = vmatpush.msra.mxu0 0.0
        %5493 = vmatpush.msra.mxu0 0.0
        %5494 = vmatpush.msra.mxu0 0.0
        %5495 = vmatpush.msra.mxu0 0.0
        %5496 = vmatpush.msra.mxu0 0.0
        %5497 = vmatpush.msra.mxu0 %v1158
        %5498 = vmatpush.msra.mxu0 %v1157
        %5499 = vmatmul.f32.gmra.mxu0 %v5361
        %v5500 = vpop.f32.mrf.mxu0
        %v5501 = vadd.f32 0.0, %v5500
        %5502 = vdwg.mxu0
        %5503 = vmatpush.msra.mxu0 0.0
        %5504 = vmatpush.msra.mxu0 0.0
        %5505 = vmatpush.msra.mxu0 0.0
        %5506 = vmatpush.msra.mxu0 0.0
        %5507 = vmatpush.msra.mxu0 0.0
        %5508 = vmatpush.msra.mxu0 0.0
        %5509 = vmatpush.msra.mxu0 0.0
        %5510 = vmatpush.msra.mxu0 0.0
        %5511 = vmatpush.msra.mxu0 0.0
        %5512 = vmatpush.msra.mxu0 0.0
        %5513 = vmatpush.msra.mxu0 0.0
        %5514 = vmatpush.msra.mxu0 0.0
        %5515 = vmatpush.msra.mxu0 0.0
        %5516 = vmatpush.msra.mxu0 0.0
        %5517 = vmatpush.msra.mxu0 %v1181
        %5518 = vmatpush.msra.mxu0 %v1180
        %5519 = vmatmul.f32.gmra.mxu0 %v5361
        %v5520 = vpop.f32.mrf.mxu0
        %v5521 = vadd.f32 0.0, %v5520
        %5522 = vdwg.mxu0
        %5523 = vmatpush.msra.mxu0 0.0
        %5524 = vmatpush.msra.mxu0 0.0
        %5525 = vmatpush.msra.mxu0 0.0
        %5526 = vmatpush.msra.mxu0 0.0
        %5527 = vmatpush.msra.mxu0 0.0
        %5528 = vmatpush.msra.mxu0 0.0
        %5529 = vmatpush.msra.mxu0 0.0
        %5530 = vmatpush.msra.mxu0 0.0
        %5531 = vmatpush.msra.mxu0 0.0
        %5532 = vmatpush.msra.mxu0 0.0
        %5533 = vmatpush.msra.mxu0 0.0
        %5534 = vmatpush.msra.mxu0 0.0
        %5535 = vmatpush.msra.mxu0 0.0
        %5536 = vmatpush.msra.mxu0 0.0
        %5537 = vmatpush.msra.mxu0 %v1204
        %5538 = vmatpush.msra.mxu0 %v1203
        %5539 = vmatmul.f32.gmra.mxu0 %v5361
        %v5540 = vpop.f32.mrf.mxu0
        %v5541 = vadd.f32 0.0, %v5540
        %5542 = vdwg.mxu0
        %s5543 = scalar_lea.vmem [#allocation2], 56
        %v5544 = vld [vmem:[%s5543] sm:$0xff]
        %s5545 = scalar_lea.vmem [#allocation4], 112
        %v5546 = vld [vmem:[%s5545] sm:$0xff]
        %v5548 = vsel %vm884, %v5544, 0
        %5550 = vmatpush.msra.mxu0 0.0
        %5551 = vmatpush.msra.mxu0 0.0
        %5552 = vmatpush.msra.mxu0 0.0
        %5553 = vmatpush.msra.mxu0 0.0
        %5554 = vmatpush.msra.mxu0 0.0
        %5555 = vmatpush.msra.mxu0 0.0
        %5556 = vmatpush.msra.mxu0 0.0
        %5557 = vmatpush.msra.mxu0 %v5541
        %5558 = vmatpush.msra.mxu0 %v5521
        %5559 = vmatpush.msra.mxu0 %v5501
        %5560 = vmatpush.msra.mxu0 %v5481
        %5561 = vmatpush.msra.mxu0 %v5461
        %5562 = vmatpush.msra.mxu0 %v5441
        %5563 = vmatpush.msra.mxu0 %v5421
        %5564 = vmatpush.msra.mxu0 %v5401
        %5565 = vmatpush.msra.mxu0 %v5381
        %5566 = vmatmul.f32.gmra.mxu0 %v5548
        %v5567 = vpop.f32.mrf.mxu0
        %v5568 = vadd.f32 %v5546, %v5567
        %5569 = vdwg.mxu0
        %vm5570 = vcmp.ge.f32.partialorder %v5568, 0.0
        %v5571 = vmul.f32 %v5568, 0.2
        %v5572 = vsel %vm5570, %v5568, %v5571
        %v5573 = vld [vmem:[#allocation10] sm:$0xff]
        %5575 = vst [vmem:[#allocation1] ss:$2 sm:$0xff] %v5573
        %v5576 = vld.sshfl [vmem:[#allocation1] sm:$0xff pattern:$0x75316420]
        %v5577 = vld.sshfl [vmem:[#allocation1 + $0x8] sm:$0xff pattern:$0x75316420]
        %v5578 = vsel %vm658, %v5576, 0
        %v5580 = vsel %vm658, %v5577, 0
        %5582 = vmatpush.msra.mxu0 0.0
        %5583 = vmatpush.msra.mxu0 0.0
        %5584 = vmatpush.msra.mxu0 0.0
        %5585 = vmatpush.msra.mxu0 0.0
        %5586 = vmatpush.msra.mxu0 0.0
        %5587 = vmatpush.msra.mxu0 0.0
        %5588 = vmatpush.msra.mxu0 0.0
        %5589 = vmatpush.msra.mxu0 0.0
        %5590 = vmatpush.msra.mxu0 0.0
        %5591 = vmatpush.msra.mxu0 0.0
        %5592 = vmatpush.msra.mxu0 0.0
        %5593 = vmatpush.msra.mxu0 0.0
        %5594 = vmatpush.msra.mxu0 0.0
        %5595 = vmatpush.msra.mxu0 0.0
        %5596 = vmatpush.msra.mxu0 0.0
        %5597 = vmatpush.msra.mxu0 %v5578
        %5598 = vmatmul.f32.gmra.mxu0 %v656
        %v5599 = vpop.f32.mrf.mxu0
        %v5600 = vadd.f32 0.0, %v5599
        %5601 = vdwg.mxu0
        %5602 = vmatpush.msra.mxu0 0.0
        %5603 = vmatpush.msra.mxu0 0.0
        %5604 = vmatpush.msra.mxu0 0.0
        %5605 = vmatpush.msra.mxu0 0.0
        %5606 = vmatpush.msra.mxu0 0.0
        %5607 = vmatpush.msra.mxu0 0.0
        %5608 = vmatpush.msra.mxu0 0.0
        %5609 = vmatpush.msra.mxu0 0.0
        %5610 = vmatpush.msra.mxu0 0.0
        %5611 = vmatpush.msra.mxu0 0.0
        %5612 = vmatpush.msra.mxu0 0.0
        %5613 = vmatpush.msra.mxu0 0.0
        %5614 = vmatpush.msra.mxu0 0.0
        %5615 = vmatpush.msra.mxu0 0.0
        %5616 = vmatpush.msra.mxu0 0.0
        %5617 = vmatpush.msra.mxu0 %v5580
        %5618 = vmatmul.f32.gmra.mxu0 %v656
        %v5619 = vpop.f32.mrf.mxu0
        %v5620 = vadd.f32 0.0, %v5619
        %5621 = vdwg.mxu0
        %5622 = vst [vmem:[#allocation1] ss:$2 sm:$0xff] %v5573
        %v5623 = vld.sshfl [vmem:[#allocation1] sm:$0xff pattern:$0x75316420]
        %v5624 = vld.sshfl [vmem:[#allocation1 + $0x8] sm:$0xff pattern:$0x75316420]
        %v5625 = vsel %vm658, %v5623, 0
        %v5627 = vsel %vm658, %v5624, 0
        %5629 = vmatpush.msra.mxu0 0.0
        %5630 = vmatpush.msra.mxu0 0.0
        %5631 = vmatpush.msra.mxu0 0.0
        %5632 = vmatpush.msra.mxu0 0.0
        %5633 = vmatpush.msra.mxu0 0.0
        %5634 = vmatpush.msra.mxu0 0.0
        %5635 = vmatpush.msra.mxu0 0.0
        %5636 = vmatpush.msra.mxu0 0.0
        %5637 = vmatpush.msra.mxu0 0.0
        %5638 = vmatpush.msra.mxu0 0.0
        %5639 = vmatpush.msra.mxu0 0.0
        %5640 = vmatpush.msra.mxu0 0.0
        %5641 = vmatpush.msra.mxu0 0.0
        %5642 = vmatpush.msra.mxu0 0.0
        %5643 = vmatpush.msra.mxu0 0.0
        %5644 = vmatpush.msra.mxu0 %v5625
        %5645 = vmatmul.f32.gmra.mxu0 %v988
        %v5646 = vpop.f32.mrf.mxu0
        %v5647 = vadd.f32 0.0, %v5646
        %5648 = vdwg.mxu0
        %5649 = vmatpush.msra.mxu0 0.0
        %5650 = vmatpush.msra.mxu0 0.0
        %5651 = vmatpush.msra.mxu0 0.0
        %5652 = vmatpush.msra.mxu0 0.0
        %5653 = vmatpush.msra.mxu0 0.0
        %5654 = vmatpush.msra.mxu0 0.0
        %5655 = vmatpush.msra.mxu0 0.0
        %5656 = vmatpush.msra.mxu0 0.0
        %5657 = vmatpush.msra.mxu0 0.0
        %5658 = vmatpush.msra.mxu0 0.0
        %5659 = vmatpush.msra.mxu0 0.0
        %5660 = vmatpush.msra.mxu0 0.0
        %5661 = vmatpush.msra.mxu0 0.0
        %5662 = vmatpush.msra.mxu0 0.0
        %5663 = vmatpush.msra.mxu0 0.0
        %5664 = vmatpush.msra.mxu0 %v5627
        %5665 = vmatmul.f32.gmra.mxu0 %v988
        %v5666 = vpop.f32.mrf.mxu0
        %v5667 = vadd.f32 0.0, %v5666
        %5668 = vdwg.mxu0
        %v5669 = vld [vmem:[#allocation12] sm:$0xff]
        %v5670 = vld [vmem:[#allocation12 + $0x8] sm:$0xff]
        %v5671 = vld [vmem:[#allocation12 + $0x10] sm:$0xff]
        %v5672 = vld [vmem:[#allocation12 + $0x18] sm:$0xff]
        %v5674 = vsel %vm1017, %v5572, 0
        %5676 = vmatpush.msra.mxu0 0.0
        %5677 = vmatpush.msra.mxu0 0.0
        %5678 = vmatpush.msra.mxu0 0.0
        %5679 = vmatpush.msra.mxu0 0.0
        %5680 = vmatpush.msra.mxu0 0.0
        %5681 = vmatpush.msra.mxu0 0.0
        %5682 = vmatpush.msra.mxu0 0.0
        %5683 = vmatpush.msra.mxu0 0.0
        %5684 = vmatpush.msra.mxu0 0.0
        %5685 = vmatpush.msra.mxu0 0.0
        %5686 = vmatpush.msra.mxu0 0.0
        %5687 = vmatpush.msra.mxu0 0.0
        %5688 = vmatpush.msra.mxu0 0.0
        %5689 = vmatpush.msra.mxu0 0.0
        %5690 = vmatpush.msra.mxu0 %v5671
        %5691 = vmatpush.msra.mxu0 %v5669
        %5692 = vmatmul.f32.gmra.mxu0 %v5674
        %v5693 = vpop.f32.mrf.mxu0
        %v5694 = vadd.f32 0.0, %v5693
        %5695 = vdwg.mxu0
        %5696 = vmatpush.msra.mxu0 0.0
        %5697 = vmatpush.msra.mxu0 0.0
        %5698 = vmatpush.msra.mxu0 0.0
        %5699 = vmatpush.msra.mxu0 0.0
        %5700 = vmatpush.msra.mxu0 0.0
        %5701 = vmatpush.msra.mxu0 0.0
        %5702 = vmatpush.msra.mxu0 0.0
        %5703 = vmatpush.msra.mxu0 0.0
        %5704 = vmatpush.msra.mxu0 0.0
        %5705 = vmatpush.msra.mxu0 0.0
        %5706 = vmatpush.msra.mxu0 0.0
        %5707 = vmatpush.msra.mxu0 0.0
        %5708 = vmatpush.msra.mxu0 0.0
        %5709 = vmatpush.msra.mxu0 0.0
        %5710 = vmatpush.msra.mxu0 %v5672
        %5711 = vmatpush.msra.mxu0 %v5670
        %5712 = vmatmul.f32.gmra.mxu0 %v5674
        %v5713 = vpop.f32.mrf.mxu0
        %v5714 = vadd.f32 0.0, %v5713
        %5715 = vdwg.mxu0
        %v5716 = vld [vmem:[#allocation13] sm:$0xff]
        %v5717 = vld [vmem:[%s13] sm:$0xff]
        %5719 = vset.pattern.permute.xlu0 0
        %5720 = vperm.xlu0 %5719, %v5717
        %v5721 = vpop.permute.xlu0 %5720
        %vm5723 = vcmask 392192
        %v5725 = vsel %vm5723, %v5716, 0
        %5727 = vmatpush.msra.mxu0 0.0
        %5728 = vmatpush.msra.mxu0 0.0
        %5729 = vmatpush.msra.mxu0 0.0
        %5730 = vmatpush.msra.mxu0 0.0
        %5731 = vmatpush.msra.mxu0 0.0
        %5732 = vmatpush.msra.mxu0 0.0
        %5733 = vmatpush.msra.mxu0 0.0
        %5734 = vmatpush.msra.mxu0 0.0
        %5735 = vmatpush.msra.mxu0 0.0
        %5736 = vmatpush.msra.mxu0 0.0
        %5737 = vmatpush.msra.mxu0 %v5694
        %5738 = vmatpush.msra.mxu0 %v5647
        %5739 = vmatpush.msra.mxu0 %v5600
        %5740 = vmatpush.msra.mxu0 %v4080
        %5741 = vmatpush.msra.mxu0 %v3306
        %5742 = vmatpush.msra.mxu0 %v648
        %5743 = vmatmul.f32.gmra.mxu0 %v5725
        %v5744 = vpop.f32.mrf.mxu0
        %v5745 = vadd.f32 %v5721, %v5744
        %5746 = vdwg.mxu0
        %5747 = vmatpush.msra.mxu0 0.0
        %5748 = vmatpush.msra.mxu0 0.0
        %5749 = vmatpush.msra.mxu0 0.0
        %5750 = vmatpush.msra.mxu0 0.0
        %5751 = vmatpush.msra.mxu0 0.0
        %5752 = vmatpush.msra.mxu0 0.0
        %5753 = vmatpush.msra.mxu0 0.0
        %5754 = vmatpush.msra.mxu0 0.0
        %5755 = vmatpush.msra.mxu0 0.0
        %5756 = vmatpush.msra.mxu0 0.0
        %5757 = vmatpush.msra.mxu0 %v5714
        %5758 = vmatpush.msra.mxu0 %v5667
        %5759 = vmatpush.msra.mxu0 %v5620
        %5760 = vmatpush.msra.mxu0 %v4081
        %5761 = vmatpush.msra.mxu0 %v3307
        %5762 = vmatpush.msra.mxu0 %v649
        %5763 = vmatmul.f32.gmra.mxu0 %v5725
        %v5764 = vpop.f32.mrf.mxu0
        %v5765 = vadd.f32 %v5721, %v5764
        %5766 = vdwg.mxu0
        %vm5767 = vcmp.ge.f32.partialorder %v5745, 0.0
        %vm5768 = vcmp.ge.f32.partialorder %v5765, 0.0
        %v5769 = vmul.f32 %v5745, 0.2
        %v5770 = vmul.f32 %v5765, 0.2
        %v5771 = vsel %vm5767, %v5745, %v5769
        %v5772 = vsel %vm5768, %v5765, %v5770
        %5773 = vst [vmem:[%s647] sm:$0xff] %v5771
        %5774 = vst [vmem:[%s647 + $0x8] sm:$0xff] %v5772
        %p5775 = scmp.lt.s32.totalorder %s30, 1
        %s5776 = scalar_select %p5775, %s30, 1
        %s5777 = smul.addr %s5776, 2
        %s5778 = smul.addr %s5777, 8
        %s5779 = scalar_lea.vmem %s14, %s5778
        // Predicated region
        $region109: #{bottomupupbottom.1} parent=75 // pred_check
          %p5780 = pneg %p362
        $region110: #{bottomupupbottom.1} parent=75 // pred_check_branch
          %5782 = sbr.rel (%p5780) target = $region112
        $region111: #{bottomupupbottom.1} parent=75 // pred_region
          _
        $region112: #{bottomupupbottom.1} parent=75 // pred_fallthru
          _
      $region76: #{bottomupupbottom.1} parent=5 // pred_fallthru
        _
      %p5783 = scmp.le.s32.totalorder 2, %s25
      // Predicated region
      $region113: #{bottomupupbottom.1} parent=5 // pred_check
        %p5784 = pneg %p5783
      $region114: #{bottomupupbottom.1} parent=5 // pred_check_branch
        %5786 = sbr.rel (%p5784) target = $region116
      $region115: #{bottomupupbottom.1} parent=5 // pred_region
        %s5787 = ssub.s32 %s25, 2
        // Predicated region
        $region117: #{bottomupupbottom.1} parent=115 // pred_check
          %p5788 = pneg %p368
        $region118: #{bottomupupbottom.1} parent=115 // pred_check_branch
          %5790 = sbr.rel (%p5788) target = $region120
        $region119: #{bottomupupbottom.1} parent=115 // pred_region
          %p5791 = scmp.lt.s32.totalorder %s31, 1
          %s5792 = scalar_select %p5791, %s31, 1
          %s5793 = smul.addr %s5792, 2
          %s5794 = smul.addr %s5793, 8
          %s5795 = scalar_lea.vmem %s14, %s5794
        $region120: #{bottomupupbottom.1} parent=115 // pred_fallthru
          _
      $region116: #{bottomupupbottom.1} parent=5 // pred_fallthru
        _
    $region6: #{bottomupupbottom.1} parent=1 // loop_footer
      %s29 = sadd.s32 1, %s25
    $region7: #{bottomupupbottom.1} parent=1 // loop_footer_branch
      %24 = sbr.rel target = $region3
    $region8: #{bottomupupbottom.1} parent=1 // loop_exit
      _
    %5796 = vsyncpa [#allocation3], 1
    %s5797 = scalar_lea.sflag [#allocation3], 1
    %5798 = vsyncpa %s5797, 1
    %5799 = vsyncpa [#allocation5], 1
    %5800 = vsyncpa [#allocation8], 1
    %5801 = vsyncpa [#allocation11], 1
    %5802 = vsyncpa [#allocation14], 1

</llo_original>
